<compile_context>
chip_gen: v7x
topology: tpu7x:2x2x1
jax: 0.10.0
libtpu: 0.0.40
codegen_flags: <defaults>
</compile_context>

<pallas_src>
import jax
import jax.numpy as jnp
from jax.experimental import pallas as pl
from jax.experimental.pallas import tpu as pltpu

EPS = 1e-5
LANE = 128                      # channel axis padded to a multiple of this
VMEM_LIMIT = 32 * 1024 * 1024   # fits every generation incl. v7x (64 MiB phys)


def _round_up(x, m):
    return (x + m - 1) // m * m


def _choose_th(h, w):
    """Row-tile height: a multiple of 8 dividing H.  Prefer >=2 tiles per image
    (keeps the grid splittable across TensorCores and exercises the halo path)
    while keeping <= ~1024 output rows per grid step."""
    assert h % 8 == 0, "spatial height must be a multiple of 8"
    cands = [t for t in range(8, h + 1, 8) if h % t == 0]
    multi = [t for t in cands if h // t >= 2] or cands
    best = multi[0]
    for t in multi:
        if t * w <= 1024:
            best = max(best, t)
    return best


def _compiler_params():
    return pltpu.CompilerParams(
        dimension_semantics=("parallel", "parallel"),
        vmem_limit_bytes=VMEM_LIMIT,
    )


# ----------------------------------------------------------------------------
# Pallas kernel bodies
# ----------------------------------------------------------------------------
def _make_conv_kernel(th, width, wp, cpad, fused_bn_relu):
    """3x3 conv (stride 1, pad 1) over one (TH, W) row tile of one image.

    Refs (VMEM):
      prev_ref : (8, WP, Cpad)  bf16 -- 8-row block containing the row above the tile
      cur_ref  : (TH, WP, Cpad) bf16 -- the tile rows
      nxt_ref  : (8, WP, Cpad)  bf16 -- 8-row block containing the row below the tile
      w_ref    : (9, Cpad, Cpad) bf16 -- resident weight slab, tap k = dh*3+dw
      [scale_ref, shift_ref : (1, Cpad) f32]  -- fused bn1-apply (+ReLU) params
    Outputs:
      o_ref     : (TH, WP, Cpad) bf16 -- raw conv output, zeros in width-pad cols
      stats_ref : (8, Cpad) f32       -- row0 = per-channel sum, row1 = sum of squares
    """

    def body(prev_ref, cur_ref, nxt_ref, w_ref, *rest):
        if fused_bn_relu:
            scale_ref, shift_ref, o_ref, stats_ref = rest
        else:
            o_ref, stats_ref = rest

        # Assemble the (TH+2, WP, Cpad) halo window.
        win = jnp.concatenate(
            [prev_ref[7:8, :, :], cur_ref[...], nxt_ref[0:1, :, :]], axis=0)

        if fused_bn_relu:
            s = scale_ref[...].reshape(1, 1, cpad)
            b = shift_ref[...].reshape(1, 1, cpad)
            a = jnp.maximum(win.astype(jnp.float32) * s + b, 0.0)
        else:
            a = win.astype(jnp.float32)

        # Conv zero-padding must hold in the *post-activation* domain:
        # zero the width-pad columns ...
        col = jax.lax.broadcasted_iota(jnp.int32, (wp, cpad), 0)
        col_ok = jnp.logical_and(col >= 1, col <= width)
        a = jnp.where(col_ok, a, 0.0)
        # ... and the halo rows when the tile touches the image boundary.
        j = pl.program_id(1)
        nj = pl.num_programs(1)
        zrow = jnp.zeros((1, wp, cpad), jnp.float32)
        top = jnp.where(j > 0, a[0:1, :, :], zrow)
        bot = jnp.where(j < nj - 1, a[th + 1:th + 2, :, :], zrow)
        a = jnp.concatenate([top, a[1:th + 1, :, :], bot], axis=0)
        a = a.astype(jnp.bfloat16)

        # 3x3 conv = 9 shifted (TH*W, Cpad) @ (Cpad, Cpad) MXU matmuls, f32 acc.
        acc = jnp.zeros((th * width, cpad), jnp.float32)
        for dh in range(3):
            adh = a[dh:dh + th, :, :]
            for dw in range(3):
                sub = adh[:, dw:dw + width, :].reshape(th * width, cpad)
                acc = acc + jnp.dot(sub, w_ref[dh * 3 + dw],
                                    preferred_element_type=jnp.float32)

        # Per-tile BN partials from the f32 accumulator (two sublane stores).
        stats_ref[0:1, :] = jnp.sum(acc, axis=0, keepdims=True)
        stats_ref[1:2, :] = jnp.sum(acc * acc, axis=0, keepdims=True)

        # Store bf16 conv output, keeping the width-pad columns exactly zero.
        res = acc.astype(o_ref.dtype).reshape(th, width, cpad)
        o_ref[:, 0:1, :] = jnp.zeros((th, 1, cpad), o_ref.dtype)
        o_ref[:, 1:width + 1, :] = res
        o_ref[:, width + 1:wp, :] = jnp.zeros((th, wp - 1 - width, cpad),
                                              o_ref.dtype)

    return body


def _make_bn_add_relu_kernel(cpad):
    """Final pass: y = relu(h * scale + shift + identity)."""

    def body(h_ref, x_ref, scale_ref, shift_ref, o_ref):
        s = scale_ref[...].reshape(1, 1, cpad)
        b = shift_ref[...].reshape(1, 1, cpad)
        o_ref[...] = jnp.maximum(
            h_ref[...].astype(jnp.float32) * s + b
            + x_ref[...].astype(jnp.float32), 0.0)

    return body


# ----------------------------------------------------------------------------
# pallas_call wrappers
# ----------------------------------------------------------------------------
def _conv_stage(xpad, wflat, th, width, scale=None, shift=None):
    """Halo conv3x3 over a lane/width-padded NHWC bf16 activation.

    Returns (h, stats): h is (N, H, WP, Cpad) bf16 raw conv output; stats is
    (N*NJ*8, Cpad) f32 with per-tile sum / sumsq in rows 0/1 of each 8-group.
    When scale/shift are given, relu(x*scale+shift) is applied to the loaded
    tile in-kernel before the conv (fused bn-apply + ReLU).
    """
    n, hgt, wp, cpad = xpad.shape
    nj = hgt // th
    nb8 = hgt // 8
    fused = scale is not None
    kernel = _make_conv_kernel(th, width, wp, cpad, fused)

    prev_spec = pl.BlockSpec(
        (None, 8, wp, cpad),
        lambda i, j: (i, jnp.maximum(j * (th // 8) - 1, 0), 0, 0))
    cur_spec = pl.BlockSpec((None, th, wp, cpad), lambda i, j: (i, j, 0, 0))
    next_spec = pl.BlockSpec(
        (None, 8, wp, cpad),
        lambda i, j: (i, jnp.minimum((j + 1) * (th // 8), nb8 - 1), 0, 0))
    w_spec = pl.BlockSpec((9, cpad, cpad), lambda i, j: (0, 0, 0))
    vec_spec = pl.BlockSpec((1, cpad), lambda i, j: (0, 0))
    o_spec = pl.BlockSpec((None, th, wp, cpad), lambda i, j: (i, j, 0, 0))
    stats_spec = pl.BlockSpec((8, cpad), lambda i, j: (i * nj + j, 0))

    in_specs = [prev_spec, cur_spec, next_spec, w_spec]
    args = [xpad, xpad, xpad, wflat]
    if fused:
        in_specs += [vec_spec, vec_spec]
        args += [scale, shift]

    return pl.pallas_call(
        kernel,
        out_shape=(jax.ShapeDtypeStruct((n, hgt, wp, cpad), jnp.bfloat16),
                   jax.ShapeDtypeStruct((n * nj * 8, cpad), jnp.float32)),
        grid=(n, nj),
        in_specs=in_specs,
        out_specs=(o_spec, stats_spec),
        compiler_params=_compiler_params(),
    )(*args)


def _bn_add_relu_stage(h2, xpad, scale, shift, th):
    n, hgt, wp, cpad = h2.shape
    nj = hgt // th
    blk_h = pl.BlockSpec((None, th, wp, cpad), lambda i, j: (i, j, 0, 0))
    blk_x = pl.BlockSpec((None, th, wp, cpad), lambda i, j: (i, j, 0, 0))
    vec = pl.BlockSpec((1, cpad), lambda i, j: (0, 0))
    return pl.pallas_call(
        _make_bn_add_relu_kernel(cpad),
        out_shape=jax.ShapeDtypeStruct((n, hgt, wp, cpad), jnp.float32),
        grid=(n, nj),
        in_specs=[blk_h, blk_x, vec, vec],
        out_specs=pl.BlockSpec((None, th, wp, cpad), lambda i, j: (i, j, 0, 0)),
        compiler_params=_compiler_params(),
    )(h2, xpad, scale, shift)


# ----------------------------------------------------------------------------
# Glue (plain JAX, O(C)-sized or one-time layout work)
# ----------------------------------------------------------------------------
def _bn_params(stats, m):
    """Reduce per-tile partials -> per-channel (scale, shift) in f32."""
    cpad = stats.shape[-1]
    st = stats.reshape(-1, 8, cpad)
    ssum = jnp.sum(st[:, 0, :], axis=0)
    ssq = jnp.sum(st[:, 1, :], axis=0)
    mean = ssum / m
    var = jnp.maximum(ssq / m - mean * mean, 0.0)        # unbiased=False
    scale = jax.lax.rsqrt(var + EPS)
    shift = -mean * scale
    return scale.reshape(1, cpad), shift.reshape(1, cpad)


def _prep_weight(w_oihw, cpad):
    """PyTorch conv weight (Cout, Cin, 3, 3) -> lane-padded (9, Cpad, Cpad) bf16.
    Padded rows/cols are exactly zero so padded channels stay zero everywhere."""
    cout, cin, kh, kw = w_oihw.shape
    wpad = jnp.pad(w_oihw, ((0, cpad - cout), (0, cpad - cin), (0, 0), (0, 0)))
    return (jnp.transpose(wpad, (2, 3, 1, 0))
            .reshape(kh * kw, cpad, cpad).astype(jnp.bfloat16))


@jax.jit
def extended_basic_block_forward(x_nchw, w1_oihw, w2_oihw):
    """PyTorch-equivalent forward. x_nchw: (N, C, H, W) f32 -> same shape."""
    n, c, hgt, width = x_nchw.shape
    cpad = _round_up(c, LANE)
    wp = _round_up(width + 2, 8)       # +1 conv pad each side, rounded to sublanes
    th = _choose_th(hgt, width)
    m = n * hgt * width

    # NCHW f32 -> lane-padded, width-padded NHWC bf16 (done once; reused as residual).
    x = jnp.transpose(x_nchw, (0, 2, 3, 1))
    x = jnp.pad(x, ((0, 0), (0, 0), (1, wp - 1 - width), (0, cpad - c)))
    x = x.astype(jnp.bfloat16)

    w1f = _prep_weight(w1_oihw, cpad)
    w2f = _prep_weight(w2_oihw, cpad)

    # conv1 (raw output) + bn1 batch statistics.
    h1, st1 = _conv_stage(x, w1f, th, width)
    sc1, sh1 = _bn_params(st1, m)
    # fused bn1-apply + ReLU + conv2 + bn2 batch statistics.
    h2, st2 = _conv_stage(h1, w2f, th, width, scale=sc1, shift=sh1)
    sc2, sh2 = _bn_params(st2, m)
    # bn2-apply + residual add + ReLU.
    out = _bn_add_relu_stage(h2, x, sc2, sh2, th)

    out = out[:, :, 1:width + 1, :c]
    return jnp.transpose(out, (0, 3, 1, 2))


# ----------------------------------------------------------------------------
# Pure-JAX reference (correctness check)
# ----------------------------------------------------------------------------
def _reference_forward(x_nchw, w1, w2):
    def conv(x, w):
        return jax.lax.conv_general_dilated(
            x, w, window_strides=(1, 1), padding=((1, 1), (1, 1)),
            dimension_numbers=('NCHW', 'OIHW', 'NCHW'),
            precision=jax.lax.Precision.HIGHEST)

    def bn(h):
        mu = h.mean(axis=(0, 2, 3), keepdims=True)
        var = ((h - mu) ** 2).mean(axis=(0, 2, 3), keepdims=True)
        return (h - mu) / jnp.sqrt(var + EPS)

    h = jax.nn.relu(bn(conv(x_nchw, w1)))
    h = bn(conv(h, w2))
    return jax.nn.relu(h + x_nchw)


if __name__ == "__main__":
    # Small deterministic problem: N=2, C=8, H=W=16 (stride=1, downsample=None,
    # in_planes == planes as in a standard BasicBlock).  TH=8 -> nj=2 row tiles
    # per image so the real (non-boundary) halo path is exercised; per-conv
    # grid = (2, 2).
    key = jax.random.PRNGKey(0)
    kx, k1, k2 = jax.random.split(key, 3)

    N, C, H, W = 2, 8, 16, 16
    x = jax.random.normal(kx, (N, C, H, W), dtype=jnp.float32)
    w1 = 0.1 * jax.random.normal(k1, (C, C, 3, 3), dtype=jnp.float32)  # conv1 (OIHW)
    w2 = 0.1 * jax.random.normal(k2, (C, C, 3, 3), dtype=jnp.float32)  # conv2 (OIHW)

    out = jax.block_until_ready(extended_basic_block_forward(x, w1, w2))
    ref = jax.block_until_ready(_reference_forward(x, w1, w2))

    assert out.shape == (N, C, H, W)
    err = float(jnp.max(jnp.abs(out - ref)))
    # bf16 MXU inputs + bf16 intermediates with f32 accumulation/statistics.
    assert err < 5e-2, f"max abs err {err}"
    print("KERNEL_OK")
</pallas_src>

<mosaic_0001>
module attributes {stable_mosaic.version = 11 : i64} {
  func.func @body(%arg0: i32, %arg1: i32, %arg2: memref<1x8x24x128xbf16, #tpu.memory_space<vmem>>, %arg3: memref<1x8x24x128xbf16, #tpu.memory_space<vmem>>, %arg4: memref<1x8x24x128xbf16, #tpu.memory_space<vmem>>, %arg5: memref<9x128x128xbf16, #tpu.memory_space<vmem>>, %arg6: memref<1x8x24x128xbf16, #tpu.memory_space<vmem>>, %arg7: memref<8x128xf32, #tpu.memory_space<vmem>>) attributes {dimension_semantics = [#tpu.dimension_semantics<parallel>, #tpu.dimension_semantics<parallel>], iteration_bounds = array<i64: 2, 2>, scalar_prefetch = 0 : i64, scratch_operands = 0 : i64, tpu.core_type = #tpu.core_type<tc>, window_params = [{transform_indices = @transform_0, window_bounds = array<i64: 1, 8, 24, 128>}, {transform_indices = @transform_1, window_bounds = array<i64: 1, 8, 24, 128>}, {transform_indices = @transform_2, window_bounds = array<i64: 1, 8, 24, 128>}, {pipeline_mode = #tpu.pipeline_mode<synchronous>, transform_indices = @transform_3, window_bounds = array<i64: 9, 128, 128>}, {transform_indices = @transform_4, window_bounds = array<i64: 1, 8, 24, 128>}, {transform_indices = @transform_5, window_bounds = array<i64: 8, 128>}]} {
    %c0 = arith.constant 0 : index
    %c7 = arith.constant 7 : index
    %c0_0 = arith.constant 0 : index
    %c0_1 = arith.constant 0 : index
    %0 = vector.load %arg2[%c0, %c7, %c0_0, %c0_1] : memref<1x8x24x128xbf16, #tpu.memory_space<vmem>>, vector<1x1x24x128xbf16>
    %1 = vector.shape_cast %0 : vector<1x1x24x128xbf16> to vector<1x24x128xbf16>
    %c0_2 = arith.constant 0 : index
    %c0_3 = arith.constant 0 : index
    %c0_4 = arith.constant 0 : index
    %c0_5 = arith.constant 0 : index
    %2 = vector.load %arg3[%c0_2, %c0_3, %c0_4, %c0_5] : memref<1x8x24x128xbf16, #tpu.memory_space<vmem>>, vector<1x8x24x128xbf16>
    %3 = vector.shape_cast %2 : vector<1x8x24x128xbf16> to vector<8x24x128xbf16>
    %c0_6 = arith.constant 0 : index
    %c0_7 = arith.constant 0 : index
    %c0_8 = arith.constant 0 : index
    %c0_9 = arith.constant 0 : index
    %4 = vector.load %arg4[%c0_6, %c0_7, %c0_8, %c0_9] : memref<1x8x24x128xbf16, #tpu.memory_space<vmem>>, vector<1x1x24x128xbf16>
    %5 = vector.shape_cast %4 : vector<1x1x24x128xbf16> to vector<1x24x128xbf16>
    %6 = tpu.concatenate %1, %3, %5 in 0 : vector<1x24x128xbf16>, vector<8x24x128xbf16>, vector<1x24x128xbf16> -> vector<10x24x128xbf16>
    %7 = arith.extf %6 : vector<10x24x128xbf16> to vector<10x24x128xf32>
    %8 = tpu.iota {dimensions = array<i32: 0>} : vector<24x128xi32>
    %c1_i32 = arith.constant 1 : i32
    %9 = vector.broadcast %c1_i32 : i32 to vector<24x128xi32>
    %10 = arith.cmpi sge, %8, %9 : vector<24x128xi32>
    %c16_i32 = arith.constant 16 : i32
    %11 = vector.broadcast %c16_i32 : i32 to vector<24x128xi32>
    %12 = arith.cmpi sle, %8, %11 : vector<24x128xi32>
    %13 = arith.andi %10, %12 : vector<24x128xi1>
    %cst = arith.constant 0.000000e+00 : f32
    %14 = vector.shape_cast %13 : vector<24x128xi1> to vector<1x24x128xi1>
    %15 = vector.broadcast %14 : vector<1x24x128xi1> to vector<10x24x128xi1>
    %16 = vector.broadcast %cst : f32 to vector<10x24x128xf32>
    %17 = arith.select %15, %7, %16 : vector<10x24x128xi1>, vector<10x24x128xf32>
    %cst_10 = arith.constant 0.000000e+00 : f32
    %18 = vector.broadcast %cst_10 : f32 to vector<1x24x128xf32>
    %c0_i32 = arith.constant 0 : i32
    %19 = arith.cmpi sgt, %arg1, %c0_i32 : i32
    %20 = vector.extract_strided_slice %17 {offsets = [0, 0, 0], sizes = [1, 24, 128], strides = [1, 1, 1]} : vector<10x24x128xf32> to vector<1x24x128xf32>
    %21 = arith.select %19, %20, %18 : vector<1x24x128xf32>
    %c1_i32_11 = arith.constant 1 : i32
    %22 = arith.cmpi slt, %arg1, %c1_i32_11 : i32
    %23 = vector.extract_strided_slice %17 {offsets = [9, 0, 0], sizes = [1, 24, 128], strides = [1, 1, 1]} : vector<10x24x128xf32> to vector<1x24x128xf32>
    %24 = arith.select %22, %23, %18 : vector<1x24x128xf32>
    %25 = vector.extract_strided_slice %17 {offsets = [1, 0, 0], sizes = [8, 24, 128], strides = [1, 1, 1]} : vector<10x24x128xf32> to vector<8x24x128xf32>
    %26 = tpu.concatenate %21, %25, %24 in 0 : vector<1x24x128xf32>, vector<8x24x128xf32>, vector<1x24x128xf32> -> vector<10x24x128xf32>
    %27 = arith.truncf %26 : vector<10x24x128xf32> to vector<10x24x128xbf16>
    %cst_12 = arith.constant 0.000000e+00 : f32
    %28 = vector.broadcast %cst_12 : f32 to vector<128x128xf32>
    %29 = vector.extract_strided_slice %27 {offsets = [0, 0, 0], sizes = [8, 24, 128], strides = [1, 1, 1]} : vector<10x24x128xbf16> to vector<8x24x128xbf16>
    %30 = vector.extract_strided_slice %29 {offsets = [0, 0, 0], sizes = [8, 16, 128], strides = [1, 1, 1]} : vector<8x24x128xbf16> to vector<8x16x128xbf16>
    %31 = vector.shape_cast %30 : vector<8x16x128xbf16> to vector<128x128xbf16>
    %c0_13 = arith.constant 0 : index
    %c0_14 = arith.constant 0 : index
    %c0_15 = arith.constant 0 : index
    %32 = vector.load %arg5[%c0_13, %c0_14, %c0_15] : memref<9x128x128xbf16, #tpu.memory_space<vmem>>, vector<1x128x128xbf16>
    %33 = vector.shape_cast %32 : vector<1x128x128xbf16> to vector<128x128xbf16>
    %cst_16 = arith.constant dense<0.000000e+00> : vector<128x128xf32>
    %34 = tpu.matmul %31, %33, %cst_16 {dimension_numbers = #tpu.dot_dimension_numbers<[1], [0], [0], [1], [0, 0, 1, 1], [], []>} : vector<128x128xbf16>, vector<128x128xbf16>, vector<128x128xf32> -> vector<128x128xf32>
    %35 = arith.addf %28, %34 : vector<128x128xf32>
    %36 = vector.extract_strided_slice %29 {offsets = [0, 1, 0], sizes = [8, 16, 128], strides = [1, 1, 1]} : vector<8x24x128xbf16> to vector<8x16x128xbf16>
    %37 = vector.shape_cast %36 : vector<8x16x128xbf16> to vector<128x128xbf16>
    %c1 = arith.constant 1 : index
    %c0_17 = arith.constant 0 : index
    %c0_18 = arith.constant 0 : index
    %38 = vector.load %arg5[%c1, %c0_17, %c0_18] : memref<9x128x128xbf16, #tpu.memory_space<vmem>>, vector<1x128x128xbf16>
    %39 = vector.shape_cast %38 : vector<1x128x128xbf16> to vector<128x128xbf16>
    %cst_19 = arith.constant dense<0.000000e+00> : vector<128x128xf32>
    %40 = tpu.matmul %37, %39, %cst_19 {dimension_numbers = #tpu.dot_dimension_numbers<[1], [0], [0], [1], [0, 0, 1, 1], [], []>} : vector<128x128xbf16>, vector<128x128xbf16>, vector<128x128xf32> -> vector<128x128xf32>
    %41 = arith.addf %35, %40 : vector<128x128xf32>
    %42 = vector.extract_strided_slice %29 {offsets = [0, 2, 0], sizes = [8, 16, 128], strides = [1, 1, 1]} : vector<8x24x128xbf16> to vector<8x16x128xbf16>
    %43 = vector.shape_cast %42 : vector<8x16x128xbf16> to vector<128x128xbf16>
    %c2 = arith.constant 2 : index
    %c0_20 = arith.constant 0 : index
    %c0_21 = arith.constant 0 : index
    %44 = vector.load %arg5[%c2, %c0_20, %c0_21] : memref<9x128x128xbf16, #tpu.memory_space<vmem>>, vector<1x128x128xbf16>
    %45 = vector.shape_cast %44 : vector<1x128x128xbf16> to vector<128x128xbf16>
    %cst_22 = arith.constant dense<0.000000e+00> : vector<128x128xf32>
    %46 = tpu.matmul %43, %45, %cst_22 {dimension_numbers = #tpu.dot_dimension_numbers<[1], [0], [0], [1], [0, 0, 1, 1], [], []>} : vector<128x128xbf16>, vector<128x128xbf16>, vector<128x128xf32> -> vector<128x128xf32>
    %47 = arith.addf %41, %46 : vector<128x128xf32>
    %48 = vector.extract_strided_slice %27 {offsets = [1, 0, 0], sizes = [8, 24, 128], strides = [1, 1, 1]} : vector<10x24x128xbf16> to vector<8x24x128xbf16>
    %49 = vector.extract_strided_slice %48 {offsets = [0, 0, 0], sizes = [8, 16, 128], strides = [1, 1, 1]} : vector<8x24x128xbf16> to vector<8x16x128xbf16>
    %50 = vector.shape_cast %49 : vector<8x16x128xbf16> to vector<128x128xbf16>
    %c3 = arith.constant 3 : index
    %c0_23 = arith.constant 0 : index
    %c0_24 = arith.constant 0 : index
    %51 = vector.load %arg5[%c3, %c0_23, %c0_24] : memref<9x128x128xbf16, #tpu.memory_space<vmem>>, vector<1x128x128xbf16>
    %52 = vector.shape_cast %51 : vector<1x128x128xbf16> to vector<128x128xbf16>
    %cst_25 = arith.constant dense<0.000000e+00> : vector<128x128xf32>
    %53 = tpu.matmul %50, %52, %cst_25 {dimension_numbers = #tpu.dot_dimension_numbers<[1], [0], [0], [1], [0, 0, 1, 1], [], []>} : vector<128x128xbf16>, vector<128x128xbf16>, vector<128x128xf32> -> vector<128x128xf32>
    %54 = arith.addf %47, %53 : vector<128x128xf32>
    %55 = vector.extract_strided_slice %48 {offsets = [0, 1, 0], sizes = [8, 16, 128], strides = [1, 1, 1]} : vector<8x24x128xbf16> to vector<8x16x128xbf16>
    %56 = vector.shape_cast %55 : vector<8x16x128xbf16> to vector<128x128xbf16>
    %c4 = arith.constant 4 : index
    %c0_26 = arith.constant 0 : index
    %c0_27 = arith.constant 0 : index
    %57 = vector.load %arg5[%c4, %c0_26, %c0_27] : memref<9x128x128xbf16, #tpu.memory_space<vmem>>, vector<1x128x128xbf16>
    %58 = vector.shape_cast %57 : vector<1x128x128xbf16> to vector<128x128xbf16>
    %cst_28 = arith.constant dense<0.000000e+00> : vector<128x128xf32>
    %59 = tpu.matmul %56, %58, %cst_28 {dimension_numbers = #tpu.dot_dimension_numbers<[1], [0], [0], [1], [0, 0, 1, 1], [], []>} : vector<128x128xbf16>, vector<128x128xbf16>, vector<128x128xf32> -> vector<128x128xf32>
    %60 = arith.addf %54, %59 : vector<128x128xf32>
    %61 = vector.extract_strided_slice %48 {offsets = [0, 2, 0], sizes = [8, 16, 128], strides = [1, 1, 1]} : vector<8x24x128xbf16> to vector<8x16x128xbf16>
    %62 = vector.shape_cast %61 : vector<8x16x128xbf16> to vector<128x128xbf16>
    %c5 = arith.constant 5 : index
    %c0_29 = arith.constant 0 : index
    %c0_30 = arith.constant 0 : index
    %63 = vector.load %arg5[%c5, %c0_29, %c0_30] : memref<9x128x128xbf16, #tpu.memory_space<vmem>>, vector<1x128x128xbf16>
    %64 = vector.shape_cast %63 : vector<1x128x128xbf16> to vector<128x128xbf16>
    %cst_31 = arith.constant dense<0.000000e+00> : vector<128x128xf32>
    %65 = tpu.matmul %62, %64, %cst_31 {dimension_numbers = #tpu.dot_dimension_numbers<[1], [0], [0], [1], [0, 0, 1, 1], [], []>} : vector<128x128xbf16>, vector<128x128xbf16>, vector<128x128xf32> -> vector<128x128xf32>
    %66 = arith.addf %60, %65 : vector<128x128xf32>
    %67 = vector.extract_strided_slice %27 {offsets = [2, 0, 0], sizes = [8, 24, 128], strides = [1, 1, 1]} : vector<10x24x128xbf16> to vector<8x24x128xbf16>
    %68 = vector.extract_strided_slice %67 {offsets = [0, 0, 0], sizes = [8, 16, 128], strides = [1, 1, 1]} : vector<8x24x128xbf16> to vector<8x16x128xbf16>
    %69 = vector.shape_cast %68 : vector<8x16x128xbf16> to vector<128x128xbf16>
    %c6 = arith.constant 6 : index
    %c0_32 = arith.constant 0 : index
    %c0_33 = arith.constant 0 : index
    %70 = vector.load %arg5[%c6, %c0_32, %c0_33] : memref<9x128x128xbf16, #tpu.memory_space<vmem>>, vector<1x128x128xbf16>
    %71 = vector.shape_cast %70 : vector<1x128x128xbf16> to vector<128x128xbf16>
    %cst_34 = arith.constant dense<0.000000e+00> : vector<128x128xf32>
    %72 = tpu.matmul %69, %71, %cst_34 {dimension_numbers = #tpu.dot_dimension_numbers<[1], [0], [0], [1], [0, 0, 1, 1], [], []>} : vector<128x128xbf16>, vector<128x128xbf16>, vector<128x128xf32> -> vector<128x128xf32>
    %73 = arith.addf %66, %72 : vector<128x128xf32>
    %74 = vector.extract_strided_slice %67 {offsets = [0, 1, 0], sizes = [8, 16, 128], strides = [1, 1, 1]} : vector<8x24x128xbf16> to vector<8x16x128xbf16>
    %75 = vector.shape_cast %74 : vector<8x16x128xbf16> to vector<128x128xbf16>
    %c7_35 = arith.constant 7 : index
    %c0_36 = arith.constant 0 : index
    %c0_37 = arith.constant 0 : index
    %76 = vector.load %arg5[%c7_35, %c0_36, %c0_37] : memref<9x128x128xbf16, #tpu.memory_space<vmem>>, vector<1x128x128xbf16>
    %77 = vector.shape_cast %76 : vector<1x128x128xbf16> to vector<128x128xbf16>
    %cst_38 = arith.constant dense<0.000000e+00> : vector<128x128xf32>
    %78 = tpu.matmul %75, %77, %cst_38 {dimension_numbers = #tpu.dot_dimension_numbers<[1], [0], [0], [1], [0, 0, 1, 1], [], []>} : vector<128x128xbf16>, vector<128x128xbf16>, vector<128x128xf32> -> vector<128x128xf32>
    %79 = arith.addf %73, %78 : vector<128x128xf32>
    %80 = vector.extract_strided_slice %67 {offsets = [0, 2, 0], sizes = [8, 16, 128], strides = [1, 1, 1]} : vector<8x24x128xbf16> to vector<8x16x128xbf16>
    %81 = vector.shape_cast %80 : vector<8x16x128xbf16> to vector<128x128xbf16>
    %c8 = arith.constant 8 : index
    %c0_39 = arith.constant 0 : index
    %c0_40 = arith.constant 0 : index
    %82 = vector.load %arg5[%c8, %c0_39, %c0_40] : memref<9x128x128xbf16, #tpu.memory_space<vmem>>, vector<1x128x128xbf16>
    %83 = vector.shape_cast %82 : vector<1x128x128xbf16> to vector<128x128xbf16>
    %cst_41 = arith.constant dense<0.000000e+00> : vector<128x128xf32>
    %84 = tpu.matmul %81, %83, %cst_41 {dimension_numbers = #tpu.dot_dimension_numbers<[1], [0], [0], [1], [0, 0, 1, 1], [], []>} : vector<128x128xbf16>, vector<128x128xbf16>, vector<128x128xf32> -> vector<128x128xf32>
    %85 = arith.addf %79, %84 : vector<128x128xf32>
    %cst_42 = arith.constant dense<0.000000e+00> : vector<128xf32>
    %86 = vector.multi_reduction <add>, %85, %cst_42 [0] : vector<128x128xf32> to vector<128xf32>
    %87 = vector.shape_cast %86 : vector<128xf32> to vector<1x128xf32>
    %c0_43 = arith.constant 0 : index
    %c0_44 = arith.constant 0 : index
    %88 = vector.load %arg7[%c0_43, %c0_44] : memref<8x128xf32, #tpu.memory_space<vmem>>, vector<1x128xf32>
    tpu.vector_store %arg7[%c0_43, %c0_44], %87 {strides = array<i32>} : memref<8x128xf32, #tpu.memory_space<vmem>>, vector<1x128xf32>,
    %89 = arith.mulf %85, %85 : vector<128x128xf32>
    %cst_45 = arith.constant dense<0.000000e+00> : vector<128xf32>
    %90 = vector.multi_reduction <add>, %89, %cst_45 [0] : vector<128x128xf32> to vector<128xf32>
    %91 = vector.shape_cast %90 : vector<128xf32> to vector<1x128xf32>
    %c1_46 = arith.constant 1 : index
    %c0_47 = arith.constant 0 : index
    %92 = vector.load %arg7[%c1_46, %c0_47] : memref<8x128xf32, #tpu.memory_space<vmem>>, vector<1x128xf32>
    tpu.vector_store %arg7[%c1_46, %c0_47], %91 {strides = array<i32>} : memref<8x128xf32, #tpu.memory_space<vmem>>, vector<1x128xf32>,
    %93 = arith.truncf %85 : vector<128x128xf32> to vector<128x128xbf16>
    %94 = vector.shape_cast %93 : vector<128x128xbf16> to vector<8x16x128xbf16>
    %cst_48 = arith.constant 0.000000e+00 : bf16
    %95 = vector.broadcast %cst_48 : bf16 to vector<8x1x128xbf16>
    %c0_49 = arith.constant 0 : index
    %c0_50 = arith.constant 0 : index
    %c0_51 = arith.constant 0 : index
    %c0_52 = arith.constant 0 : index
    %96 = vector.load %arg6[%c0_49, %c0_50, %c0_51, %c0_52] : memref<1x8x24x128xbf16, #tpu.memory_space<vmem>>, vector<1x8x1x128xbf16>
    %97 = vector.shape_cast %96 : vector<1x8x1x128xbf16> to vector<8x1x128xbf16>
    %98 = vector.shape_cast %95 : vector<8x1x128xbf16> to vector<1x8x1x128xbf16>
    tpu.vector_store %arg6[%c0_49, %c0_50, %c0_51, %c0_52], %98 {strides = array<i32>} : memref<1x8x24x128xbf16, #tpu.memory_space<vmem>>, vector<1x8x1x128xbf16>,
    %c0_53 = arith.constant 0 : index
    %c0_54 = arith.constant 0 : index
    %c1_55 = arith.constant 1 : index
    %c0_56 = arith.constant 0 : index
    %99 = vector.load %arg6[%c0_53, %c0_54, %c1_55, %c0_56] : memref<1x8x24x128xbf16, #tpu.memory_space<vmem>>, vector<1x8x16x128xbf16>
    %100 = vector.shape_cast %99 : vector<1x8x16x128xbf16> to vector<8x16x128xbf16>
    %101 = vector.shape_cast %94 : vector<8x16x128xbf16> to vector<1x8x16x128xbf16>
    tpu.vector_store %arg6[%c0_53, %c0_54, %c1_55, %c0_56], %101 {strides = array<i32>} : memref<1x8x24x128xbf16, #tpu.memory_space<vmem>>, vector<1x8x16x128xbf16>,
    %cst_57 = arith.constant 0.000000e+00 : bf16
    %102 = vector.broadcast %cst_57 : bf16 to vector<8x7x128xbf16>
    %c0_58 = arith.constant 0 : index
    %c0_59 = arith.constant 0 : index
    %c17 = arith.constant 17 : index
    %c0_60 = arith.constant 0 : index
    %103 = vector.load %arg6[%c0_58, %c0_59, %c17, %c0_60] : memref<1x8x24x128xbf16, #tpu.memory_space<vmem>>, vector<1x8x7x128xbf16>
    %104 = vector.shape_cast %103 : vector<1x8x7x128xbf16> to vector<8x7x128xbf16>
    %105 = vector.shape_cast %102 : vector<8x7x128xbf16> to vector<1x8x7x128xbf16>
    tpu.vector_store %arg6[%c0_58, %c0_59, %c17, %c0_60], %105 {strides = array<i32>} : memref<1x8x24x128xbf16, #tpu.memory_space<vmem>>, vector<1x8x7x128xbf16>,
    return
  }
  func.func @transform_0(%arg0: i32, %arg1: i32) -> (i32, i32, i32, i32) {
    %c1_i32 = arith.constant 1 : i32
    %0 = arith.muli %arg1, %c1_i32 : i32
    %c1_i32_0 = arith.constant 1 : i32
    %1 = arith.subi %0, %c1_i32_0 : i32
    %c0_i32 = arith.constant 0 : i32
    %2 = arith.maxsi %1, %c0_i32 : i32
    %c0_i32_1 = arith.constant 0 : i32
    %c0_i32_2 = arith.constant 0 : i32
    %c0_i32_3 = arith.constant 0 : i32
    return %arg0, %2, %c0_i32_1, %c0_i32_2 : i32, i32, i32, i32
  }
  func.func @transform_1(%arg0: i32, %arg1: i32) -> (i32, i32, i32, i32) {
    %c0_i32 = arith.constant 0 : i32
    %c0_i32_0 = arith.constant 0 : i32
    %c0_i32_1 = arith.constant 0 : i32
    return %arg0, %arg1, %c0_i32, %c0_i32_0 : i32, i32, i32, i32
  }
  func.func @transform_2(%arg0: i32, %arg1: i32) -> (i32, i32, i32, i32) {
    %c1_i32 = arith.constant 1 : i32
    %0 = arith.addi %arg1, %c1_i32 : i32
    %c1_i32_0 = arith.constant 1 : i32
    %1 = arith.muli %0, %c1_i32_0 : i32
    %c1_i32_1 = arith.constant 1 : i32
    %2 = arith.minsi %1, %c1_i32_1 : i32
    %c0_i32 = arith.constant 0 : i32
    %c0_i32_2 = arith.constant 0 : i32
    %c0_i32_3 = arith.constant 0 : i32
    return %arg0, %2, %c0_i32, %c0_i32_2 : i32, i32, i32, i32
  }
  func.func @transform_3(%arg0: i32, %arg1: i32) -> (i32, i32, i32) {
    %c0_i32 = arith.constant 0 : i32
    %c0_i32_0 = arith.constant 0 : i32
    %c0_i32_1 = arith.constant 0 : i32
    %c0_i32_2 = arith.constant 0 : i32
    return %c0_i32, %c0_i32_0, %c0_i32_1 : i32, i32, i32
  }
  func.func @transform_4(%arg0: i32, %arg1: i32) -> (i32, i32, i32, i32) {
    %c0_i32 = arith.constant 0 : i32
    %c0_i32_0 = arith.constant 0 : i32
    %c0_i32_1 = arith.constant 0 : i32
    return %arg0, %arg1, %c0_i32, %c0_i32_0 : i32, i32, i32, i32
  }
  func.func @transform_5(%arg0: i32, %arg1: i32) -> (i32, i32) {
    %c2_i32 = arith.constant 2 : i32
    %0 = arith.muli %arg0, %c2_i32 : i32
    %1 = arith.addi %0, %arg1 : i32
    %c0_i32 = arith.constant 0 : i32
    %c0_i32_0 = arith.constant 0 : i32
    return %1, %c0_i32 : i32, i32
  }
}

module attributes {stable_mosaic.version = 11 : i64} {
  func.func @body(%arg0: i32, %arg1: i32, %arg2: memref<1x8x24x128xbf16, #tpu.memory_space<vmem>>, %arg3: memref<1x8x24x128xbf16, #tpu.memory_space<vmem>>, %arg4: memref<1x128xf32, #tpu.memory_space<vmem>>, %arg5: memref<1x128xf32, #tpu.memory_space<vmem>>, %arg6: memref<1x8x24x128xf32, #tpu.memory_space<vmem>>) attributes {dimension_semantics = [#tpu.dimension_semantics<parallel>, #tpu.dimension_semantics<parallel>], iteration_bounds = array<i64: 2, 2>, scalar_prefetch = 0 : i64, scratch_operands = 0 : i64, tpu.core_type = #tpu.core_type<tc>, window_params = [{transform_indices = @transform_0, window_bounds = array<i64: 1, 8, 24, 128>}, {transform_indices = @transform_1, window_bounds = array<i64: 1, 8, 24, 128>}, {pipeline_mode = #tpu.pipeline_mode<synchronous>, transform_indices = @transform_2, window_bounds = array<i64: 1, 128>}, {pipeline_mode = #tpu.pipeline_mode<synchronous>, transform_indices = @transform_3, window_bounds = array<i64: 1, 128>}, {transform_indices = @transform_4, window_bounds = array<i64: 1, 8, 24, 128>}]} {
    %c0 = arith.constant 0 : index
    %c0_0 = arith.constant 0 : index
    %0 = vector.load %arg4[%c0, %c0_0] : memref<1x128xf32, #tpu.memory_space<vmem>>, vector<1x128xf32>
    %1 = vector.shape_cast %0 : vector<1x128xf32> to vector<1x1x128xf32>
    %c0_1 = arith.constant 0 : index
    %c0_2 = arith.constant 0 : index
    %2 = vector.load %arg5[%c0_1, %c0_2] : memref<1x128xf32, #tpu.memory_space<vmem>>, vector<1x128xf32>
    %3 = vector.shape_cast %2 : vector<1x128xf32> to vector<1x1x128xf32>
    %c0_3 = arith.constant 0 : index
    %c0_4 = arith.constant 0 : index
    %c0_5 = arith.constant 0 : index
    %c0_6 = arith.constant 0 : index
    %4 = vector.load %arg2[%c0_3, %c0_4, %c0_5, %c0_6] : memref<1x8x24x128xbf16, #tpu.memory_space<vmem>>, vector<1x8x24x128xbf16>
    %5 = vector.shape_cast %4 : vector<1x8x24x128xbf16> to vector<8x24x128xbf16>
    %6 = arith.extf %5 : vector<8x24x128xbf16> to vector<8x24x128xf32>
    %7 = vector.broadcast %1 : vector<1x1x128xf32> to vector<8x24x128xf32>
    %8 = arith.mulf %6, %7 : vector<8x24x128xf32>
    %9 = vector.broadcast %3 : vector<1x1x128xf32> to vector<8x24x128xf32>
    %10 = arith.addf %8, %9 : vector<8x24x128xf32>
    %c0_7 = arith.constant 0 : index
    %c0_8 = arith.constant 0 : index
    %c0_9 = arith.constant 0 : index
    %c0_10 = arith.constant 0 : index
    %11 = vector.load %arg3[%c0_7, %c0_8, %c0_9, %c0_10] : memref<1x8x24x128xbf16, #tpu.memory_space<vmem>>, vector<1x8x24x128xbf16>
    %12 = vector.shape_cast %11 : vector<1x8x24x128xbf16> to vector<8x24x128xbf16>
    %13 = arith.extf %12 : vector<8x24x128xbf16> to vector<8x24x128xf32>
    %14 = arith.addf %10, %13 : vector<8x24x128xf32>
    %cst = arith.constant 0.000000e+00 : f32
    %15 = vector.broadcast %cst : f32 to vector<8x24x128xf32>
    %16 = arith.maximumf %14, %15 : vector<8x24x128xf32>
    %c0_11 = arith.constant 0 : index
    %c0_12 = arith.constant 0 : index
    %c0_13 = arith.constant 0 : index
    %c0_14 = arith.constant 0 : index
    %17 = vector.load %arg6[%c0_11, %c0_12, %c0_13, %c0_14] : memref<1x8x24x128xf32, #tpu.memory_space<vmem>>, vector<1x8x24x128xf32>
    %18 = vector.shape_cast %17 : vector<1x8x24x128xf32> to vector<8x24x128xf32>
    %19 = vector.shape_cast %16 : vector<8x24x128xf32> to vector<1x8x24x128xf32>
    tpu.vector_store %arg6[%c0_11, %c0_12, %c0_13, %c0_14], %19 {strides = array<i32>} : memref<1x8x24x128xf32, #tpu.memory_space<vmem>>, vector<1x8x24x128xf32>,
    return
  }
  func.func @transform_0(%arg0: i32, %arg1: i32) -> (i32, i32, i32, i32) {
    %c0_i32 = arith.constant 0 : i32
    %c0_i32_0 = arith.constant 0 : i32
    %c0_i32_1 = arith.constant 0 : i32
    return %arg0, %arg1, %c0_i32, %c0_i32_0 : i32, i32, i32, i32
  }
  func.func @transform_1(%arg0: i32, %arg1: i32) -> (i32, i32, i32, i32) {
    %c0_i32 = arith.constant 0 : i32
    %c0_i32_0 = arith.constant 0 : i32
    %c0_i32_1 = arith.constant 0 : i32
    return %arg0, %arg1, %c0_i32, %c0_i32_0 : i32, i32, i32, i32
  }
  func.func @transform_2(%arg0: i32, %arg1: i32) -> (i32, i32) {
    %c0_i32 = arith.constant 0 : i32
    %c0_i32_0 = arith.constant 0 : i32
    %c0_i32_1 = arith.constant 0 : i32
    return %c0_i32, %c0_i32_0 : i32, i32
  }
  func.func @transform_3(%arg0: i32, %arg1: i32) -> (i32, i32) {
    %c0_i32 = arith.constant 0 : i32
    %c0_i32_0 = arith.constant 0 : i32
    %c0_i32_1 = arith.constant 0 : i32
    return %c0_i32, %c0_i32_0 : i32, i32
  }
  func.func @transform_4(%arg0: i32, %arg1: i32) -> (i32, i32, i32, i32) {
    %c0_i32 = arith.constant 0 : i32
    %c0_i32_0 = arith.constant 0 : i32
    %c0_i32_1 = arith.constant 0 : i32
    return %arg0, %arg1, %c0_i32, %c0_i32_0 : i32, i32, i32, i32
  }
}

module attributes {stable_mosaic.version = 11 : i64} {
  func.func @body(%arg0: i32, %arg1: i32, %arg2: memref<1x8x24x128xbf16, #tpu.memory_space<vmem>>, %arg3: memref<1x8x24x128xbf16, #tpu.memory_space<vmem>>, %arg4: memref<1x8x24x128xbf16, #tpu.memory_space<vmem>>, %arg5: memref<9x128x128xbf16, #tpu.memory_space<vmem>>, %arg6: memref<1x128xf32, #tpu.memory_space<vmem>>, %arg7: memref<1x128xf32, #tpu.memory_space<vmem>>, %arg8: memref<1x8x24x128xbf16, #tpu.memory_space<vmem>>, %arg9: memref<8x128xf32, #tpu.memory_space<vmem>>) attributes {dimension_semantics = [#tpu.dimension_semantics<parallel>, #tpu.dimension_semantics<parallel>], iteration_bounds = array<i64: 2, 2>, scalar_prefetch = 0 : i64, scratch_operands = 0 : i64, tpu.core_type = #tpu.core_type<tc>, window_params = [{transform_indices = @transform_0, window_bounds = array<i64: 1, 8, 24, 128>}, {transform_indices = @transform_1, window_bounds = array<i64: 1, 8, 24, 128>}, {transform_indices = @transform_2, window_bounds = array<i64: 1, 8, 24, 128>}, {pipeline_mode = #tpu.pipeline_mode<synchronous>, transform_indices = @transform_3, window_bounds = array<i64: 9, 128, 128>}, {pipeline_mode = #tpu.pipeline_mode<synchronous>, transform_indices = @transform_4, window_bounds = array<i64: 1, 128>}, {pipeline_mode = #tpu.pipeline_mode<synchronous>, transform_indices = @transform_5, window_bounds = array<i64: 1, 128>}, {transform_indices = @transform_6, window_bounds = array<i64: 1, 8, 24, 128>}, {transform_indices = @transform_7, window_bounds = array<i64: 8, 128>}]} {
    %c0 = arith.constant 0 : index
    %c7 = arith.constant 7 : index
    %c0_0 = arith.constant 0 : index
    %c0_1 = arith.constant 0 : index
    %0 = vector.load %arg2[%c0, %c7, %c0_0, %c0_1] : memref<1x8x24x128xbf16, #tpu.memory_space<vmem>>, vector<1x1x24x128xbf16>
    %1 = vector.shape_cast %0 : vector<1x1x24x128xbf16> to vector<1x24x128xbf16>
    %c0_2 = arith.constant 0 : index
    %c0_3 = arith.constant 0 : index
    %c0_4 = arith.constant 0 : index
    %c0_5 = arith.constant 0 : index
    %2 = vector.load %arg3[%c0_2, %c0_3, %c0_4, %c0_5] : memref<1x8x24x128xbf16, #tpu.memory_space<vmem>>, vector<1x8x24x128xbf16>
    %3 = vector.shape_cast %2 : vector<1x8x24x128xbf16> to vector<8x24x128xbf16>
    %c0_6 = arith.constant 0 : index
    %c0_7 = arith.constant 0 : index
    %c0_8 = arith.constant 0 : index
    %c0_9 = arith.constant 0 : index
    %4 = vector.load %arg4[%c0_6, %c0_7, %c0_8, %c0_9] : memref<1x8x24x128xbf16, #tpu.memory_space<vmem>>, vector<1x1x24x128xbf16>
    %5 = vector.shape_cast %4 : vector<1x1x24x128xbf16> to vector<1x24x128xbf16>
    %6 = tpu.concatenate %1, %3, %5 in 0 : vector<1x24x128xbf16>, vector<8x24x128xbf16>, vector<1x24x128xbf16> -> vector<10x24x128xbf16>
    %c0_10 = arith.constant 0 : index
    %c0_11 = arith.constant 0 : index
    %7 = vector.load %arg6[%c0_10, %c0_11] : memref<1x128xf32, #tpu.memory_space<vmem>>, vector<1x128xf32>
    %8 = vector.shape_cast %7 : vector<1x128xf32> to vector<1x1x128xf32>
    %c0_12 = arith.constant 0 : index
    %c0_13 = arith.constant 0 : index
    %9 = vector.load %arg7[%c0_12, %c0_13] : memref<1x128xf32, #tpu.memory_space<vmem>>, vector<1x128xf32>
    %10 = vector.shape_cast %9 : vector<1x128xf32> to vector<1x1x128xf32>
    %11 = arith.extf %6 : vector<10x24x128xbf16> to vector<10x24x128xf32>
    %12 = vector.broadcast %8 : vector<1x1x128xf32> to vector<10x24x128xf32>
    %13 = arith.mulf %11, %12 : vector<10x24x128xf32>
    %14 = vector.broadcast %10 : vector<1x1x128xf32> to vector<10x24x128xf32>
    %15 = arith.addf %13, %14 : vector<10x24x128xf32>
    %cst = arith.constant 0.000000e+00 : f32
    %16 = vector.broadcast %cst : f32 to vector<10x24x128xf32>
    %17 = arith.maximumf %15, %16 : vector<10x24x128xf32>
    %18 = tpu.iota {dimensions = array<i32: 0>} : vector<24x128xi32>
    %c1_i32 = arith.constant 1 : i32
    %19 = vector.broadcast %c1_i32 : i32 to vector<24x128xi32>
    %20 = arith.cmpi sge, %18, %19 : vector<24x128xi32>
    %c16_i32 = arith.constant 16 : i32
    %21 = vector.broadcast %c16_i32 : i32 to vector<24x128xi32>
    %22 = arith.cmpi sle, %18, %21 : vector<24x128xi32>
    %23 = arith.andi %20, %22 : vector<24x128xi1>
    %cst_14 = arith.constant 0.000000e+00 : f32
    %24 = vector.shape_cast %23 : vector<24x128xi1> to vector<1x24x128xi1>
    %25 = vector.broadcast %24 : vector<1x24x128xi1> to vector<10x24x128xi1>
    %26 = vector.broadcast %cst_14 : f32 to vector<10x24x128xf32>
    %27 = arith.select %25, %17, %26 : vector<10x24x128xi1>, vector<10x24x128xf32>
    %cst_15 = arith.constant 0.000000e+00 : f32
    %28 = vector.broadcast %cst_15 : f32 to vector<1x24x128xf32>
    %c0_i32 = arith.constant 0 : i32
    %29 = arith.cmpi sgt, %arg1, %c0_i32 : i32
    %30 = vector.extract_strided_slice %27 {offsets = [0, 0, 0], sizes = [1, 24, 128], strides = [1, 1, 1]} : vector<10x24x128xf32> to vector<1x24x128xf32>
    %31 = arith.select %29, %30, %28 : vector<1x24x128xf32>
    %c1_i32_16 = arith.constant 1 : i32
    %32 = arith.cmpi slt, %arg1, %c1_i32_16 : i32
    %33 = vector.extract_strided_slice %27 {offsets = [9, 0, 0], sizes = [1, 24, 128], strides = [1, 1, 1]} : vector<10x24x128xf32> to vector<1x24x128xf32>
    %34 = arith.select %32, %33, %28 : vector<1x24x128xf32>
    %35 = vector.extract_strided_slice %27 {offsets = [1, 0, 0], sizes = [8, 24, 128], strides = [1, 1, 1]} : vector<10x24x128xf32> to vector<8x24x128xf32>
    %36 = tpu.concatenate %31, %35, %34 in 0 : vector<1x24x128xf32>, vector<8x24x128xf32>, vector<1x24x128xf32> -> vector<10x24x128xf32>
    %37 = arith.truncf %36 : vector<10x24x128xf32> to vector<10x24x128xbf16>
    %cst_17 = arith.constant 0.000000e+00 : f32
    %38 = vector.broadcast %cst_17 : f32 to vector<128x128xf32>
    %39 = vector.extract_strided_slice %37 {offsets = [0, 0, 0], sizes = [8, 24, 128], strides = [1, 1, 1]} : vector<10x24x128xbf16> to vector<8x24x128xbf16>
    %40 = vector.extract_strided_slice %39 {offsets = [0, 0, 0], sizes = [8, 16, 128], strides = [1, 1, 1]} : vector<8x24x128xbf16> to vector<8x16x128xbf16>
    %41 = vector.shape_cast %40 : vector<8x16x128xbf16> to vector<128x128xbf16>
    %c0_18 = arith.constant 0 : index
    %c0_19 = arith.constant 0 : index
    %c0_20 = arith.constant 0 : index
    %42 = vector.load %arg5[%c0_18, %c0_19, %c0_20] : memref<9x128x128xbf16, #tpu.memory_space<vmem>>, vector<1x128x128xbf16>
    %43 = vector.shape_cast %42 : vector<1x128x128xbf16> to vector<128x128xbf16>
    %cst_21 = arith.constant dense<0.000000e+00> : vector<128x128xf32>
    %44 = tpu.matmul %41, %43, %cst_21 {dimension_numbers = #tpu.dot_dimension_numbers<[1], [0], [0], [1], [0, 0, 1, 1], [], []>} : vector<128x128xbf16>, vector<128x128xbf16>, vector<128x128xf32> -> vector<128x128xf32>
    %45 = arith.addf %38, %44 : vector<128x128xf32>
    %46 = vector.extract_strided_slice %39 {offsets = [0, 1, 0], sizes = [8, 16, 128], strides = [1, 1, 1]} : vector<8x24x128xbf16> to vector<8x16x128xbf16>
    %47 = vector.shape_cast %46 : vector<8x16x128xbf16> to vector<128x128xbf16>
    %c1 = arith.constant 1 : index
    %c0_22 = arith.constant 0 : index
    %c0_23 = arith.constant 0 : index
    %48 = vector.load %arg5[%c1, %c0_22, %c0_23] : memref<9x128x128xbf16, #tpu.memory_space<vmem>>, vector<1x128x128xbf16>
    %49 = vector.shape_cast %48 : vector<1x128x128xbf16> to vector<128x128xbf16>
    %cst_24 = arith.constant dense<0.000000e+00> : vector<128x128xf32>
    %50 = tpu.matmul %47, %49, %cst_24 {dimension_numbers = #tpu.dot_dimension_numbers<[1], [0], [0], [1], [0, 0, 1, 1], [], []>} : vector<128x128xbf16>, vector<128x128xbf16>, vector<128x128xf32> -> vector<128x128xf32>
    %51 = arith.addf %45, %50 : vector<128x128xf32>
    %52 = vector.extract_strided_slice %39 {offsets = [0, 2, 0], sizes = [8, 16, 128], strides = [1, 1, 1]} : vector<8x24x128xbf16> to vector<8x16x128xbf16>
    %53 = vector.shape_cast %52 : vector<8x16x128xbf16> to vector<128x128xbf16>
    %c2 = arith.constant 2 : index
    %c0_25 = arith.constant 0 : index
    %c0_26 = arith.constant 0 : index
    %54 = vector.load %arg5[%c2, %c0_25, %c0_26] : memref<9x128x128xbf16, #tpu.memory_space<vmem>>, vector<1x128x128xbf16>
    %55 = vector.shape_cast %54 : vector<1x128x128xbf16> to vector<128x128xbf16>
    %cst_27 = arith.constant dense<0.000000e+00> : vector<128x128xf32>
    %56 = tpu.matmul %53, %55, %cst_27 {dimension_numbers = #tpu.dot_dimension_numbers<[1], [0], [0], [1], [0, 0, 1, 1], [], []>} : vector<128x128xbf16>, vector<128x128xbf16>, vector<128x128xf32> -> vector<128x128xf32>
    %57 = arith.addf %51, %56 : vector<128x128xf32>
    %58 = vector.extract_strided_slice %37 {offsets = [1, 0, 0], sizes = [8, 24, 128], strides = [1, 1, 1]} : vector<10x24x128xbf16> to vector<8x24x128xbf16>
    %59 = vector.extract_strided_slice %58 {offsets = [0, 0, 0], sizes = [8, 16, 128], strides = [1, 1, 1]} : vector<8x24x128xbf16> to vector<8x16x128xbf16>
    %60 = vector.shape_cast %59 : vector<8x16x128xbf16> to vector<128x128xbf16>
    %c3 = arith.constant 3 : index
    %c0_28 = arith.constant 0 : index
    %c0_29 = arith.constant 0 : index
    %61 = vector.load %arg5[%c3, %c0_28, %c0_29] : memref<9x128x128xbf16, #tpu.memory_space<vmem>>, vector<1x128x128xbf16>
    %62 = vector.shape_cast %61 : vector<1x128x128xbf16> to vector<128x128xbf16>
    %cst_30 = arith.constant dense<0.000000e+00> : vector<128x128xf32>
    %63 = tpu.matmul %60, %62, %cst_30 {dimension_numbers = #tpu.dot_dimension_numbers<[1], [0], [0], [1], [0, 0, 1, 1], [], []>} : vector<128x128xbf16>, vector<128x128xbf16>, vector<128x128xf32> -> vector<128x128xf32>
    %64 = arith.addf %57, %63 : vector<128x128xf32>
    %65 = vector.extract_strided_slice %58 {offsets = [0, 1, 0], sizes = [8, 16, 128], strides = [1, 1, 1]} : vector<8x24x128xbf16> to vector<8x16x128xbf16>
    %66 = vector.shape_cast %65 : vector<8x16x128xbf16> to vector<128x128xbf16>
    %c4 = arith.constant 4 : index
    %c0_31 = arith.constant 0 : index
    %c0_32 = arith.constant 0 : index
    %67 = vector.load %arg5[%c4, %c0_31, %c0_32] : memref<9x128x128xbf16, #tpu.memory_space<vmem>>, vector<1x128x128xbf16>
    %68 = vector.shape_cast %67 : vector<1x128x128xbf16> to vector<128x128xbf16>
    %cst_33 = arith.constant dense<0.000000e+00> : vector<128x128xf32>
    %69 = tpu.matmul %66, %68, %cst_33 {dimension_numbers = #tpu.dot_dimension_numbers<[1], [0], [0], [1], [0, 0, 1, 1], [], []>} : vector<128x128xbf16>, vector<128x128xbf16>, vector<128x128xf32> -> vector<128x128xf32>
    %70 = arith.addf %64, %69 : vector<128x128xf32>
    %71 = vector.extract_strided_slice %58 {offsets = [0, 2, 0], sizes = [8, 16, 128], strides = [1, 1, 1]} : vector<8x24x128xbf16> to vector<8x16x128xbf16>
    %72 = vector.shape_cast %71 : vector<8x16x128xbf16> to vector<128x128xbf16>
    %c5 = arith.constant 5 : index
    %c0_34 = arith.constant 0 : index
    %c0_35 = arith.constant 0 : index
    %73 = vector.load %arg5[%c5, %c0_34, %c0_35] : memref<9x128x128xbf16, #tpu.memory_space<vmem>>, vector<1x128x128xbf16>
    %74 = vector.shape_cast %73 : vector<1x128x128xbf16> to vector<128x128xbf16>
    %cst_36 = arith.constant dense<0.000000e+00> : vector<128x128xf32>
    %75 = tpu.matmul %72, %74, %cst_36 {dimension_numbers = #tpu.dot_dimension_numbers<[1], [0], [0], [1], [0, 0, 1, 1], [], []>} : vector<128x128xbf16>, vector<128x128xbf16>, vector<128x128xf32> -> vector<128x128xf32>
    %76 = arith.addf %70, %75 : vector<128x128xf32>
    %77 = vector.extract_strided_slice %37 {offsets = [2, 0, 0], sizes = [8, 24, 128], strides = [1, 1, 1]} : vector<10x24x128xbf16> to vector<8x24x128xbf16>
    %78 = vector.extract_strided_slice %77 {offsets = [0, 0, 0], sizes = [8, 16, 128], strides = [1, 1, 1]} : vector<8x24x128xbf16> to vector<8x16x128xbf16>
    %79 = vector.shape_cast %78 : vector<8x16x128xbf16> to vector<128x128xbf16>
    %c6 = arith.constant 6 : index
    %c0_37 = arith.constant 0 : index
    %c0_38 = arith.constant 0 : index
    %80 = vector.load %arg5[%c6, %c0_37, %c0_38] : memref<9x128x128xbf16, #tpu.memory_space<vmem>>, vector<1x128x128xbf16>
    %81 = vector.shape_cast %80 : vector<1x128x128xbf16> to vector<128x128xbf16>
    %cst_39 = arith.constant dense<0.000000e+00> : vector<128x128xf32>
    %82 = tpu.matmul %79, %81, %cst_39 {dimension_numbers = #tpu.dot_dimension_numbers<[1], [0], [0], [1], [0, 0, 1, 1], [], []>} : vector<128x128xbf16>, vector<128x128xbf16>, vector<128x128xf32> -> vector<128x128xf32>
    %83 = arith.addf %76, %82 : vector<128x128xf32>
    %84 = vector.extract_strided_slice %77 {offsets = [0, 1, 0], sizes = [8, 16, 128], strides = [1, 1, 1]} : vector<8x24x128xbf16> to vector<8x16x128xbf16>
    %85 = vector.shape_cast %84 : vector<8x16x128xbf16> to vector<128x128xbf16>
    %c7_40 = arith.constant 7 : index
    %c0_41 = arith.constant 0 : index
    %c0_42 = arith.constant 0 : index
    %86 = vector.load %arg5[%c7_40, %c0_41, %c0_42] : memref<9x128x128xbf16, #tpu.memory_space<vmem>>, vector<1x128x128xbf16>
    %87 = vector.shape_cast %86 : vector<1x128x128xbf16> to vector<128x128xbf16>
    %cst_43 = arith.constant dense<0.000000e+00> : vector<128x128xf32>
    %88 = tpu.matmul %85, %87, %cst_43 {dimension_numbers = #tpu.dot_dimension_numbers<[1], [0], [0], [1], [0, 0, 1, 1], [], []>} : vector<128x128xbf16>, vector<128x128xbf16>, vector<128x128xf32> -> vector<128x128xf32>
    %89 = arith.addf %83, %88 : vector<128x128xf32>
    %90 = vector.extract_strided_slice %77 {offsets = [0, 2, 0], sizes = [8, 16, 128], strides = [1, 1, 1]} : vector<8x24x128xbf16> to vector<8x16x128xbf16>
    %91 = vector.shape_cast %90 : vector<8x16x128xbf16> to vector<128x128xbf16>
    %c8 = arith.constant 8 : index
    %c0_44 = arith.constant 0 : index
    %c0_45 = arith.constant 0 : index
    %92 = vector.load %arg5[%c8, %c0_44, %c0_45] : memref<9x128x128xbf16, #tpu.memory_space<vmem>>, vector<1x128x128xbf16>
    %93 = vector.shape_cast %92 : vector<1x128x128xbf16> to vector<128x128xbf16>
    %cst_46 = arith.constant dense<0.000000e+00> : vector<128x128xf32>
    %94 = tpu.matmul %91, %93, %cst_46 {dimension_numbers = #tpu.dot_dimension_numbers<[1], [0], [0], [1], [0, 0, 1, 1], [], []>} : vector<128x128xbf16>, vector<128x128xbf16>, vector<128x128xf32> -> vector<128x128xf32>
    %95 = arith.addf %89, %94 : vector<128x128xf32>
    %cst_47 = arith.constant dense<0.000000e+00> : vector<128xf32>
    %96 = vector.multi_reduction <add>, %95, %cst_47 [0] : vector<128x128xf32> to vector<128xf32>
    %97 = vector.shape_cast %96 : vector<128xf32> to vector<1x128xf32>
    %c0_48 = arith.constant 0 : index
    %c0_49 = arith.constant 0 : index
    %98 = vector.load %arg9[%c0_48, %c0_49] : memref<8x128xf32, #tpu.memory_space<vmem>>, vector<1x128xf32>
    tpu.vector_store %arg9[%c0_48, %c0_49], %97 {strides = array<i32>} : memref<8x128xf32, #tpu.memory_space<vmem>>, vector<1x128xf32>,
    %99 = arith.mulf %95, %95 : vector<128x128xf32>
    %cst_50 = arith.constant dense<0.000000e+00> : vector<128xf32>
    %100 = vector.multi_reduction <add>, %99, %cst_50 [0] : vector<128x128xf32> to vector<128xf32>
    %101 = vector.shape_cast %100 : vector<128xf32> to vector<1x128xf32>
    %c1_51 = arith.constant 1 : index
    %c0_52 = arith.constant 0 : index
    %102 = vector.load %arg9[%c1_51, %c0_52] : memref<8x128xf32, #tpu.memory_space<vmem>>, vector<1x128xf32>
    tpu.vector_store %arg9[%c1_51, %c0_52], %101 {strides = array<i32>} : memref<8x128xf32, #tpu.memory_space<vmem>>, vector<1x128xf32>,
    %103 = arith.truncf %95 : vector<128x128xf32> to vector<128x128xbf16>
    %104 = vector.shape_cast %103 : vector<128x128xbf16> to vector<8x16x128xbf16>
    %cst_53 = arith.constant 0.000000e+00 : bf16
    %105 = vector.broadcast %cst_53 : bf16 to vector<8x1x128xbf16>
    %c0_54 = arith.constant 0 : index
    %c0_55 = arith.constant 0 : index
    %c0_56 = arith.constant 0 : index
    %c0_57 = arith.constant 0 : index
    %106 = vector.load %arg8[%c0_54, %c0_55, %c0_56, %c0_57] : memref<1x8x24x128xbf16, #tpu.memory_space<vmem>>, vector<1x8x1x128xbf16>
    %107 = vector.shape_cast %106 : vector<1x8x1x128xbf16> to vector<8x1x128xbf16>
    %108 = vector.shape_cast %105 : vector<8x1x128xbf16> to vector<1x8x1x128xbf16>
    tpu.vector_store %arg8[%c0_54, %c0_55, %c0_56, %c0_57], %108 {strides = array<i32>} : memref<1x8x24x128xbf16, #tpu.memory_space<vmem>>, vector<1x8x1x128xbf16>,
    %c0_58 = arith.constant 0 : index
    %c0_59 = arith.constant 0 : index
    %c1_60 = arith.constant 1 : index
    %c0_61 = arith.constant 0 : index
    %109 = vector.load %arg8[%c0_58, %c0_59, %c1_60, %c0_61] : memref<1x8x24x128xbf16, #tpu.memory_space<vmem>>, vector<1x8x16x128xbf16>
    %110 = vector.shape_cast %109 : vector<1x8x16x128xbf16> to vector<8x16x128xbf16>
    %111 = vector.shape_cast %104 : vector<8x16x128xbf16> to vector<1x8x16x128xbf16>
    tpu.vector_store %arg8[%c0_58, %c0_59, %c1_60, %c0_61], %111 {strides = array<i32>} : memref<1x8x24x128xbf16, #tpu.memory_space<vmem>>, vector<1x8x16x128xbf16>,
    %cst_62 = arith.constant 0.000000e+00 : bf16
    %112 = vector.broadcast %cst_62 : bf16 to vector<8x7x128xbf16>
    %c0_63 = arith.constant 0 : index
    %c0_64 = arith.constant 0 : index
    %c17 = arith.constant 17 : index
    %c0_65 = arith.constant 0 : index
    %113 = vector.load %arg8[%c0_63, %c0_64, %c17, %c0_65] : memref<1x8x24x128xbf16, #tpu.memory_space<vmem>>, vector<1x8x7x128xbf16>
    %114 = vector.shape_cast %113 : vector<1x8x7x128xbf16> to vector<8x7x128xbf16>
    %115 = vector.shape_cast %112 : vector<8x7x128xbf16> to vector<1x8x7x128xbf16>
    tpu.vector_store %arg8[%c0_63, %c0_64, %c17, %c0_65], %115 {strides = array<i32>} : memref<1x8x24x128xbf16, #tpu.memory_space<vmem>>, vector<1x8x7x128xbf16>,
    return
  }
  func.func @transform_0(%arg0: i32, %arg1: i32) -> (i32, i32, i32, i32) {
    %c1_i32 = arith.constant 1 : i32
    %0 = arith.muli %arg1, %c1_i32 : i32
    %c1_i32_0 = arith.constant 1 : i32
    %1 = arith.subi %0, %c1_i32_0 : i32
    %c0_i32 = arith.constant 0 : i32
    %2 = arith.maxsi %1, %c0_i32 : i32
    %c0_i32_1 = arith.constant 0 : i32
    %c0_i32_2 = arith.constant 0 : i32
    %c0_i32_3 = arith.constant 0 : i32
    return %arg0, %2, %c0_i32_1, %c0_i32_2 : i32, i32, i32, i32
  }
  func.func @transform_1(%arg0: i32, %arg1: i32) -> (i32, i32, i32, i32) {
    %c0_i32 = arith.constant 0 : i32
    %c0_i32_0 = arith.constant 0 : i32
    %c0_i32_1 = arith.constant 0 : i32
    return %arg0, %arg1, %c0_i32, %c0_i32_0 : i32, i32, i32, i32
  }
  func.func @transform_2(%arg0: i32, %arg1: i32) -> (i32, i32, i32, i32) {
    %c1_i32 = arith.constant 1 : i32
    %0 = arith.addi %arg1, %c1_i32 : i32
    %c1_i32_0 = arith.constant 1 : i32
    %1 = arith.muli %0, %c1_i32_0 : i32
    %c1_i32_1 = arith.constant 1 : i32
    %2 = arith.minsi %1, %c1_i32_1 : i32
    %c0_i32 = arith.constant 0 : i32
    %c0_i32_2 = arith.constant 0 : i32
    %c0_i32_3 = arith.constant 0 : i32
    return %arg0, %2, %c0_i32, %c0_i32_2 : i32, i32, i32, i32
  }
  func.func @transform_3(%arg0: i32, %arg1: i32) -> (i32, i32, i32) {
    %c0_i32 = arith.constant 0 : i32
    %c0_i32_0 = arith.constant 0 : i32
    %c0_i32_1 = arith.constant 0 : i32
    %c0_i32_2 = arith.constant 0 : i32
    return %c0_i32, %c0_i32_0, %c0_i32_1 : i32, i32, i32
  }
  func.func @transform_4(%arg0: i32, %arg1: i32) -> (i32, i32) {
    %c0_i32 = arith.constant 0 : i32
    %c0_i32_0 = arith.constant 0 : i32
    %c0_i32_1 = arith.constant 0 : i32
    return %c0_i32, %c0_i32_0 : i32, i32
  }
  func.func @transform_5(%arg0: i32, %arg1: i32) -> (i32, i32) {
    %c0_i32 = arith.constant 0 : i32
    %c0_i32_0 = arith.constant 0 : i32
    %c0_i32_1 = arith.constant 0 : i32
    return %c0_i32, %c0_i32_0 : i32, i32
  }
  func.func @transform_6(%arg0: i32, %arg1: i32) -> (i32, i32, i32, i32) {
    %c0_i32 = arith.constant 0 : i32
    %c0_i32_0 = arith.constant 0 : i32
    %c0_i32_1 = arith.constant 0 : i32
    return %arg0, %arg1, %c0_i32, %c0_i32_0 : i32, i32, i32, i32
  }
  func.func @transform_7(%arg0: i32, %arg1: i32) -> (i32, i32) {
    %c2_i32 = arith.constant 2 : i32
    %0 = arith.muli %arg0, %c2_i32 : i32
    %1 = arith.addi %0, %arg1 : i32
    %c0_i32 = arith.constant 0 : i32
    %c0_i32_0 = arith.constant 0 : i32
    return %1, %c0_i32 : i32, i32
  }
}

</mosaic_0001>

<llo_original>
// kernel: extended_basic_block_forward.5
$region0: #{extended_basic_block_forward.5}
  #allocation0 [shape = 'u32[]', space=smem, size = 0x4, offset = 0x4, fixed_abs, tag = 'smem constant byte address 0x4 - core index']
  #allocation1 [shape = 'u32[144,128]{1,0:T(1,128)}', space=vmem, size = 0x12000, scoped, tag = 'internal scratch']
  %s0 = inlined_call_operand.vmem [shape: bf16[2,16,24,128], index: 0, kind: input, shape index: {}]
  %s1 = inlined_call_operand.vmem [shape: bf16[2,16,24,128], index: 1, kind: input, shape index: {}]
  %s2 = inlined_call_operand.vmem [shape: f32[1,128], index: 2, kind: input, shape index: {}]
  %s3 = inlined_call_operand.vmem [shape: f32[1,128], index: 3, kind: input, shape index: {}]
  %s4 = inlined_call_operand.vmem [shape: f32[2,16,24,128], index: 4, kind: output, shape index: {}]
  %s5 = sld [smem:[#allocation0]]
  $region49: #{extended_basic_block_forward.5} parent=0
    _
  %s7 = ssub.s32 1, %s5
  %s8 = scalar_select 0, %s7, %s5
  loop: start=0, step=1, limit=6
  $region2: #{extended_basic_block_forward.5} parent=0 // loop_pre_header
    _
  $region3: #{extended_basic_block_forward.5} parent=0 // loop_header
    %s10 = sphi 0, %s14
    %p11 = scmp.ge.s32.totalorder %s10, 6
    %s17 = sphi 0, %s29
    %s18 = sphi 0, %s25
    %s19 = sphi 0, %s17
    %s20 = sphi 0, %s18
    %s21 = sphi 0, %s19
    %s22 = sphi 0, %s20
    %s34 = sphi 0, %s36
    %s37 = sphi 0, %s34
    %s38 = sphi 0, %s37
    %s54 = sphi 0, %s38
    %s62 = sphi 0, %s64
    %s65 = sphi 0, %s62
    %s66 = sphi 0, %s65
    %s82 = sphi 0, %s66
    %s86 = sphi 0, %s86
    %s88 = sphi 0, %s86
    %s89 = sphi 0, %s88
    %s103 = sphi 0, %s89
    %s107 = sphi 0, %s107
    %s109 = sphi 0, %s107
    %s110 = sphi 0, %s109
    %s124 = sphi 0, %s110
    %s132 = sphi 0, %s134
    %s135 = sphi 0, %s132
    %s136 = sphi 0, %s135
    %s152 = sphi 0, %s136
  $region4: #{extended_basic_block_forward.5} parent=0 // loop_header_branch
    %13 = sbr.rel (%p11) target = $region8
  $region5: #{extended_basic_block_forward.5} parent=0 // loop_body
    %s15 = ssub.s32 %s10, 1
    %s16 = ssub.s32 %s10, 2
    %s23 = sadd.s32 1, %s18
    %p24 = scmp.ge.s32.totalorder %s23, 2
    %s25 = scalar_select %p24, 0, %s23
    %s26 = sadd.s32 1, %s17
    %s27 = scalar_select %p24, %s26, %s17
    %p28 = scmp.ge.s32.totalorder %s27, 2
    %s29 = scalar_select %p28, 0, %s27
    %s30 = ssub.s32 %s17, %s29
    %s31 = ssub.s32 %s18, %s25
    %s32 = sor.u32 %s30, %s31
    %p33 = scmp.eq.s32.totalorder %s32, 0
    %s35 = sadd.s32 %s34, 1
    %s36 = scalar_select %p33, %s34, %s35
    %p39 = pneg %p33
    %p40 = scmp.eq.s32.totalorder %s10, 3
    %p41 = por %p39, %p40
    %p42 = scmp.ne.s32.totalorder %s34, %s37
    %p43 = scmp.eq.s32.totalorder %s10, 0
    %p44 = por %p42, %p43
    %p45 = scmp.ne.s32.totalorder %s34, %s37
    %p46 = scmp.eq.s32.totalorder %s15, 3
    %p47 = por %p45, %p46
    %p48 = scmp.ne.s32.totalorder %s37, %s38
    %p49 = scmp.eq.s32.totalorder %s15, 0
    %p50 = por %p48, %p49
    %p51 = scmp.ne.s32.totalorder %s37, %s38
    %p52 = scmp.eq.s32.totalorder %s16, 3
    %p53 = por %p51, %p52
    %p55 = scmp.ne.s32.totalorder %s38, %s54
    %p56 = scmp.eq.s32.totalorder %s16, 0
    %p57 = por %p55, %p56
    %s58 = ssub.s32 %s17, %s29
    %s59 = ssub.s32 %s18, %s25
    %s60 = sor.u32 %s58, %s59
    %p61 = scmp.eq.s32.totalorder %s60, 0
    %s63 = sadd.s32 %s62, 1
    %s64 = scalar_select %p61, %s62, %s63
    %p67 = pneg %p61
    %p68 = scmp.eq.s32.totalorder %s10, 3
    %p69 = por %p67, %p68
    %p70 = scmp.ne.s32.totalorder %s62, %s65
    %p71 = scmp.eq.s32.totalorder %s10, 0
    %p72 = por %p70, %p71
    %p73 = scmp.ne.s32.totalorder %s62, %s65
    %p74 = scmp.eq.s32.totalorder %s15, 3
    %p75 = por %p73, %p74
    %p76 = scmp.ne.s32.totalorder %s65, %s66
    %p77 = scmp.eq.s32.totalorder %s15, 0
    %p78 = por %p76, %p77
    %p79 = scmp.ne.s32.totalorder %s65, %s66
    %p80 = scmp.eq.s32.totalorder %s16, 3
    %p81 = por %p79, %p80
    %p83 = scmp.ne.s32.totalorder %s66, %s82
    %p84 = scmp.eq.s32.totalorder %s16, 0
    %p85 = por %p83, %p84
    %s87 = sadd.s32 %s86, 1
    %p90 = scmp.eq.s32.totalorder %s10, 3
    %p91 = scmp.ne.s32.totalorder %s86, %s88
    %p92 = scmp.eq.s32.totalorder %s10, 0
    %p93 = por %p91, %p92
    %p94 = scmp.ne.s32.totalorder %s86, %s88
    %p95 = scmp.eq.s32.totalorder %s15, 3
    %p96 = por %p94, %p95
    %p97 = scmp.ne.s32.totalorder %s88, %s89
    %p98 = scmp.eq.s32.totalorder %s15, 0
    %p99 = por %p97, %p98
    %p100 = scmp.ne.s32.totalorder %s88, %s89
    %p101 = scmp.eq.s32.totalorder %s16, 3
    %p102 = por %p100, %p101
    %p104 = scmp.ne.s32.totalorder %s89, %s103
    %p105 = scmp.eq.s32.totalorder %s16, 0
    %p106 = por %p104, %p105
    %s108 = sadd.s32 %s107, 1
    %p111 = scmp.eq.s32.totalorder %s10, 3
    %p112 = scmp.ne.s32.totalorder %s107, %s109
    %p113 = scmp.eq.s32.totalorder %s10, 0
    %p114 = por %p112, %p113
    %p115 = scmp.ne.s32.totalorder %s107, %s109
    %p116 = scmp.eq.s32.totalorder %s15, 3
    %p117 = por %p115, %p116
    %p118 = scmp.ne.s32.totalorder %s109, %s110
    %p119 = scmp.eq.s32.totalorder %s15, 0
    %p120 = por %p118, %p119
    %p121 = scmp.ne.s32.totalorder %s109, %s110
    %p122 = scmp.eq.s32.totalorder %s16, 3
    %p123 = por %p121, %p122
    %p125 = scmp.ne.s32.totalorder %s110, %s124
    %p126 = scmp.eq.s32.totalorder %s16, 0
    %p127 = por %p125, %p126
    %s128 = ssub.s32 %s17, %s29
    %s129 = ssub.s32 %s18, %s25
    %s130 = sor.u32 %s128, %s129
    %p131 = scmp.eq.s32.totalorder %s130, 0
    %s133 = sadd.s32 %s132, 1
    %s134 = scalar_select %p131, %s132, %s133
    %p137 = pneg %p131
    %p138 = scmp.eq.s32.totalorder %s10, 3
    %p139 = por %p137, %p138
    %p140 = scmp.ne.s32.totalorder %s132, %s135
    %p141 = scmp.eq.s32.totalorder %s10, 0
    %p142 = por %p140, %p141
    %p143 = scmp.ne.s32.totalorder %s132, %s135
    %p144 = scmp.eq.s32.totalorder %s15, 3
    %p145 = por %p143, %p144
    %p146 = scmp.ne.s32.totalorder %s135, %s136
    %p147 = scmp.eq.s32.totalorder %s15, 0
    %p148 = por %p146, %p147
    %p149 = scmp.ne.s32.totalorder %s135, %s136
    %p150 = scmp.eq.s32.totalorder %s16, 3
    %p151 = por %p149, %p150
    %p153 = scmp.ne.s32.totalorder %s136, %s152
    %p154 = scmp.eq.s32.totalorder %s16, 0
    %p155 = por %p153, %p154
    %p156 = scmp.le.s32.totalorder 1, %s10
    %p157 = scmp.lt.s32.totalorder %s10, 5
    %p158 = pnand %p156, %p157
    %p159 = pneg %p158
    // Predicated region
    $region9: #{extended_basic_block_forward.5} parent=5 // pred_check
      _
    $region10: #{extended_basic_block_forward.5} parent=5 // pred_check_branch
      %161 = sbr.rel (%p158) target = $region12
    $region11: #{extended_basic_block_forward.5} parent=5 // pred_region
      %s162 = ssub.s32 %s10, 1
      // Predicated region
      $region13: #{extended_basic_block_forward.5} parent=11 // pred_check
        %p163 = pneg %p99
      $region14: #{extended_basic_block_forward.5} parent=11 // pred_check_branch
        %165 = sbr.rel (%p163) target = $region16
      $region15: #{extended_basic_block_forward.5} parent=11 // pred_region
        _
      $region16: #{extended_basic_block_forward.5} parent=11 // pred_fallthru
        _
      // Predicated region
      $region17: #{extended_basic_block_forward.5} parent=11 // pred_check
        %p166 = pneg %p120
      $region18: #{extended_basic_block_forward.5} parent=11 // pred_check_branch
        %168 = sbr.rel (%p166) target = $region20
      $region19: #{extended_basic_block_forward.5} parent=11 // pred_region
        _
      $region20: #{extended_basic_block_forward.5} parent=11 // pred_fallthru
        _
    $region12: #{extended_basic_block_forward.5} parent=5 // pred_fallthru
      _
    %p169 = scmp.lt.s32.totalorder %s10, 4
    // Predicated region
    $region21: #{extended_basic_block_forward.5} parent=5 // pred_check
      %p170 = pneg %p169
    $region22: #{extended_basic_block_forward.5} parent=5 // pred_check_branch
      %172 = sbr.rel (%p170) target = $region24
    $region23: #{extended_basic_block_forward.5} parent=5 // pred_region
      // Predicated region
      $region25: #{extended_basic_block_forward.5} parent=23 // pred_check
        %p173 = pneg %p44
      $region26: #{extended_basic_block_forward.5} parent=23 // pred_check_branch
        %175 = sbr.rel (%p173) target = $region28
      $region27: #{extended_basic_block_forward.5} parent=23 // pred_region
        %s176 = smul.u32 8, %s18
        %p177 = scmp.lt.s32.totalorder %s17, 1
        %s178 = scalar_select %p177, %s17, 1
        %p179 = scmp.lt.s32.totalorder %s176, 15
        %s180 = scalar_select %p179, %s176, 15
        %s181 = smul.addr %s180, 3
        %s182 = smul.addr %s178, 48
        %s183 = sadd.s32 %s181, %s182
        %s184 = smul.addr %s183, 4
        %s185 = scalar_lea.vmem %s0, %s184
        %s186 = smul.u32 8, %s18
      $region28: #{extended_basic_block_forward.5} parent=23 // pred_fallthru
        _
      // Predicated region
      $region29: #{extended_basic_block_forward.5} parent=23 // pred_check
        %p187 = pneg %p72
      $region30: #{extended_basic_block_forward.5} parent=23 // pred_check_branch
        %189 = sbr.rel (%p187) target = $region32
      $region31: #{extended_basic_block_forward.5} parent=23 // pred_region
        %s190 = smul.u32 8, %s18
        %p191 = scmp.lt.s32.totalorder %s17, 1
        %s192 = scalar_select %p191, %s17, 1
        %p193 = scmp.lt.s32.totalorder %s190, 15
        %s194 = scalar_select %p193, %s190, 15
        %s195 = smul.addr %s194, 3
        %s196 = smul.addr %s192, 48
        %s197 = sadd.s32 %s195, %s196
        %s198 = smul.addr %s197, 4
        %s199 = scalar_lea.vmem %s1, %s198
        %s200 = smul.u32 8, %s18
      $region32: #{extended_basic_block_forward.5} parent=23 // pred_fallthru
        _
    $region24: #{extended_basic_block_forward.5} parent=5 // pred_fallthru
      _
    %p201 = scmp.le.s32.totalorder 1, %s10
    %p202 = scmp.lt.s32.totalorder %s10, 5
    %p203 = pnand %p201, %p202
    %p204 = pneg %p203
    // Predicated region
    $region33: #{extended_basic_block_forward.5} parent=5 // pred_check
      _
    $region34: #{extended_basic_block_forward.5} parent=5 // pred_check_branch
      %206 = sbr.rel (%p203) target = $region36
    $region35: #{extended_basic_block_forward.5} parent=5 // pred_region
      %s207 = ssub.s32 %s10, 1
      %s208 = smul.u32 8, %s20
      %p209 = scmp.lt.s32.totalorder %s19, 1
      %s210 = scalar_select %p209, %s19, 1
      %p211 = scmp.lt.s32.totalorder %s208, 15
      %s212 = scalar_select %p211, %s208, 15
      %s213 = smul.addr %s212, 3
      %s214 = smul.addr %s210, 48
      %s215 = sadd.s32 %s213, %s214
      %s216 = smul.addr %s215, 4
      %s217 = scalar_lea.vmem %s0, %s216
      %p218 = pneg %p50
      %p219 = pneg %p47
      %s220 = smul.u32 8, %s20
      %p221 = scmp.lt.s32.totalorder %s19, 1
      %s222 = scalar_select %p221, %s19, 1
      %p223 = scmp.lt.s32.totalorder %s220, 15
      %s224 = scalar_select %p223, %s220, 15
      %s225 = smul.addr %s224, 3
      %s226 = smul.addr %s222, 48
      %s227 = sadd.s32 %s225, %s226
      %s228 = smul.addr %s227, 4
      %s229 = scalar_lea.vmem %s1, %s228
      %p230 = pneg %p78
      %p231 = pneg %p75
      %p232 = pneg %p99
      %p233 = pneg %p96
      %p234 = pneg %p120
      %p235 = pneg %p117
      %p236 = pneg %p148
      %p237 = pneg %p145
      %s238 = smul.u32 8, %s20
      %p239 = scmp.lt.s32.totalorder %s19, 1
      %s240 = scalar_select %p239, %s19, 1
      %p241 = scmp.lt.s32.totalorder %s238, 15
      %s242 = scalar_select %p241, %s238, 15
      %s243 = smul.addr %s242, 3
      %s244 = smul.addr %s240, 48
      %s245 = sadd.s32 %s243, %s244
      %s246 = smul.addr %s245, 8
      %s247 = scalar_lea.vmem %s4, %s246
      %s248 = smul.u32 8, %s20
      %p249 = scmp.lt.s32.totalorder %s19, 1
      %s250 = scalar_select %p249, %s19, 1
      %p251 = scmp.lt.s32.totalorder %s248, 15
      %s252 = scalar_select %p251, %s248, 15
      %s253 = smul.addr %s252, 3
      %s254 = smul.addr %s250, 48
      %s255 = sadd.s32 %s253, %s254
      %s256 = smul.addr %s255, 4
      %s257 = scalar_lea.vmem %s0, %s256
      %s258 = smul.u32 8, %s20
      %s259 = smul.u32 8, %s20
      %p260 = scmp.lt.s32.totalorder %s19, 1
      %s261 = scalar_select %p260, %s19, 1
      %p262 = scmp.lt.s32.totalorder %s259, 15
      %s263 = scalar_select %p262, %s259, 15
      %s264 = smul.addr %s263, 3
      %s265 = smul.addr %s261, 48
      %s266 = sadd.s32 %s264, %s265
      %s267 = smul.addr %s266, 4
      %s268 = scalar_lea.vmem %s1, %s267
      %s269 = smul.u32 8, %s20
      %s270 = smul.u32 8, %s20
      %p271 = scmp.lt.s32.totalorder %s19, 1
      %s272 = scalar_select %p271, %s19, 1
      %p273 = scmp.lt.s32.totalorder %s270, 15
      %s274 = scalar_select %p273, %s270, 15
      %s275 = smul.addr %s274, 3
      %s276 = smul.addr %s272, 48
      %s277 = sadd.s32 %s275, %s276
      %s278 = smul.addr %s277, 8
      %s279 = scalar_lea.vmem %s4, %s278
      %s280 = smul.u32 8, %s20
      %v281 = vld [vmem:[%s2] sm:$0x1]
      %v282 = vld [vmem:[%s3] sm:$0x1]
      %v283 = vld [vmem:[%s257] sm:$0xf]
      %v284 = vld [vmem:[%s257 + $0x4] sm:$0xf]
      %v285 = vld [vmem:[%s257 + $0x8] sm:$0xf]
      %v286 = vld [vmem:[%s257 + $0xc] sm:$0xf]
      %v287 = vld [vmem:[%s257 + $0x10] sm:$0xf]
      %v288 = vld [vmem:[%s257 + $0x14] sm:$0xf]
      %v289 = vld [vmem:[%s257 + $0x18] sm:$0xf]
      %v290 = vld [vmem:[%s257 + $0x1c] sm:$0xf]
      %v291 = vld [vmem:[%s257 + $0x20] sm:$0xf]
      %v292 = vld [vmem:[%s257 + $0x24] sm:$0xf]
      %v293 = vld [vmem:[%s257 + $0x28] sm:$0xf]
      %v294 = vld [vmem:[%s257 + $0x2c] sm:$0xf]
      %v295 = vld [vmem:[%s257 + $0x30] sm:$0xf]
      %v296 = vld [vmem:[%s257 + $0x34] sm:$0xf]
      %v297 = vld [vmem:[%s257 + $0x38] sm:$0xf]
      %v298 = vld [vmem:[%s257 + $0x3c] sm:$0xf]
      %v299 = vld [vmem:[%s257 + $0x40] sm:$0xf]
      %v300 = vld [vmem:[%s257 + $0x44] sm:$0xf]
      %v301 = vld [vmem:[%s257 + $0x48] sm:$0xf]
      %v302 = vld [vmem:[%s257 + $0x4c] sm:$0xf]
      %v303 = vld [vmem:[%s257 + $0x50] sm:$0xf]
      %v304 = vld [vmem:[%s257 + $0x54] sm:$0xf]
      %v305 = vld [vmem:[%s257 + $0x58] sm:$0xf]
      %v306 = vld [vmem:[%s257 + $0x5c] sm:$0xf]
      %v307 = vunpack.c.l.bf16 %v283
      %v308 = vunpack.c.l.bf16 %v284
      %v309 = vunpack.c.l.bf16 %v285
      %v310 = vunpack.c.l.bf16 %v286
      %v311 = vunpack.c.l.bf16 %v287
      %v312 = vunpack.c.l.bf16 %v288
      %v313 = vunpack.c.l.bf16 %v289
      %v314 = vunpack.c.l.bf16 %v290
      %v315 = vunpack.c.l.bf16 %v291
      %v316 = vunpack.c.l.bf16 %v292
      %v317 = vunpack.c.l.bf16 %v293
      %v318 = vunpack.c.l.bf16 %v294
      %v319 = vunpack.c.l.bf16 %v295
      %v320 = vunpack.c.l.bf16 %v296
      %v321 = vunpack.c.l.bf16 %v297
      %v322 = vunpack.c.l.bf16 %v298
      %v323 = vunpack.c.l.bf16 %v299
      %v324 = vunpack.c.l.bf16 %v300
      %v325 = vunpack.c.l.bf16 %v301
      %v326 = vunpack.c.l.bf16 %v302
      %v327 = vunpack.c.l.bf16 %v303
      %v328 = vunpack.c.l.bf16 %v304
      %v329 = vunpack.c.l.bf16 %v305
      %v330 = vunpack.c.l.bf16 %v306
      %v332 = vlaneseq
      %v333 = vshrl.u32 %v332, 7
      %v334 = vsub.s32 0, %v333
      %v335 = vrot.slane %v281, %v334
      %v337 = vmul.f32 %v307, %v335
      %v338 = vmul.f32 %v308, %v335
      %v339 = vmul.f32 %v309, %v335
      %v340 = vmul.f32 %v310, %v335
      %v341 = vmul.f32 %v311, %v335
      %v342 = vmul.f32 %v312, %v335
      %v343 = vmul.f32 %v313, %v335
      %v344 = vmul.f32 %v314, %v335
      %v345 = vmul.f32 %v315, %v335
      %v346 = vmul.f32 %v316, %v335
      %v347 = vmul.f32 %v317, %v335
      %v348 = vmul.f32 %v318, %v335
      %v349 = vmul.f32 %v319, %v335
      %v350 = vmul.f32 %v320, %v335
      %v351 = vmul.f32 %v321, %v335
      %v352 = vmul.f32 %v322, %v335
      %v353 = vmul.f32 %v323, %v335
      %v354 = vmul.f32 %v324, %v335
      %v355 = vmul.f32 %v325, %v335
      %v356 = vmul.f32 %v326, %v335
      %v357 = vmul.f32 %v327, %v335
      %v358 = vmul.f32 %v328, %v335
      %v359 = vmul.f32 %v329, %v335
      %v360 = vmul.f32 %v330, %v335
      %v362 = vlaneseq
      %v363 = vshrl.u32 %v362, 7
      %v364 = vsub.s32 0, %v363
      %v365 = vrot.slane %v282, %v364
      %v367 = vadd.f32 %v337, %v365
      %v368 = vadd.f32 %v338, %v365
      %v369 = vadd.f32 %v339, %v365
      %v370 = vadd.f32 %v340, %v365
      %v371 = vadd.f32 %v341, %v365
      %v372 = vadd.f32 %v342, %v365
      %v373 = vadd.f32 %v343, %v365
      %v374 = vadd.f32 %v344, %v365
      %v375 = vadd.f32 %v345, %v365
      %v376 = vadd.f32 %v346, %v365
      %v377 = vadd.f32 %v347, %v365
      %v378 = vadd.f32 %v348, %v365
      %v379 = vadd.f32 %v349, %v365
      %v380 = vadd.f32 %v350, %v365
      %v381 = vadd.f32 %v351, %v365
      %v382 = vadd.f32 %v352, %v365
      %v383 = vadd.f32 %v353, %v365
      %v384 = vadd.f32 %v354, %v365
      %v385 = vadd.f32 %v355, %v365
      %v386 = vadd.f32 %v356, %v365
      %v387 = vadd.f32 %v357, %v365
      %v388 = vadd.f32 %v358, %v365
      %v389 = vadd.f32 %v359, %v365
      %v390 = vadd.f32 %v360, %v365
      %v391 = vld [vmem:[%s268] sm:$0xf]
      %v392 = vld [vmem:[%s268 + $0x4] sm:$0xf]
      %v393 = vld [vmem:[%s268 + $0x8] sm:$0xf]
      %v394 = vld [vmem:[%s268 + $0xc] sm:$0xf]
      %v395 = vld [vmem:[%s268 + $0x10] sm:$0xf]
      %v396 = vld [vmem:[%s268 + $0x14] sm:$0xf]
      %v397 = vld [vmem:[%s268 + $0x18] sm:$0xf]
      %v398 = vld [vmem:[%s268 + $0x1c] sm:$0xf]
      %v399 = vld [vmem:[%s268 + $0x20] sm:$0xf]
      %v400 = vld [vmem:[%s268 + $0x24] sm:$0xf]
      %v401 = vld [vmem:[%s268 + $0x28] sm:$0xf]
      %v402 = vld [vmem:[%s268 + $0x2c] sm:$0xf]
      %v403 = vld [vmem:[%s268 + $0x30] sm:$0xf]
      %v404 = vld [vmem:[%s268 + $0x34] sm:$0xf]
      %v405 = vld [vmem:[%s268 + $0x38] sm:$0xf]
      %v406 = vld [vmem:[%s268 + $0x3c] sm:$0xf]
      %v407 = vld [vmem:[%s268 + $0x40] sm:$0xf]
      %v408 = vld [vmem:[%s268 + $0x44] sm:$0xf]
      %v409 = vld [vmem:[%s268 + $0x48] sm:$0xf]
      %v410 = vld [vmem:[%s268 + $0x4c] sm:$0xf]
      %v411 = vld [vmem:[%s268 + $0x50] sm:$0xf]
      %v412 = vld [vmem:[%s268 + $0x54] sm:$0xf]
      %v413 = vld [vmem:[%s268 + $0x58] sm:$0xf]
      %v414 = vld [vmem:[%s268 + $0x5c] sm:$0xf]
      %v415 = vunpack.c.l.bf16 %v391
      %v416 = vunpack.c.l.bf16 %v392
      %v417 = vunpack.c.l.bf16 %v393
      %v418 = vunpack.c.l.bf16 %v394
      %v419 = vunpack.c.l.bf16 %v395
      %v420 = vunpack.c.l.bf16 %v396
      %v421 = vunpack.c.l.bf16 %v397
      %v422 = vunpack.c.l.bf16 %v398
      %v423 = vunpack.c.l.bf16 %v399
      %v424 = vunpack.c.l.bf16 %v400
      %v425 = vunpack.c.l.bf16 %v401
      %v426 = vunpack.c.l.bf16 %v402
      %v427 = vunpack.c.l.bf16 %v403
      %v428 = vunpack.c.l.bf16 %v404
      %v429 = vunpack.c.l.bf16 %v405
      %v430 = vunpack.c.l.bf16 %v406
      %v431 = vunpack.c.l.bf16 %v407
      %v432 = vunpack.c.l.bf16 %v408
      %v433 = vunpack.c.l.bf16 %v409
      %v434 = vunpack.c.l.bf16 %v410
      %v435 = vunpack.c.l.bf16 %v411
      %v436 = vunpack.c.l.bf16 %v412
      %v437 = vunpack.c.l.bf16 %v413
      %v438 = vunpack.c.l.bf16 %v414
      %v439 = vadd.f32 %v367, %v415
      %v440 = vadd.f32 %v368, %v416
      %v441 = vadd.f32 %v369, %v417
      %v442 = vadd.f32 %v370, %v418
      %v443 = vadd.f32 %v371, %v419
      %v444 = vadd.f32 %v372, %v420
      %v445 = vadd.f32 %v373, %v421
      %v446 = vadd.f32 %v374, %v422
      %v447 = vadd.f32 %v375, %v423
      %v448 = vadd.f32 %v376, %v424
      %v449 = vadd.f32 %v377, %v425
      %v450 = vadd.f32 %v378, %v426
      %v451 = vadd.f32 %v379, %v427
      %v452 = vadd.f32 %v380, %v428
      %v453 = vadd.f32 %v381, %v429
      %v454 = vadd.f32 %v382, %v430
      %v455 = vadd.f32 %v383, %v431
      %v456 = vadd.f32 %v384, %v432
      %v457 = vadd.f32 %v385, %v433
      %v458 = vadd.f32 %v386, %v434
      %v459 = vadd.f32 %v387, %v435
      %v460 = vadd.f32 %v388, %v436
      %v461 = vadd.f32 %v389, %v437
      %v462 = vadd.f32 %v390, %v438
      %v463 = vmax.f32 %v439, 0.0
      %v464 = vmax.f32 %v440, 0.0
      %v465 = vmax.f32 %v441, 0.0
      %v466 = vmax.f32 %v442, 0.0
      %v467 = vmax.f32 %v443, 0.0
      %v468 = vmax.f32 %v444, 0.0
      %v469 = vmax.f32 %v445, 0.0
      %v470 = vmax.f32 %v446, 0.0
      %v471 = vmax.f32 %v447, 0.0
      %v472 = vmax.f32 %v448, 0.0
      %v473 = vmax.f32 %v449, 0.0
      %v474 = vmax.f32 %v450, 0.0
      %v475 = vmax.f32 %v451, 0.0
      %v476 = vmax.f32 %v452, 0.0
      %v477 = vmax.f32 %v453, 0.0
      %v478 = vmax.f32 %v454, 0.0
      %v479 = vmax.f32 %v455, 0.0
      %v480 = vmax.f32 %v456, 0.0
      %v481 = vmax.f32 %v457, 0.0
      %v482 = vmax.f32 %v458, 0.0
      %v483 = vmax.f32 %v459, 0.0
      %v484 = vmax.f32 %v460, 0.0
      %v485 = vmax.f32 %v461, 0.0
      %v486 = vmax.f32 %v462, 0.0
      %487 = vst [vmem:[%s279] sm:$0xff] %v463
      %488 = vst [vmem:[%s279 + $0x8] sm:$0xff] %v464
      %489 = vst [vmem:[%s279 + $0x10] sm:$0xff] %v465
      %490 = vst [vmem:[%s279 + $0x18] sm:$0xff] %v466
      %491 = vst [vmem:[%s279 + $0x20] sm:$0xff] %v467
      %492 = vst [vmem:[%s279 + $0x28] sm:$0xff] %v468
      %493 = vst [vmem:[%s279 + $0x30] sm:$0xff] %v469
      %494 = vst [vmem:[%s279 + $0x38] sm:$0xff] %v470
      %495 = vst [vmem:[%s279 + $0x40] sm:$0xff] %v471
      %496 = vst [vmem:[%s279 + $0x48] sm:$0xff] %v472
      %497 = vst [vmem:[%s279 + $0x50] sm:$0xff] %v473
      %498 = vst [vmem:[%s279 + $0x58] sm:$0xff] %v474
      %499 = vst [vmem:[%s279 + $0x60] sm:$0xff] %v475
      %500 = vst [vmem:[%s279 + $0x68] sm:$0xff] %v476
      %501 = vst [vmem:[%s279 + $0x70] sm:$0xff] %v477
      %502 = vst [vmem:[%s279 + $0x78] sm:$0xff] %v478
      %503 = vst [vmem:[%s279 + $0x80] sm:$0xff] %v479
      %504 = vst [vmem:[%s279 + $0x88] sm:$0xff] %v480
      %505 = vst [vmem:[%s279 + $0x90] sm:$0xff] %v481
      %506 = vst [vmem:[%s279 + $0x98] sm:$0xff] %v482
      %507 = vst [vmem:[%s279 + $0xa0] sm:$0xff] %v483
      %508 = vst [vmem:[%s279 + $0xa8] sm:$0xff] %v484
      %509 = vst [vmem:[%s279 + $0xb0] sm:$0xff] %v485
      %510 = vst [vmem:[%s279 + $0xb8] sm:$0xff] %v486
      %s511 = smul.u32 8, %s20
      %p512 = scmp.lt.s32.totalorder %s19, 1
      %s513 = scalar_select %p512, %s19, 1
      %p514 = scmp.lt.s32.totalorder %s511, 15
      %s515 = scalar_select %p514, %s511, 15
      %s516 = smul.addr %s515, 3
      %s517 = smul.addr %s513, 48
      %s518 = sadd.s32 %s516, %s517
      %s519 = smul.addr %s518, 8
      %s520 = scalar_lea.vmem %s4, %s519
      // Predicated region
      $region37: #{extended_basic_block_forward.5} parent=35 // pred_check
        %p521 = pneg %p145
      $region38: #{extended_basic_block_forward.5} parent=35 // pred_check_branch
        %523 = sbr.rel (%p521) target = $region40
      $region39: #{extended_basic_block_forward.5} parent=35 // pred_region
        %s524 = smul.u32 8, %s20
      $region40: #{extended_basic_block_forward.5} parent=35 // pred_fallthru
        _
    $region36: #{extended_basic_block_forward.5} parent=5 // pred_fallthru
      _
    %p525 = scmp.le.s32.totalorder 2, %s10
    // Predicated region
    $region41: #{extended_basic_block_forward.5} parent=5 // pred_check
      %p526 = pneg %p525
    $region42: #{extended_basic_block_forward.5} parent=5 // pred_check_branch
      %528 = sbr.rel (%p526) target = $region44
    $region43: #{extended_basic_block_forward.5} parent=5 // pred_region
      %s529 = ssub.s32 %s10, 2
      // Predicated region
      $region45: #{extended_basic_block_forward.5} parent=43 // pred_check
        %p530 = pneg %p151
      $region46: #{extended_basic_block_forward.5} parent=43 // pred_check_branch
        %532 = sbr.rel (%p530) target = $region48
      $region47: #{extended_basic_block_forward.5} parent=43 // pred_region
        %s533 = smul.u32 8, %s22
        %p534 = scmp.lt.s32.totalorder %s21, 1
        %s535 = scalar_select %p534, %s21, 1
        %p536 = scmp.lt.s32.totalorder %s533, 15
        %s537 = scalar_select %p536, %s533, 15
        %s538 = smul.addr %s537, 3
        %s539 = smul.addr %s535, 48
        %s540 = sadd.s32 %s538, %s539
        %s541 = smul.addr %s540, 8
        %s542 = scalar_lea.vmem %s4, %s541
      $region48: #{extended_basic_block_forward.5} parent=43 // pred_fallthru
        _
    $region44: #{extended_basic_block_forward.5} parent=5 // pred_fallthru
      _
  $region6: #{extended_basic_block_forward.5} parent=0 // loop_footer
    %s14 = sadd.s32 1, %s10
  $region7: #{extended_basic_block_forward.5} parent=0 // loop_footer_branch
    %9 = sbr.rel target = $region3
  $region8: #{extended_basic_block_forward.5} parent=0 // loop_exit
    _

// kernel: extended_basic_block_forward.3
$region0: #{extended_basic_block_forward.3}
  #allocation0 [shape = 'u32[]', space=smem, size = 0x4, offset = 0x4, fixed_abs, tag = 'smem constant byte address 0x4 - core index']
  #allocation1 [shape = 'u32[144,128]{1,0:T(1,128)}', space=vmem, size = 0x12000, scoped, tag = 'internal scratch']
  %s0 = inlined_call_operand.vmem [shape: bf16[2,16,24,128], index: 0, kind: input, shape index: {}, may-alias: {0,1,2}]
  %s1 = inlined_call_operand.vmem [shape: bf16[2,16,24,128], index: 1, kind: input, shape index: {}, may-alias: {0,1,2}]
  %s2 = inlined_call_operand.vmem [shape: bf16[2,16,24,128], index: 2, kind: input, shape index: {}, may-alias: {0,1,2}]
  %s3 = inlined_call_operand.vmem [shape: bf16[9,128,128], index: 3, kind: input, shape index: {}]
  %s4 = inlined_call_operand.vmem [shape: bf16[2,16,24,128], index: 4, kind: output, shape index: {0}]
  %s5 = inlined_call_operand.vmem [shape: f32[32,128], index: 5, kind: output, shape index: {1}]
  %6 = xla_tuple %s4, %s5
  %s7 = sld [smem:[#allocation0]]
  $region57: #{extended_basic_block_forward.3} parent=0
    _
  %s9 = ssub.s32 1, %s7
  %s10 = scalar_select 0, %s9, %s7
  loop: start=0, step=1, limit=6
  $region2: #{extended_basic_block_forward.3} parent=0 // loop_pre_header
    _
  $region3: #{extended_basic_block_forward.3} parent=0 // loop_header
    %s12 = sphi 0, %s16
    %p13 = scmp.ge.s32.totalorder %s12, 6
    %s19 = sphi 0, %s31
    %s20 = sphi 0, %s27
    %s21 = sphi 0, %s19
    %s22 = sphi 0, %s20
    %s23 = sphi 0, %s21
    %s24 = sphi 0, %s22
    %s42 = sphi 0, %s44
    %s45 = sphi 0, %s42
    %s46 = sphi 0, %s45
    %s62 = sphi 0, %s46
    %s70 = sphi 0, %s72
    %s73 = sphi 0, %s70
    %s74 = sphi 0, %s73
    %s90 = sphi 0, %s74
    %s104 = sphi 0, %s106
    %s107 = sphi 0, %s104
    %s108 = sphi 0, %s107
    %s124 = sphi 0, %s108
    %s128 = sphi 0, %s128
    %s130 = sphi 0, %s128
    %s131 = sphi 0, %s130
    %s145 = sphi 0, %s131
    %s153 = sphi 0, %s155
    %s156 = sphi 0, %s153
    %s157 = sphi 0, %s156
    %s173 = sphi 0, %s157
    %s183 = sphi 0, %s185
    %s186 = sphi 0, %s183
    %s187 = sphi 0, %s186
    %s203 = sphi 0, %s187
  $region4: #{extended_basic_block_forward.3} parent=0 // loop_header_branch
    %15 = sbr.rel (%p13) target = $region8
  $region5: #{extended_basic_block_forward.3} parent=0 // loop_body
    %s17 = ssub.s32 %s12, 1
    %s18 = ssub.s32 %s12, 2
    %s25 = sadd.s32 1, %s20
    %p26 = scmp.ge.s32.totalorder %s25, 2
    %s27 = scalar_select %p26, 0, %s25
    %s28 = sadd.s32 1, %s19
    %s29 = scalar_select %p26, %s28, %s19
    %p30 = scmp.ge.s32.totalorder %s29, 2
    %s31 = scalar_select %p30, 0, %s29
    %s32 = ssub.s32 %s20, 1
    %p33 = scmp.gt.s32.totalorder %s32, 0
    %s34 = scalar_select %p33, %s32, 0
    %s35 = ssub.s32 %s27, 1
    %p36 = scmp.gt.s32.totalorder %s35, 0
    %s37 = scalar_select %p36, %s35, 0
    %s38 = ssub.s32 %s19, %s31
    %s39 = ssub.s32 %s34, %s37
    %s40 = sor.u32 %s38, %s39
    %p41 = scmp.eq.s32.totalorder %s40, 0
    %s43 = sadd.s32 %s42, 1
    %s44 = scalar_select %p41, %s42, %s43
    %p47 = pneg %p41
    %p48 = scmp.eq.s32.totalorder %s12, 3
    %p49 = por %p47, %p48
    %p50 = scmp.ne.s32.totalorder %s42, %s45
    %p51 = scmp.eq.s32.totalorder %s12, 0
    %p52 = por %p50, %p51
    %p53 = scmp.ne.s32.totalorder %s42, %s45
    %p54 = scmp.eq.s32.totalorder %s17, 3
    %p55 = por %p53, %p54
    %p56 = scmp.ne.s32.totalorder %s45, %s46
    %p57 = scmp.eq.s32.totalorder %s17, 0
    %p58 = por %p56, %p57
    %p59 = scmp.ne.s32.totalorder %s45, %s46
    %p60 = scmp.eq.s32.totalorder %s18, 3
    %p61 = por %p59, %p60
    %p63 = scmp.ne.s32.totalorder %s46, %s62
    %p64 = scmp.eq.s32.totalorder %s18, 0
    %p65 = por %p63, %p64
    %s66 = ssub.s32 %s19, %s31
    %s67 = ssub.s32 %s20, %s27
    %s68 = sor.u32 %s66, %s67
    %p69 = scmp.eq.s32.totalorder %s68, 0
    %s71 = sadd.s32 %s70, 1
    %s72 = scalar_select %p69, %s70, %s71
    %p75 = pneg %p69
    %p76 = scmp.eq.s32.totalorder %s12, 3
    %p77 = por %p75, %p76
    %p78 = scmp.ne.s32.totalorder %s70, %s73
    %p79 = scmp.eq.s32.totalorder %s12, 0
    %p80 = por %p78, %p79
    %p81 = scmp.ne.s32.totalorder %s70, %s73
    %p82 = scmp.eq.s32.totalorder %s17, 3
    %p83 = por %p81, %p82
    %p84 = scmp.ne.s32.totalorder %s73, %s74
    %p85 = scmp.eq.s32.totalorder %s17, 0
    %p86 = por %p84, %p85
    %p87 = scmp.ne.s32.totalorder %s73, %s74
    %p88 = scmp.eq.s32.totalorder %s18, 3
    %p89 = por %p87, %p88
    %p91 = scmp.ne.s32.totalorder %s74, %s90
    %p92 = scmp.eq.s32.totalorder %s18, 0
    %p93 = por %p91, %p92
    %s94 = sadd.s32 %s20, 1
    %p95 = scmp.lt.s32.totalorder %s94, 1
    %s96 = scalar_select %p95, %s94, 1
    %s97 = sadd.s32 %s27, 1
    %p98 = scmp.lt.s32.totalorder %s97, 1
    %s99 = scalar_select %p98, %s97, 1
    %s100 = ssub.s32 %s19, %s31
    %s101 = ssub.s32 %s96, %s99
    %s102 = sor.u32 %s100, %s101
    %p103 = scmp.eq.s32.totalorder %s102, 0
    %s105 = sadd.s32 %s104, 1
    %s106 = scalar_select %p103, %s104, %s105
    %p109 = pneg %p103
    %p110 = scmp.eq.s32.totalorder %s12, 3
    %p111 = por %p109, %p110
    %p112 = scmp.ne.s32.totalorder %s104, %s107
    %p113 = scmp.eq.s32.totalorder %s12, 0
    %p114 = por %p112, %p113
    %p115 = scmp.ne.s32.totalorder %s104, %s107
    %p116 = scmp.eq.s32.totalorder %s17, 3
    %p117 = por %p115, %p116
    %p118 = scmp.ne.s32.totalorder %s107, %s108
    %p119 = scmp.eq.s32.totalorder %s17, 0
    %p120 = por %p118, %p119
    %p121 = scmp.ne.s32.totalorder %s107, %s108
    %p122 = scmp.eq.s32.totalorder %s18, 3
    %p123 = por %p121, %p122
    %p125 = scmp.ne.s32.totalorder %s108, %s124
    %p126 = scmp.eq.s32.totalorder %s18, 0
    %p127 = por %p125, %p126
    %s129 = sadd.s32 %s128, 1
    %p132 = scmp.eq.s32.totalorder %s12, 3
    %p133 = scmp.ne.s32.totalorder %s128, %s130
    %p134 = scmp.eq.s32.totalorder %s12, 0
    %p135 = por %p133, %p134
    %p136 = scmp.ne.s32.totalorder %s128, %s130
    %p137 = scmp.eq.s32.totalorder %s17, 3
    %p138 = por %p136, %p137
    %p139 = scmp.ne.s32.totalorder %s130, %s131
    %p140 = scmp.eq.s32.totalorder %s17, 0
    %p141 = por %p139, %p140
    %p142 = scmp.ne.s32.totalorder %s130, %s131
    %p143 = scmp.eq.s32.totalorder %s18, 3
    %p144 = por %p142, %p143
    %p146 = scmp.ne.s32.totalorder %s131, %s145
    %p147 = scmp.eq.s32.totalorder %s18, 0
    %p148 = por %p146, %p147
    %s149 = ssub.s32 %s19, %s31
    %s150 = ssub.s32 %s20, %s27
    %s151 = sor.u32 %s149, %s150
    %p152 = scmp.eq.s32.totalorder %s151, 0
    %s154 = sadd.s32 %s153, 1
    %s155 = scalar_select %p152, %s153, %s154
    %p158 = pneg %p152
    %p159 = scmp.eq.s32.totalorder %s12, 3
    %p160 = por %p158, %p159
    %p161 = scmp.ne.s32.totalorder %s153, %s156
    %p162 = scmp.eq.s32.totalorder %s12, 0
    %p163 = por %p161, %p162
    %p164 = scmp.ne.s32.totalorder %s153, %s156
    %p165 = scmp.eq.s32.totalorder %s17, 3
    %p166 = por %p164, %p165
    %p167 = scmp.ne.s32.totalorder %s156, %s157
    %p168 = scmp.eq.s32.totalorder %s17, 0
    %p169 = por %p167, %p168
    %p170 = scmp.ne.s32.totalorder %s156, %s157
    %p171 = scmp.eq.s32.totalorder %s18, 3
    %p172 = por %p170, %p171
    %p174 = scmp.ne.s32.totalorder %s157, %s173
    %p175 = scmp.eq.s32.totalorder %s18, 0
    %p176 = por %p174, %p175
    %s177 = smul.u32 %s19, 2
    %s178 = sadd.s32 %s177, %s20
    %s179 = smul.u32 %s31, 2
    %s180 = sadd.s32 %s179, %s27
    %s181 = ssub.s32 %s178, %s180
    %p182 = scmp.eq.s32.totalorder %s181, 0
    %s184 = sadd.s32 %s183, 1
    %s185 = scalar_select %p182, %s183, %s184
    %p188 = pneg %p182
    %p189 = scmp.eq.s32.totalorder %s12, 3
    %p190 = por %p188, %p189
    %p191 = scmp.ne.s32.totalorder %s183, %s186
    %p192 = scmp.eq.s32.totalorder %s12, 0
    %p193 = por %p191, %p192
    %p194 = scmp.ne.s32.totalorder %s183, %s186
    %p195 = scmp.eq.s32.totalorder %s17, 3
    %p196 = por %p194, %p195
    %p197 = scmp.ne.s32.totalorder %s186, %s187
    %p198 = scmp.eq.s32.totalorder %s17, 0
    %p199 = por %p197, %p198
    %p200 = scmp.ne.s32.totalorder %s186, %s187
    %p201 = scmp.eq.s32.totalorder %s18, 3
    %p202 = por %p200, %p201
    %p204 = scmp.ne.s32.totalorder %s187, %s203
    %p205 = scmp.eq.s32.totalorder %s18, 0
    %p206 = por %p204, %p205
    %p207 = scmp.le.s32.totalorder 1, %s12
    %p208 = scmp.lt.s32.totalorder %s12, 5
    %p209 = pnand %p207, %p208
    %p210 = pneg %p209
    // Predicated region
    $region9: #{extended_basic_block_forward.3} parent=5 // pred_check
      _
    $region10: #{extended_basic_block_forward.3} parent=5 // pred_check_branch
      %212 = sbr.rel (%p209) target = $region12
    $region11: #{extended_basic_block_forward.3} parent=5 // pred_region
      %s213 = ssub.s32 %s12, 1
      // Predicated region
      $region13: #{extended_basic_block_forward.3} parent=11 // pred_check
        %p214 = pneg %p141
      $region14: #{extended_basic_block_forward.3} parent=11 // pred_check_branch
        %216 = sbr.rel (%p214) target = $region16
      $region15: #{extended_basic_block_forward.3} parent=11 // pred_region
        _
      $region16: #{extended_basic_block_forward.3} parent=11 // pred_fallthru
        _
    $region12: #{extended_basic_block_forward.3} parent=5 // pred_fallthru
      _
    %p217 = scmp.lt.s32.totalorder %s12, 4
    // Predicated region
    $region17: #{extended_basic_block_forward.3} parent=5 // pred_check
      %p218 = pneg %p217
    $region18: #{extended_basic_block_forward.3} parent=5 // pred_check_branch
      %220 = sbr.rel (%p218) target = $region20
    $region19: #{extended_basic_block_forward.3} parent=5 // pred_region
      // Predicated region
      $region21: #{extended_basic_block_forward.3} parent=19 // pred_check
        %p221 = pneg %p52
      $region22: #{extended_basic_block_forward.3} parent=19 // pred_check_branch
        %223 = sbr.rel (%p221) target = $region24
      $region23: #{extended_basic_block_forward.3} parent=19 // pred_region
        %s224 = ssub.s32 %s20, 1
        %p225 = scmp.gt.s32.totalorder %s224, 0
        %s226 = scalar_select %p225, %s224, 0
        %s227 = smul.u32 8, %s226
        %p228 = scmp.lt.s32.totalorder %s19, 1
        %s229 = scalar_select %p228, %s19, 1
        %p230 = scmp.lt.s32.totalorder %s227, 15
        %s231 = scalar_select %p230, %s227, 15
        %s232 = smul.addr %s231, 3
        %s233 = smul.addr %s229, 48
        %s234 = sadd.s32 %s232, %s233
        %s235 = smul.addr %s234, 4
        %s236 = scalar_lea.vmem %s0, %s235
        %s237 = ssub.s32 %s20, 1
        %p238 = scmp.gt.s32.totalorder %s237, 0
        %s239 = scalar_select %p238, %s237, 0
        %s240 = smul.u32 8, %s239
      $region24: #{extended_basic_block_forward.3} parent=19 // pred_fallthru
        _
      // Predicated region
      $region25: #{extended_basic_block_forward.3} parent=19 // pred_check
        %p241 = pneg %p80
      $region26: #{extended_basic_block_forward.3} parent=19 // pred_check_branch
        %243 = sbr.rel (%p241) target = $region28
      $region27: #{extended_basic_block_forward.3} parent=19 // pred_region
        %s244 = smul.u32 8, %s20
        %p245 = scmp.lt.s32.totalorder %s19, 1
        %s246 = scalar_select %p245, %s19, 1
        %p247 = scmp.lt.s32.totalorder %s244, 15
        %s248 = scalar_select %p247, %s244, 15
        %s249 = smul.addr %s248, 3
        %s250 = smul.addr %s246, 48
        %s251 = sadd.s32 %s249, %s250
        %s252 = smul.addr %s251, 4
        %s253 = scalar_lea.vmem %s1, %s252
        %s254 = smul.u32 8, %s20
      $region28: #{extended_basic_block_forward.3} parent=19 // pred_fallthru
        _
      // Predicated region
      $region29: #{extended_basic_block_forward.3} parent=19 // pred_check
        %p255 = pneg %p114
      $region30: #{extended_basic_block_forward.3} parent=19 // pred_check_branch
        %257 = sbr.rel (%p255) target = $region32
      $region31: #{extended_basic_block_forward.3} parent=19 // pred_region
        %s258 = sadd.s32 %s20, 1
        %p259 = scmp.lt.s32.totalorder %s258, 1
        %s260 = scalar_select %p259, %s258, 1
        %s261 = smul.u32 8, %s260
        %p262 = scmp.lt.s32.totalorder %s19, 1
        %s263 = scalar_select %p262, %s19, 1
        %p264 = scmp.lt.s32.totalorder %s261, 15
        %s265 = scalar_select %p264, %s261, 15
        %s266 = smul.addr %s265, 3
        %s267 = smul.addr %s263, 48
        %s268 = sadd.s32 %s266, %s267
        %s269 = smul.addr %s268, 4
        %s270 = scalar_lea.vmem %s2, %s269
        %s271 = sadd.s32 %s20, 1
        %p272 = scmp.lt.s32.totalorder %s271, 1
        %s273 = scalar_select %p272, %s271, 1
        %s274 = smul.u32 8, %s273
      $region32: #{extended_basic_block_forward.3} parent=19 // pred_fallthru
        _
    $region20: #{extended_basic_block_forward.3} parent=5 // pred_fallthru
      _
    %p275 = scmp.le.s32.totalorder 1, %s12
    %p276 = scmp.lt.s32.totalorder %s12, 5
    %p277 = pnand %p275, %p276
    %p278 = pneg %p277
    // Predicated region
    $region33: #{extended_basic_block_forward.3} parent=5 // pred_check
      _
    $region34: #{extended_basic_block_forward.3} parent=5 // pred_check_branch
      %280 = sbr.rel (%p277) target = $region36
    $region35: #{extended_basic_block_forward.3} parent=5 // pred_region
      %s281 = ssub.s32 %s12, 1
      %s282 = ssub.s32 %s22, 1
      %p283 = scmp.gt.s32.totalorder %s282, 0
      %s284 = scalar_select %p283, %s282, 0
      %s285 = smul.u32 8, %s284
      %p286 = scmp.lt.s32.totalorder %s21, 1
      %s287 = scalar_select %p286, %s21, 1
      %p288 = scmp.lt.s32.totalorder %s285, 15
      %s289 = scalar_select %p288, %s285, 15
      %s290 = smul.addr %s289, 3
      %s291 = smul.addr %s287, 48
      %s292 = sadd.s32 %s290, %s291
      %s293 = smul.addr %s292, 4
      %s294 = scalar_lea.vmem %s0, %s293
      %p295 = pneg %p58
      %p296 = pneg %p55
      %s297 = smul.u32 8, %s22
      %p298 = scmp.lt.s32.totalorder %s21, 1
      %s299 = scalar_select %p298, %s21, 1
      %p300 = scmp.lt.s32.totalorder %s297, 15
      %s301 = scalar_select %p300, %s297, 15
      %s302 = smul.addr %s301, 3
      %s303 = smul.addr %s299, 48
      %s304 = sadd.s32 %s302, %s303
      %s305 = smul.addr %s304, 4
      %s306 = scalar_lea.vmem %s1, %s305
      %p307 = pneg %p86
      %p308 = pneg %p83
      %s309 = sadd.s32 %s22, 1
      %p310 = scmp.lt.s32.totalorder %s309, 1
      %s311 = scalar_select %p310, %s309, 1
      %s312 = smul.u32 8, %s311
      %p313 = scmp.lt.s32.totalorder %s21, 1
      %s314 = scalar_select %p313, %s21, 1
      %p315 = scmp.lt.s32.totalorder %s312, 15
      %s316 = scalar_select %p315, %s312, 15
      %s317 = smul.addr %s316, 3
      %s318 = smul.addr %s314, 48
      %s319 = sadd.s32 %s317, %s318
      %s320 = smul.addr %s319, 4
      %s321 = scalar_lea.vmem %s2, %s320
      %p322 = pneg %p120
      %p323 = pneg %p117
      %p324 = pneg %p141
      %p325 = pneg %p138
      %p326 = pneg %p169
      %p327 = pneg %p166
      %s328 = smul.u32 8, %s22
      %p329 = scmp.lt.s32.totalorder %s21, 1
      %s330 = scalar_select %p329, %s21, 1
      %p331 = scmp.lt.s32.totalorder %s328, 15
      %s332 = scalar_select %p331, %s328, 15
      %s333 = smul.addr %s332, 3
      %s334 = smul.addr %s330, 48
      %s335 = sadd.s32 %s333, %s334
      %s336 = smul.addr %s335, 4
      %s337 = scalar_lea.vmem %s4, %s336
      %p338 = pneg %p199
      %p339 = pneg %p196
      %s340 = smul.u32 %s21, 2
      %s341 = sadd.s32 %s340, %s22
      %p342 = scmp.lt.s32.totalorder %s341, 3
      %s343 = scalar_select %p342, %s341, 3
      %s344 = smul.addr %s343, 8
      %s345 = scalar_lea.vmem %s5, %s344
      %s346 = ssub.s32 %s22, 1
      %p347 = scmp.gt.s32.totalorder %s346, 0
      %s348 = scalar_select %p347, %s346, 0
      %s349 = smul.u32 8, %s348
      %p350 = scmp.lt.s32.totalorder %s21, 1
      %s351 = scalar_select %p350, %s21, 1
      %p352 = scmp.lt.s32.totalorder %s349, 15
      %s353 = scalar_select %p352, %s349, 15
      %s354 = smul.addr %s353, 3
      %s355 = smul.addr %s351, 48
      %s356 = sadd.s32 %s354, %s355
      %s357 = smul.addr %s356, 4
      %s358 = scalar_lea.vmem %s0, %s357
      %s359 = ssub.s32 %s22, 1
      %p360 = scmp.gt.s32.totalorder %s359, 0
      %s361 = scalar_select %p360, %s359, 0
      %s362 = smul.u32 8, %s361
      %s363 = smul.u32 8, %s22
      %p364 = scmp.lt.s32.totalorder %s21, 1
      %s365 = scalar_select %p364, %s21, 1
      %p366 = scmp.lt.s32.totalorder %s363, 15
      %s367 = scalar_select %p366, %s363, 15
      %s368 = smul.addr %s367, 3
      %s369 = smul.addr %s365, 48
      %s370 = sadd.s32 %s368, %s369
      %s371 = smul.addr %s370, 4
      %s372 = scalar_lea.vmem %s1, %s371
      %s373 = smul.u32 8, %s22
      %s374 = sadd.s32 %s22, 1
      %p375 = scmp.lt.s32.totalorder %s374, 1
      %s376 = scalar_select %p375, %s374, 1
      %s377 = smul.u32 8, %s376
      %p378 = scmp.lt.s32.totalorder %s21, 1
      %s379 = scalar_select %p378, %s21, 1
      %p380 = scmp.lt.s32.totalorder %s377, 15
      %s381 = scalar_select %p380, %s377, 15
      %s382 = smul.addr %s381, 3
      %s383 = smul.addr %s379, 48
      %s384 = sadd.s32 %s382, %s383
      %s385 = smul.addr %s384, 4
      %s386 = scalar_lea.vmem %s2, %s385
      %s387 = sadd.s32 %s22, 1
      %p388 = scmp.lt.s32.totalorder %s387, 1
      %s389 = scalar_select %p388, %s387, 1
      %s390 = smul.u32 8, %s389
      %s391 = smul.u32 8, %s22
      %p392 = scmp.lt.s32.totalorder %s21, 1
      %s393 = scalar_select %p392, %s21, 1
      %p394 = scmp.lt.s32.totalorder %s391, 15
      %s395 = scalar_select %p394, %s391, 15
      %s396 = smul.addr %s395, 3
      %s397 = smul.addr %s393, 48
      %s398 = sadd.s32 %s396, %s397
      %s399 = smul.addr %s398, 4
      %s400 = scalar_lea.vmem %s4, %s399
      %s401 = smul.u32 8, %s22
      %s402 = smul.u32 %s21, 2
      %s403 = sadd.s32 %s402, %s22
      %p404 = scmp.lt.s32.totalorder %s403, 3
      %s405 = scalar_select %p404, %s403, 3
      %s406 = smul.addr %s405, 8
      %s407 = scalar_lea.vmem %s5, %s406
      %s408 = smul.u32 %s21, 2
      %s409 = sadd.s32 %s408, %s22
      %s411 = scalar_lea.vmem %s358, 84
      %v412 = vld [vmem:[%s411] sm:$0xf]
      %v413 = vld [vmem:[%s411 + $0x4] sm:$0xf]
      %v414 = vld [vmem:[%s411 + $0x8] sm:$0xf]
      %v415 = vld [vmem:[%s372] sm:$0xf]
      %v416 = vld [vmem:[%s372 + $0x4] sm:$0xf]
      %v417 = vld [vmem:[%s372 + $0x8] sm:$0xf]
      %v418 = vld [vmem:[%s372 + $0xc] sm:$0xf]
      %v419 = vld [vmem:[%s372 + $0x10] sm:$0xf]
      %v420 = vld [vmem:[%s372 + $0x14] sm:$0xf]
      %v421 = vld [vmem:[%s372 + $0x18] sm:$0xf]
      %v422 = vld [vmem:[%s372 + $0x1c] sm:$0xf]
      %v423 = vld [vmem:[%s372 + $0x20] sm:$0xf]
      %v424 = vld [vmem:[%s372 + $0x24] sm:$0xf]
      %v425 = vld [vmem:[%s372 + $0x28] sm:$0xf]
      %v426 = vld [vmem:[%s372 + $0x2c] sm:$0xf]
      %v427 = vld [vmem:[%s372 + $0x30] sm:$0xf]
      %v428 = vld [vmem:[%s372 + $0x34] sm:$0xf]
      %v429 = vld [vmem:[%s372 + $0x38] sm:$0xf]
      %v430 = vld [vmem:[%s372 + $0x3c] sm:$0xf]
      %v431 = vld [vmem:[%s372 + $0x40] sm:$0xf]
      %v432 = vld [vmem:[%s372 + $0x44] sm:$0xf]
      %v433 = vld [vmem:[%s372 + $0x48] sm:$0xf]
      %v434 = vld [vmem:[%s372 + $0x4c] sm:$0xf]
      %v435 = vld [vmem:[%s372 + $0x50] sm:$0xf]
      %v436 = vld [vmem:[%s372 + $0x54] sm:$0xf]
      %v437 = vld [vmem:[%s372 + $0x58] sm:$0xf]
      %v438 = vld [vmem:[%s372 + $0x5c] sm:$0xf]
      %v439 = vld [vmem:[%s386] sm:$0xf]
      %v440 = vld [vmem:[%s386 + $0x4] sm:$0xf]
      %v441 = vld [vmem:[%s386 + $0x8] sm:$0xf]
      %v442 = vunpack.c.l.bf16 %v412
      %v443 = vunpack.c.l.bf16 %v413
      %v444 = vunpack.c.l.bf16 %v414
      %v445 = vunpack.c.l.bf16 %v415
      %v446 = vunpack.c.l.bf16 %v416
      %v447 = vunpack.c.l.bf16 %v417
      %v448 = vunpack.c.l.bf16 %v418
      %v449 = vunpack.c.l.bf16 %v419
      %v450 = vunpack.c.l.bf16 %v420
      %v451 = vunpack.c.l.bf16 %v421
      %v452 = vunpack.c.l.bf16 %v422
      %v453 = vunpack.c.l.bf16 %v423
      %v454 = vunpack.c.l.bf16 %v424
      %v455 = vunpack.c.l.bf16 %v425
      %v456 = vunpack.c.l.bf16 %v426
      %v457 = vunpack.c.l.bf16 %v427
      %v458 = vunpack.c.l.bf16 %v428
      %v459 = vunpack.c.l.bf16 %v429
      %v460 = vunpack.c.l.bf16 %v430
      %v461 = vunpack.c.l.bf16 %v431
      %v462 = vunpack.c.l.bf16 %v432
      %v463 = vunpack.c.l.bf16 %v433
      %v464 = vunpack.c.l.bf16 %v434
      %v465 = vunpack.c.l.bf16 %v435
      %v466 = vunpack.c.l.bf16 %v436
      %v467 = vunpack.c.l.bf16 %v437
      %v468 = vunpack.c.l.bf16 %v438
      %v469 = vunpack.c.l.bf16 %v439
      %v470 = vunpack.c.l.bf16 %v440
      %v471 = vunpack.c.l.bf16 %v441
      %v472 = vlaneseq
      %v473 = vshrl.u32 %v472, 7
      %v474 = vadd.s32 %v473, 8
      %v475 = vadd.s32 %v473, 16
      %vm476 = vcmp.ge.s32.totalorder %v473, 1
      %vm477 = vcmp.ge.s32.totalorder %v474, 1
      %vm478 = vcmp.ge.s32.totalorder %v475, 1
      %vm479 = vcmp.le.s32.totalorder %v473, 16
      %vm480 = vcmp.le.s32.totalorder %v474, 16
      %vm481 = vcmp.le.s32.totalorder %v475, 16
      %vm482 = vmand %vm476, %vm479
      %vm483 = vmand %vm477, %vm480
      %vm484 = vmand %vm478, %vm481
      %v485 = vsel %vm482, 1, 0
      %v486 = vsel %vm483, 1, 0
      %v487 = vsel %vm484, 1, 0
      %vm488 = vcmp.eq.s32.totalorder %v485, 1
      %vm489 = vcmp.eq.s32.totalorder %v486, 1
      %vm490 = vcmp.eq.s32.totalorder %v487, 1
      %v491 = vsel %vm488, %v442, 0.0
      %v492 = vsel %vm489, %v443, 0.0
      %v493 = vsel %vm490, %v444, 0.0
      %v494 = vsel %vm488, %v445, 0.0
      %v495 = vsel %vm489, %v446, 0.0
      %v496 = vsel %vm490, %v447, 0.0
      %v497 = vsel %vm488, %v448, 0.0
      %v498 = vsel %vm489, %v449, 0.0
      %v499 = vsel %vm490, %v450, 0.0
      %v500 = vsel %vm488, %v451, 0.0
      %v501 = vsel %vm489, %v452, 0.0
      %v502 = vsel %vm490, %v453, 0.0
      %v503 = vsel %vm488, %v454, 0.0
      %v504 = vsel %vm489, %v455, 0.0
      %v505 = vsel %vm490, %v456, 0.0
      %v506 = vsel %vm488, %v457, 0.0
      %v507 = vsel %vm489, %v458, 0.0
      %v508 = vsel %vm490, %v459, 0.0
      %v509 = vsel %vm488, %v460, 0.0
      %v510 = vsel %vm489, %v461, 0.0
      %v511 = vsel %vm490, %v462, 0.0
      %v512 = vsel %vm488, %v463, 0.0
      %v513 = vsel %vm489, %v464, 0.0
      %v514 = vsel %vm490, %v465, 0.0
      %v515 = vsel %vm488, %v466, 0.0
      %v516 = vsel %vm489, %v467, 0.0
      %v517 = vsel %vm490, %v468, 0.0
      %v518 = vsel %vm488, %v469, 0.0
      %v519 = vsel %vm489, %v470, 0.0
      %v520 = vsel %vm490, %v471, 0.0
      %p521 = scmp.gt.s32.totalorder %s22, 0
      %s522 = scalar_select %p521, 1, 0
      %v523 = vstv %s522
      %vm524 = vcmp.eq.s32.totalorder %v523, 1
      %v525 = vsel %vm524, %v491, 0.0
      %v526 = vsel %vm524, %v492, 0.0
      %v527 = vsel %vm524, %v493, 0.0
      %p528 = scmp.lt.s32.totalorder %s22, 1
      %s529 = scalar_select %p528, 1, 0
      %v530 = vstv %s529
      %vm531 = vcmp.eq.s32.totalorder %v530, 1
      %v532 = vsel %vm531, %v518, 0.0
      %v533 = vsel %vm531, %v519, 0.0
      %v534 = vsel %vm531, %v520, 0.0
      %v535 = vpack.c.bf16 %v526, %v525
      %v536 = vpack.c.bf16 %v527, %v527
      %v537 = vpack.c.bf16 %v495, %v494
      %v538 = vpack.c.bf16 %v496, %v496
      %v539 = vpack.c.bf16 %v498, %v497
      %v540 = vpack.c.bf16 %v499, %v499
      %v541 = vpack.c.bf16 %v501, %v500
      %v542 = vpack.c.bf16 %v502, %v502
      %v543 = vpack.c.bf16 %v504, %v503
      %v544 = vpack.c.bf16 %v505, %v505
      %v545 = vpack.c.bf16 %v507, %v506
      %v546 = vpack.c.bf16 %v508, %v508
      %v547 = vpack.c.bf16 %v510, %v509
      %v548 = vpack.c.bf16 %v511, %v511
      %v549 = vpack.c.bf16 %v513, %v512
      %v550 = vpack.c.bf16 %v514, %v514
      %v551 = vpack.c.bf16 %v516, %v515
      %v552 = vpack.c.bf16 %v517, %v517
      %v553 = vpack.c.bf16 %v533, %v532
      %v554 = vpack.c.bf16 %v534, %v534
      %v555 = vld [vmem:[%s3] sm:$0xf]
      %v556 = vld [vmem:[%s3 + $0x4] sm:$0xf]
      %v557 = vld [vmem:[%s3 + $0x8] sm:$0xf]
      %v558 = vld [vmem:[%s3 + $0xc] sm:$0xf]
      %v559 = vld [vmem:[%s3 + $0x10] sm:$0xf]
      %v560 = vld [vmem:[%s3 + $0x14] sm:$0xf]
      %v561 = vld [vmem:[%s3 + $0x18] sm:$0xf]
      %v562 = vld [vmem:[%s3 + $0x1c] sm:$0xf]
      %v563 = vld [vmem:[%s3 + $0x20] sm:$0xf]
      %v564 = vld [vmem:[%s3 + $0x24] sm:$0xf]
      %v565 = vld [vmem:[%s3 + $0x28] sm:$0xf]
      %v566 = vld [vmem:[%s3 + $0x2c] sm:$0xf]
      %v567 = vld [vmem:[%s3 + $0x30] sm:$0xf]
      %v568 = vld [vmem:[%s3 + $0x34] sm:$0xf]
      %v569 = vld [vmem:[%s3 + $0x38] sm:$0xf]
      %v570 = vld [vmem:[%s3 + $0x3c] sm:$0xf]
      %vm571 = vsmask.f32 7424
      %v573 = vshrl.u32 %v535, 16
      %v575 = vshll.u32 %v535, 16
      %v577 = vrot.slane %v575, 1
      %v578 = vor.u32 %v573, %v577
      %v580 = vshll.u32 %v536, 16
      %v582 = vrot.slane %v580, 1
      %v583 = vsel %vm571, %v578, %v582
      %v585 = vshrl.u32 %v537, 16
      %v587 = vshll.u32 %v537, 16
      %v589 = vrot.slane %v587, 1
      %v590 = vor.u32 %v585, %v589
      %v592 = vshll.u32 %v538, 16
      %v594 = vrot.slane %v592, 1
      %v595 = vsel %vm571, %v590, %v594
      %v597 = vshrl.u32 %v539, 16
      %v599 = vshll.u32 %v539, 16
      %v601 = vrot.slane %v599, 1
      %v602 = vor.u32 %v597, %v601
      %v604 = vshll.u32 %v540, 16
      %v606 = vrot.slane %v604, 1
      %v607 = vsel %vm571, %v602, %v606
      %v609 = vshrl.u32 %v541, 16
      %v611 = vshll.u32 %v541, 16
      %v613 = vrot.slane %v611, 1
      %v614 = vor.u32 %v609, %v613
      %v616 = vshll.u32 %v542, 16
      %v618 = vrot.slane %v616, 1
      %v619 = vsel %vm571, %v614, %v618
      %v621 = vshrl.u32 %v543, 16
      %v623 = vshll.u32 %v543, 16
      %v625 = vrot.slane %v623, 1
      %v626 = vor.u32 %v621, %v625
      %v628 = vshll.u32 %v544, 16
      %v630 = vrot.slane %v628, 1
      %v631 = vsel %vm571, %v626, %v630
      %v633 = vshrl.u32 %v545, 16
      %v635 = vshll.u32 %v545, 16
      %v637 = vrot.slane %v635, 1
      %v638 = vor.u32 %v633, %v637
      %v640 = vshll.u32 %v546, 16
      %v642 = vrot.slane %v640, 1
      %v643 = vsel %vm571, %v638, %v642
      %v645 = vshrl.u32 %v547, 16
      %v647 = vshll.u32 %v547, 16
      %v649 = vrot.slane %v647, 1
      %v650 = vor.u32 %v645, %v649
      %v652 = vshll.u32 %v548, 16
      %v654 = vrot.slane %v652, 1
      %v655 = vsel %vm571, %v650, %v654
      %v657 = vshrl.u32 %v549, 16
      %v659 = vshll.u32 %v549, 16
      %v661 = vrot.slane %v659, 1
      %v662 = vor.u32 %v657, %v661
      %v664 = vshll.u32 %v550, 16
      %v666 = vrot.slane %v664, 1
      %v667 = vsel %vm571, %v662, %v666
      %s676 = scalar_lea.vmem %s3, 64
      %v677 = vld [vmem:[%s676] sm:$0xf]
      %v678 = vld [vmem:[%s676 + $0x4] sm:$0xf]
      %v679 = vld [vmem:[%s676 + $0x8] sm:$0xf]
      %v680 = vld [vmem:[%s676 + $0xc] sm:$0xf]
      %v681 = vld [vmem:[%s676 + $0x10] sm:$0xf]
      %v682 = vld [vmem:[%s676 + $0x14] sm:$0xf]
      %v683 = vld [vmem:[%s676 + $0x18] sm:$0xf]
      %v684 = vld [vmem:[%s676 + $0x1c] sm:$0xf]
      %v685 = vld [vmem:[%s676 + $0x20] sm:$0xf]
      %v686 = vld [vmem:[%s676 + $0x24] sm:$0xf]
      %v687 = vld [vmem:[%s676 + $0x28] sm:$0xf]
      %v688 = vld [vmem:[%s676 + $0x2c] sm:$0xf]
      %v689 = vld [vmem:[%s676 + $0x30] sm:$0xf]
      %v690 = vld [vmem:[%s676 + $0x34] sm:$0xf]
      %v691 = vld [vmem:[%s676 + $0x38] sm:$0xf]
      %v692 = vld [vmem:[%s676 + $0x3c] sm:$0xf]
      %v709 = vunpack.c.l.b16 %v677
      %v710 = vunpack.c.l.b16 %v678
      %v711 = vunpack.c.l.b16 %v679
      %v712 = vunpack.c.l.b16 %v680
      %v713 = vunpack.c.l.b16 %v681
      %v714 = vunpack.c.l.b16 %v682
      %v715 = vunpack.c.l.b16 %v683
      %v716 = vunpack.c.l.b16 %v684
      %v717 = vunpack.c.l.b16 %v685
      %v718 = vunpack.c.l.b16 %v686
      %v719 = vunpack.c.l.b16 %v687
      %v720 = vunpack.c.l.b16 %v688
      %v721 = vunpack.c.l.b16 %v689
      %v722 = vunpack.c.l.b16 %v690
      %v723 = vunpack.c.l.b16 %v691
      %v724 = vunpack.c.l.b16 %v692
      %v725 = vpack.c.b16 %v710, %v709
      %v726 = vpack.c.b16 %v712, %v711
      %v727 = vpack.c.b16 %v714, %v713
      %v728 = vpack.c.b16 %v716, %v715
      %v729 = vpack.c.b16 %v718, %v717
      %v730 = vpack.c.b16 %v720, %v719
      %v731 = vpack.c.b16 %v722, %v721
      %v732 = vpack.c.b16 %v724, %v723
      %741 = vmatprep.subr.bf16.mxu0 0
      %742 = vmatpush1.bf16.msra.mxu0 %v725
      %743 = vmatprep.subr.bf16.mxu0 0
      %744 = vmatpush1.bf16.msra.mxu0 %v726
      %745 = vmatprep.subr.bf16.mxu0 0
      %746 = vmatpush1.bf16.msra.mxu0 %v727
      %747 = vmatprep.subr.bf16.mxu0 0
      %748 = vmatpush1.bf16.msra.mxu0 %v728
      %749 = vmatprep.subr.bf16.mxu0 0
      %750 = vmatpush1.bf16.msra.mxu0 %v729
      %751 = vmatprep.subr.bf16.mxu0 0
      %752 = vmatpush1.bf16.msra.mxu0 %v730
      %753 = vmatprep.subr.bf16.mxu0 0
      %754 = vmatpush1.bf16.msra.mxu0 %v731
      %755 = vmatprep.subr.bf16.mxu0 0
      %756 = vmatpush1.bf16.msra.mxu0 %v732
      %757 = vmatprep.subr.bf16.mxu0 0
      %758 = vmatpush1.bf16.msra.mxu0 0
      %759 = vmatprep.subr.bf16.mxu0 0
      %760 = vmatpush1.bf16.msra.mxu0 0
      %761 = vmatprep.subr.bf16.mxu0 0
      %762 = vmatpush1.bf16.msra.mxu0 0
      %763 = vmatprep.subr.bf16.mxu0 0
      %764 = vmatpush1.bf16.msra.mxu0 0
      %765 = vmatprep.subr.bf16.mxu0 0
      %766 = vmatpush1.bf16.msra.mxu0 0
      %767 = vmatprep.subr.bf16.mxu0 0
      %768 = vmatpush1.bf16.msra.mxu0 0
      %769 = vmatprep.subr.bf16.mxu0 0
      %770 = vmatpush1.bf16.msra.mxu0 0
      %771 = vmatprep.subr.bf16.mxu0 0
      %772 = vmatpush1.bf16.msra.mxu0 0
      %773 = vmatprep.mubr.bf16.mxu0 0
      %774 = vmatmul.mubr.bf16.gmra.mrb[0].mxu0 %v583
      %v775 = vpop.f32.mrb[0].mxu0
      %v776 = vadd.f32 0.0, %v775
      %v777 = vpop.f32.mrb[0].mxu0
      %v778 = vpop.f32.mrb[0].mxu0
      %v779 = vadd.f32 0.0, %v778
      %v780 = vpop.f32.mrb[0].mxu0
      %781 = vmatprep.mubr.bf16.mxu0 0
      %782 = vmatmul.mubr.bf16.gmra.mrb[0].mxu0 %v595
      %v783 = vpop.f32.mrb[0].mxu0
      %v784 = vadd.f32 0.0, %v783
      %v785 = vpop.f32.mrb[0].mxu0
      %v786 = vpop.f32.mrb[0].mxu0
      %v787 = vadd.f32 0.0, %v786
      %v788 = vpop.f32.mrb[0].mxu0
      %789 = vmatprep.mubr.bf16.mxu0 0
      %790 = vmatmul.mubr.bf16.gmra.mrb[0].mxu0 %v607
      %v791 = vpop.f32.mrb[0].mxu0
      %v792 = vadd.f32 0.0, %v791
      %v793 = vpop.f32.mrb[0].mxu0
      %v794 = vpop.f32.mrb[0].mxu0
      %v795 = vadd.f32 0.0, %v794
      %v796 = vpop.f32.mrb[0].mxu0
      %797 = vmatprep.mubr.bf16.mxu0 0
      %798 = vmatmul.mubr.bf16.gmra.mrb[0].mxu0 %v619
      %v799 = vpop.f32.mrb[0].mxu0
      %v800 = vadd.f32 0.0, %v799
      %v801 = vpop.f32.mrb[0].mxu0
      %v802 = vpop.f32.mrb[0].mxu0
      %v803 = vadd.f32 0.0, %v802
      %v804 = vpop.f32.mrb[0].mxu0
      %805 = vmatprep.mubr.bf16.mxu0 0
      %806 = vmatmul.mubr.bf16.gmra.mrb[0].mxu0 %v631
      %v807 = vpop.f32.mrb[0].mxu0
      %v808 = vadd.f32 0.0, %v807
      %v809 = vpop.f32.mrb[0].mxu0
      %v810 = vpop.f32.mrb[0].mxu0
      %v811 = vadd.f32 0.0, %v810
      %v812 = vpop.f32.mrb[0].mxu0
      %813 = vmatprep.mubr.bf16.mxu0 0
      %814 = vmatmul.mubr.bf16.gmra.mrb[0].mxu0 %v643
      %v815 = vpop.f32.mrb[0].mxu0
      %v816 = vadd.f32 0.0, %v815
      %v817 = vpop.f32.mrb[0].mxu0
      %v818 = vpop.f32.mrb[0].mxu0
      %v819 = vadd.f32 0.0, %v818
      %v820 = vpop.f32.mrb[0].mxu0
      %821 = vmatprep.mubr.bf16.mxu0 0
      %822 = vmatmul.mubr.bf16.gmra.mrb[0].mxu0 %v655
      %v823 = vpop.f32.mrb[0].mxu0
      %v824 = vadd.f32 0.0, %v823
      %v825 = vpop.f32.mrb[0].mxu0
      %v826 = vpop.f32.mrb[0].mxu0
      %v827 = vadd.f32 0.0, %v826
      %v828 = vpop.f32.mrb[0].mxu0
      %829 = vmatprep.mubr.bf16.mxu0 0
      %830 = vmatmul.mubr.bf16.gmra.mrb[0].mxu0 %v667
      %v831 = vpop.f32.mrb[0].mxu0
      %v832 = vadd.f32 0.0, %v831
      %v833 = vpop.f32.mrb[0].mxu0
      %v834 = vpop.f32.mrb[0].mxu0
      %v835 = vadd.f32 0.0, %v834
      %v836 = vpop.f32.mrb[0].mxu0
      %837 = vdwg.mxu0
      %v854 = vunpack.c.l.b16 %v555
      %v855 = vunpack.c.l.b16 %v556
      %v856 = vunpack.c.l.b16 %v557
      %v857 = vunpack.c.l.b16 %v558
      %v858 = vunpack.c.l.b16 %v559
      %v859 = vunpack.c.l.b16 %v560
      %v860 = vunpack.c.l.b16 %v561
      %v861 = vunpack.c.l.b16 %v562
      %v862 = vunpack.c.l.b16 %v563
      %v863 = vunpack.c.l.b16 %v564
      %v864 = vunpack.c.l.b16 %v565
      %v865 = vunpack.c.l.b16 %v566
      %v866 = vunpack.c.l.b16 %v567
      %v867 = vunpack.c.l.b16 %v568
      %v868 = vunpack.c.l.b16 %v569
      %v869 = vunpack.c.l.b16 %v570
      %v870 = vpack.c.b16 %v855, %v854
      %v871 = vpack.c.b16 %v857, %v856
      %v872 = vpack.c.b16 %v859, %v858
      %v873 = vpack.c.b16 %v861, %v860
      %v874 = vpack.c.b16 %v863, %v862
      %v875 = vpack.c.b16 %v865, %v864
      %v876 = vpack.c.b16 %v867, %v866
      %v877 = vpack.c.b16 %v869, %v868
      %886 = vmatprep.subr.bf16.mxu0 0
      %887 = vmatpush1.bf16.msra.mxu0 %v870
      %888 = vmatprep.subr.bf16.mxu0 0
      %889 = vmatpush1.bf16.msra.mxu0 %v871
      %890 = vmatprep.subr.bf16.mxu0 0
      %891 = vmatpush1.bf16.msra.mxu0 %v872
      %892 = vmatprep.subr.bf16.mxu0 0
      %893 = vmatpush1.bf16.msra.mxu0 %v873
      %894 = vmatprep.subr.bf16.mxu0 0
      %895 = vmatpush1.bf16.msra.mxu0 %v874
      %896 = vmatprep.subr.bf16.mxu0 0
      %897 = vmatpush1.bf16.msra.mxu0 %v875
      %898 = vmatprep.subr.bf16.mxu0 0
      %899 = vmatpush1.bf16.msra.mxu0 %v876
      %900 = vmatprep.subr.bf16.mxu0 0
      %901 = vmatpush1.bf16.msra.mxu0 %v877
      %902 = vmatprep.subr.bf16.mxu0 0
      %903 = vmatpush1.bf16.msra.mxu0 0
      %904 = vmatprep.subr.bf16.mxu0 0
      %905 = vmatpush1.bf16.msra.mxu0 0
      %906 = vmatprep.subr.bf16.mxu0 0
      %907 = vmatpush1.bf16.msra.mxu0 0
      %908 = vmatprep.subr.bf16.mxu0 0
      %909 = vmatpush1.bf16.msra.mxu0 0
      %910 = vmatprep.subr.bf16.mxu0 0
      %911 = vmatpush1.bf16.msra.mxu0 0
      %912 = vmatprep.subr.bf16.mxu0 0
      %913 = vmatpush1.bf16.msra.mxu0 0
      %914 = vmatprep.subr.bf16.mxu0 0
      %915 = vmatpush1.bf16.msra.mxu0 0
      %916 = vmatprep.subr.bf16.mxu0 0
      %917 = vmatpush1.bf16.msra.mxu0 0
      %918 = vmatprep.mubr.bf16.mxu0 0
      %919 = vmatmul.mubr.bf16.gmra.mrb[0].mxu0 %v535
      %v920 = vpop.f32.mrb[0].mxu0
      %v921 = vadd.f32 %v776, %v920
      %v922 = vpop.f32.mrb[0].mxu0
      %v923 = vpop.f32.mrb[0].mxu0
      %v924 = vadd.f32 %v779, %v923
      %v925 = vpop.f32.mrb[0].mxu0
      %926 = vmatprep.mubr.bf16.mxu0 0
      %927 = vmatmul.mubr.bf16.gmra.mrb[0].mxu0 %v537
      %v928 = vpop.f32.mrb[0].mxu0
      %v929 = vadd.f32 %v784, %v928
      %v930 = vpop.f32.mrb[0].mxu0
      %v931 = vpop.f32.mrb[0].mxu0
      %v932 = vadd.f32 %v787, %v931
      %v933 = vpop.f32.mrb[0].mxu0
      %934 = vmatprep.mubr.bf16.mxu0 0
      %935 = vmatmul.mubr.bf16.gmra.mrb[0].mxu0 %v539
      %v936 = vpop.f32.mrb[0].mxu0
      %v937 = vadd.f32 %v792, %v936
      %v938 = vpop.f32.mrb[0].mxu0
      %v939 = vpop.f32.mrb[0].mxu0
      %v940 = vadd.f32 %v795, %v939
      %v941 = vpop.f32.mrb[0].mxu0
      %942 = vmatprep.mubr.bf16.mxu0 0
      %943 = vmatmul.mubr.bf16.gmra.mrb[0].mxu0 %v541
      %v944 = vpop.f32.mrb[0].mxu0
      %v945 = vadd.f32 %v800, %v944
      %v946 = vpop.f32.mrb[0].mxu0
      %v947 = vpop.f32.mrb[0].mxu0
      %v948 = vadd.f32 %v803, %v947
      %v949 = vpop.f32.mrb[0].mxu0
      %950 = vmatprep.mubr.bf16.mxu0 0
      %951 = vmatmul.mubr.bf16.gmra.mrb[0].mxu0 %v543
      %v952 = vpop.f32.mrb[0].mxu0
      %v953 = vadd.f32 %v808, %v952
      %v954 = vpop.f32.mrb[0].mxu0
      %v955 = vpop.f32.mrb[0].mxu0
      %v956 = vadd.f32 %v811, %v955
      %v957 = vpop.f32.mrb[0].mxu0
      %958 = vmatprep.mubr.bf16.mxu0 0
      %959 = vmatmul.mubr.bf16.gmra.mrb[0].mxu0 %v545
      %v960 = vpop.f32.mrb[0].mxu0
      %v961 = vadd.f32 %v816, %v960
      %v962 = vpop.f32.mrb[0].mxu0
      %v963 = vpop.f32.mrb[0].mxu0
      %v964 = vadd.f32 %v819, %v963
      %v965 = vpop.f32.mrb[0].mxu0
      %966 = vmatprep.mubr.bf16.mxu0 0
      %967 = vmatmul.mubr.bf16.gmra.mrb[0].mxu0 %v547
      %v968 = vpop.f32.mrb[0].mxu0
      %v969 = vadd.f32 %v824, %v968
      %v970 = vpop.f32.mrb[0].mxu0
      %v971 = vpop.f32.mrb[0].mxu0
      %v972 = vadd.f32 %v827, %v971
      %v973 = vpop.f32.mrb[0].mxu0
      %974 = vmatprep.mubr.bf16.mxu0 0
      %975 = vmatmul.mubr.bf16.gmra.mrb[0].mxu0 %v549
      %v976 = vpop.f32.mrb[0].mxu0
      %v977 = vadd.f32 %v832, %v976
      %v978 = vpop.f32.mrb[0].mxu0
      %v979 = vpop.f32.mrb[0].mxu0
      %v980 = vadd.f32 %v835, %v979
      %v981 = vpop.f32.mrb[0].mxu0
      %982 = vdwg.mxu0
      %vm999 = vcmask 1046528
      %v1000 = vrot.slane %v535, 1
      %v1001 = vrot.slane %v536, 1
      %v1002 = vsel %vm999, %v1000, %v1001
      %v1003 = vrot.slane %v537, 1
      %v1004 = vrot.slane %v538, 1
      %v1005 = vsel %vm999, %v1003, %v1004
      %v1006 = vrot.slane %v539, 1
      %v1007 = vrot.slane %v540, 1
      %v1008 = vsel %vm999, %v1006, %v1007
      %v1009 = vrot.slane %v541, 1
      %v1010 = vrot.slane %v542, 1
      %v1011 = vsel %vm999, %v1009, %v1010
      %v1012 = vrot.slane %v543, 1
      %v1013 = vrot.slane %v544, 1
      %v1014 = vsel %vm999, %v1012, %v1013
      %v1015 = vrot.slane %v545, 1
      %v1016 = vrot.slane %v546, 1
      %v1017 = vsel %vm999, %v1015, %v1016
      %v1018 = vrot.slane %v547, 1
      %v1019 = vrot.slane %v548, 1
      %v1020 = vsel %vm999, %v1018, %v1019
      %v1021 = vrot.slane %v549, 1
      %v1022 = vrot.slane %v550, 1
      %v1023 = vsel %vm999, %v1021, %v1022
      %s1032 = scalar_lea.vmem %s3, 128
      %v1033 = vld [vmem:[%s1032] sm:$0xf]
      %v1034 = vld [vmem:[%s1032 + $0x4] sm:$0xf]
      %v1035 = vld [vmem:[%s1032 + $0x8] sm:$0xf]
      %v1036 = vld [vmem:[%s1032 + $0xc] sm:$0xf]
      %v1037 = vld [vmem:[%s1032 + $0x10] sm:$0xf]
      %v1038 = vld [vmem:[%s1032 + $0x14] sm:$0xf]
      %v1039 = vld [vmem:[%s1032 + $0x18] sm:$0xf]
      %v1040 = vld [vmem:[%s1032 + $0x1c] sm:$0xf]
      %v1041 = vld [vmem:[%s1032 + $0x20] sm:$0xf]
      %v1042 = vld [vmem:[%s1032 + $0x24] sm:$0xf]
      %v1043 = vld [vmem:[%s1032 + $0x28] sm:$0xf]
      %v1044 = vld [vmem:[%s1032 + $0x2c] sm:$0xf]
      %v1045 = vld [vmem:[%s1032 + $0x30] sm:$0xf]
      %v1046 = vld [vmem:[%s1032 + $0x34] sm:$0xf]
      %v1047 = vld [vmem:[%s1032 + $0x38] sm:$0xf]
      %v1048 = vld [vmem:[%s1032 + $0x3c] sm:$0xf]
      %v1065 = vunpack.c.l.b16 %v1033
      %v1066 = vunpack.c.l.b16 %v1034
      %v1067 = vunpack.c.l.b16 %v1035
      %v1068 = vunpack.c.l.b16 %v1036
      %v1069 = vunpack.c.l.b16 %v1037
      %v1070 = vunpack.c.l.b16 %v1038
      %v1071 = vunpack.c.l.b16 %v1039
      %v1072 = vunpack.c.l.b16 %v1040
      %v1073 = vunpack.c.l.b16 %v1041
      %v1074 = vunpack.c.l.b16 %v1042
      %v1075 = vunpack.c.l.b16 %v1043
      %v1076 = vunpack.c.l.b16 %v1044
      %v1077 = vunpack.c.l.b16 %v1045
      %v1078 = vunpack.c.l.b16 %v1046
      %v1079 = vunpack.c.l.b16 %v1047
      %v1080 = vunpack.c.l.b16 %v1048
      %v1081 = vpack.c.b16 %v1066, %v1065
      %v1082 = vpack.c.b16 %v1068, %v1067
      %v1083 = vpack.c.b16 %v1070, %v1069
      %v1084 = vpack.c.b16 %v1072, %v1071
      %v1085 = vpack.c.b16 %v1074, %v1073
      %v1086 = vpack.c.b16 %v1076, %v1075
      %v1087 = vpack.c.b16 %v1078, %v1077
      %v1088 = vpack.c.b16 %v1080, %v1079
      %1097 = vmatprep.subr.bf16.mxu0 0
      %1098 = vmatpush1.bf16.msra.mxu0 %v1081
      %1099 = vmatprep.subr.bf16.mxu0 0
      %1100 = vmatpush1.bf16.msra.mxu0 %v1082
      %1101 = vmatprep.subr.bf16.mxu0 0
      %1102 = vmatpush1.bf16.msra.mxu0 %v1083
      %1103 = vmatprep.subr.bf16.mxu0 0
      %1104 = vmatpush1.bf16.msra.mxu0 %v1084
      %1105 = vmatprep.subr.bf16.mxu0 0
      %1106 = vmatpush1.bf16.msra.mxu0 %v1085
      %1107 = vmatprep.subr.bf16.mxu0 0
      %1108 = vmatpush1.bf16.msra.mxu0 %v1086
      %1109 = vmatprep.subr.bf16.mxu0 0
      %1110 = vmatpush1.bf16.msra.mxu0 %v1087
      %1111 = vmatprep.subr.bf16.mxu0 0
      %1112 = vmatpush1.bf16.msra.mxu0 %v1088
      %1113 = vmatprep.subr.bf16.mxu0 0
      %1114 = vmatpush1.bf16.msra.mxu0 0
      %1115 = vmatprep.subr.bf16.mxu0 0
      %1116 = vmatpush1.bf16.msra.mxu0 0
      %1117 = vmatprep.subr.bf16.mxu0 0
      %1118 = vmatpush1.bf16.msra.mxu0 0
      %1119 = vmatprep.subr.bf16.mxu0 0
      %1120 = vmatpush1.bf16.msra.mxu0 0
      %1121 = vmatprep.subr.bf16.mxu0 0
      %1122 = vmatpush1.bf16.msra.mxu0 0
      %1123 = vmatprep.subr.bf16.mxu0 0
      %1124 = vmatpush1.bf16.msra.mxu0 0
      %1125 = vmatprep.subr.bf16.mxu0 0
      %1126 = vmatpush1.bf16.msra.mxu0 0
      %1127 = vmatprep.subr.bf16.mxu0 0
      %1128 = vmatpush1.bf16.msra.mxu0 0
      %1129 = vmatprep.mubr.bf16.mxu0 0
      %1130 = vmatmul.mubr.bf16.gmra.mrb[0].mxu0 %v1002
      %v1131 = vpop.f32.mrb[0].mxu0
      %v1132 = vadd.f32 0.0, %v1131
      %v1133 = vpop.f32.mrb[0].mxu0
      %v1134 = vpop.f32.mrb[0].mxu0
      %v1135 = vadd.f32 0.0, %v1134
      %v1136 = vpop.f32.mrb[0].mxu0
      %1137 = vmatprep.mubr.bf16.mxu0 0
      %1138 = vmatmul.mubr.bf16.gmra.mrb[0].mxu0 %v1005
      %v1139 = vpop.f32.mrb[0].mxu0
      %v1140 = vadd.f32 0.0, %v1139
      %v1141 = vpop.f32.mrb[0].mxu0
      %v1142 = vpop.f32.mrb[0].mxu0
      %v1143 = vadd.f32 0.0, %v1142
      %v1144 = vpop.f32.mrb[0].mxu0
      %1145 = vmatprep.mubr.bf16.mxu0 0
      %1146 = vmatmul.mubr.bf16.gmra.mrb[0].mxu0 %v1008
      %v1147 = vpop.f32.mrb[0].mxu0
      %v1148 = vadd.f32 0.0, %v1147
      %v1149 = vpop.f32.mrb[0].mxu0
      %v1150 = vpop.f32.mrb[0].mxu0
      %v1151 = vadd.f32 0.0, %v1150
      %v1152 = vpop.f32.mrb[0].mxu0
      %1153 = vmatprep.mubr.bf16.mxu0 0
      %1154 = vmatmul.mubr.bf16.gmra.mrb[0].mxu0 %v1011
      %v1155 = vpop.f32.mrb[0].mxu0
      %v1156 = vadd.f32 0.0, %v1155
      %v1157 = vpop.f32.mrb[0].mxu0
      %v1158 = vpop.f32.mrb[0].mxu0
      %v1159 = vadd.f32 0.0, %v1158
      %v1160 = vpop.f32.mrb[0].mxu0
      %1161 = vmatprep.mubr.bf16.mxu0 0
      %1162 = vmatmul.mubr.bf16.gmra.mrb[0].mxu0 %v1014
      %v1163 = vpop.f32.mrb[0].mxu0
      %v1164 = vadd.f32 0.0, %v1163
      %v1165 = vpop.f32.mrb[0].mxu0
      %v1166 = vpop.f32.mrb[0].mxu0
      %v1167 = vadd.f32 0.0, %v1166
      %v1168 = vpop.f32.mrb[0].mxu0
      %1169 = vmatprep.mubr.bf16.mxu0 0
      %1170 = vmatmul.mubr.bf16.gmra.mrb[0].mxu0 %v1017
      %v1171 = vpop.f32.mrb[0].mxu0
      %v1172 = vadd.f32 0.0, %v1171
      %v1173 = vpop.f32.mrb[0].mxu0
      %v1174 = vpop.f32.mrb[0].mxu0
      %v1175 = vadd.f32 0.0, %v1174
      %v1176 = vpop.f32.mrb[0].mxu0
      %1177 = vmatprep.mubr.bf16.mxu0 0
      %1178 = vmatmul.mubr.bf16.gmra.mrb[0].mxu0 %v1020
      %v1179 = vpop.f32.mrb[0].mxu0
      %v1180 = vadd.f32 0.0, %v1179
      %v1181 = vpop.f32.mrb[0].mxu0
      %v1182 = vpop.f32.mrb[0].mxu0
      %v1183 = vadd.f32 0.0, %v1182
      %v1184 = vpop.f32.mrb[0].mxu0
      %1185 = vmatprep.mubr.bf16.mxu0 0
      %1186 = vmatmul.mubr.bf16.gmra.mrb[0].mxu0 %v1023
      %v1187 = vpop.f32.mrb[0].mxu0
      %v1188 = vadd.f32 0.0, %v1187
      %v1189 = vpop.f32.mrb[0].mxu0
      %v1190 = vpop.f32.mrb[0].mxu0
      %v1191 = vadd.f32 0.0, %v1190
      %v1192 = vpop.f32.mrb[0].mxu0
      %1193 = vdwg.mxu0
      %v1194 = vadd.f32 %v921, %v1132
      %v1195 = vadd.f32 %v924, %v1135
      %v1196 = vadd.f32 %v929, %v1140
      %v1197 = vadd.f32 %v932, %v1143
      %v1198 = vadd.f32 %v937, %v1148
      %v1199 = vadd.f32 %v940, %v1151
      %v1200 = vadd.f32 %v945, %v1156
      %v1201 = vadd.f32 %v948, %v1159
      %v1202 = vadd.f32 %v953, %v1164
      %v1203 = vadd.f32 %v956, %v1167
      %v1204 = vadd.f32 %v961, %v1172
      %v1205 = vadd.f32 %v964, %v1175
      %v1206 = vadd.f32 %v969, %v1180
      %v1207 = vadd.f32 %v972, %v1183
      %v1208 = vadd.f32 %v977, %v1188
      %v1209 = vadd.f32 %v980, %v1191
      %s1210 = scalar_lea.vmem %s3, 192
      %v1211 = vld [vmem:[%s1210] sm:$0xf]
      %v1212 = vld [vmem:[%s1210 + $0x4] sm:$0xf]
      %v1213 = vld [vmem:[%s1210 + $0x8] sm:$0xf]
      %v1214 = vld [vmem:[%s1210 + $0xc] sm:$0xf]
      %v1215 = vld [vmem:[%s1210 + $0x10] sm:$0xf]
      %v1216 = vld [vmem:[%s1210 + $0x14] sm:$0xf]
      %v1217 = vld [vmem:[%s1210 + $0x18] sm:$0xf]
      %v1218 = vld [vmem:[%s1210 + $0x1c] sm:$0xf]
      %v1219 = vld [vmem:[%s1210 + $0x20] sm:$0xf]
      %v1220 = vld [vmem:[%s1210 + $0x24] sm:$0xf]
      %v1221 = vld [vmem:[%s1210 + $0x28] sm:$0xf]
      %v1222 = vld [vmem:[%s1210 + $0x2c] sm:$0xf]
      %v1223 = vld [vmem:[%s1210 + $0x30] sm:$0xf]
      %v1224 = vld [vmem:[%s1210 + $0x34] sm:$0xf]
      %v1225 = vld [vmem:[%s1210 + $0x38] sm:$0xf]
      %v1226 = vld [vmem:[%s1210 + $0x3c] sm:$0xf]
      %v1243 = vunpack.c.l.b16 %v1211
      %v1244 = vunpack.c.l.b16 %v1212
      %v1245 = vunpack.c.l.b16 %v1213
      %v1246 = vunpack.c.l.b16 %v1214
      %v1247 = vunpack.c.l.b16 %v1215
      %v1248 = vunpack.c.l.b16 %v1216
      %v1249 = vunpack.c.l.b16 %v1217
      %v1250 = vunpack.c.l.b16 %v1218
      %v1251 = vunpack.c.l.b16 %v1219
      %v1252 = vunpack.c.l.b16 %v1220
      %v1253 = vunpack.c.l.b16 %v1221
      %v1254 = vunpack.c.l.b16 %v1222
      %v1255 = vunpack.c.l.b16 %v1223
      %v1256 = vunpack.c.l.b16 %v1224
      %v1257 = vunpack.c.l.b16 %v1225
      %v1258 = vunpack.c.l.b16 %v1226
      %v1259 = vpack.c.b16 %v1244, %v1243
      %v1260 = vpack.c.b16 %v1246, %v1245
      %v1261 = vpack.c.b16 %v1248, %v1247
      %v1262 = vpack.c.b16 %v1250, %v1249
      %v1263 = vpack.c.b16 %v1252, %v1251
      %v1264 = vpack.c.b16 %v1254, %v1253
      %v1265 = vpack.c.b16 %v1256, %v1255
      %v1266 = vpack.c.b16 %v1258, %v1257
      %1275 = vmatprep.subr.bf16.mxu0 0
      %1276 = vmatpush1.bf16.msra.mxu0 %v1259
      %1277 = vmatprep.subr.bf16.mxu0 0
      %1278 = vmatpush1.bf16.msra.mxu0 %v1260
      %1279 = vmatprep.subr.bf16.mxu0 0
      %1280 = vmatpush1.bf16.msra.mxu0 %v1261
      %1281 = vmatprep.subr.bf16.mxu0 0
      %1282 = vmatpush1.bf16.msra.mxu0 %v1262
      %1283 = vmatprep.subr.bf16.mxu0 0
      %1284 = vmatpush1.bf16.msra.mxu0 %v1263
      %1285 = vmatprep.subr.bf16.mxu0 0
      %1286 = vmatpush1.bf16.msra.mxu0 %v1264
      %1287 = vmatprep.subr.bf16.mxu0 0
      %1288 = vmatpush1.bf16.msra.mxu0 %v1265
      %1289 = vmatprep.subr.bf16.mxu0 0
      %1290 = vmatpush1.bf16.msra.mxu0 %v1266
      %1291 = vmatprep.subr.bf16.mxu0 0
      %1292 = vmatpush1.bf16.msra.mxu0 0
      %1293 = vmatprep.subr.bf16.mxu0 0
      %1294 = vmatpush1.bf16.msra.mxu0 0
      %1295 = vmatprep.subr.bf16.mxu0 0
      %1296 = vmatpush1.bf16.msra.mxu0 0
      %1297 = vmatprep.subr.bf16.mxu0 0
      %1298 = vmatpush1.bf16.msra.mxu0 0
      %1299 = vmatprep.subr.bf16.mxu0 0
      %1300 = vmatpush1.bf16.msra.mxu0 0
      %1301 = vmatprep.subr.bf16.mxu0 0
      %1302 = vmatpush1.bf16.msra.mxu0 0
      %1303 = vmatprep.subr.bf16.mxu0 0
      %1304 = vmatpush1.bf16.msra.mxu0 0
      %1305 = vmatprep.subr.bf16.mxu0 0
      %1306 = vmatpush1.bf16.msra.mxu0 0
      %1307 = vmatprep.mubr.bf16.mxu0 0
      %1308 = vmatmul.mubr.bf16.gmra.mrb[0].mxu0 %v537
      %v1309 = vpop.f32.mrb[0].mxu0
      %v1310 = vadd.f32 0.0, %v1309
      %v1311 = vpop.f32.mrb[0].mxu0
      %v1312 = vpop.f32.mrb[0].mxu0
      %v1313 = vadd.f32 0.0, %v1312
      %v1314 = vpop.f32.mrb[0].mxu0
      %1315 = vmatprep.mubr.bf16.mxu0 0
      %1316 = vmatmul.mubr.bf16.gmra.mrb[0].mxu0 %v539
      %v1317 = vpop.f32.mrb[0].mxu0
      %v1318 = vadd.f32 0.0, %v1317
      %v1319 = vpop.f32.mrb[0].mxu0
      %v1320 = vpop.f32.mrb[0].mxu0
      %v1321 = vadd.f32 0.0, %v1320
      %v1322 = vpop.f32.mrb[0].mxu0
      %1323 = vmatprep.mubr.bf16.mxu0 0
      %1324 = vmatmul.mubr.bf16.gmra.mrb[0].mxu0 %v541
      %v1325 = vpop.f32.mrb[0].mxu0
      %v1326 = vadd.f32 0.0, %v1325
      %v1327 = vpop.f32.mrb[0].mxu0
      %v1328 = vpop.f32.mrb[0].mxu0
      %v1329 = vadd.f32 0.0, %v1328
      %v1330 = vpop.f32.mrb[0].mxu0
      %1331 = vmatprep.mubr.bf16.mxu0 0
      %1332 = vmatmul.mubr.bf16.gmra.mrb[0].mxu0 %v543
      %v1333 = vpop.f32.mrb[0].mxu0
      %v1334 = vadd.f32 0.0, %v1333
      %v1335 = vpop.f32.mrb[0].mxu0
      %v1336 = vpop.f32.mrb[0].mxu0
      %v1337 = vadd.f32 0.0, %v1336
      %v1338 = vpop.f32.mrb[0].mxu0
      %1339 = vmatprep.mubr.bf16.mxu0 0
      %1340 = vmatmul.mubr.bf16.gmra.mrb[0].mxu0 %v545
      %v1341 = vpop.f32.mrb[0].mxu0
      %v1342 = vadd.f32 0.0, %v1341
      %v1343 = vpop.f32.mrb[0].mxu0
      %v1344 = vpop.f32.mrb[0].mxu0
      %v1345 = vadd.f32 0.0, %v1344
      %v1346 = vpop.f32.mrb[0].mxu0
      %1347 = vmatprep.mubr.bf16.mxu0 0
      %1348 = vmatmul.mubr.bf16.gmra.mrb[0].mxu0 %v547
      %v1349 = vpop.f32.mrb[0].mxu0
      %v1350 = vadd.f32 0.0, %v1349
      %v1351 = vpop.f32.mrb[0].mxu0
      %v1352 = vpop.f32.mrb[0].mxu0
      %v1353 = vadd.f32 0.0, %v1352
      %v1354 = vpop.f32.mrb[0].mxu0
      %1355 = vmatprep.mubr.bf16.mxu0 0
      %1356 = vmatmul.mubr.bf16.gmra.mrb[0].mxu0 %v549
      %v1357 = vpop.f32.mrb[0].mxu0
      %v1358 = vadd.f32 0.0, %v1357
      %v1359 = vpop.f32.mrb[0].mxu0
      %v1360 = vpop.f32.mrb[0].mxu0
      %v1361 = vadd.f32 0.0, %v1360
      %v1362 = vpop.f32.mrb[0].mxu0
      %1363 = vmatprep.mubr.bf16.mxu0 0
      %1364 = vmatmul.mubr.bf16.gmra.mrb[0].mxu0 %v551
      %v1365 = vpop.f32.mrb[0].mxu0
      %v1366 = vadd.f32 0.0, %v1365
      %v1367 = vpop.f32.mrb[0].mxu0
      %v1368 = vpop.f32.mrb[0].mxu0
      %v1369 = vadd.f32 0.0, %v1368
      %v1370 = vpop.f32.mrb[0].mxu0
      %1371 = vdwg.mxu0
      %v1372 = vadd.f32 %v1194, %v1310
      %v1373 = vadd.f32 %v1195, %v1313
      %v1374 = vadd.f32 %v1196, %v1318
      %v1375 = vadd.f32 %v1197, %v1321
      %v1376 = vadd.f32 %v1198, %v1326
      %v1377 = vadd.f32 %v1199, %v1329
      %v1378 = vadd.f32 %v1200, %v1334
      %v1379 = vadd.f32 %v1201, %v1337
      %v1380 = vadd.f32 %v1202, %v1342
      %v1381 = vadd.f32 %v1203, %v1345
      %v1382 = vadd.f32 %v1204, %v1350
      %v1383 = vadd.f32 %v1205, %v1353
      %v1384 = vadd.f32 %v1206, %v1358
      %v1385 = vadd.f32 %v1207, %v1361
      %v1386 = vadd.f32 %v1208, %v1366
      %v1387 = vadd.f32 %v1209, %v1369
      %v1389 = vshrl.u32 %v551, 16
      %v1391 = vshll.u32 %v551, 16
      %v1393 = vrot.slane %v1391, 1
      %v1394 = vor.u32 %v1389, %v1393
      %v1396 = vshll.u32 %v552, 16
      %v1398 = vrot.slane %v1396, 1
      %v1399 = vsel %vm571, %v1394, %v1398
      %s1401 = scalar_lea.vmem %s3, 256
      %v1402 = vld [vmem:[%s1401] sm:$0xf]
      %v1403 = vld [vmem:[%s1401 + $0x4] sm:$0xf]
      %v1404 = vld [vmem:[%s1401 + $0x8] sm:$0xf]
      %v1405 = vld [vmem:[%s1401 + $0xc] sm:$0xf]
      %v1406 = vld [vmem:[%s1401 + $0x10] sm:$0xf]
      %v1407 = vld [vmem:[%s1401 + $0x14] sm:$0xf]
      %v1408 = vld [vmem:[%s1401 + $0x18] sm:$0xf]
      %v1409 = vld [vmem:[%s1401 + $0x1c] sm:$0xf]
      %v1410 = vld [vmem:[%s1401 + $0x20] sm:$0xf]
      %v1411 = vld [vmem:[%s1401 + $0x24] sm:$0xf]
      %v1412 = vld [vmem:[%s1401 + $0x28] sm:$0xf]
      %v1413 = vld [vmem:[%s1401 + $0x2c] sm:$0xf]
      %v1414 = vld [vmem:[%s1401 + $0x30] sm:$0xf]
      %v1415 = vld [vmem:[%s1401 + $0x34] sm:$0xf]
      %v1416 = vld [vmem:[%s1401 + $0x38] sm:$0xf]
      %v1417 = vld [vmem:[%s1401 + $0x3c] sm:$0xf]
      %v1434 = vunpack.c.l.b16 %v1402
      %v1435 = vunpack.c.l.b16 %v1403
      %v1436 = vunpack.c.l.b16 %v1404
      %v1437 = vunpack.c.l.b16 %v1405
      %v1438 = vunpack.c.l.b16 %v1406
      %v1439 = vunpack.c.l.b16 %v1407
      %v1440 = vunpack.c.l.b16 %v1408
      %v1441 = vunpack.c.l.b16 %v1409
      %v1442 = vunpack.c.l.b16 %v1410
      %v1443 = vunpack.c.l.b16 %v1411
      %v1444 = vunpack.c.l.b16 %v1412
      %v1445 = vunpack.c.l.b16 %v1413
      %v1446 = vunpack.c.l.b16 %v1414
      %v1447 = vunpack.c.l.b16 %v1415
      %v1448 = vunpack.c.l.b16 %v1416
      %v1449 = vunpack.c.l.b16 %v1417
      %v1450 = vpack.c.b16 %v1435, %v1434
      %v1451 = vpack.c.b16 %v1437, %v1436
      %v1452 = vpack.c.b16 %v1439, %v1438
      %v1453 = vpack.c.b16 %v1441, %v1440
      %v1454 = vpack.c.b16 %v1443, %v1442
      %v1455 = vpack.c.b16 %v1445, %v1444
      %v1456 = vpack.c.b16 %v1447, %v1446
      %v1457 = vpack.c.b16 %v1449, %v1448
      %1466 = vmatprep.subr.bf16.mxu0 0
      %1467 = vmatpush1.bf16.msra.mxu0 %v1450
      %1468 = vmatprep.subr.bf16.mxu0 0
      %1469 = vmatpush1.bf16.msra.mxu0 %v1451
      %1470 = vmatprep.subr.bf16.mxu0 0
      %1471 = vmatpush1.bf16.msra.mxu0 %v1452
      %1472 = vmatprep.subr.bf16.mxu0 0
      %1473 = vmatpush1.bf16.msra.mxu0 %v1453
      %1474 = vmatprep.subr.bf16.mxu0 0
      %1475 = vmatpush1.bf16.msra.mxu0 %v1454
      %1476 = vmatprep.subr.bf16.mxu0 0
      %1477 = vmatpush1.bf16.msra.mxu0 %v1455
      %1478 = vmatprep.subr.bf16.mxu0 0
      %1479 = vmatpush1.bf16.msra.mxu0 %v1456
      %1480 = vmatprep.subr.bf16.mxu0 0
      %1481 = vmatpush1.bf16.msra.mxu0 %v1457
      %1482 = vmatprep.subr.bf16.mxu0 0
      %1483 = vmatpush1.bf16.msra.mxu0 0
      %1484 = vmatprep.subr.bf16.mxu0 0
      %1485 = vmatpush1.bf16.msra.mxu0 0
      %1486 = vmatprep.subr.bf16.mxu0 0
      %1487 = vmatpush1.bf16.msra.mxu0 0
      %1488 = vmatprep.subr.bf16.mxu0 0
      %1489 = vmatpush1.bf16.msra.mxu0 0
      %1490 = vmatprep.subr.bf16.mxu0 0
      %1491 = vmatpush1.bf16.msra.mxu0 0
      %1492 = vmatprep.subr.bf16.mxu0 0
      %1493 = vmatpush1.bf16.msra.mxu0 0
      %1494 = vmatprep.subr.bf16.mxu0 0
      %1495 = vmatpush1.bf16.msra.mxu0 0
      %1496 = vmatprep.subr.bf16.mxu0 0
      %1497 = vmatpush1.bf16.msra.mxu0 0
      %1498 = vmatprep.mubr.bf16.mxu0 0
      %1499 = vmatmul.mubr.bf16.gmra.mrb[0].mxu0 %v595
      %v1500 = vpop.f32.mrb[0].mxu0
      %v1501 = vadd.f32 0.0, %v1500
      %v1502 = vpop.f32.mrb[0].mxu0
      %v1503 = vpop.f32.mrb[0].mxu0
      %v1504 = vadd.f32 0.0, %v1503
      %v1505 = vpop.f32.mrb[0].mxu0
      %1506 = vmatprep.mubr.bf16.mxu0 0
      %1507 = vmatmul.mubr.bf16.gmra.mrb[0].mxu0 %v607
      %v1508 = vpop.f32.mrb[0].mxu0
      %v1509 = vadd.f32 0.0, %v1508
      %v1510 = vpop.f32.mrb[0].mxu0
      %v1511 = vpop.f32.mrb[0].mxu0
      %v1512 = vadd.f32 0.0, %v1511
      %v1513 = vpop.f32.mrb[0].mxu0
      %1514 = vmatprep.mubr.bf16.mxu0 0
      %1515 = vmatmul.mubr.bf16.gmra.mrb[0].mxu0 %v619
      %v1516 = vpop.f32.mrb[0].mxu0
      %v1517 = vadd.f32 0.0, %v1516
      %v1518 = vpop.f32.mrb[0].mxu0
      %v1519 = vpop.f32.mrb[0].mxu0
      %v1520 = vadd.f32 0.0, %v1519
      %v1521 = vpop.f32.mrb[0].mxu0
      %1522 = vmatprep.mubr.bf16.mxu0 0
      %1523 = vmatmul.mubr.bf16.gmra.mrb[0].mxu0 %v631
      %v1524 = vpop.f32.mrb[0].mxu0
      %v1525 = vadd.f32 0.0, %v1524
      %v1526 = vpop.f32.mrb[0].mxu0
      %v1527 = vpop.f32.mrb[0].mxu0
      %v1528 = vadd.f32 0.0, %v1527
      %v1529 = vpop.f32.mrb[0].mxu0
      %1530 = vmatprep.mubr.bf16.mxu0 0
      %1531 = vmatmul.mubr.bf16.gmra.mrb[0].mxu0 %v643
      %v1532 = vpop.f32.mrb[0].mxu0
      %v1533 = vadd.f32 0.0, %v1532
      %v1534 = vpop.f32.mrb[0].mxu0
      %v1535 = vpop.f32.mrb[0].mxu0
      %v1536 = vadd.f32 0.0, %v1535
      %v1537 = vpop.f32.mrb[0].mxu0
      %1538 = vmatprep.mubr.bf16.mxu0 0
      %1539 = vmatmul.mubr.bf16.gmra.mrb[0].mxu0 %v655
      %v1540 = vpop.f32.mrb[0].mxu0
      %v1541 = vadd.f32 0.0, %v1540
      %v1542 = vpop.f32.mrb[0].mxu0
      %v1543 = vpop.f32.mrb[0].mxu0
      %v1544 = vadd.f32 0.0, %v1543
      %v1545 = vpop.f32.mrb[0].mxu0
      %1546 = vmatprep.mubr.bf16.mxu0 0
      %1547 = vmatmul.mubr.bf16.gmra.mrb[0].mxu0 %v667
      %v1548 = vpop.f32.mrb[0].mxu0
      %v1549 = vadd.f32 0.0, %v1548
      %v1550 = vpop.f32.mrb[0].mxu0
      %v1551 = vpop.f32.mrb[0].mxu0
      %v1552 = vadd.f32 0.0, %v1551
      %v1553 = vpop.f32.mrb[0].mxu0
      %1554 = vmatprep.mubr.bf16.mxu0 0
      %1555 = vmatmul.mubr.bf16.gmra.mrb[0].mxu0 %v1399
      %v1556 = vpop.f32.mrb[0].mxu0
      %v1557 = vadd.f32 0.0, %v1556
      %v1558 = vpop.f32.mrb[0].mxu0
      %v1559 = vpop.f32.mrb[0].mxu0
      %v1560 = vadd.f32 0.0, %v1559
      %v1561 = vpop.f32.mrb[0].mxu0
      %1562 = vdwg.mxu0
      %v1563 = vadd.f32 %v1372, %v1501
      %v1564 = vadd.f32 %v1373, %v1504
      %v1565 = vadd.f32 %v1374, %v1509
      %v1566 = vadd.f32 %v1375, %v1512
      %v1567 = vadd.f32 %v1376, %v1517
      %v1568 = vadd.f32 %v1377, %v1520
      %v1569 = vadd.f32 %v1378, %v1525
      %v1570 = vadd.f32 %v1379, %v1528
      %v1571 = vadd.f32 %v1380, %v1533
      %v1572 = vadd.f32 %v1381, %v1536
      %v1573 = vadd.f32 %v1382, %v1541
      %v1574 = vadd.f32 %v1383, %v1544
      %v1575 = vadd.f32 %v1384, %v1549
      %v1576 = vadd.f32 %v1385, %v1552
      %v1577 = vadd.f32 %v1386, %v1557
      %v1578 = vadd.f32 %v1387, %v1560
      %v1581 = vrot.slane %v551, 1
      %v1582 = vrot.slane %v552, 1
      %v1583 = vsel %vm999, %v1581, %v1582
      %s1585 = scalar_lea.vmem %s3, 320
      %v1586 = vld [vmem:[%s1585] sm:$0xf]
      %v1587 = vld [vmem:[%s1585 + $0x4] sm:$0xf]
      %v1588 = vld [vmem:[%s1585 + $0x8] sm:$0xf]
      %v1589 = vld [vmem:[%s1585 + $0xc] sm:$0xf]
      %v1590 = vld [vmem:[%s1585 + $0x10] sm:$0xf]
      %v1591 = vld [vmem:[%s1585 + $0x14] sm:$0xf]
      %v1592 = vld [vmem:[%s1585 + $0x18] sm:$0xf]
      %v1593 = vld [vmem:[%s1585 + $0x1c] sm:$0xf]
      %v1594 = vld [vmem:[%s1585 + $0x20] sm:$0xf]
      %v1595 = vld [vmem:[%s1585 + $0x24] sm:$0xf]
      %v1596 = vld [vmem:[%s1585 + $0x28] sm:$0xf]
      %v1597 = vld [vmem:[%s1585 + $0x2c] sm:$0xf]
      %v1598 = vld [vmem:[%s1585 + $0x30] sm:$0xf]
      %v1599 = vld [vmem:[%s1585 + $0x34] sm:$0xf]
      %v1600 = vld [vmem:[%s1585 + $0x38] sm:$0xf]
      %v1601 = vld [vmem:[%s1585 + $0x3c] sm:$0xf]
      %v1618 = vunpack.c.l.b16 %v1586
      %v1619 = vunpack.c.l.b16 %v1587
      %v1620 = vunpack.c.l.b16 %v1588
      %v1621 = vunpack.c.l.b16 %v1589
      %v1622 = vunpack.c.l.b16 %v1590
      %v1623 = vunpack.c.l.b16 %v1591
      %v1624 = vunpack.c.l.b16 %v1592
      %v1625 = vunpack.c.l.b16 %v1593
      %v1626 = vunpack.c.l.b16 %v1594
      %v1627 = vunpack.c.l.b16 %v1595
      %v1628 = vunpack.c.l.b16 %v1596
      %v1629 = vunpack.c.l.b16 %v1597
      %v1630 = vunpack.c.l.b16 %v1598
      %v1631 = vunpack.c.l.b16 %v1599
      %v1632 = vunpack.c.l.b16 %v1600
      %v1633 = vunpack.c.l.b16 %v1601
      %v1634 = vpack.c.b16 %v1619, %v1618
      %v1635 = vpack.c.b16 %v1621, %v1620
      %v1636 = vpack.c.b16 %v1623, %v1622
      %v1637 = vpack.c.b16 %v1625, %v1624
      %v1638 = vpack.c.b16 %v1627, %v1626
      %v1639 = vpack.c.b16 %v1629, %v1628
      %v1640 = vpack.c.b16 %v1631, %v1630
      %v1641 = vpack.c.b16 %v1633, %v1632
      %1650 = vmatprep.subr.bf16.mxu0 0
      %1651 = vmatpush1.bf16.msra.mxu0 %v1634
      %1652 = vmatprep.subr.bf16.mxu0 0
      %1653 = vmatpush1.bf16.msra.mxu0 %v1635
      %1654 = vmatprep.subr.bf16.mxu0 0
      %1655 = vmatpush1.bf16.msra.mxu0 %v1636
      %1656 = vmatprep.subr.bf16.mxu0 0
      %1657 = vmatpush1.bf16.msra.mxu0 %v1637
      %1658 = vmatprep.subr.bf16.mxu0 0
      %1659 = vmatpush1.bf16.msra.mxu0 %v1638
      %1660 = vmatprep.subr.bf16.mxu0 0
      %1661 = vmatpush1.bf16.msra.mxu0 %v1639
      %1662 = vmatprep.subr.bf16.mxu0 0
      %1663 = vmatpush1.bf16.msra.mxu0 %v1640
      %1664 = vmatprep.subr.bf16.mxu0 0
      %1665 = vmatpush1.bf16.msra.mxu0 %v1641
      %1666 = vmatprep.subr.bf16.mxu0 0
      %1667 = vmatpush1.bf16.msra.mxu0 0
      %1668 = vmatprep.subr.bf16.mxu0 0
      %1669 = vmatpush1.bf16.msra.mxu0 0
      %1670 = vmatprep.subr.bf16.mxu0 0
      %1671 = vmatpush1.bf16.msra.mxu0 0
      %1672 = vmatprep.subr.bf16.mxu0 0
      %1673 = vmatpush1.bf16.msra.mxu0 0
      %1674 = vmatprep.subr.bf16.mxu0 0
      %1675 = vmatpush1.bf16.msra.mxu0 0
      %1676 = vmatprep.subr.bf16.mxu0 0
      %1677 = vmatpush1.bf16.msra.mxu0 0
      %1678 = vmatprep.subr.bf16.mxu0 0
      %1679 = vmatpush1.bf16.msra.mxu0 0
      %1680 = vmatprep.subr.bf16.mxu0 0
      %1681 = vmatpush1.bf16.msra.mxu0 0
      %1682 = vmatprep.mubr.bf16.mxu0 0
      %1683 = vmatmul.mubr.bf16.gmra.mrb[0].mxu0 %v1005
      %v1684 = vpop.f32.mrb[0].mxu0
      %v1685 = vadd.f32 0.0, %v1684
      %v1686 = vpop.f32.mrb[0].mxu0
      %v1687 = vpop.f32.mrb[0].mxu0
      %v1688 = vadd.f32 0.0, %v1687
      %v1689 = vpop.f32.mrb[0].mxu0
      %1690 = vmatprep.mubr.bf16.mxu0 0
      %1691 = vmatmul.mubr.bf16.gmra.mrb[0].mxu0 %v1008
      %v1692 = vpop.f32.mrb[0].mxu0
      %v1693 = vadd.f32 0.0, %v1692
      %v1694 = vpop.f32.mrb[0].mxu0
      %v1695 = vpop.f32.mrb[0].mxu0
      %v1696 = vadd.f32 0.0, %v1695
      %v1697 = vpop.f32.mrb[0].mxu0
      %1698 = vmatprep.mubr.bf16.mxu0 0
      %1699 = vmatmul.mubr.bf16.gmra.mrb[0].mxu0 %v1011
      %v1700 = vpop.f32.mrb[0].mxu0
      %v1701 = vadd.f32 0.0, %v1700
      %v1702 = vpop.f32.mrb[0].mxu0
      %v1703 = vpop.f32.mrb[0].mxu0
      %v1704 = vadd.f32 0.0, %v1703
      %v1705 = vpop.f32.mrb[0].mxu0
      %1706 = vmatprep.mubr.bf16.mxu0 0
      %1707 = vmatmul.mubr.bf16.gmra.mrb[0].mxu0 %v1014
      %v1708 = vpop.f32.mrb[0].mxu0
      %v1709 = vadd.f32 0.0, %v1708
      %v1710 = vpop.f32.mrb[0].mxu0
      %v1711 = vpop.f32.mrb[0].mxu0
      %v1712 = vadd.f32 0.0, %v1711
      %v1713 = vpop.f32.mrb[0].mxu0
      %1714 = vmatprep.mubr.bf16.mxu0 0
      %1715 = vmatmul.mubr.bf16.gmra.mrb[0].mxu0 %v1017
      %v1716 = vpop.f32.mrb[0].mxu0
      %v1717 = vadd.f32 0.0, %v1716
      %v1718 = vpop.f32.mrb[0].mxu0
      %v1719 = vpop.f32.mrb[0].mxu0
      %v1720 = vadd.f32 0.0, %v1719
      %v1721 = vpop.f32.mrb[0].mxu0
      %1722 = vmatprep.mubr.bf16.mxu0 0
      %1723 = vmatmul.mubr.bf16.gmra.mrb[0].mxu0 %v1020
      %v1724 = vpop.f32.mrb[0].mxu0
      %v1725 = vadd.f32 0.0, %v1724
      %v1726 = vpop.f32.mrb[0].mxu0
      %v1727 = vpop.f32.mrb[0].mxu0
      %v1728 = vadd.f32 0.0, %v1727
      %v1729 = vpop.f32.mrb[0].mxu0
      %1730 = vmatprep.mubr.bf16.mxu0 0
      %1731 = vmatmul.mubr.bf16.gmra.mrb[0].mxu0 %v1023
      %v1732 = vpop.f32.mrb[0].mxu0
      %v1733 = vadd.f32 0.0, %v1732
      %v1734 = vpop.f32.mrb[0].mxu0
      %v1735 = vpop.f32.mrb[0].mxu0
      %v1736 = vadd.f32 0.0, %v1735
      %v1737 = vpop.f32.mrb[0].mxu0
      %1738 = vmatprep.mubr.bf16.mxu0 0
      %1739 = vmatmul.mubr.bf16.gmra.mrb[0].mxu0 %v1583
      %v1740 = vpop.f32.mrb[0].mxu0
      %v1741 = vadd.f32 0.0, %v1740
      %v1742 = vpop.f32.mrb[0].mxu0
      %v1743 = vpop.f32.mrb[0].mxu0
      %v1744 = vadd.f32 0.0, %v1743
      %v1745 = vpop.f32.mrb[0].mxu0
      %1746 = vdwg.mxu0
      %v1747 = vadd.f32 %v1563, %v1685
      %v1748 = vadd.f32 %v1564, %v1688
      %v1749 = vadd.f32 %v1565, %v1693
      %v1750 = vadd.f32 %v1566, %v1696
      %v1751 = vadd.f32 %v1567, %v1701
      %v1752 = vadd.f32 %v1568, %v1704
      %v1753 = vadd.f32 %v1569, %v1709
      %v1754 = vadd.f32 %v1570, %v1712
      %v1755 = vadd.f32 %v1571, %v1717
      %v1756 = vadd.f32 %v1572, %v1720
      %v1757 = vadd.f32 %v1573, %v1725
      %v1758 = vadd.f32 %v1574, %v1728
      %v1759 = vadd.f32 %v1575, %v1733
      %v1760 = vadd.f32 %v1576, %v1736
      %v1761 = vadd.f32 %v1577, %v1741
      %v1762 = vadd.f32 %v1578, %v1744
      %s1763 = scalar_lea.vmem %s3, 384
      %v1764 = vld [vmem:[%s1763] sm:$0xf]
      %v1765 = vld [vmem:[%s1763 + $0x4] sm:$0xf]
      %v1766 = vld [vmem:[%s1763 + $0x8] sm:$0xf]
      %v1767 = vld [vmem:[%s1763 + $0xc] sm:$0xf]
      %v1768 = vld [vmem:[%s1763 + $0x10] sm:$0xf]
      %v1769 = vld [vmem:[%s1763 + $0x14] sm:$0xf]
      %v1770 = vld [vmem:[%s1763 + $0x18] sm:$0xf]
      %v1771 = vld [vmem:[%s1763 + $0x1c] sm:$0xf]
      %v1772 = vld [vmem:[%s1763 + $0x20] sm:$0xf]
      %v1773 = vld [vmem:[%s1763 + $0x24] sm:$0xf]
      %v1774 = vld [vmem:[%s1763 + $0x28] sm:$0xf]
      %v1775 = vld [vmem:[%s1763 + $0x2c] sm:$0xf]
      %v1776 = vld [vmem:[%s1763 + $0x30] sm:$0xf]
      %v1777 = vld [vmem:[%s1763 + $0x34] sm:$0xf]
      %v1778 = vld [vmem:[%s1763 + $0x38] sm:$0xf]
      %v1779 = vld [vmem:[%s1763 + $0x3c] sm:$0xf]
      %v1796 = vunpack.c.l.b16 %v1764
      %v1797 = vunpack.c.l.b16 %v1765
      %v1798 = vunpack.c.l.b16 %v1766
      %v1799 = vunpack.c.l.b16 %v1767
      %v1800 = vunpack.c.l.b16 %v1768
      %v1801 = vunpack.c.l.b16 %v1769
      %v1802 = vunpack.c.l.b16 %v1770
      %v1803 = vunpack.c.l.b16 %v1771
      %v1804 = vunpack.c.l.b16 %v1772
      %v1805 = vunpack.c.l.b16 %v1773
      %v1806 = vunpack.c.l.b16 %v1774
      %v1807 = vunpack.c.l.b16 %v1775
      %v1808 = vunpack.c.l.b16 %v1776
      %v1809 = vunpack.c.l.b16 %v1777
      %v1810 = vunpack.c.l.b16 %v1778
      %v1811 = vunpack.c.l.b16 %v1779
      %v1812 = vpack.c.b16 %v1797, %v1796
      %v1813 = vpack.c.b16 %v1799, %v1798
      %v1814 = vpack.c.b16 %v1801, %v1800
      %v1815 = vpack.c.b16 %v1803, %v1802
      %v1816 = vpack.c.b16 %v1805, %v1804
      %v1817 = vpack.c.b16 %v1807, %v1806
      %v1818 = vpack.c.b16 %v1809, %v1808
      %v1819 = vpack.c.b16 %v1811, %v1810
      %1828 = vmatprep.subr.bf16.mxu0 0
      %1829 = vmatpush1.bf16.msra.mxu0 %v1812
      %1830 = vmatprep.subr.bf16.mxu0 0
      %1831 = vmatpush1.bf16.msra.mxu0 %v1813
      %1832 = vmatprep.subr.bf16.mxu0 0
      %1833 = vmatpush1.bf16.msra.mxu0 %v1814
      %1834 = vmatprep.subr.bf16.mxu0 0
      %1835 = vmatpush1.bf16.msra.mxu0 %v1815
      %1836 = vmatprep.subr.bf16.mxu0 0
      %1837 = vmatpush1.bf16.msra.mxu0 %v1816
      %1838 = vmatprep.subr.bf16.mxu0 0
      %1839 = vmatpush1.bf16.msra.mxu0 %v1817
      %1840 = vmatprep.subr.bf16.mxu0 0
      %1841 = vmatpush1.bf16.msra.mxu0 %v1818
      %1842 = vmatprep.subr.bf16.mxu0 0
      %1843 = vmatpush1.bf16.msra.mxu0 %v1819
      %1844 = vmatprep.subr.bf16.mxu0 0
      %1845 = vmatpush1.bf16.msra.mxu0 0
      %1846 = vmatprep.subr.bf16.mxu0 0
      %1847 = vmatpush1.bf16.msra.mxu0 0
      %1848 = vmatprep.subr.bf16.mxu0 0
      %1849 = vmatpush1.bf16.msra.mxu0 0
      %1850 = vmatprep.subr.bf16.mxu0 0
      %1851 = vmatpush1.bf16.msra.mxu0 0
      %1852 = vmatprep.subr.bf16.mxu0 0
      %1853 = vmatpush1.bf16.msra.mxu0 0
      %1854 = vmatprep.subr.bf16.mxu0 0
      %1855 = vmatpush1.bf16.msra.mxu0 0
      %1856 = vmatprep.subr.bf16.mxu0 0
      %1857 = vmatpush1.bf16.msra.mxu0 0
      %1858 = vmatprep.subr.bf16.mxu0 0
      %1859 = vmatpush1.bf16.msra.mxu0 0
      %1860 = vmatprep.mubr.bf16.mxu0 0
      %1861 = vmatmul.mubr.bf16.gmra.mrb[0].mxu0 %v539
      %v1862 = vpop.f32.mrb[0].mxu0
      %v1863 = vadd.f32 0.0, %v1862
      %v1864 = vpop.f32.mrb[0].mxu0
      %v1865 = vpop.f32.mrb[0].mxu0
      %v1866 = vadd.f32 0.0, %v1865
      %v1867 = vpop.f32.mrb[0].mxu0
      %1868 = vmatprep.mubr.bf16.mxu0 0
      %1869 = vmatmul.mubr.bf16.gmra.mrb[0].mxu0 %v541
      %v1870 = vpop.f32.mrb[0].mxu0
      %v1871 = vadd.f32 0.0, %v1870
      %v1872 = vpop.f32.mrb[0].mxu0
      %v1873 = vpop.f32.mrb[0].mxu0
      %v1874 = vadd.f32 0.0, %v1873
      %v1875 = vpop.f32.mrb[0].mxu0
      %1876 = vmatprep.mubr.bf16.mxu0 0
      %1877 = vmatmul.mubr.bf16.gmra.mrb[0].mxu0 %v543
      %v1878 = vpop.f32.mrb[0].mxu0
      %v1879 = vadd.f32 0.0, %v1878
      %v1880 = vpop.f32.mrb[0].mxu0
      %v1881 = vpop.f32.mrb[0].mxu0
      %v1882 = vadd.f32 0.0, %v1881
      %v1883 = vpop.f32.mrb[0].mxu0
      %1884 = vmatprep.mubr.bf16.mxu0 0
      %1885 = vmatmul.mubr.bf16.gmra.mrb[0].mxu0 %v545
      %v1886 = vpop.f32.mrb[0].mxu0
      %v1887 = vadd.f32 0.0, %v1886
      %v1888 = vpop.f32.mrb[0].mxu0
      %v1889 = vpop.f32.mrb[0].mxu0
      %v1890 = vadd.f32 0.0, %v1889
      %v1891 = vpop.f32.mrb[0].mxu0
      %1892 = vmatprep.mubr.bf16.mxu0 0
      %1893 = vmatmul.mubr.bf16.gmra.mrb[0].mxu0 %v547
      %v1894 = vpop.f32.mrb[0].mxu0
      %v1895 = vadd.f32 0.0, %v1894
      %v1896 = vpop.f32.mrb[0].mxu0
      %v1897 = vpop.f32.mrb[0].mxu0
      %v1898 = vadd.f32 0.0, %v1897
      %v1899 = vpop.f32.mrb[0].mxu0
      %1900 = vmatprep.mubr.bf16.mxu0 0
      %1901 = vmatmul.mubr.bf16.gmra.mrb[0].mxu0 %v549
      %v1902 = vpop.f32.mrb[0].mxu0
      %v1903 = vadd.f32 0.0, %v1902
      %v1904 = vpop.f32.mrb[0].mxu0
      %v1905 = vpop.f32.mrb[0].mxu0
      %v1906 = vadd.f32 0.0, %v1905
      %v1907 = vpop.f32.mrb[0].mxu0
      %1908 = vmatprep.mubr.bf16.mxu0 0
      %1909 = vmatmul.mubr.bf16.gmra.mrb[0].mxu0 %v551
      %v1910 = vpop.f32.mrb[0].mxu0
      %v1911 = vadd.f32 0.0, %v1910
      %v1912 = vpop.f32.mrb[0].mxu0
      %v1913 = vpop.f32.mrb[0].mxu0
      %v1914 = vadd.f32 0.0, %v1913
      %v1915 = vpop.f32.mrb[0].mxu0
      %1916 = vmatprep.mubr.bf16.mxu0 0
      %1917 = vmatmul.mubr.bf16.gmra.mrb[0].mxu0 %v553
      %v1918 = vpop.f32.mrb[0].mxu0
      %v1919 = vadd.f32 0.0, %v1918
      %v1920 = vpop.f32.mrb[0].mxu0
      %v1921 = vpop.f32.mrb[0].mxu0
      %v1922 = vadd.f32 0.0, %v1921
      %v1923 = vpop.f32.mrb[0].mxu0
      %1924 = vdwg.mxu0
      %v1925 = vadd.f32 %v1747, %v1863
      %v1926 = vadd.f32 %v1748, %v1866
      %v1927 = vadd.f32 %v1749, %v1871
      %v1928 = vadd.f32 %v1750, %v1874
      %v1929 = vadd.f32 %v1751, %v1879
      %v1930 = vadd.f32 %v1752, %v1882
      %v1931 = vadd.f32 %v1753, %v1887
      %v1932 = vadd.f32 %v1754, %v1890
      %v1933 = vadd.f32 %v1755, %v1895
      %v1934 = vadd.f32 %v1756, %v1898
      %v1935 = vadd.f32 %v1757, %v1903
      %v1936 = vadd.f32 %v1758, %v1906
      %v1937 = vadd.f32 %v1759, %v1911
      %v1938 = vadd.f32 %v1760, %v1914
      %v1939 = vadd.f32 %v1761, %v1919
      %v1940 = vadd.f32 %v1762, %v1922
      %v1942 = vshrl.u32 %v553, 16
      %v1944 = vshll.u32 %v553, 16
      %v1946 = vrot.slane %v1944, 1
      %v1947 = vor.u32 %v1942, %v1946
      %v1949 = vshll.u32 %v554, 16
      %v1951 = vrot.slane %v1949, 1
      %v1952 = vsel %vm571, %v1947, %v1951
      %s1954 = scalar_lea.vmem %s3, 448
      %v1955 = vld [vmem:[%s1954] sm:$0xf]
      %v1956 = vld [vmem:[%s1954 + $0x4] sm:$0xf]
      %v1957 = vld [vmem:[%s1954 + $0x8] sm:$0xf]
      %v1958 = vld [vmem:[%s1954 + $0xc] sm:$0xf]
      %v1959 = vld [vmem:[%s1954 + $0x10] sm:$0xf]
      %v1960 = vld [vmem:[%s1954 + $0x14] sm:$0xf]
      %v1961 = vld [vmem:[%s1954 + $0x18] sm:$0xf]
      %v1962 = vld [vmem:[%s1954 + $0x1c] sm:$0xf]
      %v1963 = vld [vmem:[%s1954 + $0x20] sm:$0xf]
      %v1964 = vld [vmem:[%s1954 + $0x24] sm:$0xf]
      %v1965 = vld [vmem:[%s1954 + $0x28] sm:$0xf]
      %v1966 = vld [vmem:[%s1954 + $0x2c] sm:$0xf]
      %v1967 = vld [vmem:[%s1954 + $0x30] sm:$0xf]
      %v1968 = vld [vmem:[%s1954 + $0x34] sm:$0xf]
      %v1969 = vld [vmem:[%s1954 + $0x38] sm:$0xf]
      %v1970 = vld [vmem:[%s1954 + $0x3c] sm:$0xf]
      %v1987 = vunpack.c.l.b16 %v1955
      %v1988 = vunpack.c.l.b16 %v1956
      %v1989 = vunpack.c.l.b16 %v1957
      %v1990 = vunpack.c.l.b16 %v1958
      %v1991 = vunpack.c.l.b16 %v1959
      %v1992 = vunpack.c.l.b16 %v1960
      %v1993 = vunpack.c.l.b16 %v1961
      %v1994 = vunpack.c.l.b16 %v1962
      %v1995 = vunpack.c.l.b16 %v1963
      %v1996 = vunpack.c.l.b16 %v1964
      %v1997 = vunpack.c.l.b16 %v1965
      %v1998 = vunpack.c.l.b16 %v1966
      %v1999 = vunpack.c.l.b16 %v1967
      %v2000 = vunpack.c.l.b16 %v1968
      %v2001 = vunpack.c.l.b16 %v1969
      %v2002 = vunpack.c.l.b16 %v1970
      %v2003 = vpack.c.b16 %v1988, %v1987
      %v2004 = vpack.c.b16 %v1990, %v1989
      %v2005 = vpack.c.b16 %v1992, %v1991
      %v2006 = vpack.c.b16 %v1994, %v1993
      %v2007 = vpack.c.b16 %v1996, %v1995
      %v2008 = vpack.c.b16 %v1998, %v1997
      %v2009 = vpack.c.b16 %v2000, %v1999
      %v2010 = vpack.c.b16 %v2002, %v2001
      %2019 = vmatprep.subr.bf16.mxu0 0
      %2020 = vmatpush1.bf16.msra.mxu0 %v2003
      %2021 = vmatprep.subr.bf16.mxu0 0
      %2022 = vmatpush1.bf16.msra.mxu0 %v2004
      %2023 = vmatprep.subr.bf16.mxu0 0
      %2024 = vmatpush1.bf16.msra.mxu0 %v2005
      %2025 = vmatprep.subr.bf16.mxu0 0
      %2026 = vmatpush1.bf16.msra.mxu0 %v2006
      %2027 = vmatprep.subr.bf16.mxu0 0
      %2028 = vmatpush1.bf16.msra.mxu0 %v2007
      %2029 = vmatprep.subr.bf16.mxu0 0
      %2030 = vmatpush1.bf16.msra.mxu0 %v2008
      %2031 = vmatprep.subr.bf16.mxu0 0
      %2032 = vmatpush1.bf16.msra.mxu0 %v2009
      %2033 = vmatprep.subr.bf16.mxu0 0
      %2034 = vmatpush1.bf16.msra.mxu0 %v2010
      %2035 = vmatprep.subr.bf16.mxu0 0
      %2036 = vmatpush1.bf16.msra.mxu0 0
      %2037 = vmatprep.subr.bf16.mxu0 0
      %2038 = vmatpush1.bf16.msra.mxu0 0
      %2039 = vmatprep.subr.bf16.mxu0 0
      %2040 = vmatpush1.bf16.msra.mxu0 0
      %2041 = vmatprep.subr.bf16.mxu0 0
      %2042 = vmatpush1.bf16.msra.mxu0 0
      %2043 = vmatprep.subr.bf16.mxu0 0
      %2044 = vmatpush1.bf16.msra.mxu0 0
      %2045 = vmatprep.subr.bf16.mxu0 0
      %2046 = vmatpush1.bf16.msra.mxu0 0
      %2047 = vmatprep.subr.bf16.mxu0 0
      %2048 = vmatpush1.bf16.msra.mxu0 0
      %2049 = vmatprep.subr.bf16.mxu0 0
      %2050 = vmatpush1.bf16.msra.mxu0 0
      %2051 = vmatprep.mubr.bf16.mxu0 0
      %2052 = vmatmul.mubr.bf16.gmra.mrb[0].mxu0 %v607
      %v2053 = vpop.f32.mrb[0].mxu0
      %v2054 = vadd.f32 0.0, %v2053
      %v2055 = vpop.f32.mrb[0].mxu0
      %v2056 = vpop.f32.mrb[0].mxu0
      %v2057 = vadd.f32 0.0, %v2056
      %v2058 = vpop.f32.mrb[0].mxu0
      %2059 = vmatprep.mubr.bf16.mxu0 0
      %2060 = vmatmul.mubr.bf16.gmra.mrb[0].mxu0 %v619
      %v2061 = vpop.f32.mrb[0].mxu0
      %v2062 = vadd.f32 0.0, %v2061
      %v2063 = vpop.f32.mrb[0].mxu0
      %v2064 = vpop.f32.mrb[0].mxu0
      %v2065 = vadd.f32 0.0, %v2064
      %v2066 = vpop.f32.mrb[0].mxu0
      %2067 = vmatprep.mubr.bf16.mxu0 0
      %2068 = vmatmul.mubr.bf16.gmra.mrb[0].mxu0 %v631
      %v2069 = vpop.f32.mrb[0].mxu0
      %v2070 = vadd.f32 0.0, %v2069
      %v2071 = vpop.f32.mrb[0].mxu0
      %v2072 = vpop.f32.mrb[0].mxu0
      %v2073 = vadd.f32 0.0, %v2072
      %v2074 = vpop.f32.mrb[0].mxu0
      %2075 = vmatprep.mubr.bf16.mxu0 0
      %2076 = vmatmul.mubr.bf16.gmra.mrb[0].mxu0 %v643
      %v2077 = vpop.f32.mrb[0].mxu0
      %v2078 = vadd.f32 0.0, %v2077
      %v2079 = vpop.f32.mrb[0].mxu0
      %v2080 = vpop.f32.mrb[0].mxu0
      %v2081 = vadd.f32 0.0, %v2080
      %v2082 = vpop.f32.mrb[0].mxu0
      %2083 = vmatprep.mubr.bf16.mxu0 0
      %2084 = vmatmul.mubr.bf16.gmra.mrb[0].mxu0 %v655
      %v2085 = vpop.f32.mrb[0].mxu0
      %v2086 = vadd.f32 0.0, %v2085
      %v2087 = vpop.f32.mrb[0].mxu0
      %v2088 = vpop.f32.mrb[0].mxu0
      %v2089 = vadd.f32 0.0, %v2088
      %v2090 = vpop.f32.mrb[0].mxu0
      %2091 = vmatprep.mubr.bf16.mxu0 0
      %2092 = vmatmul.mubr.bf16.gmra.mrb[0].mxu0 %v667
      %v2093 = vpop.f32.mrb[0].mxu0
      %v2094 = vadd.f32 0.0, %v2093
      %v2095 = vpop.f32.mrb[0].mxu0
      %v2096 = vpop.f32.mrb[0].mxu0
      %v2097 = vadd.f32 0.0, %v2096
      %v2098 = vpop.f32.mrb[0].mxu0
      %2099 = vmatprep.mubr.bf16.mxu0 0
      %2100 = vmatmul.mubr.bf16.gmra.mrb[0].mxu0 %v1399
      %v2101 = vpop.f32.mrb[0].mxu0
      %v2102 = vadd.f32 0.0, %v2101
      %v2103 = vpop.f32.mrb[0].mxu0
      %v2104 = vpop.f32.mrb[0].mxu0
      %v2105 = vadd.f32 0.0, %v2104
      %v2106 = vpop.f32.mrb[0].mxu0
      %2107 = vmatprep.mubr.bf16.mxu0 0
      %2108 = vmatmul.mubr.bf16.gmra.mrb[0].mxu0 %v1952
      %v2109 = vpop.f32.mrb[0].mxu0
      %v2110 = vadd.f32 0.0, %v2109
      %v2111 = vpop.f32.mrb[0].mxu0
      %v2112 = vpop.f32.mrb[0].mxu0
      %v2113 = vadd.f32 0.0, %v2112
      %v2114 = vpop.f32.mrb[0].mxu0
      %2115 = vdwg.mxu0
      %v2116 = vadd.f32 %v1925, %v2054
      %v2117 = vadd.f32 %v1926, %v2057
      %v2118 = vadd.f32 %v1927, %v2062
      %v2119 = vadd.f32 %v1928, %v2065
      %v2120 = vadd.f32 %v1929, %v2070
      %v2121 = vadd.f32 %v1930, %v2073
      %v2122 = vadd.f32 %v1931, %v2078
      %v2123 = vadd.f32 %v1932, %v2081
      %v2124 = vadd.f32 %v1933, %v2086
      %v2125 = vadd.f32 %v1934, %v2089
      %v2126 = vadd.f32 %v1935, %v2094
      %v2127 = vadd.f32 %v1936, %v2097
      %v2128 = vadd.f32 %v1937, %v2102
      %v2129 = vadd.f32 %v1938, %v2105
      %v2130 = vadd.f32 %v1939, %v2110
      %v2131 = vadd.f32 %v1940, %v2113
      %v2134 = vrot.slane %v553, 1
      %v2135 = vrot.slane %v554, 1
      %v2136 = vsel %vm999, %v2134, %v2135
      %s2138 = scalar_lea.vmem %s3, 512
      %v2139 = vld [vmem:[%s2138] sm:$0xf]
      %v2140 = vld [vmem:[%s2138 + $0x4] sm:$0xf]
      %v2141 = vld [vmem:[%s2138 + $0x8] sm:$0xf]
      %v2142 = vld [vmem:[%s2138 + $0xc] sm:$0xf]
      %v2143 = vld [vmem:[%s2138 + $0x10] sm:$0xf]
      %v2144 = vld [vmem:[%s2138 + $0x14] sm:$0xf]
      %v2145 = vld [vmem:[%s2138 + $0x18] sm:$0xf]
      %v2146 = vld [vmem:[%s2138 + $0x1c] sm:$0xf]
      %v2147 = vld [vmem:[%s2138 + $0x20] sm:$0xf]
      %v2148 = vld [vmem:[%s2138 + $0x24] sm:$0xf]
      %v2149 = vld [vmem:[%s2138 + $0x28] sm:$0xf]
      %v2150 = vld [vmem:[%s2138 + $0x2c] sm:$0xf]
      %v2151 = vld [vmem:[%s2138 + $0x30] sm:$0xf]
      %v2152 = vld [vmem:[%s2138 + $0x34] sm:$0xf]
      %v2153 = vld [vmem:[%s2138 + $0x38] sm:$0xf]
      %v2154 = vld [vmem:[%s2138 + $0x3c] sm:$0xf]
      %v2171 = vunpack.c.l.b16 %v2139
      %v2172 = vunpack.c.l.b16 %v2140
      %v2173 = vunpack.c.l.b16 %v2141
      %v2174 = vunpack.c.l.b16 %v2142
      %v2175 = vunpack.c.l.b16 %v2143
      %v2176 = vunpack.c.l.b16 %v2144
      %v2177 = vunpack.c.l.b16 %v2145
      %v2178 = vunpack.c.l.b16 %v2146
      %v2179 = vunpack.c.l.b16 %v2147
      %v2180 = vunpack.c.l.b16 %v2148
      %v2181 = vunpack.c.l.b16 %v2149
      %v2182 = vunpack.c.l.b16 %v2150
      %v2183 = vunpack.c.l.b16 %v2151
      %v2184 = vunpack.c.l.b16 %v2152
      %v2185 = vunpack.c.l.b16 %v2153
      %v2186 = vunpack.c.l.b16 %v2154
      %v2187 = vpack.c.b16 %v2172, %v2171
      %v2188 = vpack.c.b16 %v2174, %v2173
      %v2189 = vpack.c.b16 %v2176, %v2175
      %v2190 = vpack.c.b16 %v2178, %v2177
      %v2191 = vpack.c.b16 %v2180, %v2179
      %v2192 = vpack.c.b16 %v2182, %v2181
      %v2193 = vpack.c.b16 %v2184, %v2183
      %v2194 = vpack.c.b16 %v2186, %v2185
      %2203 = vmatprep.subr.bf16.mxu0 0
      %2204 = vmatpush1.bf16.msra.mxu0 %v2187
      %2205 = vmatprep.subr.bf16.mxu0 0
      %2206 = vmatpush1.bf16.msra.mxu0 %v2188
      %2207 = vmatprep.subr.bf16.mxu0 0
      %2208 = vmatpush1.bf16.msra.mxu0 %v2189
      %2209 = vmatprep.subr.bf16.mxu0 0
      %2210 = vmatpush1.bf16.msra.mxu0 %v2190
      %2211 = vmatprep.subr.bf16.mxu0 0
      %2212 = vmatpush1.bf16.msra.mxu0 %v2191
      %2213 = vmatprep.subr.bf16.mxu0 0
      %2214 = vmatpush1.bf16.msra.mxu0 %v2192
      %2215 = vmatprep.subr.bf16.mxu0 0
      %2216 = vmatpush1.bf16.msra.mxu0 %v2193
      %2217 = vmatprep.subr.bf16.mxu0 0
      %2218 = vmatpush1.bf16.msra.mxu0 %v2194
      %2219 = vmatprep.subr.bf16.mxu0 0
      %2220 = vmatpush1.bf16.msra.mxu0 0
      %2221 = vmatprep.subr.bf16.mxu0 0
      %2222 = vmatpush1.bf16.msra.mxu0 0
      %2223 = vmatprep.subr.bf16.mxu0 0
      %2224 = vmatpush1.bf16.msra.mxu0 0
      %2225 = vmatprep.subr.bf16.mxu0 0
      %2226 = vmatpush1.bf16.msra.mxu0 0
      %2227 = vmatprep.subr.bf16.mxu0 0
      %2228 = vmatpush1.bf16.msra.mxu0 0
      %2229 = vmatprep.subr.bf16.mxu0 0
      %2230 = vmatpush1.bf16.msra.mxu0 0
      %2231 = vmatprep.subr.bf16.mxu0 0
      %2232 = vmatpush1.bf16.msra.mxu0 0
      %2233 = vmatprep.subr.bf16.mxu0 0
      %2234 = vmatpush1.bf16.msra.mxu0 0
      %2235 = vmatprep.mubr.bf16.mxu0 0
      %2236 = vmatmul.mubr.bf16.gmra.mrb[0].mxu0 %v1008
      %v2237 = vpop.f32.mrb[0].mxu0
      %v2238 = vadd.f32 0.0, %v2237
      %v2239 = vpop.f32.mrb[0].mxu0
      %v2240 = vpop.f32.mrb[0].mxu0
      %v2241 = vadd.f32 0.0, %v2240
      %v2242 = vpop.f32.mrb[0].mxu0
      %2243 = vmatprep.mubr.bf16.mxu0 0
      %2244 = vmatmul.mubr.bf16.gmra.mrb[0].mxu0 %v1011
      %v2245 = vpop.f32.mrb[0].mxu0
      %v2246 = vadd.f32 0.0, %v2245
      %v2247 = vpop.f32.mrb[0].mxu0
      %v2248 = vpop.f32.mrb[0].mxu0
      %v2249 = vadd.f32 0.0, %v2248
      %v2250 = vpop.f32.mrb[0].mxu0
      %2251 = vmatprep.mubr.bf16.mxu0 0
      %2252 = vmatmul.mubr.bf16.gmra.mrb[0].mxu0 %v1014
      %v2253 = vpop.f32.mrb[0].mxu0
      %v2254 = vadd.f32 0.0, %v2253
      %v2255 = vpop.f32.mrb[0].mxu0
      %v2256 = vpop.f32.mrb[0].mxu0
      %v2257 = vadd.f32 0.0, %v2256
      %v2258 = vpop.f32.mrb[0].mxu0
      %2259 = vmatprep.mubr.bf16.mxu0 0
      %2260 = vmatmul.mubr.bf16.gmra.mrb[0].mxu0 %v1017
      %v2261 = vpop.f32.mrb[0].mxu0
      %v2262 = vadd.f32 0.0, %v2261
      %v2263 = vpop.f32.mrb[0].mxu0
      %v2264 = vpop.f32.mrb[0].mxu0
      %v2265 = vadd.f32 0.0, %v2264
      %v2266 = vpop.f32.mrb[0].mxu0
      %2267 = vmatprep.mubr.bf16.mxu0 0
      %2268 = vmatmul.mubr.bf16.gmra.mrb[0].mxu0 %v1020
      %v2269 = vpop.f32.mrb[0].mxu0
      %v2270 = vadd.f32 0.0, %v2269
      %v2271 = vpop.f32.mrb[0].mxu0
      %v2272 = vpop.f32.mrb[0].mxu0
      %v2273 = vadd.f32 0.0, %v2272
      %v2274 = vpop.f32.mrb[0].mxu0
      %2275 = vmatprep.mubr.bf16.mxu0 0
      %2276 = vmatmul.mubr.bf16.gmra.mrb[0].mxu0 %v1023
      %v2277 = vpop.f32.mrb[0].mxu0
      %v2278 = vadd.f32 0.0, %v2277
      %v2279 = vpop.f32.mrb[0].mxu0
      %v2280 = vpop.f32.mrb[0].mxu0
      %v2281 = vadd.f32 0.0, %v2280
      %v2282 = vpop.f32.mrb[0].mxu0
      %2283 = vmatprep.mubr.bf16.mxu0 0
      %2284 = vmatmul.mubr.bf16.gmra.mrb[0].mxu0 %v1583
      %v2285 = vpop.f32.mrb[0].mxu0
      %v2286 = vadd.f32 0.0, %v2285
      %v2287 = vpop.f32.mrb[0].mxu0
      %v2288 = vpop.f32.mrb[0].mxu0
      %v2289 = vadd.f32 0.0, %v2288
      %v2290 = vpop.f32.mrb[0].mxu0
      %2291 = vmatprep.mubr.bf16.mxu0 0
      %2292 = vmatmul.mubr.bf16.gmra.mrb[0].mxu0 %v2136
      %v2293 = vpop.f32.mrb[0].mxu0
      %v2294 = vadd.f32 0.0, %v2293
      %v2295 = vpop.f32.mrb[0].mxu0
      %v2296 = vpop.f32.mrb[0].mxu0
      %v2297 = vadd.f32 0.0, %v2296
      %v2298 = vpop.f32.mrb[0].mxu0
      %2299 = vdwg.mxu0
      %v2300 = vadd.f32 %v2116, %v2238
      %v2301 = vadd.f32 %v2117, %v2241
      %v2302 = vadd.f32 %v2118, %v2246
      %v2303 = vadd.f32 %v2119, %v2249
      %v2304 = vadd.f32 %v2120, %v2254
      %v2305 = vadd.f32 %v2121, %v2257
      %v2306 = vadd.f32 %v2122, %v2262
      %v2307 = vadd.f32 %v2123, %v2265
      %v2308 = vadd.f32 %v2124, %v2270
      %v2309 = vadd.f32 %v2125, %v2273
      %v2310 = vadd.f32 %v2126, %v2278
      %v2311 = vadd.f32 %v2127, %v2281
      %v2312 = vadd.f32 %v2128, %v2286
      %v2313 = vadd.f32 %v2129, %v2289
      %v2314 = vadd.f32 %v2130, %v2294
      %v2315 = vadd.f32 %v2131, %v2297
      %v2316 = vadd.f32 %v2300, %v2301
      %v2317 = vadd.f32 %v2316, %v2302
      %v2318 = vadd.f32 %v2317, %v2303
      %v2319 = vadd.f32 %v2318, %v2304
      %v2320 = vadd.f32 %v2319, %v2305
      %v2321 = vadd.f32 %v2320, %v2306
      %v2322 = vadd.f32 %v2321, %v2307
      %v2323 = vadd.f32 %v2322, %v2308
      %v2324 = vadd.f32 %v2323, %v2309
      %v2325 = vadd.f32 %v2324, %v2310
      %v2326 = vadd.f32 %v2325, %v2311
      %v2327 = vadd.f32 %v2326, %v2312
      %v2328 = vadd.f32 %v2327, %v2313
      %v2329 = vadd.f32 %v2328, %v2314
      %v2330 = vadd.f32 %v2329, %v2315
      %v2331 = vrot.slane %v2330, 4
      %v2332 = vadd.f32 %v2330, %v2331
      %v2333 = vrot.slane %v2332, 2
      %v2334 = vadd.f32 %v2332, %v2333
      %v2335 = vrot.slane %v2334, 1
      %v2336 = vadd.f32 %v2334, %v2335
      %2337 = vst [vmem:[%s407] sm:$0x1] %v2336
      %v2338 = vmul.f32 %v2300, %v2300
      %v2339 = vmul.f32 %v2301, %v2301
      %v2340 = vmul.f32 %v2302, %v2302
      %v2341 = vmul.f32 %v2303, %v2303
      %v2342 = vmul.f32 %v2304, %v2304
      %v2343 = vmul.f32 %v2305, %v2305
      %v2344 = vmul.f32 %v2306, %v2306
      %v2345 = vmul.f32 %v2307, %v2307
      %v2346 = vmul.f32 %v2308, %v2308
      %v2347 = vmul.f32 %v2309, %v2309
      %v2348 = vmul.f32 %v2310, %v2310
      %v2349 = vmul.f32 %v2311, %v2311
      %v2350 = vmul.f32 %v2312, %v2312
      %v2351 = vmul.f32 %v2313, %v2313
      %v2352 = vmul.f32 %v2314, %v2314
      %v2353 = vmul.f32 %v2315, %v2315
      %v2354 = vadd.f32 %v2338, %v2339
      %v2355 = vadd.f32 %v2354, %v2340
      %v2356 = vadd.f32 %v2355, %v2341
      %v2357 = vadd.f32 %v2356, %v2342
      %v2358 = vadd.f32 %v2357, %v2343
      %v2359 = vadd.f32 %v2358, %v2344
      %v2360 = vadd.f32 %v2359, %v2345
      %v2361 = vadd.f32 %v2360, %v2346
      %v2362 = vadd.f32 %v2361, %v2347
      %v2363 = vadd.f32 %v2362, %v2348
      %v2364 = vadd.f32 %v2363, %v2349
      %v2365 = vadd.f32 %v2364, %v2350
      %v2366 = vadd.f32 %v2365, %v2351
      %v2367 = vadd.f32 %v2366, %v2352
      %v2368 = vadd.f32 %v2367, %v2353
      %v2369 = vrot.slane %v2368, 4
      %v2370 = vadd.f32 %v2368, %v2369
      %v2371 = vrot.slane %v2370, 2
      %v2372 = vadd.f32 %v2370, %v2371
      %v2373 = vrot.slane %v2372, 1
      %v2374 = vadd.f32 %v2372, %v2373
      %2375 = vst [vmem:[%s407 + $0x1] sm:$0x1] %v2374
      %v2376 = vpack.c.bf16 %v2301, %v2300
      %v2377 = vpack.c.bf16 %v2303, %v2302
      %v2378 = vpack.c.bf16 %v2305, %v2304
      %v2379 = vpack.c.bf16 %v2307, %v2306
      %v2380 = vpack.c.bf16 %v2309, %v2308
      %v2381 = vpack.c.bf16 %v2311, %v2310
      %v2382 = vpack.c.bf16 %v2313, %v2312
      %v2383 = vpack.c.bf16 %v2315, %v2314
      %vm2384 = vcmask 1040384
      %vm2385 = vsmask.f32 256
      %vm2386 = vmand %vm2384, %vm2385
      %v2387 = vld [vmem:[%s400] sm:$0x1]
      %v2388 = vsel %vm2386, 0, %v2387
      %2389 = vst [vmem:[%s400] sm:$0x1] %v2388
      %v2390 = vld [vmem:[%s400 + $0xc] sm:$0x1]
      %v2391 = vsel %vm2386, 0, %v2390
      %2392 = vst [vmem:[%s400 + $0xc] sm:$0x1] %v2391
      %v2393 = vld [vmem:[%s400 + $0x18] sm:$0x1]
      %v2394 = vsel %vm2386, 0, %v2393
      %2395 = vst [vmem:[%s400 + $0x18] sm:$0x1] %v2394
      %v2396 = vld [vmem:[%s400 + $0x24] sm:$0x1]
      %v2397 = vsel %vm2386, 0, %v2396
      %2398 = vst [vmem:[%s400 + $0x24] sm:$0x1] %v2397
      %v2399 = vld [vmem:[%s400 + $0x30] sm:$0x1]
      %v2400 = vsel %vm2386, 0, %v2399
      %2401 = vst [vmem:[%s400 + $0x30] sm:$0x1] %v2400
      %v2402 = vld [vmem:[%s400 + $0x3c] sm:$0x1]
      %v2403 = vsel %vm2386, 0, %v2402
      %2404 = vst [vmem:[%s400 + $0x3c] sm:$0x1] %v2403
      %v2405 = vld [vmem:[%s400 + $0x48] sm:$0x1]
      %v2406 = vsel %vm2386, 0, %v2405
      %2407 = vst [vmem:[%s400 + $0x48] sm:$0x1] %v2406
      %v2408 = vld [vmem:[%s400 + $0x54] sm:$0x1]
      %v2409 = vsel %vm2386, 0, %v2408
      %2410 = vst [vmem:[%s400 + $0x54] sm:$0x1] %v2409
      %v2419 = vunpack.c.l.b16 %v2376
      %v2420 = vunpack.c.h.b16 %v2376
      %v2421 = vunpack.c.l.b16 %v2377
      %v2422 = vunpack.c.h.b16 %v2377
      %v2423 = vunpack.c.l.b16 %v2378
      %v2424 = vunpack.c.h.b16 %v2378
      %v2425 = vunpack.c.l.b16 %v2379
      %v2426 = vunpack.c.h.b16 %v2379
      %v2427 = vunpack.c.l.b16 %v2380
      %v2428 = vunpack.c.h.b16 %v2380
      %v2429 = vunpack.c.l.b16 %v2381
      %v2430 = vunpack.c.h.b16 %v2381
      %v2431 = vunpack.c.l.b16 %v2382
      %v2432 = vunpack.c.h.b16 %v2382
      %v2433 = vunpack.c.l.b16 %v2383
      %v2434 = vunpack.c.h.b16 %v2383
      %v2435 = vpack.c.b16 %v2419, %v2419
      %v2436 = vpack.c.b16 %v2420, %v2420
      %v2437 = vpack.c.b16 %v2421, %v2421
      %v2438 = vpack.c.b16 %v2422, %v2422
      %v2439 = vpack.c.b16 %v2423, %v2423
      %v2440 = vpack.c.b16 %v2424, %v2424
      %v2441 = vpack.c.b16 %v2425, %v2425
      %v2442 = vpack.c.b16 %v2426, %v2426
      %v2443 = vpack.c.b16 %v2427, %v2427
      %v2444 = vpack.c.b16 %v2428, %v2428
      %v2445 = vpack.c.b16 %v2429, %v2429
      %v2446 = vpack.c.b16 %v2430, %v2430
      %v2447 = vpack.c.b16 %v2431, %v2431
      %v2448 = vpack.c.b16 %v2432, %v2432
      %v2449 = vpack.c.b16 %v2433, %v2433
      %v2450 = vpack.c.b16 %v2434, %v2434
      %vm2451 = vsmask.f32 4368
      %vm2452 = vmor %vm2385, %vm2451
      %v2454 = vshrl.u32 %v2435, 16
      %v2456 = vrot.slane %v2454, 7
      %v2457 = vshll.u32 %v2435, 16
      %v2459 = vor.u32 %v2456, %v2457
      %v2460 = vrot.slane %v2456, 4
      %v2462 = vshrl.u32 %v2436, 16
      %v2464 = vrot.slane %v2462, 7
      %v2465 = vshll.u32 %v2436, 16
      %v2467 = vor.u32 %v2464, %v2465
      %v2468 = vsel %vm2452, %v2460, %v2467
      %v2469 = vrot.slane %v2464, 4
      %v2471 = vshrl.u32 %v2437, 16
      %v2473 = vrot.slane %v2471, 7
      %v2474 = vshll.u32 %v2437, 16
      %v2476 = vor.u32 %v2473, %v2474
      %v2477 = vrot.slane %v2473, 4
      %v2479 = vshrl.u32 %v2438, 16
      %v2481 = vrot.slane %v2479, 7
      %v2482 = vshll.u32 %v2438, 16
      %v2484 = vor.u32 %v2481, %v2482
      %v2485 = vsel %vm2452, %v2477, %v2484
      %v2486 = vrot.slane %v2481, 4
      %v2488 = vshrl.u32 %v2439, 16
      %v2490 = vrot.slane %v2488, 7
      %v2491 = vshll.u32 %v2439, 16
      %v2493 = vor.u32 %v2490, %v2491
      %v2494 = vrot.slane %v2490, 4
      %v2496 = vshrl.u32 %v2440, 16
      %v2498 = vrot.slane %v2496, 7
      %v2499 = vshll.u32 %v2440, 16
      %v2501 = vor.u32 %v2498, %v2499
      %v2502 = vsel %vm2452, %v2494, %v2501
      %v2503 = vrot.slane %v2498, 4
      %v2505 = vshrl.u32 %v2441, 16
      %v2507 = vrot.slane %v2505, 7
      %v2508 = vshll.u32 %v2441, 16
      %v2510 = vor.u32 %v2507, %v2508
      %v2511 = vrot.slane %v2507, 4
      %v2513 = vshrl.u32 %v2442, 16
      %v2515 = vrot.slane %v2513, 7
      %v2516 = vshll.u32 %v2442, 16
      %v2518 = vor.u32 %v2515, %v2516
      %v2519 = vsel %vm2452, %v2511, %v2518
      %v2520 = vrot.slane %v2515, 4
      %v2522 = vshrl.u32 %v2443, 16
      %v2524 = vrot.slane %v2522, 7
      %v2525 = vshll.u32 %v2443, 16
      %v2527 = vor.u32 %v2524, %v2525
      %v2528 = vrot.slane %v2524, 4
      %v2530 = vshrl.u32 %v2444, 16
      %v2532 = vrot.slane %v2530, 7
      %v2533 = vshll.u32 %v2444, 16
      %v2535 = vor.u32 %v2532, %v2533
      %v2536 = vsel %vm2452, %v2528, %v2535
      %v2537 = vrot.slane %v2532, 4
      %v2539 = vshrl.u32 %v2445, 16
      %v2541 = vrot.slane %v2539, 7
      %v2542 = vshll.u32 %v2445, 16
      %v2544 = vor.u32 %v2541, %v2542
      %v2545 = vrot.slane %v2541, 4
      %v2547 = vshrl.u32 %v2446, 16
      %v2549 = vrot.slane %v2547, 7
      %v2550 = vshll.u32 %v2446, 16
      %v2552 = vor.u32 %v2549, %v2550
      %v2553 = vsel %vm2452, %v2545, %v2552
      %v2554 = vrot.slane %v2549, 4
      %v2556 = vshrl.u32 %v2447, 16
      %v2558 = vrot.slane %v2556, 7
      %v2559 = vshll.u32 %v2447, 16
      %v2561 = vor.u32 %v2558, %v2559
      %v2562 = vrot.slane %v2558, 4
      %v2564 = vshrl.u32 %v2448, 16
      %v2566 = vrot.slane %v2564, 7
      %v2567 = vshll.u32 %v2448, 16
      %v2569 = vor.u32 %v2566, %v2567
      %v2570 = vsel %vm2452, %v2562, %v2569
      %v2571 = vrot.slane %v2566, 4
      %v2573 = vshrl.u32 %v2449, 16
      %v2575 = vrot.slane %v2573, 7
      %v2576 = vshll.u32 %v2449, 16
      %v2578 = vor.u32 %v2575, %v2576
      %v2579 = vrot.slane %v2575, 4
      %v2581 = vshrl.u32 %v2450, 16
      %v2583 = vrot.slane %v2581, 7
      %v2584 = vshll.u32 %v2450, 16
      %v2586 = vor.u32 %v2583, %v2584
      %v2587 = vsel %vm2452, %v2579, %v2586
      %v2588 = vrot.slane %v2583, 4
      %vm2613 = vcmask 1043456
      %vm2614 = vsmask.f32 7938
      %vm2615 = vmand %vm2613, %vm2614
      %v2616 = vld [vmem:[%s400] sm:$0xf]
      %v2617 = vsel %vm2615, %v2459, %v2616
      %2618 = vst [vmem:[%s400] sm:$0xf] %v2617
      %2619 = vst [vmem:[%s400 + $0x4] sm:$0xf] %v2468
      %v2620 = vld [vmem:[%s400 + $0x8] sm:$0x1]
      %v2621 = vsel %vm2386, %v2469, %v2620
      %2622 = vst [vmem:[%s400 + $0x8] sm:$0x1] %v2621
      %v2623 = vld [vmem:[%s400 + $0xc] sm:$0xf]
      %v2624 = vsel %vm2615, %v2476, %v2623
      %2625 = vst [vmem:[%s400 + $0xc] sm:$0xf] %v2624
      %2626 = vst [vmem:[%s400 + $0x10] sm:$0xf] %v2485
      %v2627 = vld [vmem:[%s400 + $0x14] sm:$0x1]
      %v2628 = vsel %vm2386, %v2486, %v2627
      %2629 = vst [vmem:[%s400 + $0x14] sm:$0x1] %v2628
      %v2630 = vld [vmem:[%s400 + $0x18] sm:$0xf]
      %v2631 = vsel %vm2615, %v2493, %v2630
      %2632 = vst [vmem:[%s400 + $0x18] sm:$0xf] %v2631
      %2633 = vst [vmem:[%s400 + $0x1c] sm:$0xf] %v2502
      %v2634 = vld [vmem:[%s400 + $0x20] sm:$0x1]
      %v2635 = vsel %vm2386, %v2503, %v2634
      %2636 = vst [vmem:[%s400 + $0x20] sm:$0x1] %v2635
      %v2637 = vld [vmem:[%s400 + $0x24] sm:$0xf]
      %v2638 = vsel %vm2615, %v2510, %v2637
      %2639 = vst [vmem:[%s400 + $0x24] sm:$0xf] %v2638
      %2640 = vst [vmem:[%s400 + $0x28] sm:$0xf] %v2519
      %v2641 = vld [vmem:[%s400 + $0x2c] sm:$0x1]
      %v2642 = vsel %vm2386, %v2520, %v2641
      %2643 = vst [vmem:[%s400 + $0x2c] sm:$0x1] %v2642
      %v2644 = vld [vmem:[%s400 + $0x30] sm:$0xf]
      %v2645 = vsel %vm2615, %v2527, %v2644
      %2646 = vst [vmem:[%s400 + $0x30] sm:$0xf] %v2645
      %2647 = vst [vmem:[%s400 + $0x34] sm:$0xf] %v2536
      %v2648 = vld [vmem:[%s400 + $0x38] sm:$0x1]
      %v2649 = vsel %vm2386, %v2537, %v2648
      %2650 = vst [vmem:[%s400 + $0x38] sm:$0x1] %v2649
      %v2651 = vld [vmem:[%s400 + $0x3c] sm:$0xf]
      %v2652 = vsel %vm2615, %v2544, %v2651
      %2653 = vst [vmem:[%s400 + $0x3c] sm:$0xf] %v2652
      %2654 = vst [vmem:[%s400 + $0x40] sm:$0xf] %v2553
      %v2655 = vld [vmem:[%s400 + $0x44] sm:$0x1]
      %v2656 = vsel %vm2386, %v2554, %v2655
      %2657 = vst [vmem:[%s400 + $0x44] sm:$0x1] %v2656
      %v2658 = vld [vmem:[%s400 + $0x48] sm:$0xf]
      %v2659 = vsel %vm2615, %v2561, %v2658
      %2660 = vst [vmem:[%s400 + $0x48] sm:$0xf] %v2659
      %2661 = vst [vmem:[%s400 + $0x4c] sm:$0xf] %v2570
      %v2662 = vld [vmem:[%s400 + $0x50] sm:$0x1]
      %v2663 = vsel %vm2386, %v2571, %v2662
      %2664 = vst [vmem:[%s400 + $0x50] sm:$0x1] %v2663
      %v2665 = vld [vmem:[%s400 + $0x54] sm:$0xf]
      %v2666 = vsel %vm2615, %v2578, %v2665
      %2667 = vst [vmem:[%s400 + $0x54] sm:$0xf] %v2666
      %2668 = vst [vmem:[%s400 + $0x58] sm:$0xf] %v2587
      %v2669 = vld [vmem:[%s400 + $0x5c] sm:$0x1]
      %v2670 = vsel %vm2386, %v2588, %v2669
      %2671 = vst [vmem:[%s400 + $0x5c] sm:$0x1] %v2670
      %v2672 = vld [vmem:[%s400 + $0x8] sm:$0xf]
      %v2673 = vsel %vm2615, 0, %v2672
      %2674 = vst [vmem:[%s400 + $0x8] sm:$0xf] %v2673
      %v2675 = vld [vmem:[%s400 + $0x14] sm:$0xf]
      %v2676 = vsel %vm2615, 0, %v2675
      %2677 = vst [vmem:[%s400 + $0x14] sm:$0xf] %v2676
      %v2678 = vld [vmem:[%s400 + $0x20] sm:$0xf]
      %v2679 = vsel %vm2615, 0, %v2678
      %2680 = vst [vmem:[%s400 + $0x20] sm:$0xf] %v2679
      %v2681 = vld [vmem:[%s400 + $0x2c] sm:$0xf]
      %v2682 = vsel %vm2615, 0, %v2681
      %2683 = vst [vmem:[%s400 + $0x2c] sm:$0xf] %v2682
      %v2684 = vld [vmem:[%s400 + $0x38] sm:$0xf]
      %v2685 = vsel %vm2615, 0, %v2684
      %2686 = vst [vmem:[%s400 + $0x38] sm:$0xf] %v2685
      %v2687 = vld [vmem:[%s400 + $0x44] sm:$0xf]
      %v2688 = vsel %vm2615, 0, %v2687
      %2689 = vst [vmem:[%s400 + $0x44] sm:$0xf] %v2688
      %v2690 = vld [vmem:[%s400 + $0x50] sm:$0xf]
      %v2691 = vsel %vm2615, 0, %v2690
      %2692 = vst [vmem:[%s400 + $0x50] sm:$0xf] %v2691
      %v2693 = vld [vmem:[%s400 + $0x5c] sm:$0xf]
      %v2694 = vsel %vm2615, 0, %v2693
      %2695 = vst [vmem:[%s400 + $0x5c] sm:$0xf] %v2694
      %s2696 = smul.u32 8, %s22
      %p2697 = scmp.lt.s32.totalorder %s21, 1
      %s2698 = scalar_select %p2697, %s21, 1
      %p2699 = scmp.lt.s32.totalorder %s2696, 15
      %s2700 = scalar_select %p2699, %s2696, 15
      %s2701 = smul.addr %s2700, 3
      %s2702 = smul.addr %s2698, 48
      %s2703 = sadd.s32 %s2701, %s2702
      %s2704 = smul.addr %s2703, 4
      %s2705 = scalar_lea.vmem %s4, %s2704
      %s2706 = smul.u32 %s21, 2
      %s2707 = sadd.s32 %s2706, %s22
      %p2708 = scmp.lt.s32.totalorder %s2707, 3
      %s2709 = scalar_select %p2708, %s2707, 3
      %s2710 = smul.addr %s2709, 8
      %s2711 = scalar_lea.vmem %s5, %s2710
      // Predicated region
      $region37: #{extended_basic_block_forward.3} parent=35 // pred_check
        %p2712 = pneg %p166
      $region38: #{extended_basic_block_forward.3} parent=35 // pred_check_branch
        %2714 = sbr.rel (%p2712) target = $region40
      $region39: #{extended_basic_block_forward.3} parent=35 // pred_region
        %s2715 = smul.u32 8, %s22
      $region40: #{extended_basic_block_forward.3} parent=35 // pred_fallthru
        _
      // Predicated region
      $region41: #{extended_basic_block_forward.3} parent=35 // pred_check
        %p2716 = pneg %p196
      $region42: #{extended_basic_block_forward.3} parent=35 // pred_check_branch
        %2718 = sbr.rel (%p2716) target = $region44
      $region43: #{extended_basic_block_forward.3} parent=35 // pred_region
        %s2719 = smul.u32 %s21, 2
        %s2720 = sadd.s32 %s2719, %s22
      $region44: #{extended_basic_block_forward.3} parent=35 // pred_fallthru
        _
    $region36: #{extended_basic_block_forward.3} parent=5 // pred_fallthru
      _
    %p2721 = scmp.le.s32.totalorder 2, %s12
    // Predicated region
    $region45: #{extended_basic_block_forward.3} parent=5 // pred_check
      %p2722 = pneg %p2721
    $region46: #{extended_basic_block_forward.3} parent=5 // pred_check_branch
      %2724 = sbr.rel (%p2722) target = $region48
    $region47: #{extended_basic_block_forward.3} parent=5 // pred_region
      %s2725 = ssub.s32 %s12, 2
      // Predicated region
      $region49: #{extended_basic_block_forward.3} parent=47 // pred_check
        %p2726 = pneg %p172
      $region50: #{extended_basic_block_forward.3} parent=47 // pred_check_branch
        %2728 = sbr.rel (%p2726) target = $region52
      $region51: #{extended_basic_block_forward.3} parent=47 // pred_region
        %s2729 = smul.u32 8, %s24
        %p2730 = scmp.lt.s32.totalorder %s23, 1
        %s2731 = scalar_select %p2730, %s23, 1
        %p2732 = scmp.lt.s32.totalorder %s2729, 15
        %s2733 = scalar_select %p2732, %s2729, 15
        %s2734 = smul.addr %s2733, 3
        %s2735 = smul.addr %s2731, 48
        %s2736 = sadd.s32 %s2734, %s2735
        %s2737 = smul.addr %s2736, 4
        %s2738 = scalar_lea.vmem %s4, %s2737
      $region52: #{extended_basic_block_forward.3} parent=47 // pred_fallthru
        _
      // Predicated region
      $region53: #{extended_basic_block_forward.3} parent=47 // pred_check
        %p2739 = pneg %p202
      $region54: #{extended_basic_block_forward.3} parent=47 // pred_check_branch
        %2741 = sbr.rel (%p2739) target = $region56
      $region55: #{extended_basic_block_forward.3} parent=47 // pred_region
        %s2742 = smul.u32 %s23, 2
        %s2743 = sadd.s32 %s2742, %s24
        %p2744 = scmp.lt.s32.totalorder %s2743, 3
        %s2745 = scalar_select %p2744, %s2743, 3
        %s2746 = smul.addr %s2745, 8
        %s2747 = scalar_lea.vmem %s5, %s2746
      $region56: #{extended_basic_block_forward.3} parent=47 // pred_fallthru
        _
    $region48: #{extended_basic_block_forward.3} parent=5 // pred_fallthru
      _
  $region6: #{extended_basic_block_forward.3} parent=0 // loop_footer
    %s16 = sadd.s32 1, %s12
  $region7: #{extended_basic_block_forward.3} parent=0 // loop_footer_branch
    %11 = sbr.rel target = $region3
  $region8: #{extended_basic_block_forward.3} parent=0 // loop_exit
    _

// kernel: extended_basic_block_forward.4
$region0: #{extended_basic_block_forward.4}
  #allocation0 [shape = 'u32[]', space=smem, size = 0x4, offset = 0x4, fixed_abs, tag = 'smem constant byte address 0x4 - core index']
  #allocation1 [shape = 'u32[144,128]{1,0:T(1,128)}', space=vmem, size = 0x12000, scoped, tag = 'internal scratch']
  %s0 = inlined_call_operand.vmem [shape: bf16[2,16,24,128], index: 0, kind: input, shape index: {}, may-alias: {0,1,2}]
  %s1 = inlined_call_operand.vmem [shape: bf16[2,16,24,128], index: 1, kind: input, shape index: {}, may-alias: {0,1,2}]
  %s2 = inlined_call_operand.vmem [shape: bf16[2,16,24,128], index: 2, kind: input, shape index: {}, may-alias: {0,1,2}]
  %s3 = inlined_call_operand.vmem [shape: bf16[9,128,128], index: 3, kind: input, shape index: {}]
  %s4 = inlined_call_operand.vmem [shape: f32[1,128], index: 4, kind: input, shape index: {}]
  %s5 = inlined_call_operand.vmem [shape: f32[1,128], index: 5, kind: input, shape index: {}]
  %s6 = inlined_call_operand.vmem [shape: bf16[2,16,24,128], index: 6, kind: output, shape index: {0}]
  %s7 = inlined_call_operand.vmem [shape: f32[32,128], index: 7, kind: output, shape index: {1}]
  %8 = xla_tuple %s6, %s7
  %s9 = sld [smem:[#allocation0]]
  $region65: #{extended_basic_block_forward.4} parent=0
    _
  %s11 = ssub.s32 1, %s9
  %s12 = scalar_select 0, %s11, %s9
  loop: start=0, step=1, limit=6
  $region2: #{extended_basic_block_forward.4} parent=0 // loop_pre_header
    _
  $region3: #{extended_basic_block_forward.4} parent=0 // loop_header
    %s14 = sphi 0, %s18
    %p15 = scmp.ge.s32.totalorder %s14, 6
    %s21 = sphi 0, %s33
    %s22 = sphi 0, %s29
    %s23 = sphi 0, %s21
    %s24 = sphi 0, %s22
    %s25 = sphi 0, %s23
    %s26 = sphi 0, %s24
    %s44 = sphi 0, %s46
    %s47 = sphi 0, %s44
    %s48 = sphi 0, %s47
    %s64 = sphi 0, %s48
    %s72 = sphi 0, %s74
    %s75 = sphi 0, %s72
    %s76 = sphi 0, %s75
    %s92 = sphi 0, %s76
    %s106 = sphi 0, %s108
    %s109 = sphi 0, %s106
    %s110 = sphi 0, %s109
    %s126 = sphi 0, %s110
    %s130 = sphi 0, %s130
    %s132 = sphi 0, %s130
    %s133 = sphi 0, %s132
    %s147 = sphi 0, %s133
    %s151 = sphi 0, %s151
    %s153 = sphi 0, %s151
    %s154 = sphi 0, %s153
    %s168 = sphi 0, %s154
    %s172 = sphi 0, %s172
    %s174 = sphi 0, %s172
    %s175 = sphi 0, %s174
    %s189 = sphi 0, %s175
    %s197 = sphi 0, %s199
    %s200 = sphi 0, %s197
    %s201 = sphi 0, %s200
    %s217 = sphi 0, %s201
    %s227 = sphi 0, %s229
    %s230 = sphi 0, %s227
    %s231 = sphi 0, %s230
    %s247 = sphi 0, %s231
  $region4: #{extended_basic_block_forward.4} parent=0 // loop_header_branch
    %17 = sbr.rel (%p15) target = $region8
  $region5: #{extended_basic_block_forward.4} parent=0 // loop_body
    %s19 = ssub.s32 %s14, 1
    %s20 = ssub.s32 %s14, 2
    %s27 = sadd.s32 1, %s22
    %p28 = scmp.ge.s32.totalorder %s27, 2
    %s29 = scalar_select %p28, 0, %s27
    %s30 = sadd.s32 1, %s21
    %s31 = scalar_select %p28, %s30, %s21
    %p32 = scmp.ge.s32.totalorder %s31, 2
    %s33 = scalar_select %p32, 0, %s31
    %s34 = ssub.s32 %s22, 1
    %p35 = scmp.gt.s32.totalorder %s34, 0
    %s36 = scalar_select %p35, %s34, 0
    %s37 = ssub.s32 %s29, 1
    %p38 = scmp.gt.s32.totalorder %s37, 0
    %s39 = scalar_select %p38, %s37, 0
    %s40 = ssub.s32 %s21, %s33
    %s41 = ssub.s32 %s36, %s39
    %s42 = sor.u32 %s40, %s41
    %p43 = scmp.eq.s32.totalorder %s42, 0
    %s45 = sadd.s32 %s44, 1
    %s46 = scalar_select %p43, %s44, %s45
    %p49 = pneg %p43
    %p50 = scmp.eq.s32.totalorder %s14, 3
    %p51 = por %p49, %p50
    %p52 = scmp.ne.s32.totalorder %s44, %s47
    %p53 = scmp.eq.s32.totalorder %s14, 0
    %p54 = por %p52, %p53
    %p55 = scmp.ne.s32.totalorder %s44, %s47
    %p56 = scmp.eq.s32.totalorder %s19, 3
    %p57 = por %p55, %p56
    %p58 = scmp.ne.s32.totalorder %s47, %s48
    %p59 = scmp.eq.s32.totalorder %s19, 0
    %p60 = por %p58, %p59
    %p61 = scmp.ne.s32.totalorder %s47, %s48
    %p62 = scmp.eq.s32.totalorder %s20, 3
    %p63 = por %p61, %p62
    %p65 = scmp.ne.s32.totalorder %s48, %s64
    %p66 = scmp.eq.s32.totalorder %s20, 0
    %p67 = por %p65, %p66
    %s68 = ssub.s32 %s21, %s33
    %s69 = ssub.s32 %s22, %s29
    %s70 = sor.u32 %s68, %s69
    %p71 = scmp.eq.s32.totalorder %s70, 0
    %s73 = sadd.s32 %s72, 1
    %s74 = scalar_select %p71, %s72, %s73
    %p77 = pneg %p71
    %p78 = scmp.eq.s32.totalorder %s14, 3
    %p79 = por %p77, %p78
    %p80 = scmp.ne.s32.totalorder %s72, %s75
    %p81 = scmp.eq.s32.totalorder %s14, 0
    %p82 = por %p80, %p81
    %p83 = scmp.ne.s32.totalorder %s72, %s75
    %p84 = scmp.eq.s32.totalorder %s19, 3
    %p85 = por %p83, %p84
    %p86 = scmp.ne.s32.totalorder %s75, %s76
    %p87 = scmp.eq.s32.totalorder %s19, 0
    %p88 = por %p86, %p87
    %p89 = scmp.ne.s32.totalorder %s75, %s76
    %p90 = scmp.eq.s32.totalorder %s20, 3
    %p91 = por %p89, %p90
    %p93 = scmp.ne.s32.totalorder %s76, %s92
    %p94 = scmp.eq.s32.totalorder %s20, 0
    %p95 = por %p93, %p94
    %s96 = sadd.s32 %s22, 1
    %p97 = scmp.lt.s32.totalorder %s96, 1
    %s98 = scalar_select %p97, %s96, 1
    %s99 = sadd.s32 %s29, 1
    %p100 = scmp.lt.s32.totalorder %s99, 1
    %s101 = scalar_select %p100, %s99, 1
    %s102 = ssub.s32 %s21, %s33
    %s103 = ssub.s32 %s98, %s101
    %s104 = sor.u32 %s102, %s103
    %p105 = scmp.eq.s32.totalorder %s104, 0
    %s107 = sadd.s32 %s106, 1
    %s108 = scalar_select %p105, %s106, %s107
    %p111 = pneg %p105
    %p112 = scmp.eq.s32.totalorder %s14, 3
    %p113 = por %p111, %p112
    %p114 = scmp.ne.s32.totalorder %s106, %s109
    %p115 = scmp.eq.s32.totalorder %s14, 0
    %p116 = por %p114, %p115
    %p117 = scmp.ne.s32.totalorder %s106, %s109
    %p118 = scmp.eq.s32.totalorder %s19, 3
    %p119 = por %p117, %p118
    %p120 = scmp.ne.s32.totalorder %s109, %s110
    %p121 = scmp.eq.s32.totalorder %s19, 0
    %p122 = por %p120, %p121
    %p123 = scmp.ne.s32.totalorder %s109, %s110
    %p124 = scmp.eq.s32.totalorder %s20, 3
    %p125 = por %p123, %p124
    %p127 = scmp.ne.s32.totalorder %s110, %s126
    %p128 = scmp.eq.s32.totalorder %s20, 0
    %p129 = por %p127, %p128
    %s131 = sadd.s32 %s130, 1
    %p134 = scmp.eq.s32.totalorder %s14, 3
    %p135 = scmp.ne.s32.totalorder %s130, %s132
    %p136 = scmp.eq.s32.totalorder %s14, 0
    %p137 = por %p135, %p136
    %p138 = scmp.ne.s32.totalorder %s130, %s132
    %p139 = scmp.eq.s32.totalorder %s19, 3
    %p140 = por %p138, %p139
    %p141 = scmp.ne.s32.totalorder %s132, %s133
    %p142 = scmp.eq.s32.totalorder %s19, 0
    %p143 = por %p141, %p142
    %p144 = scmp.ne.s32.totalorder %s132, %s133
    %p145 = scmp.eq.s32.totalorder %s20, 3
    %p146 = por %p144, %p145
    %p148 = scmp.ne.s32.totalorder %s133, %s147
    %p149 = scmp.eq.s32.totalorder %s20, 0
    %p150 = por %p148, %p149
    %s152 = sadd.s32 %s151, 1
    %p155 = scmp.eq.s32.totalorder %s14, 3
    %p156 = scmp.ne.s32.totalorder %s151, %s153
    %p157 = scmp.eq.s32.totalorder %s14, 0
    %p158 = por %p156, %p157
    %p159 = scmp.ne.s32.totalorder %s151, %s153
    %p160 = scmp.eq.s32.totalorder %s19, 3
    %p161 = por %p159, %p160
    %p162 = scmp.ne.s32.totalorder %s153, %s154
    %p163 = scmp.eq.s32.totalorder %s19, 0
    %p164 = por %p162, %p163
    %p165 = scmp.ne.s32.totalorder %s153, %s154
    %p166 = scmp.eq.s32.totalorder %s20, 3
    %p167 = por %p165, %p166
    %p169 = scmp.ne.s32.totalorder %s154, %s168
    %p170 = scmp.eq.s32.totalorder %s20, 0
    %p171 = por %p169, %p170
    %s173 = sadd.s32 %s172, 1
    %p176 = scmp.eq.s32.totalorder %s14, 3
    %p177 = scmp.ne.s32.totalorder %s172, %s174
    %p178 = scmp.eq.s32.totalorder %s14, 0
    %p179 = por %p177, %p178
    %p180 = scmp.ne.s32.totalorder %s172, %s174
    %p181 = scmp.eq.s32.totalorder %s19, 3
    %p182 = por %p180, %p181
    %p183 = scmp.ne.s32.totalorder %s174, %s175
    %p184 = scmp.eq.s32.totalorder %s19, 0
    %p185 = por %p183, %p184
    %p186 = scmp.ne.s32.totalorder %s174, %s175
    %p187 = scmp.eq.s32.totalorder %s20, 3
    %p188 = por %p186, %p187
    %p190 = scmp.ne.s32.totalorder %s175, %s189
    %p191 = scmp.eq.s32.totalorder %s20, 0
    %p192 = por %p190, %p191
    %s193 = ssub.s32 %s21, %s33
    %s194 = ssub.s32 %s22, %s29
    %s195 = sor.u32 %s193, %s194
    %p196 = scmp.eq.s32.totalorder %s195, 0
    %s198 = sadd.s32 %s197, 1
    %s199 = scalar_select %p196, %s197, %s198
    %p202 = pneg %p196
    %p203 = scmp.eq.s32.totalorder %s14, 3
    %p204 = por %p202, %p203
    %p205 = scmp.ne.s32.totalorder %s197, %s200
    %p206 = scmp.eq.s32.totalorder %s14, 0
    %p207 = por %p205, %p206
    %p208 = scmp.ne.s32.totalorder %s197, %s200
    %p209 = scmp.eq.s32.totalorder %s19, 3
    %p210 = por %p208, %p209
    %p211 = scmp.ne.s32.totalorder %s200, %s201
    %p212 = scmp.eq.s32.totalorder %s19, 0
    %p213 = por %p211, %p212
    %p214 = scmp.ne.s32.totalorder %s200, %s201
    %p215 = scmp.eq.s32.totalorder %s20, 3
    %p216 = por %p214, %p215
    %p218 = scmp.ne.s32.totalorder %s201, %s217
    %p219 = scmp.eq.s32.totalorder %s20, 0
    %p220 = por %p218, %p219
    %s221 = smul.u32 %s21, 2
    %s222 = sadd.s32 %s221, %s22
    %s223 = smul.u32 %s33, 2
    %s224 = sadd.s32 %s223, %s29
    %s225 = ssub.s32 %s222, %s224
    %p226 = scmp.eq.s32.totalorder %s225, 0
    %s228 = sadd.s32 %s227, 1
    %s229 = scalar_select %p226, %s227, %s228
    %p232 = pneg %p226
    %p233 = scmp.eq.s32.totalorder %s14, 3
    %p234 = por %p232, %p233
    %p235 = scmp.ne.s32.totalorder %s227, %s230
    %p236 = scmp.eq.s32.totalorder %s14, 0
    %p237 = por %p235, %p236
    %p238 = scmp.ne.s32.totalorder %s227, %s230
    %p239 = scmp.eq.s32.totalorder %s19, 3
    %p240 = por %p238, %p239
    %p241 = scmp.ne.s32.totalorder %s230, %s231
    %p242 = scmp.eq.s32.totalorder %s19, 0
    %p243 = por %p241, %p242
    %p244 = scmp.ne.s32.totalorder %s230, %s231
    %p245 = scmp.eq.s32.totalorder %s20, 3
    %p246 = por %p244, %p245
    %p248 = scmp.ne.s32.totalorder %s231, %s247
    %p249 = scmp.eq.s32.totalorder %s20, 0
    %p250 = por %p248, %p249
    %p251 = scmp.le.s32.totalorder 1, %s14
    %p252 = scmp.lt.s32.totalorder %s14, 5
    %p253 = pnand %p251, %p252
    %p254 = pneg %p253
    // Predicated region
    $region9: #{extended_basic_block_forward.4} parent=5 // pred_check
      _
    $region10: #{extended_basic_block_forward.4} parent=5 // pred_check_branch
      %256 = sbr.rel (%p253) target = $region12
    $region11: #{extended_basic_block_forward.4} parent=5 // pred_region
      %s257 = ssub.s32 %s14, 1
      // Predicated region
      $region13: #{extended_basic_block_forward.4} parent=11 // pred_check
        %p258 = pneg %p143
      $region14: #{extended_basic_block_forward.4} parent=11 // pred_check_branch
        %260 = sbr.rel (%p258) target = $region16
      $region15: #{extended_basic_block_forward.4} parent=11 // pred_region
        _
      $region16: #{extended_basic_block_forward.4} parent=11 // pred_fallthru
        _
      // Predicated region
      $region17: #{extended_basic_block_forward.4} parent=11 // pred_check
        %p261 = pneg %p164
      $region18: #{extended_basic_block_forward.4} parent=11 // pred_check_branch
        %263 = sbr.rel (%p261) target = $region20
      $region19: #{extended_basic_block_forward.4} parent=11 // pred_region
        _
      $region20: #{extended_basic_block_forward.4} parent=11 // pred_fallthru
        _
      // Predicated region
      $region21: #{extended_basic_block_forward.4} parent=11 // pred_check
        %p264 = pneg %p185
      $region22: #{extended_basic_block_forward.4} parent=11 // pred_check_branch
        %266 = sbr.rel (%p264) target = $region24
      $region23: #{extended_basic_block_forward.4} parent=11 // pred_region
        _
      $region24: #{extended_basic_block_forward.4} parent=11 // pred_fallthru
        _
    $region12: #{extended_basic_block_forward.4} parent=5 // pred_fallthru
      _
    %p267 = scmp.lt.s32.totalorder %s14, 4
    // Predicated region
    $region25: #{extended_basic_block_forward.4} parent=5 // pred_check
      %p268 = pneg %p267
    $region26: #{extended_basic_block_forward.4} parent=5 // pred_check_branch
      %270 = sbr.rel (%p268) target = $region28
    $region27: #{extended_basic_block_forward.4} parent=5 // pred_region
      // Predicated region
      $region29: #{extended_basic_block_forward.4} parent=27 // pred_check
        %p271 = pneg %p54
      $region30: #{extended_basic_block_forward.4} parent=27 // pred_check_branch
        %273 = sbr.rel (%p271) target = $region32
      $region31: #{extended_basic_block_forward.4} parent=27 // pred_region
        %s274 = ssub.s32 %s22, 1
        %p275 = scmp.gt.s32.totalorder %s274, 0
        %s276 = scalar_select %p275, %s274, 0
        %s277 = smul.u32 8, %s276
        %p278 = scmp.lt.s32.totalorder %s21, 1
        %s279 = scalar_select %p278, %s21, 1
        %p280 = scmp.lt.s32.totalorder %s277, 15
        %s281 = scalar_select %p280, %s277, 15
        %s282 = smul.addr %s281, 3
        %s283 = smul.addr %s279, 48
        %s284 = sadd.s32 %s282, %s283
        %s285 = smul.addr %s284, 4
        %s286 = scalar_lea.vmem %s0, %s285
        %s287 = ssub.s32 %s22, 1
        %p288 = scmp.gt.s32.totalorder %s287, 0
        %s289 = scalar_select %p288, %s287, 0
        %s290 = smul.u32 8, %s289
      $region32: #{extended_basic_block_forward.4} parent=27 // pred_fallthru
        _
      // Predicated region
      $region33: #{extended_basic_block_forward.4} parent=27 // pred_check
        %p291 = pneg %p82
      $region34: #{extended_basic_block_forward.4} parent=27 // pred_check_branch
        %293 = sbr.rel (%p291) target = $region36
      $region35: #{extended_basic_block_forward.4} parent=27 // pred_region
        %s294 = smul.u32 8, %s22
        %p295 = scmp.lt.s32.totalorder %s21, 1
        %s296 = scalar_select %p295, %s21, 1
        %p297 = scmp.lt.s32.totalorder %s294, 15
        %s298 = scalar_select %p297, %s294, 15
        %s299 = smul.addr %s298, 3
        %s300 = smul.addr %s296, 48
        %s301 = sadd.s32 %s299, %s300
        %s302 = smul.addr %s301, 4
        %s303 = scalar_lea.vmem %s1, %s302
        %s304 = smul.u32 8, %s22
      $region36: #{extended_basic_block_forward.4} parent=27 // pred_fallthru
        _
      // Predicated region
      $region37: #{extended_basic_block_forward.4} parent=27 // pred_check
        %p305 = pneg %p116
      $region38: #{extended_basic_block_forward.4} parent=27 // pred_check_branch
        %307 = sbr.rel (%p305) target = $region40
      $region39: #{extended_basic_block_forward.4} parent=27 // pred_region
        %s308 = sadd.s32 %s22, 1
        %p309 = scmp.lt.s32.totalorder %s308, 1
        %s310 = scalar_select %p309, %s308, 1
        %s311 = smul.u32 8, %s310
        %p312 = scmp.lt.s32.totalorder %s21, 1
        %s313 = scalar_select %p312, %s21, 1
        %p314 = scmp.lt.s32.totalorder %s311, 15
        %s315 = scalar_select %p314, %s311, 15
        %s316 = smul.addr %s315, 3
        %s317 = smul.addr %s313, 48
        %s318 = sadd.s32 %s316, %s317
        %s319 = smul.addr %s318, 4
        %s320 = scalar_lea.vmem %s2, %s319
        %s321 = sadd.s32 %s22, 1
        %p322 = scmp.lt.s32.totalorder %s321, 1
        %s323 = scalar_select %p322, %s321, 1
        %s324 = smul.u32 8, %s323
      $region40: #{extended_basic_block_forward.4} parent=27 // pred_fallthru
        _
    $region28: #{extended_basic_block_forward.4} parent=5 // pred_fallthru
      _
    %p325 = scmp.le.s32.totalorder 1, %s14
    %p326 = scmp.lt.s32.totalorder %s14, 5
    %p327 = pnand %p325, %p326
    %p328 = pneg %p327
    // Predicated region
    $region41: #{extended_basic_block_forward.4} parent=5 // pred_check
      _
    $region42: #{extended_basic_block_forward.4} parent=5 // pred_check_branch
      %330 = sbr.rel (%p327) target = $region44
    $region43: #{extended_basic_block_forward.4} parent=5 // pred_region
      %s331 = ssub.s32 %s14, 1
      %s332 = ssub.s32 %s24, 1
      %p333 = scmp.gt.s32.totalorder %s332, 0
      %s334 = scalar_select %p333, %s332, 0
      %s335 = smul.u32 8, %s334
      %p336 = scmp.lt.s32.totalorder %s23, 1
      %s337 = scalar_select %p336, %s23, 1
      %p338 = scmp.lt.s32.totalorder %s335, 15
      %s339 = scalar_select %p338, %s335, 15
      %s340 = smul.addr %s339, 3
      %s341 = smul.addr %s337, 48
      %s342 = sadd.s32 %s340, %s341
      %s343 = smul.addr %s342, 4
      %s344 = scalar_lea.vmem %s0, %s343
      %p345 = pneg %p60
      %p346 = pneg %p57
      %s347 = smul.u32 8, %s24
      %p348 = scmp.lt.s32.totalorder %s23, 1
      %s349 = scalar_select %p348, %s23, 1
      %p350 = scmp.lt.s32.totalorder %s347, 15
      %s351 = scalar_select %p350, %s347, 15
      %s352 = smul.addr %s351, 3
      %s353 = smul.addr %s349, 48
      %s354 = sadd.s32 %s352, %s353
      %s355 = smul.addr %s354, 4
      %s356 = scalar_lea.vmem %s1, %s355
      %p357 = pneg %p88
      %p358 = pneg %p85
      %s359 = sadd.s32 %s24, 1
      %p360 = scmp.lt.s32.totalorder %s359, 1
      %s361 = scalar_select %p360, %s359, 1
      %s362 = smul.u32 8, %s361
      %p363 = scmp.lt.s32.totalorder %s23, 1
      %s364 = scalar_select %p363, %s23, 1
      %p365 = scmp.lt.s32.totalorder %s362, 15
      %s366 = scalar_select %p365, %s362, 15
      %s367 = smul.addr %s366, 3
      %s368 = smul.addr %s364, 48
      %s369 = sadd.s32 %s367, %s368
      %s370 = smul.addr %s369, 4
      %s371 = scalar_lea.vmem %s2, %s370
      %p372 = pneg %p122
      %p373 = pneg %p119
      %p374 = pneg %p143
      %p375 = pneg %p140
      %p376 = pneg %p164
      %p377 = pneg %p161
      %p378 = pneg %p185
      %p379 = pneg %p182
      %p380 = pneg %p213
      %p381 = pneg %p210
      %s382 = smul.u32 8, %s24
      %p383 = scmp.lt.s32.totalorder %s23, 1
      %s384 = scalar_select %p383, %s23, 1
      %p385 = scmp.lt.s32.totalorder %s382, 15
      %s386 = scalar_select %p385, %s382, 15
      %s387 = smul.addr %s386, 3
      %s388 = smul.addr %s384, 48
      %s389 = sadd.s32 %s387, %s388
      %s390 = smul.addr %s389, 4
      %s391 = scalar_lea.vmem %s6, %s390
      %p392 = pneg %p243
      %p393 = pneg %p240
      %s394 = smul.u32 %s23, 2
      %s395 = sadd.s32 %s394, %s24
      %p396 = scmp.lt.s32.totalorder %s395, 3
      %s397 = scalar_select %p396, %s395, 3
      %s398 = smul.addr %s397, 8
      %s399 = scalar_lea.vmem %s7, %s398
      %s400 = ssub.s32 %s24, 1
      %p401 = scmp.gt.s32.totalorder %s400, 0
      %s402 = scalar_select %p401, %s400, 0
      %s403 = smul.u32 8, %s402
      %p404 = scmp.lt.s32.totalorder %s23, 1
      %s405 = scalar_select %p404, %s23, 1
      %p406 = scmp.lt.s32.totalorder %s403, 15
      %s407 = scalar_select %p406, %s403, 15
      %s408 = smul.addr %s407, 3
      %s409 = smul.addr %s405, 48
      %s410 = sadd.s32 %s408, %s409
      %s411 = smul.addr %s410, 4
      %s412 = scalar_lea.vmem %s0, %s411
      %s413 = ssub.s32 %s24, 1
      %p414 = scmp.gt.s32.totalorder %s413, 0
      %s415 = scalar_select %p414, %s413, 0
      %s416 = smul.u32 8, %s415
      %s417 = smul.u32 8, %s24
      %p418 = scmp.lt.s32.totalorder %s23, 1
      %s419 = scalar_select %p418, %s23, 1
      %p420 = scmp.lt.s32.totalorder %s417, 15
      %s421 = scalar_select %p420, %s417, 15
      %s422 = smul.addr %s421, 3
      %s423 = smul.addr %s419, 48
      %s424 = sadd.s32 %s422, %s423
      %s425 = smul.addr %s424, 4
      %s426 = scalar_lea.vmem %s1, %s425
      %s427 = smul.u32 8, %s24
      %s428 = sadd.s32 %s24, 1
      %p429 = scmp.lt.s32.totalorder %s428, 1
      %s430 = scalar_select %p429, %s428, 1
      %s431 = smul.u32 8, %s430
      %p432 = scmp.lt.s32.totalorder %s23, 1
      %s433 = scalar_select %p432, %s23, 1
      %p434 = scmp.lt.s32.totalorder %s431, 15
      %s435 = scalar_select %p434, %s431, 15
      %s436 = smul.addr %s435, 3
      %s437 = smul.addr %s433, 48
      %s438 = sadd.s32 %s436, %s437
      %s439 = smul.addr %s438, 4
      %s440 = scalar_lea.vmem %s2, %s439
      %s441 = sadd.s32 %s24, 1
      %p442 = scmp.lt.s32.totalorder %s441, 1
      %s443 = scalar_select %p442, %s441, 1
      %s444 = smul.u32 8, %s443
      %s445 = smul.u32 8, %s24
      %p446 = scmp.lt.s32.totalorder %s23, 1
      %s447 = scalar_select %p446, %s23, 1
      %p448 = scmp.lt.s32.totalorder %s445, 15
      %s449 = scalar_select %p448, %s445, 15
      %s450 = smul.addr %s449, 3
      %s451 = smul.addr %s447, 48
      %s452 = sadd.s32 %s450, %s451
      %s453 = smul.addr %s452, 4
      %s454 = scalar_lea.vmem %s6, %s453
      %s455 = smul.u32 8, %s24
      %s456 = smul.u32 %s23, 2
      %s457 = sadd.s32 %s456, %s24
      %p458 = scmp.lt.s32.totalorder %s457, 3
      %s459 = scalar_select %p458, %s457, 3
      %s460 = smul.addr %s459, 8
      %s461 = scalar_lea.vmem %s7, %s460
      %s462 = smul.u32 %s23, 2
      %s463 = sadd.s32 %s462, %s24
      %s465 = scalar_lea.vmem %s412, 84
      %v466 = vld [vmem:[%s465] sm:$0xf]
      %v467 = vld [vmem:[%s465 + $0x4] sm:$0xf]
      %v468 = vld [vmem:[%s465 + $0x8] sm:$0xf]
      %v469 = vld [vmem:[%s426] sm:$0xf]
      %v470 = vld [vmem:[%s426 + $0x4] sm:$0xf]
      %v471 = vld [vmem:[%s426 + $0x8] sm:$0xf]
      %v472 = vld [vmem:[%s426 + $0xc] sm:$0xf]
      %v473 = vld [vmem:[%s426 + $0x10] sm:$0xf]
      %v474 = vld [vmem:[%s426 + $0x14] sm:$0xf]
      %v475 = vld [vmem:[%s426 + $0x18] sm:$0xf]
      %v476 = vld [vmem:[%s426 + $0x1c] sm:$0xf]
      %v477 = vld [vmem:[%s426 + $0x20] sm:$0xf]
      %v478 = vld [vmem:[%s426 + $0x24] sm:$0xf]
      %v479 = vld [vmem:[%s426 + $0x28] sm:$0xf]
      %v480 = vld [vmem:[%s426 + $0x2c] sm:$0xf]
      %v481 = vld [vmem:[%s426 + $0x30] sm:$0xf]
      %v482 = vld [vmem:[%s426 + $0x34] sm:$0xf]
      %v483 = vld [vmem:[%s426 + $0x38] sm:$0xf]
      %v484 = vld [vmem:[%s426 + $0x3c] sm:$0xf]
      %v485 = vld [vmem:[%s426 + $0x40] sm:$0xf]
      %v486 = vld [vmem:[%s426 + $0x44] sm:$0xf]
      %v487 = vld [vmem:[%s426 + $0x48] sm:$0xf]
      %v488 = vld [vmem:[%s426 + $0x4c] sm:$0xf]
      %v489 = vld [vmem:[%s426 + $0x50] sm:$0xf]
      %v490 = vld [vmem:[%s426 + $0x54] sm:$0xf]
      %v491 = vld [vmem:[%s426 + $0x58] sm:$0xf]
      %v492 = vld [vmem:[%s426 + $0x5c] sm:$0xf]
      %v493 = vld [vmem:[%s440] sm:$0xf]
      %v494 = vld [vmem:[%s440 + $0x4] sm:$0xf]
      %v495 = vld [vmem:[%s440 + $0x8] sm:$0xf]
      %v496 = vld [vmem:[%s4] sm:$0x1]
      %v497 = vld [vmem:[%s5] sm:$0x1]
      %v498 = vunpack.c.l.bf16 %v466
      %v499 = vunpack.c.l.bf16 %v467
      %v500 = vunpack.c.l.bf16 %v468
      %v501 = vunpack.c.l.bf16 %v469
      %v502 = vunpack.c.l.bf16 %v470
      %v503 = vunpack.c.l.bf16 %v471
      %v504 = vunpack.c.l.bf16 %v472
      %v505 = vunpack.c.l.bf16 %v473
      %v506 = vunpack.c.l.bf16 %v474
      %v507 = vunpack.c.l.bf16 %v475
      %v508 = vunpack.c.l.bf16 %v476
      %v509 = vunpack.c.l.bf16 %v477
      %v510 = vunpack.c.l.bf16 %v478
      %v511 = vunpack.c.l.bf16 %v479
      %v512 = vunpack.c.l.bf16 %v480
      %v513 = vunpack.c.l.bf16 %v481
      %v514 = vunpack.c.l.bf16 %v482
      %v515 = vunpack.c.l.bf16 %v483
      %v516 = vunpack.c.l.bf16 %v484
      %v517 = vunpack.c.l.bf16 %v485
      %v518 = vunpack.c.l.bf16 %v486
      %v519 = vunpack.c.l.bf16 %v487
      %v520 = vunpack.c.l.bf16 %v488
      %v521 = vunpack.c.l.bf16 %v489
      %v522 = vunpack.c.l.bf16 %v490
      %v523 = vunpack.c.l.bf16 %v491
      %v524 = vunpack.c.l.bf16 %v492
      %v525 = vunpack.c.l.bf16 %v493
      %v526 = vunpack.c.l.bf16 %v494
      %v527 = vunpack.c.l.bf16 %v495
      %v529 = vlaneseq
      %v530 = vshrl.u32 %v529, 7
      %v531 = vsub.s32 0, %v530
      %v532 = vrot.slane %v496, %v531
      %v534 = vmul.f32 %v498, %v532
      %v535 = vmul.f32 %v499, %v532
      %v536 = vmul.f32 %v500, %v532
      %v537 = vmul.f32 %v501, %v532
      %v538 = vmul.f32 %v502, %v532
      %v539 = vmul.f32 %v503, %v532
      %v540 = vmul.f32 %v504, %v532
      %v541 = vmul.f32 %v505, %v532
      %v542 = vmul.f32 %v506, %v532
      %v543 = vmul.f32 %v507, %v532
      %v544 = vmul.f32 %v508, %v532
      %v545 = vmul.f32 %v509, %v532
      %v546 = vmul.f32 %v510, %v532
      %v547 = vmul.f32 %v511, %v532
      %v548 = vmul.f32 %v512, %v532
      %v549 = vmul.f32 %v513, %v532
      %v550 = vmul.f32 %v514, %v532
      %v551 = vmul.f32 %v515, %v532
      %v552 = vmul.f32 %v516, %v532
      %v553 = vmul.f32 %v517, %v532
      %v554 = vmul.f32 %v518, %v532
      %v555 = vmul.f32 %v519, %v532
      %v556 = vmul.f32 %v520, %v532
      %v557 = vmul.f32 %v521, %v532
      %v558 = vmul.f32 %v522, %v532
      %v559 = vmul.f32 %v523, %v532
      %v560 = vmul.f32 %v524, %v532
      %v561 = vmul.f32 %v525, %v532
      %v562 = vmul.f32 %v526, %v532
      %v563 = vmul.f32 %v527, %v532
      %v565 = vlaneseq
      %v566 = vshrl.u32 %v565, 7
      %v567 = vsub.s32 0, %v566
      %v568 = vrot.slane %v497, %v567
      %v570 = vadd.f32 %v534, %v568
      %v571 = vadd.f32 %v535, %v568
      %v572 = vadd.f32 %v536, %v568
      %v573 = vadd.f32 %v537, %v568
      %v574 = vadd.f32 %v538, %v568
      %v575 = vadd.f32 %v539, %v568
      %v576 = vadd.f32 %v540, %v568
      %v577 = vadd.f32 %v541, %v568
      %v578 = vadd.f32 %v542, %v568
      %v579 = vadd.f32 %v543, %v568
      %v580 = vadd.f32 %v544, %v568
      %v581 = vadd.f32 %v545, %v568
      %v582 = vadd.f32 %v546, %v568
      %v583 = vadd.f32 %v547, %v568
      %v584 = vadd.f32 %v548, %v568
      %v585 = vadd.f32 %v549, %v568
      %v586 = vadd.f32 %v550, %v568
      %v587 = vadd.f32 %v551, %v568
      %v588 = vadd.f32 %v552, %v568
      %v589 = vadd.f32 %v553, %v568
      %v590 = vadd.f32 %v554, %v568
      %v591 = vadd.f32 %v555, %v568
      %v592 = vadd.f32 %v556, %v568
      %v593 = vadd.f32 %v557, %v568
      %v594 = vadd.f32 %v558, %v568
      %v595 = vadd.f32 %v559, %v568
      %v596 = vadd.f32 %v560, %v568
      %v597 = vadd.f32 %v561, %v568
      %v598 = vadd.f32 %v562, %v568
      %v599 = vadd.f32 %v563, %v568
      %v600 = vmax.f32 %v570, 0.0
      %v601 = vmax.f32 %v571, 0.0
      %v602 = vmax.f32 %v572, 0.0
      %v603 = vmax.f32 %v573, 0.0
      %v604 = vmax.f32 %v574, 0.0
      %v605 = vmax.f32 %v575, 0.0
      %v606 = vmax.f32 %v576, 0.0
      %v607 = vmax.f32 %v577, 0.0
      %v608 = vmax.f32 %v578, 0.0
      %v609 = vmax.f32 %v579, 0.0
      %v610 = vmax.f32 %v580, 0.0
      %v611 = vmax.f32 %v581, 0.0
      %v612 = vmax.f32 %v582, 0.0
      %v613 = vmax.f32 %v583, 0.0
      %v614 = vmax.f32 %v584, 0.0
      %v615 = vmax.f32 %v585, 0.0
      %v616 = vmax.f32 %v586, 0.0
      %v617 = vmax.f32 %v587, 0.0
      %v618 = vmax.f32 %v588, 0.0
      %v619 = vmax.f32 %v589, 0.0
      %v620 = vmax.f32 %v590, 0.0
      %v621 = vmax.f32 %v591, 0.0
      %v622 = vmax.f32 %v592, 0.0
      %v623 = vmax.f32 %v593, 0.0
      %v624 = vmax.f32 %v594, 0.0
      %v625 = vmax.f32 %v595, 0.0
      %v626 = vmax.f32 %v596, 0.0
      %v627 = vmax.f32 %v597, 0.0
      %v628 = vmax.f32 %v598, 0.0
      %v629 = vmax.f32 %v599, 0.0
      %v630 = vlaneseq
      %v631 = vshrl.u32 %v630, 7
      %v632 = vadd.s32 %v631, 8
      %v633 = vadd.s32 %v631, 16
      %vm634 = vcmp.ge.s32.totalorder %v631, 1
      %vm635 = vcmp.ge.s32.totalorder %v632, 1
      %vm636 = vcmp.ge.s32.totalorder %v633, 1
      %vm637 = vcmp.le.s32.totalorder %v631, 16
      %vm638 = vcmp.le.s32.totalorder %v632, 16
      %vm639 = vcmp.le.s32.totalorder %v633, 16
      %vm640 = vmand %vm634, %vm637
      %vm641 = vmand %vm635, %vm638
      %vm642 = vmand %vm636, %vm639
      %v643 = vsel %vm640, 1, 0
      %v644 = vsel %vm641, 1, 0
      %v645 = vsel %vm642, 1, 0
      %vm646 = vcmp.eq.s32.totalorder %v643, 1
      %vm647 = vcmp.eq.s32.totalorder %v644, 1
      %vm648 = vcmp.eq.s32.totalorder %v645, 1
      %v649 = vsel %vm646, %v600, 0.0
      %v650 = vsel %vm647, %v601, 0.0
      %v651 = vsel %vm648, %v602, 0.0
      %v652 = vsel %vm646, %v603, 0.0
      %v653 = vsel %vm647, %v604, 0.0
      %v654 = vsel %vm648, %v605, 0.0
      %v655 = vsel %vm646, %v606, 0.0
      %v656 = vsel %vm647, %v607, 0.0
      %v657 = vsel %vm648, %v608, 0.0
      %v658 = vsel %vm646, %v609, 0.0
      %v659 = vsel %vm647, %v610, 0.0
      %v660 = vsel %vm648, %v611, 0.0
      %v661 = vsel %vm646, %v612, 0.0
      %v662 = vsel %vm647, %v613, 0.0
      %v663 = vsel %vm648, %v614, 0.0
      %v664 = vsel %vm646, %v615, 0.0
      %v665 = vsel %vm647, %v616, 0.0
      %v666 = vsel %vm648, %v617, 0.0
      %v667 = vsel %vm646, %v618, 0.0
      %v668 = vsel %vm647, %v619, 0.0
      %v669 = vsel %vm648, %v620, 0.0
      %v670 = vsel %vm646, %v621, 0.0
      %v671 = vsel %vm647, %v622, 0.0
      %v672 = vsel %vm648, %v623, 0.0
      %v673 = vsel %vm646, %v624, 0.0
      %v674 = vsel %vm647, %v625, 0.0
      %v675 = vsel %vm648, %v626, 0.0
      %v676 = vsel %vm646, %v627, 0.0
      %v677 = vsel %vm647, %v628, 0.0
      %v678 = vsel %vm648, %v629, 0.0
      %p679 = scmp.gt.s32.totalorder %s24, 0
      %s680 = scalar_select %p679, 1, 0
      %v681 = vstv %s680
      %vm682 = vcmp.eq.s32.totalorder %v681, 1
      %v683 = vsel %vm682, %v649, 0.0
      %v684 = vsel %vm682, %v650, 0.0
      %v685 = vsel %vm682, %v651, 0.0
      %p686 = scmp.lt.s32.totalorder %s24, 1
      %s687 = scalar_select %p686, 1, 0
      %v688 = vstv %s687
      %vm689 = vcmp.eq.s32.totalorder %v688, 1
      %v690 = vsel %vm689, %v676, 0.0
      %v691 = vsel %vm689, %v677, 0.0
      %v692 = vsel %vm689, %v678, 0.0
      %v693 = vpack.c.bf16 %v684, %v683
      %v694 = vpack.c.bf16 %v685, %v685
      %v695 = vpack.c.bf16 %v653, %v652
      %v696 = vpack.c.bf16 %v654, %v654
      %v697 = vpack.c.bf16 %v656, %v655
      %v698 = vpack.c.bf16 %v657, %v657
      %v699 = vpack.c.bf16 %v659, %v658
      %v700 = vpack.c.bf16 %v660, %v660
      %v701 = vpack.c.bf16 %v662, %v661
      %v702 = vpack.c.bf16 %v663, %v663
      %v703 = vpack.c.bf16 %v665, %v664
      %v704 = vpack.c.bf16 %v666, %v666
      %v705 = vpack.c.bf16 %v668, %v667
      %v706 = vpack.c.bf16 %v669, %v669
      %v707 = vpack.c.bf16 %v671, %v670
      %v708 = vpack.c.bf16 %v672, %v672
      %v709 = vpack.c.bf16 %v674, %v673
      %v710 = vpack.c.bf16 %v675, %v675
      %v711 = vpack.c.bf16 %v691, %v690
      %v712 = vpack.c.bf16 %v692, %v692
      %v713 = vld [vmem:[%s3] sm:$0xf]
      %v714 = vld [vmem:[%s3 + $0x4] sm:$0xf]
      %v715 = vld [vmem:[%s3 + $0x8] sm:$0xf]
      %v716 = vld [vmem:[%s3 + $0xc] sm:$0xf]
      %v717 = vld [vmem:[%s3 + $0x10] sm:$0xf]
      %v718 = vld [vmem:[%s3 + $0x14] sm:$0xf]
      %v719 = vld [vmem:[%s3 + $0x18] sm:$0xf]
      %v720 = vld [vmem:[%s3 + $0x1c] sm:$0xf]
      %v721 = vld [vmem:[%s3 + $0x20] sm:$0xf]
      %v722 = vld [vmem:[%s3 + $0x24] sm:$0xf]
      %v723 = vld [vmem:[%s3 + $0x28] sm:$0xf]
      %v724 = vld [vmem:[%s3 + $0x2c] sm:$0xf]
      %v725 = vld [vmem:[%s3 + $0x30] sm:$0xf]
      %v726 = vld [vmem:[%s3 + $0x34] sm:$0xf]
      %v727 = vld [vmem:[%s3 + $0x38] sm:$0xf]
      %v728 = vld [vmem:[%s3 + $0x3c] sm:$0xf]
      %vm729 = vsmask.f32 7424
      %v731 = vshrl.u32 %v693, 16
      %v733 = vshll.u32 %v693, 16
      %v735 = vrot.slane %v733, 1
      %v736 = vor.u32 %v731, %v735
      %v738 = vshll.u32 %v694, 16
      %v740 = vrot.slane %v738, 1
      %v741 = vsel %vm729, %v736, %v740
      %v743 = vshrl.u32 %v695, 16
      %v745 = vshll.u32 %v695, 16
      %v747 = vrot.slane %v745, 1
      %v748 = vor.u32 %v743, %v747
      %v750 = vshll.u32 %v696, 16
      %v752 = vrot.slane %v750, 1
      %v753 = vsel %vm729, %v748, %v752
      %v755 = vshrl.u32 %v697, 16
      %v757 = vshll.u32 %v697, 16
      %v759 = vrot.slane %v757, 1
      %v760 = vor.u32 %v755, %v759
      %v762 = vshll.u32 %v698, 16
      %v764 = vrot.slane %v762, 1
      %v765 = vsel %vm729, %v760, %v764
      %v767 = vshrl.u32 %v699, 16
      %v769 = vshll.u32 %v699, 16
      %v771 = vrot.slane %v769, 1
      %v772 = vor.u32 %v767, %v771
      %v774 = vshll.u32 %v700, 16
      %v776 = vrot.slane %v774, 1
      %v777 = vsel %vm729, %v772, %v776
      %v779 = vshrl.u32 %v701, 16
      %v781 = vshll.u32 %v701, 16
      %v783 = vrot.slane %v781, 1
      %v784 = vor.u32 %v779, %v783
      %v786 = vshll.u32 %v702, 16
      %v788 = vrot.slane %v786, 1
      %v789 = vsel %vm729, %v784, %v788
      %v791 = vshrl.u32 %v703, 16
      %v793 = vshll.u32 %v703, 16
      %v795 = vrot.slane %v793, 1
      %v796 = vor.u32 %v791, %v795
      %v798 = vshll.u32 %v704, 16
      %v800 = vrot.slane %v798, 1
      %v801 = vsel %vm729, %v796, %v800
      %v803 = vshrl.u32 %v705, 16
      %v805 = vshll.u32 %v705, 16
      %v807 = vrot.slane %v805, 1
      %v808 = vor.u32 %v803, %v807
      %v810 = vshll.u32 %v706, 16
      %v812 = vrot.slane %v810, 1
      %v813 = vsel %vm729, %v808, %v812
      %v815 = vshrl.u32 %v707, 16
      %v817 = vshll.u32 %v707, 16
      %v819 = vrot.slane %v817, 1
      %v820 = vor.u32 %v815, %v819
      %v822 = vshll.u32 %v708, 16
      %v824 = vrot.slane %v822, 1
      %v825 = vsel %vm729, %v820, %v824
      %s834 = scalar_lea.vmem %s3, 64
      %v835 = vld [vmem:[%s834] sm:$0xf]
      %v836 = vld [vmem:[%s834 + $0x4] sm:$0xf]
      %v837 = vld [vmem:[%s834 + $0x8] sm:$0xf]
      %v838 = vld [vmem:[%s834 + $0xc] sm:$0xf]
      %v839 = vld [vmem:[%s834 + $0x10] sm:$0xf]
      %v840 = vld [vmem:[%s834 + $0x14] sm:$0xf]
      %v841 = vld [vmem:[%s834 + $0x18] sm:$0xf]
      %v842 = vld [vmem:[%s834 + $0x1c] sm:$0xf]
      %v843 = vld [vmem:[%s834 + $0x20] sm:$0xf]
      %v844 = vld [vmem:[%s834 + $0x24] sm:$0xf]
      %v845 = vld [vmem:[%s834 + $0x28] sm:$0xf]
      %v846 = vld [vmem:[%s834 + $0x2c] sm:$0xf]
      %v847 = vld [vmem:[%s834 + $0x30] sm:$0xf]
      %v848 = vld [vmem:[%s834 + $0x34] sm:$0xf]
      %v849 = vld [vmem:[%s834 + $0x38] sm:$0xf]
      %v850 = vld [vmem:[%s834 + $0x3c] sm:$0xf]
      %v867 = vunpack.c.l.b16 %v835
      %v868 = vunpack.c.l.b16 %v836
      %v869 = vunpack.c.l.b16 %v837
      %v870 = vunpack.c.l.b16 %v838
      %v871 = vunpack.c.l.b16 %v839
      %v872 = vunpack.c.l.b16 %v840
      %v873 = vunpack.c.l.b16 %v841
      %v874 = vunpack.c.l.b16 %v842
      %v875 = vunpack.c.l.b16 %v843
      %v876 = vunpack.c.l.b16 %v844
      %v877 = vunpack.c.l.b16 %v845
      %v878 = vunpack.c.l.b16 %v846
      %v879 = vunpack.c.l.b16 %v847
      %v880 = vunpack.c.l.b16 %v848
      %v881 = vunpack.c.l.b16 %v849
      %v882 = vunpack.c.l.b16 %v850
      %v883 = vpack.c.b16 %v868, %v867
      %v884 = vpack.c.b16 %v870, %v869
      %v885 = vpack.c.b16 %v872, %v871
      %v886 = vpack.c.b16 %v874, %v873
      %v887 = vpack.c.b16 %v876, %v875
      %v888 = vpack.c.b16 %v878, %v877
      %v889 = vpack.c.b16 %v880, %v879
      %v890 = vpack.c.b16 %v882, %v881
      %899 = vmatprep.subr.bf16.mxu0 0
      %900 = vmatpush1.bf16.msra.mxu0 %v883
      %901 = vmatprep.subr.bf16.mxu0 0
      %902 = vmatpush1.bf16.msra.mxu0 %v884
      %903 = vmatprep.subr.bf16.mxu0 0
      %904 = vmatpush1.bf16.msra.mxu0 %v885
      %905 = vmatprep.subr.bf16.mxu0 0
      %906 = vmatpush1.bf16.msra.mxu0 %v886
      %907 = vmatprep.subr.bf16.mxu0 0
      %908 = vmatpush1.bf16.msra.mxu0 %v887
      %909 = vmatprep.subr.bf16.mxu0 0
      %910 = vmatpush1.bf16.msra.mxu0 %v888
      %911 = vmatprep.subr.bf16.mxu0 0
      %912 = vmatpush1.bf16.msra.mxu0 %v889
      %913 = vmatprep.subr.bf16.mxu0 0
      %914 = vmatpush1.bf16.msra.mxu0 %v890
      %915 = vmatprep.subr.bf16.mxu0 0
      %916 = vmatpush1.bf16.msra.mxu0 0
      %917 = vmatprep.subr.bf16.mxu0 0
      %918 = vmatpush1.bf16.msra.mxu0 0
      %919 = vmatprep.subr.bf16.mxu0 0
      %920 = vmatpush1.bf16.msra.mxu0 0
      %921 = vmatprep.subr.bf16.mxu0 0
      %922 = vmatpush1.bf16.msra.mxu0 0
      %923 = vmatprep.subr.bf16.mxu0 0
      %924 = vmatpush1.bf16.msra.mxu0 0
      %925 = vmatprep.subr.bf16.mxu0 0
      %926 = vmatpush1.bf16.msra.mxu0 0
      %927 = vmatprep.subr.bf16.mxu0 0
      %928 = vmatpush1.bf16.msra.mxu0 0
      %929 = vmatprep.subr.bf16.mxu0 0
      %930 = vmatpush1.bf16.msra.mxu0 0
      %931 = vmatprep.mubr.bf16.mxu0 0
      %932 = vmatmul.mubr.bf16.gmra.mrb[0].mxu0 %v741
      %v933 = vpop.f32.mrb[0].mxu0
      %v934 = vadd.f32 0.0, %v933
      %v935 = vpop.f32.mrb[0].mxu0
      %v936 = vpop.f32.mrb[0].mxu0
      %v937 = vadd.f32 0.0, %v936
      %v938 = vpop.f32.mrb[0].mxu0
      %939 = vmatprep.mubr.bf16.mxu0 0
      %940 = vmatmul.mubr.bf16.gmra.mrb[0].mxu0 %v753
      %v941 = vpop.f32.mrb[0].mxu0
      %v942 = vadd.f32 0.0, %v941
      %v943 = vpop.f32.mrb[0].mxu0
      %v944 = vpop.f32.mrb[0].mxu0
      %v945 = vadd.f32 0.0, %v944
      %v946 = vpop.f32.mrb[0].mxu0
      %947 = vmatprep.mubr.bf16.mxu0 0
      %948 = vmatmul.mubr.bf16.gmra.mrb[0].mxu0 %v765
      %v949 = vpop.f32.mrb[0].mxu0
      %v950 = vadd.f32 0.0, %v949
      %v951 = vpop.f32.mrb[0].mxu0
      %v952 = vpop.f32.mrb[0].mxu0
      %v953 = vadd.f32 0.0, %v952
      %v954 = vpop.f32.mrb[0].mxu0
      %955 = vmatprep.mubr.bf16.mxu0 0
      %956 = vmatmul.mubr.bf16.gmra.mrb[0].mxu0 %v777
      %v957 = vpop.f32.mrb[0].mxu0
      %v958 = vadd.f32 0.0, %v957
      %v959 = vpop.f32.mrb[0].mxu0
      %v960 = vpop.f32.mrb[0].mxu0
      %v961 = vadd.f32 0.0, %v960
      %v962 = vpop.f32.mrb[0].mxu0
      %963 = vmatprep.mubr.bf16.mxu0 0
      %964 = vmatmul.mubr.bf16.gmra.mrb[0].mxu0 %v789
      %v965 = vpop.f32.mrb[0].mxu0
      %v966 = vadd.f32 0.0, %v965
      %v967 = vpop.f32.mrb[0].mxu0
      %v968 = vpop.f32.mrb[0].mxu0
      %v969 = vadd.f32 0.0, %v968
      %v970 = vpop.f32.mrb[0].mxu0
      %971 = vmatprep.mubr.bf16.mxu0 0
      %972 = vmatmul.mubr.bf16.gmra.mrb[0].mxu0 %v801
      %v973 = vpop.f32.mrb[0].mxu0
      %v974 = vadd.f32 0.0, %v973
      %v975 = vpop.f32.mrb[0].mxu0
      %v976 = vpop.f32.mrb[0].mxu0
      %v977 = vadd.f32 0.0, %v976
      %v978 = vpop.f32.mrb[0].mxu0
      %979 = vmatprep.mubr.bf16.mxu0 0
      %980 = vmatmul.mubr.bf16.gmra.mrb[0].mxu0 %v813
      %v981 = vpop.f32.mrb[0].mxu0
      %v982 = vadd.f32 0.0, %v981
      %v983 = vpop.f32.mrb[0].mxu0
      %v984 = vpop.f32.mrb[0].mxu0
      %v985 = vadd.f32 0.0, %v984
      %v986 = vpop.f32.mrb[0].mxu0
      %987 = vmatprep.mubr.bf16.mxu0 0
      %988 = vmatmul.mubr.bf16.gmra.mrb[0].mxu0 %v825
      %v989 = vpop.f32.mrb[0].mxu0
      %v990 = vadd.f32 0.0, %v989
      %v991 = vpop.f32.mrb[0].mxu0
      %v992 = vpop.f32.mrb[0].mxu0
      %v993 = vadd.f32 0.0, %v992
      %v994 = vpop.f32.mrb[0].mxu0
      %995 = vdwg.mxu0
      %v1012 = vunpack.c.l.b16 %v713
      %v1013 = vunpack.c.l.b16 %v714
      %v1014 = vunpack.c.l.b16 %v715
      %v1015 = vunpack.c.l.b16 %v716
      %v1016 = vunpack.c.l.b16 %v717
      %v1017 = vunpack.c.l.b16 %v718
      %v1018 = vunpack.c.l.b16 %v719
      %v1019 = vunpack.c.l.b16 %v720
      %v1020 = vunpack.c.l.b16 %v721
      %v1021 = vunpack.c.l.b16 %v722
      %v1022 = vunpack.c.l.b16 %v723
      %v1023 = vunpack.c.l.b16 %v724
      %v1024 = vunpack.c.l.b16 %v725
      %v1025 = vunpack.c.l.b16 %v726
      %v1026 = vunpack.c.l.b16 %v727
      %v1027 = vunpack.c.l.b16 %v728
      %v1028 = vpack.c.b16 %v1013, %v1012
      %v1029 = vpack.c.b16 %v1015, %v1014
      %v1030 = vpack.c.b16 %v1017, %v1016
      %v1031 = vpack.c.b16 %v1019, %v1018
      %v1032 = vpack.c.b16 %v1021, %v1020
      %v1033 = vpack.c.b16 %v1023, %v1022
      %v1034 = vpack.c.b16 %v1025, %v1024
      %v1035 = vpack.c.b16 %v1027, %v1026
      %1044 = vmatprep.subr.bf16.mxu0 0
      %1045 = vmatpush1.bf16.msra.mxu0 %v1028
      %1046 = vmatprep.subr.bf16.mxu0 0
      %1047 = vmatpush1.bf16.msra.mxu0 %v1029
      %1048 = vmatprep.subr.bf16.mxu0 0
      %1049 = vmatpush1.bf16.msra.mxu0 %v1030
      %1050 = vmatprep.subr.bf16.mxu0 0
      %1051 = vmatpush1.bf16.msra.mxu0 %v1031
      %1052 = vmatprep.subr.bf16.mxu0 0
      %1053 = vmatpush1.bf16.msra.mxu0 %v1032
      %1054 = vmatprep.subr.bf16.mxu0 0
      %1055 = vmatpush1.bf16.msra.mxu0 %v1033
      %1056 = vmatprep.subr.bf16.mxu0 0
      %1057 = vmatpush1.bf16.msra.mxu0 %v1034
      %1058 = vmatprep.subr.bf16.mxu0 0
      %1059 = vmatpush1.bf16.msra.mxu0 %v1035
      %1060 = vmatprep.subr.bf16.mxu0 0
      %1061 = vmatpush1.bf16.msra.mxu0 0
      %1062 = vmatprep.subr.bf16.mxu0 0
      %1063 = vmatpush1.bf16.msra.mxu0 0
      %1064 = vmatprep.subr.bf16.mxu0 0
      %1065 = vmatpush1.bf16.msra.mxu0 0
      %1066 = vmatprep.subr.bf16.mxu0 0
      %1067 = vmatpush1.bf16.msra.mxu0 0
      %1068 = vmatprep.subr.bf16.mxu0 0
      %1069 = vmatpush1.bf16.msra.mxu0 0
      %1070 = vmatprep.subr.bf16.mxu0 0
      %1071 = vmatpush1.bf16.msra.mxu0 0
      %1072 = vmatprep.subr.bf16.mxu0 0
      %1073 = vmatpush1.bf16.msra.mxu0 0
      %1074 = vmatprep.subr.bf16.mxu0 0
      %1075 = vmatpush1.bf16.msra.mxu0 0
      %1076 = vmatprep.mubr.bf16.mxu0 0
      %1077 = vmatmul.mubr.bf16.gmra.mrb[0].mxu0 %v693
      %v1078 = vpop.f32.mrb[0].mxu0
      %v1079 = vadd.f32 %v934, %v1078
      %v1080 = vpop.f32.mrb[0].mxu0
      %v1081 = vpop.f32.mrb[0].mxu0
      %v1082 = vadd.f32 %v937, %v1081
      %v1083 = vpop.f32.mrb[0].mxu0
      %1084 = vmatprep.mubr.bf16.mxu0 0
      %1085 = vmatmul.mubr.bf16.gmra.mrb[0].mxu0 %v695
      %v1086 = vpop.f32.mrb[0].mxu0
      %v1087 = vadd.f32 %v942, %v1086
      %v1088 = vpop.f32.mrb[0].mxu0
      %v1089 = vpop.f32.mrb[0].mxu0
      %v1090 = vadd.f32 %v945, %v1089
      %v1091 = vpop.f32.mrb[0].mxu0
      %1092 = vmatprep.mubr.bf16.mxu0 0
      %1093 = vmatmul.mubr.bf16.gmra.mrb[0].mxu0 %v697
      %v1094 = vpop.f32.mrb[0].mxu0
      %v1095 = vadd.f32 %v950, %v1094
      %v1096 = vpop.f32.mrb[0].mxu0
      %v1097 = vpop.f32.mrb[0].mxu0
      %v1098 = vadd.f32 %v953, %v1097
      %v1099 = vpop.f32.mrb[0].mxu0
      %1100 = vmatprep.mubr.bf16.mxu0 0
      %1101 = vmatmul.mubr.bf16.gmra.mrb[0].mxu0 %v699
      %v1102 = vpop.f32.mrb[0].mxu0
      %v1103 = vadd.f32 %v958, %v1102
      %v1104 = vpop.f32.mrb[0].mxu0
      %v1105 = vpop.f32.mrb[0].mxu0
      %v1106 = vadd.f32 %v961, %v1105
      %v1107 = vpop.f32.mrb[0].mxu0
      %1108 = vmatprep.mubr.bf16.mxu0 0
      %1109 = vmatmul.mubr.bf16.gmra.mrb[0].mxu0 %v701
      %v1110 = vpop.f32.mrb[0].mxu0
      %v1111 = vadd.f32 %v966, %v1110
      %v1112 = vpop.f32.mrb[0].mxu0
      %v1113 = vpop.f32.mrb[0].mxu0
      %v1114 = vadd.f32 %v969, %v1113
      %v1115 = vpop.f32.mrb[0].mxu0
      %1116 = vmatprep.mubr.bf16.mxu0 0
      %1117 = vmatmul.mubr.bf16.gmra.mrb[0].mxu0 %v703
      %v1118 = vpop.f32.mrb[0].mxu0
      %v1119 = vadd.f32 %v974, %v1118
      %v1120 = vpop.f32.mrb[0].mxu0
      %v1121 = vpop.f32.mrb[0].mxu0
      %v1122 = vadd.f32 %v977, %v1121
      %v1123 = vpop.f32.mrb[0].mxu0
      %1124 = vmatprep.mubr.bf16.mxu0 0
      %1125 = vmatmul.mubr.bf16.gmra.mrb[0].mxu0 %v705
      %v1126 = vpop.f32.mrb[0].mxu0
      %v1127 = vadd.f32 %v982, %v1126
      %v1128 = vpop.f32.mrb[0].mxu0
      %v1129 = vpop.f32.mrb[0].mxu0
      %v1130 = vadd.f32 %v985, %v1129
      %v1131 = vpop.f32.mrb[0].mxu0
      %1132 = vmatprep.mubr.bf16.mxu0 0
      %1133 = vmatmul.mubr.bf16.gmra.mrb[0].mxu0 %v707
      %v1134 = vpop.f32.mrb[0].mxu0
      %v1135 = vadd.f32 %v990, %v1134
      %v1136 = vpop.f32.mrb[0].mxu0
      %v1137 = vpop.f32.mrb[0].mxu0
      %v1138 = vadd.f32 %v993, %v1137
      %v1139 = vpop.f32.mrb[0].mxu0
      %1140 = vdwg.mxu0
      %vm1157 = vcmask 1046528
      %v1158 = vrot.slane %v693, 1
      %v1159 = vrot.slane %v694, 1
      %v1160 = vsel %vm1157, %v1158, %v1159
      %v1161 = vrot.slane %v695, 1
      %v1162 = vrot.slane %v696, 1
      %v1163 = vsel %vm1157, %v1161, %v1162
      %v1164 = vrot.slane %v697, 1
      %v1165 = vrot.slane %v698, 1
      %v1166 = vsel %vm1157, %v1164, %v1165
      %v1167 = vrot.slane %v699, 1
      %v1168 = vrot.slane %v700, 1
      %v1169 = vsel %vm1157, %v1167, %v1168
      %v1170 = vrot.slane %v701, 1
      %v1171 = vrot.slane %v702, 1
      %v1172 = vsel %vm1157, %v1170, %v1171
      %v1173 = vrot.slane %v703, 1
      %v1174 = vrot.slane %v704, 1
      %v1175 = vsel %vm1157, %v1173, %v1174
      %v1176 = vrot.slane %v705, 1
      %v1177 = vrot.slane %v706, 1
      %v1178 = vsel %vm1157, %v1176, %v1177
      %v1179 = vrot.slane %v707, 1
      %v1180 = vrot.slane %v708, 1
      %v1181 = vsel %vm1157, %v1179, %v1180
      %s1190 = scalar_lea.vmem %s3, 128
      %v1191 = vld [vmem:[%s1190] sm:$0xf]
      %v1192 = vld [vmem:[%s1190 + $0x4] sm:$0xf]
      %v1193 = vld [vmem:[%s1190 + $0x8] sm:$0xf]
      %v1194 = vld [vmem:[%s1190 + $0xc] sm:$0xf]
      %v1195 = vld [vmem:[%s1190 + $0x10] sm:$0xf]
      %v1196 = vld [vmem:[%s1190 + $0x14] sm:$0xf]
      %v1197 = vld [vmem:[%s1190 + $0x18] sm:$0xf]
      %v1198 = vld [vmem:[%s1190 + $0x1c] sm:$0xf]
      %v1199 = vld [vmem:[%s1190 + $0x20] sm:$0xf]
      %v1200 = vld [vmem:[%s1190 + $0x24] sm:$0xf]
      %v1201 = vld [vmem:[%s1190 + $0x28] sm:$0xf]
      %v1202 = vld [vmem:[%s1190 + $0x2c] sm:$0xf]
      %v1203 = vld [vmem:[%s1190 + $0x30] sm:$0xf]
      %v1204 = vld [vmem:[%s1190 + $0x34] sm:$0xf]
      %v1205 = vld [vmem:[%s1190 + $0x38] sm:$0xf]
      %v1206 = vld [vmem:[%s1190 + $0x3c] sm:$0xf]
      %v1223 = vunpack.c.l.b16 %v1191
      %v1224 = vunpack.c.l.b16 %v1192
      %v1225 = vunpack.c.l.b16 %v1193
      %v1226 = vunpack.c.l.b16 %v1194
      %v1227 = vunpack.c.l.b16 %v1195
      %v1228 = vunpack.c.l.b16 %v1196
      %v1229 = vunpack.c.l.b16 %v1197
      %v1230 = vunpack.c.l.b16 %v1198
      %v1231 = vunpack.c.l.b16 %v1199
      %v1232 = vunpack.c.l.b16 %v1200
      %v1233 = vunpack.c.l.b16 %v1201
      %v1234 = vunpack.c.l.b16 %v1202
      %v1235 = vunpack.c.l.b16 %v1203
      %v1236 = vunpack.c.l.b16 %v1204
      %v1237 = vunpack.c.l.b16 %v1205
      %v1238 = vunpack.c.l.b16 %v1206
      %v1239 = vpack.c.b16 %v1224, %v1223
      %v1240 = vpack.c.b16 %v1226, %v1225
      %v1241 = vpack.c.b16 %v1228, %v1227
      %v1242 = vpack.c.b16 %v1230, %v1229
      %v1243 = vpack.c.b16 %v1232, %v1231
      %v1244 = vpack.c.b16 %v1234, %v1233
      %v1245 = vpack.c.b16 %v1236, %v1235
      %v1246 = vpack.c.b16 %v1238, %v1237
      %1255 = vmatprep.subr.bf16.mxu0 0
      %1256 = vmatpush1.bf16.msra.mxu0 %v1239
      %1257 = vmatprep.subr.bf16.mxu0 0
      %1258 = vmatpush1.bf16.msra.mxu0 %v1240
      %1259 = vmatprep.subr.bf16.mxu0 0
      %1260 = vmatpush1.bf16.msra.mxu0 %v1241
      %1261 = vmatprep.subr.bf16.mxu0 0
      %1262 = vmatpush1.bf16.msra.mxu0 %v1242
      %1263 = vmatprep.subr.bf16.mxu0 0
      %1264 = vmatpush1.bf16.msra.mxu0 %v1243
      %1265 = vmatprep.subr.bf16.mxu0 0
      %1266 = vmatpush1.bf16.msra.mxu0 %v1244
      %1267 = vmatprep.subr.bf16.mxu0 0
      %1268 = vmatpush1.bf16.msra.mxu0 %v1245
      %1269 = vmatprep.subr.bf16.mxu0 0
      %1270 = vmatpush1.bf16.msra.mxu0 %v1246
      %1271 = vmatprep.subr.bf16.mxu0 0
      %1272 = vmatpush1.bf16.msra.mxu0 0
      %1273 = vmatprep.subr.bf16.mxu0 0
      %1274 = vmatpush1.bf16.msra.mxu0 0
      %1275 = vmatprep.subr.bf16.mxu0 0
      %1276 = vmatpush1.bf16.msra.mxu0 0
      %1277 = vmatprep.subr.bf16.mxu0 0
      %1278 = vmatpush1.bf16.msra.mxu0 0
      %1279 = vmatprep.subr.bf16.mxu0 0
      %1280 = vmatpush1.bf16.msra.mxu0 0
      %1281 = vmatprep.subr.bf16.mxu0 0
      %1282 = vmatpush1.bf16.msra.mxu0 0
      %1283 = vmatprep.subr.bf16.mxu0 0
      %1284 = vmatpush1.bf16.msra.mxu0 0
      %1285 = vmatprep.subr.bf16.mxu0 0
      %1286 = vmatpush1.bf16.msra.mxu0 0
      %1287 = vmatprep.mubr.bf16.mxu0 0
      %1288 = vmatmul.mubr.bf16.gmra.mrb[0].mxu0 %v1160
      %v1289 = vpop.f32.mrb[0].mxu0
      %v1290 = vadd.f32 0.0, %v1289
      %v1291 = vpop.f32.mrb[0].mxu0
      %v1292 = vpop.f32.mrb[0].mxu0
      %v1293 = vadd.f32 0.0, %v1292
      %v1294 = vpop.f32.mrb[0].mxu0
      %1295 = vmatprep.mubr.bf16.mxu0 0
      %1296 = vmatmul.mubr.bf16.gmra.mrb[0].mxu0 %v1163
      %v1297 = vpop.f32.mrb[0].mxu0
      %v1298 = vadd.f32 0.0, %v1297
      %v1299 = vpop.f32.mrb[0].mxu0
      %v1300 = vpop.f32.mrb[0].mxu0
      %v1301 = vadd.f32 0.0, %v1300
      %v1302 = vpop.f32.mrb[0].mxu0
      %1303 = vmatprep.mubr.bf16.mxu0 0
      %1304 = vmatmul.mubr.bf16.gmra.mrb[0].mxu0 %v1166
      %v1305 = vpop.f32.mrb[0].mxu0
      %v1306 = vadd.f32 0.0, %v1305
      %v1307 = vpop.f32.mrb[0].mxu0
      %v1308 = vpop.f32.mrb[0].mxu0
      %v1309 = vadd.f32 0.0, %v1308
      %v1310 = vpop.f32.mrb[0].mxu0
      %1311 = vmatprep.mubr.bf16.mxu0 0
      %1312 = vmatmul.mubr.bf16.gmra.mrb[0].mxu0 %v1169
      %v1313 = vpop.f32.mrb[0].mxu0
      %v1314 = vadd.f32 0.0, %v1313
      %v1315 = vpop.f32.mrb[0].mxu0
      %v1316 = vpop.f32.mrb[0].mxu0
      %v1317 = vadd.f32 0.0, %v1316
      %v1318 = vpop.f32.mrb[0].mxu0
      %1319 = vmatprep.mubr.bf16.mxu0 0
      %1320 = vmatmul.mubr.bf16.gmra.mrb[0].mxu0 %v1172
      %v1321 = vpop.f32.mrb[0].mxu0
      %v1322 = vadd.f32 0.0, %v1321
      %v1323 = vpop.f32.mrb[0].mxu0
      %v1324 = vpop.f32.mrb[0].mxu0
      %v1325 = vadd.f32 0.0, %v1324
      %v1326 = vpop.f32.mrb[0].mxu0
      %1327 = vmatprep.mubr.bf16.mxu0 0
      %1328 = vmatmul.mubr.bf16.gmra.mrb[0].mxu0 %v1175
      %v1329 = vpop.f32.mrb[0].mxu0
      %v1330 = vadd.f32 0.0, %v1329
      %v1331 = vpop.f32.mrb[0].mxu0
      %v1332 = vpop.f32.mrb[0].mxu0
      %v1333 = vadd.f32 0.0, %v1332
      %v1334 = vpop.f32.mrb[0].mxu0
      %1335 = vmatprep.mubr.bf16.mxu0 0
      %1336 = vmatmul.mubr.bf16.gmra.mrb[0].mxu0 %v1178
      %v1337 = vpop.f32.mrb[0].mxu0
      %v1338 = vadd.f32 0.0, %v1337
      %v1339 = vpop.f32.mrb[0].mxu0
      %v1340 = vpop.f32.mrb[0].mxu0
      %v1341 = vadd.f32 0.0, %v1340
      %v1342 = vpop.f32.mrb[0].mxu0
      %1343 = vmatprep.mubr.bf16.mxu0 0
      %1344 = vmatmul.mubr.bf16.gmra.mrb[0].mxu0 %v1181
      %v1345 = vpop.f32.mrb[0].mxu0
      %v1346 = vadd.f32 0.0, %v1345
      %v1347 = vpop.f32.mrb[0].mxu0
      %v1348 = vpop.f32.mrb[0].mxu0
      %v1349 = vadd.f32 0.0, %v1348
      %v1350 = vpop.f32.mrb[0].mxu0
      %1351 = vdwg.mxu0
      %v1352 = vadd.f32 %v1079, %v1290
      %v1353 = vadd.f32 %v1082, %v1293
      %v1354 = vadd.f32 %v1087, %v1298
      %v1355 = vadd.f32 %v1090, %v1301
      %v1356 = vadd.f32 %v1095, %v1306
      %v1357 = vadd.f32 %v1098, %v1309
      %v1358 = vadd.f32 %v1103, %v1314
      %v1359 = vadd.f32 %v1106, %v1317
      %v1360 = vadd.f32 %v1111, %v1322
      %v1361 = vadd.f32 %v1114, %v1325
      %v1362 = vadd.f32 %v1119, %v1330
      %v1363 = vadd.f32 %v1122, %v1333
      %v1364 = vadd.f32 %v1127, %v1338
      %v1365 = vadd.f32 %v1130, %v1341
      %v1366 = vadd.f32 %v1135, %v1346
      %v1367 = vadd.f32 %v1138, %v1349
      %s1368 = scalar_lea.vmem %s3, 192
      %v1369 = vld [vmem:[%s1368] sm:$0xf]
      %v1370 = vld [vmem:[%s1368 + $0x4] sm:$0xf]
      %v1371 = vld [vmem:[%s1368 + $0x8] sm:$0xf]
      %v1372 = vld [vmem:[%s1368 + $0xc] sm:$0xf]
      %v1373 = vld [vmem:[%s1368 + $0x10] sm:$0xf]
      %v1374 = vld [vmem:[%s1368 + $0x14] sm:$0xf]
      %v1375 = vld [vmem:[%s1368 + $0x18] sm:$0xf]
      %v1376 = vld [vmem:[%s1368 + $0x1c] sm:$0xf]
      %v1377 = vld [vmem:[%s1368 + $0x20] sm:$0xf]
      %v1378 = vld [vmem:[%s1368 + $0x24] sm:$0xf]
      %v1379 = vld [vmem:[%s1368 + $0x28] sm:$0xf]
      %v1380 = vld [vmem:[%s1368 + $0x2c] sm:$0xf]
      %v1381 = vld [vmem:[%s1368 + $0x30] sm:$0xf]
      %v1382 = vld [vmem:[%s1368 + $0x34] sm:$0xf]
      %v1383 = vld [vmem:[%s1368 + $0x38] sm:$0xf]
      %v1384 = vld [vmem:[%s1368 + $0x3c] sm:$0xf]
      %v1401 = vunpack.c.l.b16 %v1369
      %v1402 = vunpack.c.l.b16 %v1370
      %v1403 = vunpack.c.l.b16 %v1371
      %v1404 = vunpack.c.l.b16 %v1372
      %v1405 = vunpack.c.l.b16 %v1373
      %v1406 = vunpack.c.l.b16 %v1374
      %v1407 = vunpack.c.l.b16 %v1375
      %v1408 = vunpack.c.l.b16 %v1376
      %v1409 = vunpack.c.l.b16 %v1377
      %v1410 = vunpack.c.l.b16 %v1378
      %v1411 = vunpack.c.l.b16 %v1379
      %v1412 = vunpack.c.l.b16 %v1380
      %v1413 = vunpack.c.l.b16 %v1381
      %v1414 = vunpack.c.l.b16 %v1382
      %v1415 = vunpack.c.l.b16 %v1383
      %v1416 = vunpack.c.l.b16 %v1384
      %v1417 = vpack.c.b16 %v1402, %v1401
      %v1418 = vpack.c.b16 %v1404, %v1403
      %v1419 = vpack.c.b16 %v1406, %v1405
      %v1420 = vpack.c.b16 %v1408, %v1407
      %v1421 = vpack.c.b16 %v1410, %v1409
      %v1422 = vpack.c.b16 %v1412, %v1411
      %v1423 = vpack.c.b16 %v1414, %v1413
      %v1424 = vpack.c.b16 %v1416, %v1415
      %1433 = vmatprep.subr.bf16.mxu0 0
      %1434 = vmatpush1.bf16.msra.mxu0 %v1417
      %1435 = vmatprep.subr.bf16.mxu0 0
      %1436 = vmatpush1.bf16.msra.mxu0 %v1418
      %1437 = vmatprep.subr.bf16.mxu0 0
      %1438 = vmatpush1.bf16.msra.mxu0 %v1419
      %1439 = vmatprep.subr.bf16.mxu0 0
      %1440 = vmatpush1.bf16.msra.mxu0 %v1420
      %1441 = vmatprep.subr.bf16.mxu0 0
      %1442 = vmatpush1.bf16.msra.mxu0 %v1421
      %1443 = vmatprep.subr.bf16.mxu0 0
      %1444 = vmatpush1.bf16.msra.mxu0 %v1422
      %1445 = vmatprep.subr.bf16.mxu0 0
      %1446 = vmatpush1.bf16.msra.mxu0 %v1423
      %1447 = vmatprep.subr.bf16.mxu0 0
      %1448 = vmatpush1.bf16.msra.mxu0 %v1424
      %1449 = vmatprep.subr.bf16.mxu0 0
      %1450 = vmatpush1.bf16.msra.mxu0 0
      %1451 = vmatprep.subr.bf16.mxu0 0
      %1452 = vmatpush1.bf16.msra.mxu0 0
      %1453 = vmatprep.subr.bf16.mxu0 0
      %1454 = vmatpush1.bf16.msra.mxu0 0
      %1455 = vmatprep.subr.bf16.mxu0 0
      %1456 = vmatpush1.bf16.msra.mxu0 0
      %1457 = vmatprep.subr.bf16.mxu0 0
      %1458 = vmatpush1.bf16.msra.mxu0 0
      %1459 = vmatprep.subr.bf16.mxu0 0
      %1460 = vmatpush1.bf16.msra.mxu0 0
      %1461 = vmatprep.subr.bf16.mxu0 0
      %1462 = vmatpush1.bf16.msra.mxu0 0
      %1463 = vmatprep.subr.bf16.mxu0 0
      %1464 = vmatpush1.bf16.msra.mxu0 0
      %1465 = vmatprep.mubr.bf16.mxu0 0
      %1466 = vmatmul.mubr.bf16.gmra.mrb[0].mxu0 %v695
      %v1467 = vpop.f32.mrb[0].mxu0
      %v1468 = vadd.f32 0.0, %v1467
      %v1469 = vpop.f32.mrb[0].mxu0
      %v1470 = vpop.f32.mrb[0].mxu0
      %v1471 = vadd.f32 0.0, %v1470
      %v1472 = vpop.f32.mrb[0].mxu0
      %1473 = vmatprep.mubr.bf16.mxu0 0
      %1474 = vmatmul.mubr.bf16.gmra.mrb[0].mxu0 %v697
      %v1475 = vpop.f32.mrb[0].mxu0
      %v1476 = vadd.f32 0.0, %v1475
      %v1477 = vpop.f32.mrb[0].mxu0
      %v1478 = vpop.f32.mrb[0].mxu0
      %v1479 = vadd.f32 0.0, %v1478
      %v1480 = vpop.f32.mrb[0].mxu0
      %1481 = vmatprep.mubr.bf16.mxu0 0
      %1482 = vmatmul.mubr.bf16.gmra.mrb[0].mxu0 %v699
      %v1483 = vpop.f32.mrb[0].mxu0
      %v1484 = vadd.f32 0.0, %v1483
      %v1485 = vpop.f32.mrb[0].mxu0
      %v1486 = vpop.f32.mrb[0].mxu0
      %v1487 = vadd.f32 0.0, %v1486
      %v1488 = vpop.f32.mrb[0].mxu0
      %1489 = vmatprep.mubr.bf16.mxu0 0
      %1490 = vmatmul.mubr.bf16.gmra.mrb[0].mxu0 %v701
      %v1491 = vpop.f32.mrb[0].mxu0
      %v1492 = vadd.f32 0.0, %v1491
      %v1493 = vpop.f32.mrb[0].mxu0
      %v1494 = vpop.f32.mrb[0].mxu0
      %v1495 = vadd.f32 0.0, %v1494
      %v1496 = vpop.f32.mrb[0].mxu0
      %1497 = vmatprep.mubr.bf16.mxu0 0
      %1498 = vmatmul.mubr.bf16.gmra.mrb[0].mxu0 %v703
      %v1499 = vpop.f32.mrb[0].mxu0
      %v1500 = vadd.f32 0.0, %v1499
      %v1501 = vpop.f32.mrb[0].mxu0
      %v1502 = vpop.f32.mrb[0].mxu0
      %v1503 = vadd.f32 0.0, %v1502
      %v1504 = vpop.f32.mrb[0].mxu0
      %1505 = vmatprep.mubr.bf16.mxu0 0
      %1506 = vmatmul.mubr.bf16.gmra.mrb[0].mxu0 %v705
      %v1507 = vpop.f32.mrb[0].mxu0
      %v1508 = vadd.f32 0.0, %v1507
      %v1509 = vpop.f32.mrb[0].mxu0
      %v1510 = vpop.f32.mrb[0].mxu0
      %v1511 = vadd.f32 0.0, %v1510
      %v1512 = vpop.f32.mrb[0].mxu0
      %1513 = vmatprep.mubr.bf16.mxu0 0
      %1514 = vmatmul.mubr.bf16.gmra.mrb[0].mxu0 %v707
      %v1515 = vpop.f32.mrb[0].mxu0
      %v1516 = vadd.f32 0.0, %v1515
      %v1517 = vpop.f32.mrb[0].mxu0
      %v1518 = vpop.f32.mrb[0].mxu0
      %v1519 = vadd.f32 0.0, %v1518
      %v1520 = vpop.f32.mrb[0].mxu0
      %1521 = vmatprep.mubr.bf16.mxu0 0
      %1522 = vmatmul.mubr.bf16.gmra.mrb[0].mxu0 %v709
      %v1523 = vpop.f32.mrb[0].mxu0
      %v1524 = vadd.f32 0.0, %v1523
      %v1525 = vpop.f32.mrb[0].mxu0
      %v1526 = vpop.f32.mrb[0].mxu0
      %v1527 = vadd.f32 0.0, %v1526
      %v1528 = vpop.f32.mrb[0].mxu0
      %1529 = vdwg.mxu0
      %v1530 = vadd.f32 %v1352, %v1468
      %v1531 = vadd.f32 %v1353, %v1471
      %v1532 = vadd.f32 %v1354, %v1476
      %v1533 = vadd.f32 %v1355, %v1479
      %v1534 = vadd.f32 %v1356, %v1484
      %v1535 = vadd.f32 %v1357, %v1487
      %v1536 = vadd.f32 %v1358, %v1492
      %v1537 = vadd.f32 %v1359, %v1495
      %v1538 = vadd.f32 %v1360, %v1500
      %v1539 = vadd.f32 %v1361, %v1503
      %v1540 = vadd.f32 %v1362, %v1508
      %v1541 = vadd.f32 %v1363, %v1511
      %v1542 = vadd.f32 %v1364, %v1516
      %v1543 = vadd.f32 %v1365, %v1519
      %v1544 = vadd.f32 %v1366, %v1524
      %v1545 = vadd.f32 %v1367, %v1527
      %v1547 = vshrl.u32 %v709, 16
      %v1549 = vshll.u32 %v709, 16
      %v1551 = vrot.slane %v1549, 1
      %v1552 = vor.u32 %v1547, %v1551
      %v1554 = vshll.u32 %v710, 16
      %v1556 = vrot.slane %v1554, 1
      %v1557 = vsel %vm729, %v1552, %v1556
      %s1559 = scalar_lea.vmem %s3, 256
      %v1560 = vld [vmem:[%s1559] sm:$0xf]
      %v1561 = vld [vmem:[%s1559 + $0x4] sm:$0xf]
      %v1562 = vld [vmem:[%s1559 + $0x8] sm:$0xf]
      %v1563 = vld [vmem:[%s1559 + $0xc] sm:$0xf]
      %v1564 = vld [vmem:[%s1559 + $0x10] sm:$0xf]
      %v1565 = vld [vmem:[%s1559 + $0x14] sm:$0xf]
      %v1566 = vld [vmem:[%s1559 + $0x18] sm:$0xf]
      %v1567 = vld [vmem:[%s1559 + $0x1c] sm:$0xf]
      %v1568 = vld [vmem:[%s1559 + $0x20] sm:$0xf]
      %v1569 = vld [vmem:[%s1559 + $0x24] sm:$0xf]
      %v1570 = vld [vmem:[%s1559 + $0x28] sm:$0xf]
      %v1571 = vld [vmem:[%s1559 + $0x2c] sm:$0xf]
      %v1572 = vld [vmem:[%s1559 + $0x30] sm:$0xf]
      %v1573 = vld [vmem:[%s1559 + $0x34] sm:$0xf]
      %v1574 = vld [vmem:[%s1559 + $0x38] sm:$0xf]
      %v1575 = vld [vmem:[%s1559 + $0x3c] sm:$0xf]
      %v1592 = vunpack.c.l.b16 %v1560
      %v1593 = vunpack.c.l.b16 %v1561
      %v1594 = vunpack.c.l.b16 %v1562
      %v1595 = vunpack.c.l.b16 %v1563
      %v1596 = vunpack.c.l.b16 %v1564
      %v1597 = vunpack.c.l.b16 %v1565
      %v1598 = vunpack.c.l.b16 %v1566
      %v1599 = vunpack.c.l.b16 %v1567
      %v1600 = vunpack.c.l.b16 %v1568
      %v1601 = vunpack.c.l.b16 %v1569
      %v1602 = vunpack.c.l.b16 %v1570
      %v1603 = vunpack.c.l.b16 %v1571
      %v1604 = vunpack.c.l.b16 %v1572
      %v1605 = vunpack.c.l.b16 %v1573
      %v1606 = vunpack.c.l.b16 %v1574
      %v1607 = vunpack.c.l.b16 %v1575
      %v1608 = vpack.c.b16 %v1593, %v1592
      %v1609 = vpack.c.b16 %v1595, %v1594
      %v1610 = vpack.c.b16 %v1597, %v1596
      %v1611 = vpack.c.b16 %v1599, %v1598
      %v1612 = vpack.c.b16 %v1601, %v1600
      %v1613 = vpack.c.b16 %v1603, %v1602
      %v1614 = vpack.c.b16 %v1605, %v1604
      %v1615 = vpack.c.b16 %v1607, %v1606
      %1624 = vmatprep.subr.bf16.mxu0 0
      %1625 = vmatpush1.bf16.msra.mxu0 %v1608
      %1626 = vmatprep.subr.bf16.mxu0 0
      %1627 = vmatpush1.bf16.msra.mxu0 %v1609
      %1628 = vmatprep.subr.bf16.mxu0 0
      %1629 = vmatpush1.bf16.msra.mxu0 %v1610
      %1630 = vmatprep.subr.bf16.mxu0 0
      %1631 = vmatpush1.bf16.msra.mxu0 %v1611
      %1632 = vmatprep.subr.bf16.mxu0 0
      %1633 = vmatpush1.bf16.msra.mxu0 %v1612
      %1634 = vmatprep.subr.bf16.mxu0 0
      %1635 = vmatpush1.bf16.msra.mxu0 %v1613
      %1636 = vmatprep.subr.bf16.mxu0 0
      %1637 = vmatpush1.bf16.msra.mxu0 %v1614
      %1638 = vmatprep.subr.bf16.mxu0 0
      %1639 = vmatpush1.bf16.msra.mxu0 %v1615
      %1640 = vmatprep.subr.bf16.mxu0 0
      %1641 = vmatpush1.bf16.msra.mxu0 0
      %1642 = vmatprep.subr.bf16.mxu0 0
      %1643 = vmatpush1.bf16.msra.mxu0 0
      %1644 = vmatprep.subr.bf16.mxu0 0
      %1645 = vmatpush1.bf16.msra.mxu0 0
      %1646 = vmatprep.subr.bf16.mxu0 0
      %1647 = vmatpush1.bf16.msra.mxu0 0
      %1648 = vmatprep.subr.bf16.mxu0 0
      %1649 = vmatpush1.bf16.msra.mxu0 0
      %1650 = vmatprep.subr.bf16.mxu0 0
      %1651 = vmatpush1.bf16.msra.mxu0 0
      %1652 = vmatprep.subr.bf16.mxu0 0
      %1653 = vmatpush1.bf16.msra.mxu0 0
      %1654 = vmatprep.subr.bf16.mxu0 0
      %1655 = vmatpush1.bf16.msra.mxu0 0
      %1656 = vmatprep.mubr.bf16.mxu0 0
      %1657 = vmatmul.mubr.bf16.gmra.mrb[0].mxu0 %v753
      %v1658 = vpop.f32.mrb[0].mxu0
      %v1659 = vadd.f32 0.0, %v1658
      %v1660 = vpop.f32.mrb[0].mxu0
      %v1661 = vpop.f32.mrb[0].mxu0
      %v1662 = vadd.f32 0.0, %v1661
      %v1663 = vpop.f32.mrb[0].mxu0
      %1664 = vmatprep.mubr.bf16.mxu0 0
      %1665 = vmatmul.mubr.bf16.gmra.mrb[0].mxu0 %v765
      %v1666 = vpop.f32.mrb[0].mxu0
      %v1667 = vadd.f32 0.0, %v1666
      %v1668 = vpop.f32.mrb[0].mxu0
      %v1669 = vpop.f32.mrb[0].mxu0
      %v1670 = vadd.f32 0.0, %v1669
      %v1671 = vpop.f32.mrb[0].mxu0
      %1672 = vmatprep.mubr.bf16.mxu0 0
      %1673 = vmatmul.mubr.bf16.gmra.mrb[0].mxu0 %v777
      %v1674 = vpop.f32.mrb[0].mxu0
      %v1675 = vadd.f32 0.0, %v1674
      %v1676 = vpop.f32.mrb[0].mxu0
      %v1677 = vpop.f32.mrb[0].mxu0
      %v1678 = vadd.f32 0.0, %v1677
      %v1679 = vpop.f32.mrb[0].mxu0
      %1680 = vmatprep.mubr.bf16.mxu0 0
      %1681 = vmatmul.mubr.bf16.gmra.mrb[0].mxu0 %v789
      %v1682 = vpop.f32.mrb[0].mxu0
      %v1683 = vadd.f32 0.0, %v1682
      %v1684 = vpop.f32.mrb[0].mxu0
      %v1685 = vpop.f32.mrb[0].mxu0
      %v1686 = vadd.f32 0.0, %v1685
      %v1687 = vpop.f32.mrb[0].mxu0
      %1688 = vmatprep.mubr.bf16.mxu0 0
      %1689 = vmatmul.mubr.bf16.gmra.mrb[0].mxu0 %v801
      %v1690 = vpop.f32.mrb[0].mxu0
      %v1691 = vadd.f32 0.0, %v1690
      %v1692 = vpop.f32.mrb[0].mxu0
      %v1693 = vpop.f32.mrb[0].mxu0
      %v1694 = vadd.f32 0.0, %v1693
      %v1695 = vpop.f32.mrb[0].mxu0
      %1696 = vmatprep.mubr.bf16.mxu0 0
      %1697 = vmatmul.mubr.bf16.gmra.mrb[0].mxu0 %v813
      %v1698 = vpop.f32.mrb[0].mxu0
      %v1699 = vadd.f32 0.0, %v1698
      %v1700 = vpop.f32.mrb[0].mxu0
      %v1701 = vpop.f32.mrb[0].mxu0
      %v1702 = vadd.f32 0.0, %v1701
      %v1703 = vpop.f32.mrb[0].mxu0
      %1704 = vmatprep.mubr.bf16.mxu0 0
      %1705 = vmatmul.mubr.bf16.gmra.mrb[0].mxu0 %v825
      %v1706 = vpop.f32.mrb[0].mxu0
      %v1707 = vadd.f32 0.0, %v1706
      %v1708 = vpop.f32.mrb[0].mxu0
      %v1709 = vpop.f32.mrb[0].mxu0
      %v1710 = vadd.f32 0.0, %v1709
      %v1711 = vpop.f32.mrb[0].mxu0
      %1712 = vmatprep.mubr.bf16.mxu0 0
      %1713 = vmatmul.mubr.bf16.gmra.mrb[0].mxu0 %v1557
      %v1714 = vpop.f32.mrb[0].mxu0
      %v1715 = vadd.f32 0.0, %v1714
      %v1716 = vpop.f32.mrb[0].mxu0
      %v1717 = vpop.f32.mrb[0].mxu0
      %v1718 = vadd.f32 0.0, %v1717
      %v1719 = vpop.f32.mrb[0].mxu0
      %1720 = vdwg.mxu0
      %v1721 = vadd.f32 %v1530, %v1659
      %v1722 = vadd.f32 %v1531, %v1662
      %v1723 = vadd.f32 %v1532, %v1667
      %v1724 = vadd.f32 %v1533, %v1670
      %v1725 = vadd.f32 %v1534, %v1675
      %v1726 = vadd.f32 %v1535, %v1678
      %v1727 = vadd.f32 %v1536, %v1683
      %v1728 = vadd.f32 %v1537, %v1686
      %v1729 = vadd.f32 %v1538, %v1691
      %v1730 = vadd.f32 %v1539, %v1694
      %v1731 = vadd.f32 %v1540, %v1699
      %v1732 = vadd.f32 %v1541, %v1702
      %v1733 = vadd.f32 %v1542, %v1707
      %v1734 = vadd.f32 %v1543, %v1710
      %v1735 = vadd.f32 %v1544, %v1715
      %v1736 = vadd.f32 %v1545, %v1718
      %v1739 = vrot.slane %v709, 1
      %v1740 = vrot.slane %v710, 1
      %v1741 = vsel %vm1157, %v1739, %v1740
      %s1743 = scalar_lea.vmem %s3, 320
      %v1744 = vld [vmem:[%s1743] sm:$0xf]
      %v1745 = vld [vmem:[%s1743 + $0x4] sm:$0xf]
      %v1746 = vld [vmem:[%s1743 + $0x8] sm:$0xf]
      %v1747 = vld [vmem:[%s1743 + $0xc] sm:$0xf]
      %v1748 = vld [vmem:[%s1743 + $0x10] sm:$0xf]
      %v1749 = vld [vmem:[%s1743 + $0x14] sm:$0xf]
      %v1750 = vld [vmem:[%s1743 + $0x18] sm:$0xf]
      %v1751 = vld [vmem:[%s1743 + $0x1c] sm:$0xf]
      %v1752 = vld [vmem:[%s1743 + $0x20] sm:$0xf]
      %v1753 = vld [vmem:[%s1743 + $0x24] sm:$0xf]
      %v1754 = vld [vmem:[%s1743 + $0x28] sm:$0xf]
      %v1755 = vld [vmem:[%s1743 + $0x2c] sm:$0xf]
      %v1756 = vld [vmem:[%s1743 + $0x30] sm:$0xf]
      %v1757 = vld [vmem:[%s1743 + $0x34] sm:$0xf]
      %v1758 = vld [vmem:[%s1743 + $0x38] sm:$0xf]
      %v1759 = vld [vmem:[%s1743 + $0x3c] sm:$0xf]
      %v1776 = vunpack.c.l.b16 %v1744
      %v1777 = vunpack.c.l.b16 %v1745
      %v1778 = vunpack.c.l.b16 %v1746
      %v1779 = vunpack.c.l.b16 %v1747
      %v1780 = vunpack.c.l.b16 %v1748
      %v1781 = vunpack.c.l.b16 %v1749
      %v1782 = vunpack.c.l.b16 %v1750
      %v1783 = vunpack.c.l.b16 %v1751
      %v1784 = vunpack.c.l.b16 %v1752
      %v1785 = vunpack.c.l.b16 %v1753
      %v1786 = vunpack.c.l.b16 %v1754
      %v1787 = vunpack.c.l.b16 %v1755
      %v1788 = vunpack.c.l.b16 %v1756
      %v1789 = vunpack.c.l.b16 %v1757
      %v1790 = vunpack.c.l.b16 %v1758
      %v1791 = vunpack.c.l.b16 %v1759
      %v1792 = vpack.c.b16 %v1777, %v1776
      %v1793 = vpack.c.b16 %v1779, %v1778
      %v1794 = vpack.c.b16 %v1781, %v1780
      %v1795 = vpack.c.b16 %v1783, %v1782
      %v1796 = vpack.c.b16 %v1785, %v1784
      %v1797 = vpack.c.b16 %v1787, %v1786
      %v1798 = vpack.c.b16 %v1789, %v1788
      %v1799 = vpack.c.b16 %v1791, %v1790
      %1808 = vmatprep.subr.bf16.mxu0 0
      %1809 = vmatpush1.bf16.msra.mxu0 %v1792
      %1810 = vmatprep.subr.bf16.mxu0 0
      %1811 = vmatpush1.bf16.msra.mxu0 %v1793
      %1812 = vmatprep.subr.bf16.mxu0 0
      %1813 = vmatpush1.bf16.msra.mxu0 %v1794
      %1814 = vmatprep.subr.bf16.mxu0 0
      %1815 = vmatpush1.bf16.msra.mxu0 %v1795
      %1816 = vmatprep.subr.bf16.mxu0 0
      %1817 = vmatpush1.bf16.msra.mxu0 %v1796
      %1818 = vmatprep.subr.bf16.mxu0 0
      %1819 = vmatpush1.bf16.msra.mxu0 %v1797
      %1820 = vmatprep.subr.bf16.mxu0 0
      %1821 = vmatpush1.bf16.msra.mxu0 %v1798
      %1822 = vmatprep.subr.bf16.mxu0 0
      %1823 = vmatpush1.bf16.msra.mxu0 %v1799
      %1824 = vmatprep.subr.bf16.mxu0 0
      %1825 = vmatpush1.bf16.msra.mxu0 0
      %1826 = vmatprep.subr.bf16.mxu0 0
      %1827 = vmatpush1.bf16.msra.mxu0 0
      %1828 = vmatprep.subr.bf16.mxu0 0
      %1829 = vmatpush1.bf16.msra.mxu0 0
      %1830 = vmatprep.subr.bf16.mxu0 0
      %1831 = vmatpush1.bf16.msra.mxu0 0
      %1832 = vmatprep.subr.bf16.mxu0 0
      %1833 = vmatpush1.bf16.msra.mxu0 0
      %1834 = vmatprep.subr.bf16.mxu0 0
      %1835 = vmatpush1.bf16.msra.mxu0 0
      %1836 = vmatprep.subr.bf16.mxu0 0
      %1837 = vmatpush1.bf16.msra.mxu0 0
      %1838 = vmatprep.subr.bf16.mxu0 0
      %1839 = vmatpush1.bf16.msra.mxu0 0
      %1840 = vmatprep.mubr.bf16.mxu0 0
      %1841 = vmatmul.mubr.bf16.gmra.mrb[0].mxu0 %v1163
      %v1842 = vpop.f32.mrb[0].mxu0
      %v1843 = vadd.f32 0.0, %v1842
      %v1844 = vpop.f32.mrb[0].mxu0
      %v1845 = vpop.f32.mrb[0].mxu0
      %v1846 = vadd.f32 0.0, %v1845
      %v1847 = vpop.f32.mrb[0].mxu0
      %1848 = vmatprep.mubr.bf16.mxu0 0
      %1849 = vmatmul.mubr.bf16.gmra.mrb[0].mxu0 %v1166
      %v1850 = vpop.f32.mrb[0].mxu0
      %v1851 = vadd.f32 0.0, %v1850
      %v1852 = vpop.f32.mrb[0].mxu0
      %v1853 = vpop.f32.mrb[0].mxu0
      %v1854 = vadd.f32 0.0, %v1853
      %v1855 = vpop.f32.mrb[0].mxu0
      %1856 = vmatprep.mubr.bf16.mxu0 0
      %1857 = vmatmul.mubr.bf16.gmra.mrb[0].mxu0 %v1169
      %v1858 = vpop.f32.mrb[0].mxu0
      %v1859 = vadd.f32 0.0, %v1858
      %v1860 = vpop.f32.mrb[0].mxu0
      %v1861 = vpop.f32.mrb[0].mxu0
      %v1862 = vadd.f32 0.0, %v1861
      %v1863 = vpop.f32.mrb[0].mxu0
      %1864 = vmatprep.mubr.bf16.mxu0 0
      %1865 = vmatmul.mubr.bf16.gmra.mrb[0].mxu0 %v1172
      %v1866 = vpop.f32.mrb[0].mxu0
      %v1867 = vadd.f32 0.0, %v1866
      %v1868 = vpop.f32.mrb[0].mxu0
      %v1869 = vpop.f32.mrb[0].mxu0
      %v1870 = vadd.f32 0.0, %v1869
      %v1871 = vpop.f32.mrb[0].mxu0
      %1872 = vmatprep.mubr.bf16.mxu0 0
      %1873 = vmatmul.mubr.bf16.gmra.mrb[0].mxu0 %v1175
      %v1874 = vpop.f32.mrb[0].mxu0
      %v1875 = vadd.f32 0.0, %v1874
      %v1876 = vpop.f32.mrb[0].mxu0
      %v1877 = vpop.f32.mrb[0].mxu0
      %v1878 = vadd.f32 0.0, %v1877
      %v1879 = vpop.f32.mrb[0].mxu0
      %1880 = vmatprep.mubr.bf16.mxu0 0
      %1881 = vmatmul.mubr.bf16.gmra.mrb[0].mxu0 %v1178
      %v1882 = vpop.f32.mrb[0].mxu0
      %v1883 = vadd.f32 0.0, %v1882
      %v1884 = vpop.f32.mrb[0].mxu0
      %v1885 = vpop.f32.mrb[0].mxu0
      %v1886 = vadd.f32 0.0, %v1885
      %v1887 = vpop.f32.mrb[0].mxu0
      %1888 = vmatprep.mubr.bf16.mxu0 0
      %1889 = vmatmul.mubr.bf16.gmra.mrb[0].mxu0 %v1181
      %v1890 = vpop.f32.mrb[0].mxu0
      %v1891 = vadd.f32 0.0, %v1890
      %v1892 = vpop.f32.mrb[0].mxu0
      %v1893 = vpop.f32.mrb[0].mxu0
      %v1894 = vadd.f32 0.0, %v1893
      %v1895 = vpop.f32.mrb[0].mxu0
      %1896 = vmatprep.mubr.bf16.mxu0 0
      %1897 = vmatmul.mubr.bf16.gmra.mrb[0].mxu0 %v1741
      %v1898 = vpop.f32.mrb[0].mxu0
      %v1899 = vadd.f32 0.0, %v1898
      %v1900 = vpop.f32.mrb[0].mxu0
      %v1901 = vpop.f32.mrb[0].mxu0
      %v1902 = vadd.f32 0.0, %v1901
      %v1903 = vpop.f32.mrb[0].mxu0
      %1904 = vdwg.mxu0
      %v1905 = vadd.f32 %v1721, %v1843
      %v1906 = vadd.f32 %v1722, %v1846
      %v1907 = vadd.f32 %v1723, %v1851
      %v1908 = vadd.f32 %v1724, %v1854
      %v1909 = vadd.f32 %v1725, %v1859
      %v1910 = vadd.f32 %v1726, %v1862
      %v1911 = vadd.f32 %v1727, %v1867
      %v1912 = vadd.f32 %v1728, %v1870
      %v1913 = vadd.f32 %v1729, %v1875
      %v1914 = vadd.f32 %v1730, %v1878
      %v1915 = vadd.f32 %v1731, %v1883
      %v1916 = vadd.f32 %v1732, %v1886
      %v1917 = vadd.f32 %v1733, %v1891
      %v1918 = vadd.f32 %v1734, %v1894
      %v1919 = vadd.f32 %v1735, %v1899
      %v1920 = vadd.f32 %v1736, %v1902
      %s1921 = scalar_lea.vmem %s3, 384
      %v1922 = vld [vmem:[%s1921] sm:$0xf]
      %v1923 = vld [vmem:[%s1921 + $0x4] sm:$0xf]
      %v1924 = vld [vmem:[%s1921 + $0x8] sm:$0xf]
      %v1925 = vld [vmem:[%s1921 + $0xc] sm:$0xf]
      %v1926 = vld [vmem:[%s1921 + $0x10] sm:$0xf]
      %v1927 = vld [vmem:[%s1921 + $0x14] sm:$0xf]
      %v1928 = vld [vmem:[%s1921 + $0x18] sm:$0xf]
      %v1929 = vld [vmem:[%s1921 + $0x1c] sm:$0xf]
      %v1930 = vld [vmem:[%s1921 + $0x20] sm:$0xf]
      %v1931 = vld [vmem:[%s1921 + $0x24] sm:$0xf]
      %v1932 = vld [vmem:[%s1921 + $0x28] sm:$0xf]
      %v1933 = vld [vmem:[%s1921 + $0x2c] sm:$0xf]
      %v1934 = vld [vmem:[%s1921 + $0x30] sm:$0xf]
      %v1935 = vld [vmem:[%s1921 + $0x34] sm:$0xf]
      %v1936 = vld [vmem:[%s1921 + $0x38] sm:$0xf]
      %v1937 = vld [vmem:[%s1921 + $0x3c] sm:$0xf]
      %v1954 = vunpack.c.l.b16 %v1922
      %v1955 = vunpack.c.l.b16 %v1923
      %v1956 = vunpack.c.l.b16 %v1924
      %v1957 = vunpack.c.l.b16 %v1925
      %v1958 = vunpack.c.l.b16 %v1926
      %v1959 = vunpack.c.l.b16 %v1927
      %v1960 = vunpack.c.l.b16 %v1928
      %v1961 = vunpack.c.l.b16 %v1929
      %v1962 = vunpack.c.l.b16 %v1930
      %v1963 = vunpack.c.l.b16 %v1931
      %v1964 = vunpack.c.l.b16 %v1932
      %v1965 = vunpack.c.l.b16 %v1933
      %v1966 = vunpack.c.l.b16 %v1934
      %v1967 = vunpack.c.l.b16 %v1935
      %v1968 = vunpack.c.l.b16 %v1936
      %v1969 = vunpack.c.l.b16 %v1937
      %v1970 = vpack.c.b16 %v1955, %v1954
      %v1971 = vpack.c.b16 %v1957, %v1956
      %v1972 = vpack.c.b16 %v1959, %v1958
      %v1973 = vpack.c.b16 %v1961, %v1960
      %v1974 = vpack.c.b16 %v1963, %v1962
      %v1975 = vpack.c.b16 %v1965, %v1964
      %v1976 = vpack.c.b16 %v1967, %v1966
      %v1977 = vpack.c.b16 %v1969, %v1968
      %1986 = vmatprep.subr.bf16.mxu0 0
      %1987 = vmatpush1.bf16.msra.mxu0 %v1970
      %1988 = vmatprep.subr.bf16.mxu0 0
      %1989 = vmatpush1.bf16.msra.mxu0 %v1971
      %1990 = vmatprep.subr.bf16.mxu0 0
      %1991 = vmatpush1.bf16.msra.mxu0 %v1972
      %1992 = vmatprep.subr.bf16.mxu0 0
      %1993 = vmatpush1.bf16.msra.mxu0 %v1973
      %1994 = vmatprep.subr.bf16.mxu0 0
      %1995 = vmatpush1.bf16.msra.mxu0 %v1974
      %1996 = vmatprep.subr.bf16.mxu0 0
      %1997 = vmatpush1.bf16.msra.mxu0 %v1975
      %1998 = vmatprep.subr.bf16.mxu0 0
      %1999 = vmatpush1.bf16.msra.mxu0 %v1976
      %2000 = vmatprep.subr.bf16.mxu0 0
      %2001 = vmatpush1.bf16.msra.mxu0 %v1977
      %2002 = vmatprep.subr.bf16.mxu0 0
      %2003 = vmatpush1.bf16.msra.mxu0 0
      %2004 = vmatprep.subr.bf16.mxu0 0
      %2005 = vmatpush1.bf16.msra.mxu0 0
      %2006 = vmatprep.subr.bf16.mxu0 0
      %2007 = vmatpush1.bf16.msra.mxu0 0
      %2008 = vmatprep.subr.bf16.mxu0 0
      %2009 = vmatpush1.bf16.msra.mxu0 0
      %2010 = vmatprep.subr.bf16.mxu0 0
      %2011 = vmatpush1.bf16.msra.mxu0 0
      %2012 = vmatprep.subr.bf16.mxu0 0
      %2013 = vmatpush1.bf16.msra.mxu0 0
      %2014 = vmatprep.subr.bf16.mxu0 0
      %2015 = vmatpush1.bf16.msra.mxu0 0
      %2016 = vmatprep.subr.bf16.mxu0 0
      %2017 = vmatpush1.bf16.msra.mxu0 0
      %2018 = vmatprep.mubr.bf16.mxu0 0
      %2019 = vmatmul.mubr.bf16.gmra.mrb[0].mxu0 %v697
      %v2020 = vpop.f32.mrb[0].mxu0
      %v2021 = vadd.f32 0.0, %v2020
      %v2022 = vpop.f32.mrb[0].mxu0
      %v2023 = vpop.f32.mrb[0].mxu0
      %v2024 = vadd.f32 0.0, %v2023
      %v2025 = vpop.f32.mrb[0].mxu0
      %2026 = vmatprep.mubr.bf16.mxu0 0
      %2027 = vmatmul.mubr.bf16.gmra.mrb[0].mxu0 %v699
      %v2028 = vpop.f32.mrb[0].mxu0
      %v2029 = vadd.f32 0.0, %v2028
      %v2030 = vpop.f32.mrb[0].mxu0
      %v2031 = vpop.f32.mrb[0].mxu0
      %v2032 = vadd.f32 0.0, %v2031
      %v2033 = vpop.f32.mrb[0].mxu0
      %2034 = vmatprep.mubr.bf16.mxu0 0
      %2035 = vmatmul.mubr.bf16.gmra.mrb[0].mxu0 %v701
      %v2036 = vpop.f32.mrb[0].mxu0
      %v2037 = vadd.f32 0.0, %v2036
      %v2038 = vpop.f32.mrb[0].mxu0
      %v2039 = vpop.f32.mrb[0].mxu0
      %v2040 = vadd.f32 0.0, %v2039
      %v2041 = vpop.f32.mrb[0].mxu0
      %2042 = vmatprep.mubr.bf16.mxu0 0
      %2043 = vmatmul.mubr.bf16.gmra.mrb[0].mxu0 %v703
      %v2044 = vpop.f32.mrb[0].mxu0
      %v2045 = vadd.f32 0.0, %v2044
      %v2046 = vpop.f32.mrb[0].mxu0
      %v2047 = vpop.f32.mrb[0].mxu0
      %v2048 = vadd.f32 0.0, %v2047
      %v2049 = vpop.f32.mrb[0].mxu0
      %2050 = vmatprep.mubr.bf16.mxu0 0
      %2051 = vmatmul.mubr.bf16.gmra.mrb[0].mxu0 %v705
      %v2052 = vpop.f32.mrb[0].mxu0
      %v2053 = vadd.f32 0.0, %v2052
      %v2054 = vpop.f32.mrb[0].mxu0
      %v2055 = vpop.f32.mrb[0].mxu0
      %v2056 = vadd.f32 0.0, %v2055
      %v2057 = vpop.f32.mrb[0].mxu0
      %2058 = vmatprep.mubr.bf16.mxu0 0
      %2059 = vmatmul.mubr.bf16.gmra.mrb[0].mxu0 %v707
      %v2060 = vpop.f32.mrb[0].mxu0
      %v2061 = vadd.f32 0.0, %v2060
      %v2062 = vpop.f32.mrb[0].mxu0
      %v2063 = vpop.f32.mrb[0].mxu0
      %v2064 = vadd.f32 0.0, %v2063
      %v2065 = vpop.f32.mrb[0].mxu0
      %2066 = vmatprep.mubr.bf16.mxu0 0
      %2067 = vmatmul.mubr.bf16.gmra.mrb[0].mxu0 %v709
      %v2068 = vpop.f32.mrb[0].mxu0
      %v2069 = vadd.f32 0.0, %v2068
      %v2070 = vpop.f32.mrb[0].mxu0
      %v2071 = vpop.f32.mrb[0].mxu0
      %v2072 = vadd.f32 0.0, %v2071
      %v2073 = vpop.f32.mrb[0].mxu0
      %2074 = vmatprep.mubr.bf16.mxu0 0
      %2075 = vmatmul.mubr.bf16.gmra.mrb[0].mxu0 %v711
      %v2076 = vpop.f32.mrb[0].mxu0
      %v2077 = vadd.f32 0.0, %v2076
      %v2078 = vpop.f32.mrb[0].mxu0
      %v2079 = vpop.f32.mrb[0].mxu0
      %v2080 = vadd.f32 0.0, %v2079
      %v2081 = vpop.f32.mrb[0].mxu0
      %2082 = vdwg.mxu0
      %v2083 = vadd.f32 %v1905, %v2021
      %v2084 = vadd.f32 %v1906, %v2024
      %v2085 = vadd.f32 %v1907, %v2029
      %v2086 = vadd.f32 %v1908, %v2032
      %v2087 = vadd.f32 %v1909, %v2037
      %v2088 = vadd.f32 %v1910, %v2040
      %v2089 = vadd.f32 %v1911, %v2045
      %v2090 = vadd.f32 %v1912, %v2048
      %v2091 = vadd.f32 %v1913, %v2053
      %v2092 = vadd.f32 %v1914, %v2056
      %v2093 = vadd.f32 %v1915, %v2061
      %v2094 = vadd.f32 %v1916, %v2064
      %v2095 = vadd.f32 %v1917, %v2069
      %v2096 = vadd.f32 %v1918, %v2072
      %v2097 = vadd.f32 %v1919, %v2077
      %v2098 = vadd.f32 %v1920, %v2080
      %v2100 = vshrl.u32 %v711, 16
      %v2102 = vshll.u32 %v711, 16
      %v2104 = vrot.slane %v2102, 1
      %v2105 = vor.u32 %v2100, %v2104
      %v2107 = vshll.u32 %v712, 16
      %v2109 = vrot.slane %v2107, 1
      %v2110 = vsel %vm729, %v2105, %v2109
      %s2112 = scalar_lea.vmem %s3, 448
      %v2113 = vld [vmem:[%s2112] sm:$0xf]
      %v2114 = vld [vmem:[%s2112 + $0x4] sm:$0xf]
      %v2115 = vld [vmem:[%s2112 + $0x8] sm:$0xf]
      %v2116 = vld [vmem:[%s2112 + $0xc] sm:$0xf]
      %v2117 = vld [vmem:[%s2112 + $0x10] sm:$0xf]
      %v2118 = vld [vmem:[%s2112 + $0x14] sm:$0xf]
      %v2119 = vld [vmem:[%s2112 + $0x18] sm:$0xf]
      %v2120 = vld [vmem:[%s2112 + $0x1c] sm:$0xf]
      %v2121 = vld [vmem:[%s2112 + $0x20] sm:$0xf]
      %v2122 = vld [vmem:[%s2112 + $0x24] sm:$0xf]
      %v2123 = vld [vmem:[%s2112 + $0x28] sm:$0xf]
      %v2124 = vld [vmem:[%s2112 + $0x2c] sm:$0xf]
      %v2125 = vld [vmem:[%s2112 + $0x30] sm:$0xf]
      %v2126 = vld [vmem:[%s2112 + $0x34] sm:$0xf]
      %v2127 = vld [vmem:[%s2112 + $0x38] sm:$0xf]
      %v2128 = vld [vmem:[%s2112 + $0x3c] sm:$0xf]
      %v2145 = vunpack.c.l.b16 %v2113
      %v2146 = vunpack.c.l.b16 %v2114
      %v2147 = vunpack.c.l.b16 %v2115
      %v2148 = vunpack.c.l.b16 %v2116
      %v2149 = vunpack.c.l.b16 %v2117
      %v2150 = vunpack.c.l.b16 %v2118
      %v2151 = vunpack.c.l.b16 %v2119
      %v2152 = vunpack.c.l.b16 %v2120
      %v2153 = vunpack.c.l.b16 %v2121
      %v2154 = vunpack.c.l.b16 %v2122
      %v2155 = vunpack.c.l.b16 %v2123
      %v2156 = vunpack.c.l.b16 %v2124
      %v2157 = vunpack.c.l.b16 %v2125
      %v2158 = vunpack.c.l.b16 %v2126
      %v2159 = vunpack.c.l.b16 %v2127
      %v2160 = vunpack.c.l.b16 %v2128
      %v2161 = vpack.c.b16 %v2146, %v2145
      %v2162 = vpack.c.b16 %v2148, %v2147
      %v2163 = vpack.c.b16 %v2150, %v2149
      %v2164 = vpack.c.b16 %v2152, %v2151
      %v2165 = vpack.c.b16 %v2154, %v2153
      %v2166 = vpack.c.b16 %v2156, %v2155
      %v2167 = vpack.c.b16 %v2158, %v2157
      %v2168 = vpack.c.b16 %v2160, %v2159
      %2177 = vmatprep.subr.bf16.mxu0 0
      %2178 = vmatpush1.bf16.msra.mxu0 %v2161
      %2179 = vmatprep.subr.bf16.mxu0 0
      %2180 = vmatpush1.bf16.msra.mxu0 %v2162
      %2181 = vmatprep.subr.bf16.mxu0 0
      %2182 = vmatpush1.bf16.msra.mxu0 %v2163
      %2183 = vmatprep.subr.bf16.mxu0 0
      %2184 = vmatpush1.bf16.msra.mxu0 %v2164
      %2185 = vmatprep.subr.bf16.mxu0 0
      %2186 = vmatpush1.bf16.msra.mxu0 %v2165
      %2187 = vmatprep.subr.bf16.mxu0 0
      %2188 = vmatpush1.bf16.msra.mxu0 %v2166
      %2189 = vmatprep.subr.bf16.mxu0 0
      %2190 = vmatpush1.bf16.msra.mxu0 %v2167
      %2191 = vmatprep.subr.bf16.mxu0 0
      %2192 = vmatpush1.bf16.msra.mxu0 %v2168
      %2193 = vmatprep.subr.bf16.mxu0 0
      %2194 = vmatpush1.bf16.msra.mxu0 0
      %2195 = vmatprep.subr.bf16.mxu0 0
      %2196 = vmatpush1.bf16.msra.mxu0 0
      %2197 = vmatprep.subr.bf16.mxu0 0
      %2198 = vmatpush1.bf16.msra.mxu0 0
      %2199 = vmatprep.subr.bf16.mxu0 0
      %2200 = vmatpush1.bf16.msra.mxu0 0
      %2201 = vmatprep.subr.bf16.mxu0 0
      %2202 = vmatpush1.bf16.msra.mxu0 0
      %2203 = vmatprep.subr.bf16.mxu0 0
      %2204 = vmatpush1.bf16.msra.mxu0 0
      %2205 = vmatprep.subr.bf16.mxu0 0
      %2206 = vmatpush1.bf16.msra.mxu0 0
      %2207 = vmatprep.subr.bf16.mxu0 0
      %2208 = vmatpush1.bf16.msra.mxu0 0
      %2209 = vmatprep.mubr.bf16.mxu0 0
      %2210 = vmatmul.mubr.bf16.gmra.mrb[0].mxu0 %v765
      %v2211 = vpop.f32.mrb[0].mxu0
      %v2212 = vadd.f32 0.0, %v2211
      %v2213 = vpop.f32.mrb[0].mxu0
      %v2214 = vpop.f32.mrb[0].mxu0
      %v2215 = vadd.f32 0.0, %v2214
      %v2216 = vpop.f32.mrb[0].mxu0
      %2217 = vmatprep.mubr.bf16.mxu0 0
      %2218 = vmatmul.mubr.bf16.gmra.mrb[0].mxu0 %v777
      %v2219 = vpop.f32.mrb[0].mxu0
      %v2220 = vadd.f32 0.0, %v2219
      %v2221 = vpop.f32.mrb[0].mxu0
      %v2222 = vpop.f32.mrb[0].mxu0
      %v2223 = vadd.f32 0.0, %v2222
      %v2224 = vpop.f32.mrb[0].mxu0
      %2225 = vmatprep.mubr.bf16.mxu0 0
      %2226 = vmatmul.mubr.bf16.gmra.mrb[0].mxu0 %v789
      %v2227 = vpop.f32.mrb[0].mxu0
      %v2228 = vadd.f32 0.0, %v2227
      %v2229 = vpop.f32.mrb[0].mxu0
      %v2230 = vpop.f32.mrb[0].mxu0
      %v2231 = vadd.f32 0.0, %v2230
      %v2232 = vpop.f32.mrb[0].mxu0
      %2233 = vmatprep.mubr.bf16.mxu0 0
      %2234 = vmatmul.mubr.bf16.gmra.mrb[0].mxu0 %v801
      %v2235 = vpop.f32.mrb[0].mxu0
      %v2236 = vadd.f32 0.0, %v2235
      %v2237 = vpop.f32.mrb[0].mxu0
      %v2238 = vpop.f32.mrb[0].mxu0
      %v2239 = vadd.f32 0.0, %v2238
      %v2240 = vpop.f32.mrb[0].mxu0
      %2241 = vmatprep.mubr.bf16.mxu0 0
      %2242 = vmatmul.mubr.bf16.gmra.mrb[0].mxu0 %v813
      %v2243 = vpop.f32.mrb[0].mxu0
      %v2244 = vadd.f32 0.0, %v2243
      %v2245 = vpop.f32.mrb[0].mxu0
      %v2246 = vpop.f32.mrb[0].mxu0
      %v2247 = vadd.f32 0.0, %v2246
      %v2248 = vpop.f32.mrb[0].mxu0
      %2249 = vmatprep.mubr.bf16.mxu0 0
      %2250 = vmatmul.mubr.bf16.gmra.mrb[0].mxu0 %v825
      %v2251 = vpop.f32.mrb[0].mxu0
      %v2252 = vadd.f32 0.0, %v2251
      %v2253 = vpop.f32.mrb[0].mxu0
      %v2254 = vpop.f32.mrb[0].mxu0
      %v2255 = vadd.f32 0.0, %v2254
      %v2256 = vpop.f32.mrb[0].mxu0
      %2257 = vmatprep.mubr.bf16.mxu0 0
      %2258 = vmatmul.mubr.bf16.gmra.mrb[0].mxu0 %v1557
      %v2259 = vpop.f32.mrb[0].mxu0
      %v2260 = vadd.f32 0.0, %v2259
      %v2261 = vpop.f32.mrb[0].mxu0
      %v2262 = vpop.f32.mrb[0].mxu0
      %v2263 = vadd.f32 0.0, %v2262
      %v2264 = vpop.f32.mrb[0].mxu0
      %2265 = vmatprep.mubr.bf16.mxu0 0
      %2266 = vmatmul.mubr.bf16.gmra.mrb[0].mxu0 %v2110
      %v2267 = vpop.f32.mrb[0].mxu0
      %v2268 = vadd.f32 0.0, %v2267
      %v2269 = vpop.f32.mrb[0].mxu0
      %v2270 = vpop.f32.mrb[0].mxu0
      %v2271 = vadd.f32 0.0, %v2270
      %v2272 = vpop.f32.mrb[0].mxu0
      %2273 = vdwg.mxu0
      %v2274 = vadd.f32 %v2083, %v2212
      %v2275 = vadd.f32 %v2084, %v2215
      %v2276 = vadd.f32 %v2085, %v2220
      %v2277 = vadd.f32 %v2086, %v2223
      %v2278 = vadd.f32 %v2087, %v2228
      %v2279 = vadd.f32 %v2088, %v2231
      %v2280 = vadd.f32 %v2089, %v2236
      %v2281 = vadd.f32 %v2090, %v2239
      %v2282 = vadd.f32 %v2091, %v2244
      %v2283 = vadd.f32 %v2092, %v2247
      %v2284 = vadd.f32 %v2093, %v2252
      %v2285 = vadd.f32 %v2094, %v2255
      %v2286 = vadd.f32 %v2095, %v2260
      %v2287 = vadd.f32 %v2096, %v2263
      %v2288 = vadd.f32 %v2097, %v2268
      %v2289 = vadd.f32 %v2098, %v2271
      %v2292 = vrot.slane %v711, 1
      %v2293 = vrot.slane %v712, 1
      %v2294 = vsel %vm1157, %v2292, %v2293
      %s2296 = scalar_lea.vmem %s3, 512
      %v2297 = vld [vmem:[%s2296] sm:$0xf]
      %v2298 = vld [vmem:[%s2296 + $0x4] sm:$0xf]
      %v2299 = vld [vmem:[%s2296 + $0x8] sm:$0xf]
      %v2300 = vld [vmem:[%s2296 + $0xc] sm:$0xf]
      %v2301 = vld [vmem:[%s2296 + $0x10] sm:$0xf]
      %v2302 = vld [vmem:[%s2296 + $0x14] sm:$0xf]
      %v2303 = vld [vmem:[%s2296 + $0x18] sm:$0xf]
      %v2304 = vld [vmem:[%s2296 + $0x1c] sm:$0xf]
      %v2305 = vld [vmem:[%s2296 + $0x20] sm:$0xf]
      %v2306 = vld [vmem:[%s2296 + $0x24] sm:$0xf]
      %v2307 = vld [vmem:[%s2296 + $0x28] sm:$0xf]
      %v2308 = vld [vmem:[%s2296 + $0x2c] sm:$0xf]
      %v2309 = vld [vmem:[%s2296 + $0x30] sm:$0xf]
      %v2310 = vld [vmem:[%s2296 + $0x34] sm:$0xf]
      %v2311 = vld [vmem:[%s2296 + $0x38] sm:$0xf]
      %v2312 = vld [vmem:[%s2296 + $0x3c] sm:$0xf]
      %v2329 = vunpack.c.l.b16 %v2297
      %v2330 = vunpack.c.l.b16 %v2298
      %v2331 = vunpack.c.l.b16 %v2299
      %v2332 = vunpack.c.l.b16 %v2300
      %v2333 = vunpack.c.l.b16 %v2301
      %v2334 = vunpack.c.l.b16 %v2302
      %v2335 = vunpack.c.l.b16 %v2303
      %v2336 = vunpack.c.l.b16 %v2304
      %v2337 = vunpack.c.l.b16 %v2305
      %v2338 = vunpack.c.l.b16 %v2306
      %v2339 = vunpack.c.l.b16 %v2307
      %v2340 = vunpack.c.l.b16 %v2308
      %v2341 = vunpack.c.l.b16 %v2309
      %v2342 = vunpack.c.l.b16 %v2310
      %v2343 = vunpack.c.l.b16 %v2311
      %v2344 = vunpack.c.l.b16 %v2312
      %v2345 = vpack.c.b16 %v2330, %v2329
      %v2346 = vpack.c.b16 %v2332, %v2331
      %v2347 = vpack.c.b16 %v2334, %v2333
      %v2348 = vpack.c.b16 %v2336, %v2335
      %v2349 = vpack.c.b16 %v2338, %v2337
      %v2350 = vpack.c.b16 %v2340, %v2339
      %v2351 = vpack.c.b16 %v2342, %v2341
      %v2352 = vpack.c.b16 %v2344, %v2343
      %2361 = vmatprep.subr.bf16.mxu0 0
      %2362 = vmatpush1.bf16.msra.mxu0 %v2345
      %2363 = vmatprep.subr.bf16.mxu0 0
      %2364 = vmatpush1.bf16.msra.mxu0 %v2346
      %2365 = vmatprep.subr.bf16.mxu0 0
      %2366 = vmatpush1.bf16.msra.mxu0 %v2347
      %2367 = vmatprep.subr.bf16.mxu0 0
      %2368 = vmatpush1.bf16.msra.mxu0 %v2348
      %2369 = vmatprep.subr.bf16.mxu0 0
      %2370 = vmatpush1.bf16.msra.mxu0 %v2349
      %2371 = vmatprep.subr.bf16.mxu0 0
      %2372 = vmatpush1.bf16.msra.mxu0 %v2350
      %2373 = vmatprep.subr.bf16.mxu0 0
      %2374 = vmatpush1.bf16.msra.mxu0 %v2351
      %2375 = vmatprep.subr.bf16.mxu0 0
      %2376 = vmatpush1.bf16.msra.mxu0 %v2352
      %2377 = vmatprep.subr.bf16.mxu0 0
      %2378 = vmatpush1.bf16.msra.mxu0 0
      %2379 = vmatprep.subr.bf16.mxu0 0
      %2380 = vmatpush1.bf16.msra.mxu0 0
      %2381 = vmatprep.subr.bf16.mxu0 0
      %2382 = vmatpush1.bf16.msra.mxu0 0
      %2383 = vmatprep.subr.bf16.mxu0 0
      %2384 = vmatpush1.bf16.msra.mxu0 0
      %2385 = vmatprep.subr.bf16.mxu0 0
      %2386 = vmatpush1.bf16.msra.mxu0 0
      %2387 = vmatprep.subr.bf16.mxu0 0
      %2388 = vmatpush1.bf16.msra.mxu0 0
      %2389 = vmatprep.subr.bf16.mxu0 0
      %2390 = vmatpush1.bf16.msra.mxu0 0
      %2391 = vmatprep.subr.bf16.mxu0 0
      %2392 = vmatpush1.bf16.msra.mxu0 0
      %2393 = vmatprep.mubr.bf16.mxu0 0
      %2394 = vmatmul.mubr.bf16.gmra.mrb[0].mxu0 %v1166
      %v2395 = vpop.f32.mrb[0].mxu0
      %v2396 = vadd.f32 0.0, %v2395
      %v2397 = vpop.f32.mrb[0].mxu0
      %v2398 = vpop.f32.mrb[0].mxu0
      %v2399 = vadd.f32 0.0, %v2398
      %v2400 = vpop.f32.mrb[0].mxu0
      %2401 = vmatprep.mubr.bf16.mxu0 0
      %2402 = vmatmul.mubr.bf16.gmra.mrb[0].mxu0 %v1169
      %v2403 = vpop.f32.mrb[0].mxu0
      %v2404 = vadd.f32 0.0, %v2403
      %v2405 = vpop.f32.mrb[0].mxu0
      %v2406 = vpop.f32.mrb[0].mxu0
      %v2407 = vadd.f32 0.0, %v2406
      %v2408 = vpop.f32.mrb[0].mxu0
      %2409 = vmatprep.mubr.bf16.mxu0 0
      %2410 = vmatmul.mubr.bf16.gmra.mrb[0].mxu0 %v1172
      %v2411 = vpop.f32.mrb[0].mxu0
      %v2412 = vadd.f32 0.0, %v2411
      %v2413 = vpop.f32.mrb[0].mxu0
      %v2414 = vpop.f32.mrb[0].mxu0
      %v2415 = vadd.f32 0.0, %v2414
      %v2416 = vpop.f32.mrb[0].mxu0
      %2417 = vmatprep.mubr.bf16.mxu0 0
      %2418 = vmatmul.mubr.bf16.gmra.mrb[0].mxu0 %v1175
      %v2419 = vpop.f32.mrb[0].mxu0
      %v2420 = vadd.f32 0.0, %v2419
      %v2421 = vpop.f32.mrb[0].mxu0
      %v2422 = vpop.f32.mrb[0].mxu0
      %v2423 = vadd.f32 0.0, %v2422
      %v2424 = vpop.f32.mrb[0].mxu0
      %2425 = vmatprep.mubr.bf16.mxu0 0
      %2426 = vmatmul.mubr.bf16.gmra.mrb[0].mxu0 %v1178
      %v2427 = vpop.f32.mrb[0].mxu0
      %v2428 = vadd.f32 0.0, %v2427
      %v2429 = vpop.f32.mrb[0].mxu0
      %v2430 = vpop.f32.mrb[0].mxu0
      %v2431 = vadd.f32 0.0, %v2430
      %v2432 = vpop.f32.mrb[0].mxu0
      %2433 = vmatprep.mubr.bf16.mxu0 0
      %2434 = vmatmul.mubr.bf16.gmra.mrb[0].mxu0 %v1181
      %v2435 = vpop.f32.mrb[0].mxu0
      %v2436 = vadd.f32 0.0, %v2435
      %v2437 = vpop.f32.mrb[0].mxu0
      %v2438 = vpop.f32.mrb[0].mxu0
      %v2439 = vadd.f32 0.0, %v2438
      %v2440 = vpop.f32.mrb[0].mxu0
      %2441 = vmatprep.mubr.bf16.mxu0 0
      %2442 = vmatmul.mubr.bf16.gmra.mrb[0].mxu0 %v1741
      %v2443 = vpop.f32.mrb[0].mxu0
      %v2444 = vadd.f32 0.0, %v2443
      %v2445 = vpop.f32.mrb[0].mxu0
      %v2446 = vpop.f32.mrb[0].mxu0
      %v2447 = vadd.f32 0.0, %v2446
      %v2448 = vpop.f32.mrb[0].mxu0
      %2449 = vmatprep.mubr.bf16.mxu0 0
      %2450 = vmatmul.mubr.bf16.gmra.mrb[0].mxu0 %v2294
      %v2451 = vpop.f32.mrb[0].mxu0
      %v2452 = vadd.f32 0.0, %v2451
      %v2453 = vpop.f32.mrb[0].mxu0
      %v2454 = vpop.f32.mrb[0].mxu0
      %v2455 = vadd.f32 0.0, %v2454
      %v2456 = vpop.f32.mrb[0].mxu0
      %2457 = vdwg.mxu0
      %v2458 = vadd.f32 %v2274, %v2396
      %v2459 = vadd.f32 %v2275, %v2399
      %v2460 = vadd.f32 %v2276, %v2404
      %v2461 = vadd.f32 %v2277, %v2407
      %v2462 = vadd.f32 %v2278, %v2412
      %v2463 = vadd.f32 %v2279, %v2415
      %v2464 = vadd.f32 %v2280, %v2420
      %v2465 = vadd.f32 %v2281, %v2423
      %v2466 = vadd.f32 %v2282, %v2428
      %v2467 = vadd.f32 %v2283, %v2431
      %v2468 = vadd.f32 %v2284, %v2436
      %v2469 = vadd.f32 %v2285, %v2439
      %v2470 = vadd.f32 %v2286, %v2444
      %v2471 = vadd.f32 %v2287, %v2447
      %v2472 = vadd.f32 %v2288, %v2452
      %v2473 = vadd.f32 %v2289, %v2455
      %v2474 = vadd.f32 %v2458, %v2459
      %v2475 = vadd.f32 %v2474, %v2460
      %v2476 = vadd.f32 %v2475, %v2461
      %v2477 = vadd.f32 %v2476, %v2462
      %v2478 = vadd.f32 %v2477, %v2463
      %v2479 = vadd.f32 %v2478, %v2464
      %v2480 = vadd.f32 %v2479, %v2465
      %v2481 = vadd.f32 %v2480, %v2466
      %v2482 = vadd.f32 %v2481, %v2467
      %v2483 = vadd.f32 %v2482, %v2468
      %v2484 = vadd.f32 %v2483, %v2469
      %v2485 = vadd.f32 %v2484, %v2470
      %v2486 = vadd.f32 %v2485, %v2471
      %v2487 = vadd.f32 %v2486, %v2472
      %v2488 = vadd.f32 %v2487, %v2473
      %v2489 = vrot.slane %v2488, 4
      %v2490 = vadd.f32 %v2488, %v2489
      %v2491 = vrot.slane %v2490, 2
      %v2492 = vadd.f32 %v2490, %v2491
      %v2493 = vrot.slane %v2492, 1
      %v2494 = vadd.f32 %v2492, %v2493
      %2495 = vst [vmem:[%s461] sm:$0x1] %v2494
      %v2496 = vmul.f32 %v2458, %v2458
      %v2497 = vmul.f32 %v2459, %v2459
      %v2498 = vmul.f32 %v2460, %v2460
      %v2499 = vmul.f32 %v2461, %v2461
      %v2500 = vmul.f32 %v2462, %v2462
      %v2501 = vmul.f32 %v2463, %v2463
      %v2502 = vmul.f32 %v2464, %v2464
      %v2503 = vmul.f32 %v2465, %v2465
      %v2504 = vmul.f32 %v2466, %v2466
      %v2505 = vmul.f32 %v2467, %v2467
      %v2506 = vmul.f32 %v2468, %v2468
      %v2507 = vmul.f32 %v2469, %v2469
      %v2508 = vmul.f32 %v2470, %v2470
      %v2509 = vmul.f32 %v2471, %v2471
      %v2510 = vmul.f32 %v2472, %v2472
      %v2511 = vmul.f32 %v2473, %v2473
      %v2512 = vadd.f32 %v2496, %v2497
      %v2513 = vadd.f32 %v2512, %v2498
      %v2514 = vadd.f32 %v2513, %v2499
      %v2515 = vadd.f32 %v2514, %v2500
      %v2516 = vadd.f32 %v2515, %v2501
      %v2517 = vadd.f32 %v2516, %v2502
      %v2518 = vadd.f32 %v2517, %v2503
      %v2519 = vadd.f32 %v2518, %v2504
      %v2520 = vadd.f32 %v2519, %v2505
      %v2521 = vadd.f32 %v2520, %v2506
      %v2522 = vadd.f32 %v2521, %v2507
      %v2523 = vadd.f32 %v2522, %v2508
      %v2524 = vadd.f32 %v2523, %v2509
      %v2525 = vadd.f32 %v2524, %v2510
      %v2526 = vadd.f32 %v2525, %v2511
      %v2527 = vrot.slane %v2526, 4
      %v2528 = vadd.f32 %v2526, %v2527
      %v2529 = vrot.slane %v2528, 2
      %v2530 = vadd.f32 %v2528, %v2529
      %v2531 = vrot.slane %v2530, 1
      %v2532 = vadd.f32 %v2530, %v2531
      %2533 = vst [vmem:[%s461 + $0x1] sm:$0x1] %v2532
      %v2534 = vpack.c.bf16 %v2459, %v2458
      %v2535 = vpack.c.bf16 %v2461, %v2460
      %v2536 = vpack.c.bf16 %v2463, %v2462
      %v2537 = vpack.c.bf16 %v2465, %v2464
      %v2538 = vpack.c.bf16 %v2467, %v2466
      %v2539 = vpack.c.bf16 %v2469, %v2468
      %v2540 = vpack.c.bf16 %v2471, %v2470
      %v2541 = vpack.c.bf16 %v2473, %v2472
      %vm2542 = vcmask 1040384
      %vm2543 = vsmask.f32 256
      %vm2544 = vmand %vm2542, %vm2543
      %v2545 = vld [vmem:[%s454] sm:$0x1]
      %v2546 = vsel %vm2544, 0, %v2545
      %2547 = vst [vmem:[%s454] sm:$0x1] %v2546
      %v2548 = vld [vmem:[%s454 + $0xc] sm:$0x1]
      %v2549 = vsel %vm2544, 0, %v2548
      %2550 = vst [vmem:[%s454 + $0xc] sm:$0x1] %v2549
      %v2551 = vld [vmem:[%s454 + $0x18] sm:$0x1]
      %v2552 = vsel %vm2544, 0, %v2551
      %2553 = vst [vmem:[%s454 + $0x18] sm:$0x1] %v2552
      %v2554 = vld [vmem:[%s454 + $0x24] sm:$0x1]
      %v2555 = vsel %vm2544, 0, %v2554
      %2556 = vst [vmem:[%s454 + $0x24] sm:$0x1] %v2555
      %v2557 = vld [vmem:[%s454 + $0x30] sm:$0x1]
      %v2558 = vsel %vm2544, 0, %v2557
      %2559 = vst [vmem:[%s454 + $0x30] sm:$0x1] %v2558
      %v2560 = vld [vmem:[%s454 + $0x3c] sm:$0x1]
      %v2561 = vsel %vm2544, 0, %v2560
      %2562 = vst [vmem:[%s454 + $0x3c] sm:$0x1] %v2561
      %v2563 = vld [vmem:[%s454 + $0x48] sm:$0x1]
      %v2564 = vsel %vm2544, 0, %v2563
      %2565 = vst [vmem:[%s454 + $0x48] sm:$0x1] %v2564
      %v2566 = vld [vmem:[%s454 + $0x54] sm:$0x1]
      %v2567 = vsel %vm2544, 0, %v2566
      %2568 = vst [vmem:[%s454 + $0x54] sm:$0x1] %v2567
      %v2577 = vunpack.c.l.b16 %v2534
      %v2578 = vunpack.c.h.b16 %v2534
      %v2579 = vunpack.c.l.b16 %v2535
      %v2580 = vunpack.c.h.b16 %v2535
      %v2581 = vunpack.c.l.b16 %v2536
      %v2582 = vunpack.c.h.b16 %v2536
      %v2583 = vunpack.c.l.b16 %v2537
      %v2584 = vunpack.c.h.b16 %v2537
      %v2585 = vunpack.c.l.b16 %v2538
      %v2586 = vunpack.c.h.b16 %v2538
      %v2587 = vunpack.c.l.b16 %v2539
      %v2588 = vunpack.c.h.b16 %v2539
      %v2589 = vunpack.c.l.b16 %v2540
      %v2590 = vunpack.c.h.b16 %v2540
      %v2591 = vunpack.c.l.b16 %v2541
      %v2592 = vunpack.c.h.b16 %v2541
      %v2593 = vpack.c.b16 %v2577, %v2577
      %v2594 = vpack.c.b16 %v2578, %v2578
      %v2595 = vpack.c.b16 %v2579, %v2579
      %v2596 = vpack.c.b16 %v2580, %v2580
      %v2597 = vpack.c.b16 %v2581, %v2581
      %v2598 = vpack.c.b16 %v2582, %v2582
      %v2599 = vpack.c.b16 %v2583, %v2583
      %v2600 = vpack.c.b16 %v2584, %v2584
      %v2601 = vpack.c.b16 %v2585, %v2585
      %v2602 = vpack.c.b16 %v2586, %v2586
      %v2603 = vpack.c.b16 %v2587, %v2587
      %v2604 = vpack.c.b16 %v2588, %v2588
      %v2605 = vpack.c.b16 %v2589, %v2589
      %v2606 = vpack.c.b16 %v2590, %v2590
      %v2607 = vpack.c.b16 %v2591, %v2591
      %v2608 = vpack.c.b16 %v2592, %v2592
      %vm2609 = vsmask.f32 4368
      %vm2610 = vmor %vm2543, %vm2609
      %v2612 = vshrl.u32 %v2593, 16
      %v2614 = vrot.slane %v2612, 7
      %v2615 = vshll.u32 %v2593, 16
      %v2617 = vor.u32 %v2614, %v2615
      %v2618 = vrot.slane %v2614, 4
      %v2620 = vshrl.u32 %v2594, 16
      %v2622 = vrot.slane %v2620, 7
      %v2623 = vshll.u32 %v2594, 16
      %v2625 = vor.u32 %v2622, %v2623
      %v2626 = vsel %vm2610, %v2618, %v2625
      %v2627 = vrot.slane %v2622, 4
      %v2629 = vshrl.u32 %v2595, 16
      %v2631 = vrot.slane %v2629, 7
      %v2632 = vshll.u32 %v2595, 16
      %v2634 = vor.u32 %v2631, %v2632
      %v2635 = vrot.slane %v2631, 4
      %v2637 = vshrl.u32 %v2596, 16
      %v2639 = vrot.slane %v2637, 7
      %v2640 = vshll.u32 %v2596, 16
      %v2642 = vor.u32 %v2639, %v2640
      %v2643 = vsel %vm2610, %v2635, %v2642
      %v2644 = vrot.slane %v2639, 4
      %v2646 = vshrl.u32 %v2597, 16
      %v2648 = vrot.slane %v2646, 7
      %v2649 = vshll.u32 %v2597, 16
      %v2651 = vor.u32 %v2648, %v2649
      %v2652 = vrot.slane %v2648, 4
      %v2654 = vshrl.u32 %v2598, 16
      %v2656 = vrot.slane %v2654, 7
      %v2657 = vshll.u32 %v2598, 16
      %v2659 = vor.u32 %v2656, %v2657
      %v2660 = vsel %vm2610, %v2652, %v2659
      %v2661 = vrot.slane %v2656, 4
      %v2663 = vshrl.u32 %v2599, 16
      %v2665 = vrot.slane %v2663, 7
      %v2666 = vshll.u32 %v2599, 16
      %v2668 = vor.u32 %v2665, %v2666
      %v2669 = vrot.slane %v2665, 4
      %v2671 = vshrl.u32 %v2600, 16
      %v2673 = vrot.slane %v2671, 7
      %v2674 = vshll.u32 %v2600, 16
      %v2676 = vor.u32 %v2673, %v2674
      %v2677 = vsel %vm2610, %v2669, %v2676
      %v2678 = vrot.slane %v2673, 4
      %v2680 = vshrl.u32 %v2601, 16
      %v2682 = vrot.slane %v2680, 7
      %v2683 = vshll.u32 %v2601, 16
      %v2685 = vor.u32 %v2682, %v2683
      %v2686 = vrot.slane %v2682, 4
      %v2688 = vshrl.u32 %v2602, 16
      %v2690 = vrot.slane %v2688, 7
      %v2691 = vshll.u32 %v2602, 16
      %v2693 = vor.u32 %v2690, %v2691
      %v2694 = vsel %vm2610, %v2686, %v2693
      %v2695 = vrot.slane %v2690, 4
      %v2697 = vshrl.u32 %v2603, 16
      %v2699 = vrot.slane %v2697, 7
      %v2700 = vshll.u32 %v2603, 16
      %v2702 = vor.u32 %v2699, %v2700
      %v2703 = vrot.slane %v2699, 4
      %v2705 = vshrl.u32 %v2604, 16
      %v2707 = vrot.slane %v2705, 7
      %v2708 = vshll.u32 %v2604, 16
      %v2710 = vor.u32 %v2707, %v2708
      %v2711 = vsel %vm2610, %v2703, %v2710
      %v2712 = vrot.slane %v2707, 4
      %v2714 = vshrl.u32 %v2605, 16
      %v2716 = vrot.slane %v2714, 7
      %v2717 = vshll.u32 %v2605, 16
      %v2719 = vor.u32 %v2716, %v2717
      %v2720 = vrot.slane %v2716, 4
      %v2722 = vshrl.u32 %v2606, 16
      %v2724 = vrot.slane %v2722, 7
      %v2725 = vshll.u32 %v2606, 16
      %v2727 = vor.u32 %v2724, %v2725
      %v2728 = vsel %vm2610, %v2720, %v2727
      %v2729 = vrot.slane %v2724, 4
      %v2731 = vshrl.u32 %v2607, 16
      %v2733 = vrot.slane %v2731, 7
      %v2734 = vshll.u32 %v2607, 16
      %v2736 = vor.u32 %v2733, %v2734
      %v2737 = vrot.slane %v2733, 4
      %v2739 = vshrl.u32 %v2608, 16
      %v2741 = vrot.slane %v2739, 7
      %v2742 = vshll.u32 %v2608, 16
      %v2744 = vor.u32 %v2741, %v2742
      %v2745 = vsel %vm2610, %v2737, %v2744
      %v2746 = vrot.slane %v2741, 4
      %vm2771 = vcmask 1043456
      %vm2772 = vsmask.f32 7938
      %vm2773 = vmand %vm2771, %vm2772
      %v2774 = vld [vmem:[%s454] sm:$0xf]
      %v2775 = vsel %vm2773, %v2617, %v2774
      %2776 = vst [vmem:[%s454] sm:$0xf] %v2775
      %2777 = vst [vmem:[%s454 + $0x4] sm:$0xf] %v2626
      %v2778 = vld [vmem:[%s454 + $0x8] sm:$0x1]
      %v2779 = vsel %vm2544, %v2627, %v2778
      %2780 = vst [vmem:[%s454 + $0x8] sm:$0x1] %v2779
      %v2781 = vld [vmem:[%s454 + $0xc] sm:$0xf]
      %v2782 = vsel %vm2773, %v2634, %v2781
      %2783 = vst [vmem:[%s454 + $0xc] sm:$0xf] %v2782
      %2784 = vst [vmem:[%s454 + $0x10] sm:$0xf] %v2643
      %v2785 = vld [vmem:[%s454 + $0x14] sm:$0x1]
      %v2786 = vsel %vm2544, %v2644, %v2785
      %2787 = vst [vmem:[%s454 + $0x14] sm:$0x1] %v2786
      %v2788 = vld [vmem:[%s454 + $0x18] sm:$0xf]
      %v2789 = vsel %vm2773, %v2651, %v2788
      %2790 = vst [vmem:[%s454 + $0x18] sm:$0xf] %v2789
      %2791 = vst [vmem:[%s454 + $0x1c] sm:$0xf] %v2660
      %v2792 = vld [vmem:[%s454 + $0x20] sm:$0x1]
      %v2793 = vsel %vm2544, %v2661, %v2792
      %2794 = vst [vmem:[%s454 + $0x20] sm:$0x1] %v2793
      %v2795 = vld [vmem:[%s454 + $0x24] sm:$0xf]
      %v2796 = vsel %vm2773, %v2668, %v2795
      %2797 = vst [vmem:[%s454 + $0x24] sm:$0xf] %v2796
      %2798 = vst [vmem:[%s454 + $0x28] sm:$0xf] %v2677
      %v2799 = vld [vmem:[%s454 + $0x2c] sm:$0x1]
      %v2800 = vsel %vm2544, %v2678, %v2799
      %2801 = vst [vmem:[%s454 + $0x2c] sm:$0x1] %v2800
      %v2802 = vld [vmem:[%s454 + $0x30] sm:$0xf]
      %v2803 = vsel %vm2773, %v2685, %v2802
      %2804 = vst [vmem:[%s454 + $0x30] sm:$0xf] %v2803
      %2805 = vst [vmem:[%s454 + $0x34] sm:$0xf] %v2694
      %v2806 = vld [vmem:[%s454 + $0x38] sm:$0x1]
      %v2807 = vsel %vm2544, %v2695, %v2806
      %2808 = vst [vmem:[%s454 + $0x38] sm:$0x1] %v2807
      %v2809 = vld [vmem:[%s454 + $0x3c] sm:$0xf]
      %v2810 = vsel %vm2773, %v2702, %v2809
      %2811 = vst [vmem:[%s454 + $0x3c] sm:$0xf] %v2810
      %2812 = vst [vmem:[%s454 + $0x40] sm:$0xf] %v2711
      %v2813 = vld [vmem:[%s454 + $0x44] sm:$0x1]
      %v2814 = vsel %vm2544, %v2712, %v2813
      %2815 = vst [vmem:[%s454 + $0x44] sm:$0x1] %v2814
      %v2816 = vld [vmem:[%s454 + $0x48] sm:$0xf]
      %v2817 = vsel %vm2773, %v2719, %v2816
      %2818 = vst [vmem:[%s454 + $0x48] sm:$0xf] %v2817
      %2819 = vst [vmem:[%s454 + $0x4c] sm:$0xf] %v2728
      %v2820 = vld [vmem:[%s454 + $0x50] sm:$0x1]
      %v2821 = vsel %vm2544, %v2729, %v2820
      %2822 = vst [vmem:[%s454 + $0x50] sm:$0x1] %v2821
      %v2823 = vld [vmem:[%s454 + $0x54] sm:$0xf]
      %v2824 = vsel %vm2773, %v2736, %v2823
      %2825 = vst [vmem:[%s454 + $0x54] sm:$0xf] %v2824
      %2826 = vst [vmem:[%s454 + $0x58] sm:$0xf] %v2745
      %v2827 = vld [vmem:[%s454 + $0x5c] sm:$0x1]
      %v2828 = vsel %vm2544, %v2746, %v2827
      %2829 = vst [vmem:[%s454 + $0x5c] sm:$0x1] %v2828
      %v2830 = vld [vmem:[%s454 + $0x8] sm:$0xf]
      %v2831 = vsel %vm2773, 0, %v2830
      %2832 = vst [vmem:[%s454 + $0x8] sm:$0xf] %v2831
      %v2833 = vld [vmem:[%s454 + $0x14] sm:$0xf]
      %v2834 = vsel %vm2773, 0, %v2833
      %2835 = vst [vmem:[%s454 + $0x14] sm:$0xf] %v2834
      %v2836 = vld [vmem:[%s454 + $0x20] sm:$0xf]
      %v2837 = vsel %vm2773, 0, %v2836
      %2838 = vst [vmem:[%s454 + $0x20] sm:$0xf] %v2837
      %v2839 = vld [vmem:[%s454 + $0x2c] sm:$0xf]
      %v2840 = vsel %vm2773, 0, %v2839
      %2841 = vst [vmem:[%s454 + $0x2c] sm:$0xf] %v2840
      %v2842 = vld [vmem:[%s454 + $0x38] sm:$0xf]
      %v2843 = vsel %vm2773, 0, %v2842
      %2844 = vst [vmem:[%s454 + $0x38] sm:$0xf] %v2843
      %v2845 = vld [vmem:[%s454 + $0x44] sm:$0xf]
      %v2846 = vsel %vm2773, 0, %v2845
      %2847 = vst [vmem:[%s454 + $0x44] sm:$0xf] %v2846
      %v2848 = vld [vmem:[%s454 + $0x50] sm:$0xf]
      %v2849 = vsel %vm2773, 0, %v2848
      %2850 = vst [vmem:[%s454 + $0x50] sm:$0xf] %v2849
      %v2851 = vld [vmem:[%s454 + $0x5c] sm:$0xf]
      %v2852 = vsel %vm2773, 0, %v2851
      %2853 = vst [vmem:[%s454 + $0x5c] sm:$0xf] %v2852
      %s2854 = smul.u32 8, %s24
      %p2855 = scmp.lt.s32.totalorder %s23, 1
      %s2856 = scalar_select %p2855, %s23, 1
      %p2857 = scmp.lt.s32.totalorder %s2854, 15
      %s2858 = scalar_select %p2857, %s2854, 15
      %s2859 = smul.addr %s2858, 3
      %s2860 = smul.addr %s2856, 48
      %s2861 = sadd.s32 %s2859, %s2860
      %s2862 = smul.addr %s2861, 4
      %s2863 = scalar_lea.vmem %s6, %s2862
      %s2864 = smul.u32 %s23, 2
      %s2865 = sadd.s32 %s2864, %s24
      %p2866 = scmp.lt.s32.totalorder %s2865, 3
      %s2867 = scalar_select %p2866, %s2865, 3
      %s2868 = smul.addr %s2867, 8
      %s2869 = scalar_lea.vmem %s7, %s2868
      // Predicated region
      $region45: #{extended_basic_block_forward.4} parent=43 // pred_check
        %p2870 = pneg %p210
      $region46: #{extended_basic_block_forward.4} parent=43 // pred_check_branch
        %2872 = sbr.rel (%p2870) target = $region48
      $region47: #{extended_basic_block_forward.4} parent=43 // pred_region
        %s2873 = smul.u32 8, %s24
      $region48: #{extended_basic_block_forward.4} parent=43 // pred_fallthru
        _
      // Predicated region
      $region49: #{extended_basic_block_forward.4} parent=43 // pred_check
        %p2874 = pneg %p240
      $region50: #{extended_basic_block_forward.4} parent=43 // pred_check_branch
        %2876 = sbr.rel (%p2874) target = $region52
      $region51: #{extended_basic_block_forward.4} parent=43 // pred_region
        %s2877 = smul.u32 %s23, 2
        %s2878 = sadd.s32 %s2877, %s24
      $region52: #{extended_basic_block_forward.4} parent=43 // pred_fallthru
        _
    $region44: #{extended_basic_block_forward.4} parent=5 // pred_fallthru
      _
    %p2879 = scmp.le.s32.totalorder 2, %s14
    // Predicated region
    $region53: #{extended_basic_block_forward.4} parent=5 // pred_check
      %p2880 = pneg %p2879
    $region54: #{extended_basic_block_forward.4} parent=5 // pred_check_branch
      %2882 = sbr.rel (%p2880) target = $region56
    $region55: #{extended_basic_block_forward.4} parent=5 // pred_region
      %s2883 = ssub.s32 %s14, 2
      // Predicated region
      $region57: #{extended_basic_block_forward.4} parent=55 // pred_check
        %p2884 = pneg %p216
      $region58: #{extended_basic_block_forward.4} parent=55 // pred_check_branch
        %2886 = sbr.rel (%p2884) target = $region60
      $region59: #{extended_basic_block_forward.4} parent=55 // pred_region
        %s2887 = smul.u32 8, %s26
        %p2888 = scmp.lt.s32.totalorder %s25, 1
        %s2889 = scalar_select %p2888, %s25, 1
        %p2890 = scmp.lt.s32.totalorder %s2887, 15
        %s2891 = scalar_select %p2890, %s2887, 15
        %s2892 = smul.addr %s2891, 3
        %s2893 = smul.addr %s2889, 48
        %s2894 = sadd.s32 %s2892, %s2893
        %s2895 = smul.addr %s2894, 4
        %s2896 = scalar_lea.vmem %s6, %s2895
      $region60: #{extended_basic_block_forward.4} parent=55 // pred_fallthru
        _
      // Predicated region
      $region61: #{extended_basic_block_forward.4} parent=55 // pred_check
        %p2897 = pneg %p246
      $region62: #{extended_basic_block_forward.4} parent=55 // pred_check_branch
        %2899 = sbr.rel (%p2897) target = $region64
      $region63: #{extended_basic_block_forward.4} parent=55 // pred_region
        %s2900 = smul.u32 %s25, 2
        %s2901 = sadd.s32 %s2900, %s26
        %p2902 = scmp.lt.s32.totalorder %s2901, 3
        %s2903 = scalar_select %p2902, %s2901, 3
        %s2904 = smul.addr %s2903, 8
        %s2905 = scalar_lea.vmem %s7, %s2904
      $region64: #{extended_basic_block_forward.4} parent=55 // pred_fallthru
        _
    $region56: #{extended_basic_block_forward.4} parent=5 // pred_fallthru
      _
  $region6: #{extended_basic_block_forward.4} parent=0 // loop_footer
    %s18 = sadd.s32 1, %s14
  $region7: #{extended_basic_block_forward.4} parent=0 // loop_footer_branch
    %13 = sbr.rel target = $region3
  $region8: #{extended_basic_block_forward.4} parent=0 // loop_exit
    _

</llo_original>
